<compile_context>
chip_gen: v7x
topology: tpu7x:2x2x1
jax: 0.10.0
libtpu: 0.0.40
codegen_flags: <defaults>
</compile_context>

<pallas_src>
import functools
import numpy as np

import jax
import jax.numpy as jnp
from jax.experimental import pallas as pl
from jax.experimental.pallas import tpu as pltpu

EPS = 1e-5
LANE = 128
SUB = 8          # f32 sublane tile


def _round_up(x, m):
    return (x + m - 1) // m * m


def _vmem_limit(block_bytes, scratch_bytes=0):
    """VMEM limit from actual block footprints (x2 for double-buffering) plus
    in-kernel temporaries and headroom; clamped to [32 MiB, 64 MiB] so it is
    always valid on v5e/v6e (128 MiB VMEM) and v7x (64 MiB VMEM)."""
    need = 2 * sum(block_bytes) + scratch_bytes + (8 << 20)
    return int(min(max(need, 32 << 20), 64 << 20))


# ----------------------------------------------------------------------------
# Kernel 1: fused VALID KxK conv + folded-BN shift + ReLU
#           grid = (batch, 128-out-channel blocks), both "parallel"
# ----------------------------------------------------------------------------
def _conv_bn_relu_kernel(x_ref, w_ref, shift_ref, o_ref, *, kh, kw, ho, wo):
    """x_ref:(1,H,Wp,Cin) bf16 (W zero-padded to a multiple of 8),
    w_ref:(kh,kw,Cin,CB) bf16 with BN scale folded in, shift_ref:(1,CB) f32,
    o_ref:(1,ho,wo,CB) bf16 where wo is the 8-aligned padded output width
    (columns >= the true width are junk and never read downstream).

    Per vertical tap: one contiguous full-width (ho*Wp, Cin) MXU dot per
    horizontal tap weight; the (ho,Wp,CB) product is aligned to its output
    position with an XLU sublane roll — no misaligned slices in the loop."""
    wp = x_ref.shape[2]
    cin = x_ref.shape[3]
    cb = o_ref.shape[3]
    acc = jnp.zeros((ho, wp, cb), jnp.float32)
    for u in range(kh):
        rows = x_ref[0, u:u + ho].reshape(ho * wp, cin)     # leading-dim slice only
        for v in range(kw):
            prod = jnp.dot(rows, w_ref[u, v],
                           preferred_element_type=jnp.float32).reshape(ho, wp, cb)
            if v:
                prod = pltpu.roll(prod, wp - v, axis=1)     # out[x] needs in[x + v]
            acc = acc + prod
    out = jnp.maximum(acc[:, :wo, :] + shift_ref[...], 0.0)
    o_ref[0] = out.astype(o_ref.dtype)


def conv_bn_relu_nhwc(x_nhwc, w_folded, shift):
    """VALID KxK conv (no bias) + BN(eval) + ReLU.
    x_nhwc:(B,H,W,Cin); w_folded:(kh,kw,Cin,Cpad) bf16; shift:(1,Cpad) f32.
    Returns (B, Ho, round_up(Wo,8), Cpad) bf16; columns >= Wo are junk pad."""
    B, H, W, Cin = x_nhwc.shape
    kh, kw, _, Cpad = w_folded.shape
    Ho, Wo = H - kh + 1, W - kw + 1
    Wp = _round_up(W, SUB)            # keep every in-kernel roll on an 8-aligned axis
    Wo_pad = _round_up(Wo, SUB)

    x = x_nhwc.astype(jnp.bfloat16)
    if Wp != W:
        x = jnp.pad(x, ((0, 0), (0, 0), (0, Wp - W), (0, 0)))

    kernel = functools.partial(_conv_bn_relu_kernel, kh=kh, kw=kw, ho=Ho, wo=Wo_pad)
    vmem = _vmem_limit(
        [H * Wp * Cin * 2, kh * kw * Cin * LANE * 2, LANE * 4, Ho * Wo_pad * LANE * 2],
        scratch_bytes=3 * Ho * Wp * LANE * 4 + Ho * Wp * Cin * 2)
    return pl.pallas_call(
        kernel,
        out_shape=jax.ShapeDtypeStruct((B, Ho, Wo_pad, Cpad), jnp.bfloat16),
        grid=(B, Cpad // LANE),
        in_specs=[
            pl.BlockSpec((1, H, Wp, Cin), lambda b, c: (b, 0, 0, 0)),      # not re-DMA'd over c
            pl.BlockSpec((kh, kw, Cin, LANE), lambda b, c: (0, 0, 0, c)),
            pl.BlockSpec((1, LANE), lambda b, c: (0, c)),
        ],
        out_specs=pl.BlockSpec((1, Ho, Wo_pad, LANE), lambda b, c: (b, 0, 0, c)),
        compiler_params=pltpu.CompilerParams(
            dimension_semantics=("parallel", "parallel"),
            vmem_limit_bytes=vmem),
    )(x, w_folded, shift)


# ----------------------------------------------------------------------------
# Kernel 2: depthwise cross-correlation, grid = (batch, 128-channel blocks)
# ----------------------------------------------------------------------------
def _xcorr_kernel(s_ref, k_ref, o_ref, *, hk, wk, ho, wo):
    """s_ref:(1,Hs,Wsp,CB) bf16 (W 8-padded), k_ref:(1,Hk,Wkp,CB) bf16,
    o_ref:(1,ho,wo,CB) bf16.  The search slab is loaded + upcast once,
    pre-rolled once per horizontal shift (XLU), and every (u,v) tap is a
    full-width f32 VPU FMA on leading-dim slices only."""
    s = s_ref[0].astype(jnp.float32)          # (Hs, Wsp, CB)
    k = k_ref[0].astype(jnp.float32)          # (Hk, Wkp, CB)
    wsp = s.shape[1]
    cb = s.shape[2]
    acc = jnp.zeros((ho, wsp, cb), jnp.float32)
    for v in range(wk):
        sv = s if v == 0 else pltpu.roll(s, wsp - v, axis=1)   # out[x] needs in[x + v]
        for u in range(hk):
            acc = acc + sv[u:u + ho] * k[u, v][None, None, :]
    o_ref[0] = acc[:, :wo, :].astype(o_ref.dtype)


def xcorr_depthwise_nhwc(search, kern, *, ws_true, wk_true):
    """search:(B,Hs,Wsp,C) bf16, kern:(B,Hk,Wkp,C) bf16 (widths 8-padded);
    ws_true/wk_true are the valid widths.  -> (B, Hs-Hk+1, ws_true-wk_true+1, C)."""
    B, Hs, Wsp, C = search.shape
    _, Hk, Wkp, _ = kern.shape
    Ho, Wo = Hs - Hk + 1, ws_true - wk_true + 1
    assert C % LANE == 0
    kernel = functools.partial(_xcorr_kernel, hk=Hk, wk=wk_true, ho=Ho, wo=Wo)
    vmem = _vmem_limit(
        [Hs * Wsp * LANE * 2, Hk * Wkp * LANE * 2, Ho * Wo * LANE * 2],
        scratch_bytes=(2 * Hs * Wsp + Ho * Wsp + Hk * Wkp) * LANE * 4)
    return pl.pallas_call(
        kernel,
        out_shape=jax.ShapeDtypeStruct((B, Ho, Wo, C), jnp.bfloat16),
        grid=(B, C // LANE),
        in_specs=[
            pl.BlockSpec((1, Hs, Wsp, LANE), lambda b, c: (b, 0, 0, c)),
            pl.BlockSpec((1, Hk, Wkp, LANE), lambda b, c: (b, 0, 0, c)),
        ],
        out_specs=pl.BlockSpec((1, Ho, Wo, LANE), lambda b, c: (b, 0, 0, c)),
        compiler_params=pltpu.CompilerParams(
            dimension_semantics=("parallel", "parallel"),
            vmem_limit_bytes=vmem),
    )(search, kern)


# ----------------------------------------------------------------------------
# Kernel 3: fused head (1x1 conv + BN + ReLU + 1x1 conv + bias), M-tiled
# ----------------------------------------------------------------------------
def _head_kernel(x_ref, w1_ref, s1_ref, w2_ref, b2_ref, o_ref):
    """(x @ w1 + shift1).relu() @ w2 + bias2 on one M tile; the (tm, hidden)
    intermediate stays in VMEM (no HBM round-trip between the two matmuls)."""
    y = jnp.dot(x_ref[...], w1_ref[...], preferred_element_type=jnp.float32)
    y = jnp.maximum(y + s1_ref[...], 0.0)
    z = jnp.dot(y.astype(jnp.bfloat16), w2_ref[...],
                preferred_element_type=jnp.float32)
    o_ref[...] = z + b2_ref[...]


def head_nhwc(feat, w1, shift1, w2, bias2, out_channels):
    """feat:(B,H,W,Cpad) bf16 -> (B,H,W,out_channels) f32.  Weights already
    folded/padded/bf16-cast by prepare_params()."""
    B, H, W, Cpad = feat.shape
    Npad = bias2.shape[-1]
    M = B * H * W
    tm = min(512, _round_up(M, SUB))          # big M tile: amortize step overhead
    Mpad = _round_up(M, tm)
    x2d = feat.reshape(M, Cpad)
    if Mpad != M:
        x2d = jnp.pad(x2d, ((0, Mpad - M), (0, 0)))

    vmem = _vmem_limit(
        [tm * Cpad * 2, Cpad * Cpad * 2, Cpad * 4, Cpad * Npad * 2, Npad * 4,
         tm * Npad * 4],
        scratch_bytes=2 * tm * Cpad * 4)
    out = pl.pallas_call(
        _head_kernel,
        out_shape=jax.ShapeDtypeStruct((Mpad, Npad), jnp.float32),
        grid=(Mpad // tm,),
        in_specs=[
            pl.BlockSpec((tm, Cpad), lambda m: (m, 0)),
            pl.BlockSpec((Cpad, Cpad), lambda m: (0, 0)),
            pl.BlockSpec((1, Cpad), lambda m: (0, 0)),
            pl.BlockSpec((Cpad, Npad), lambda m: (0, 0)),
            pl.BlockSpec((1, Npad), lambda m: (0, 0)),
        ],
        out_specs=pl.BlockSpec((tm, Npad), lambda m: (m, 0)),
        compiler_params=pltpu.CompilerParams(
            dimension_semantics=("parallel",),
            vmem_limit_bytes=vmem),
    )(x2d, w1, shift1, w2, bias2)
    return out[:M, :out_channels].reshape(B, H, W, out_channels)


# ----------------------------------------------------------------------------
# Hoisted weight preprocessing (run once per checkpoint, not per frame)
# ----------------------------------------------------------------------------
def prepare_params(p):
    """BN fold (inference mode), layout transpose, 128-lane channel padding and
    bf16 cast for all MXU weight operands."""
    def prep_conv(w_oihw, g, b, m, v):
        cout = w_oihw.shape[0]
        cpad = _round_up(cout, LANE)
        scale = g / jnp.sqrt(v + EPS)
        shift = b - m * scale
        w = jnp.transpose(w_oihw, (2, 3, 1, 0)) * scale[None, None, None, :]
        w = jnp.pad(w, ((0, 0), (0, 0), (0, 0), (0, cpad - cout)))
        shift = jnp.pad(shift, (0, cpad - cout)).reshape(1, cpad)
        return w.astype(jnp.bfloat16), shift.astype(jnp.float32)

    def prep_head(w1, g1, b1, m1, v1, w2, bias2):
        hidden = w1.shape[0]
        cout = w2.shape[0]
        cpad = _round_up(hidden, LANE)
        npad = _round_up(cout, LANE)
        scale1 = g1 / jnp.sqrt(v1 + EPS)
        shift1 = b1 - m1 * scale1
        w1_2d = w1.reshape(hidden, hidden).T * scale1[None, :]          # (in, out)
        w1_2d = jnp.pad(w1_2d, ((0, cpad - hidden), (0, cpad - hidden)))
        shift1 = jnp.pad(shift1, (0, cpad - hidden)).reshape(1, cpad)
        w2_2d = jnp.pad(w2.reshape(cout, hidden).T,
                        ((0, cpad - hidden), (0, npad - cout)))         # (in, out)
        b2 = jnp.pad(bias2, (0, npad - cout)).reshape(1, npad)
        return (w1_2d.astype(jnp.bfloat16), shift1.astype(jnp.float32),
                w2_2d.astype(jnp.bfloat16), b2.astype(jnp.float32))

    ck_w, ck_s = prep_conv(p['ck_w'], p['ck_g'], p['ck_b'], p['ck_m'], p['ck_v'])
    cs_w, cs_s = prep_conv(p['cs_w'], p['cs_g'], p['cs_b'], p['cs_m'], p['cs_v'])
    h1_w, h1_s, h2_w, h2_b = prep_head(p['h1_w'], p['h1_g'], p['h1_b'],
                                       p['h1_m'], p['h1_v'], p['h2_w'], p['h2_bias'])
    return dict(ck_w=ck_w, ck_s=ck_s, cs_w=cs_w, cs_s=cs_s,
                h1_w=h1_w, h1_s=h1_s, h2_w=h2_w, h2_b=h2_b)


# ----------------------------------------------------------------------------
# Full forward (matches DepthwiseXCorr.forward; NCHW in, NCHW out)
# ----------------------------------------------------------------------------
@functools.partial(jax.jit, static_argnames=("out_channels",))
def depthwise_xcorr_forward(prepped, kernel_nchw, search_nchw, *, out_channels):
    k_nhwc = jnp.transpose(kernel_nchw, (0, 2, 3, 1))
    s_nhwc = jnp.transpose(search_nchw, (0, 2, 3, 1))

    kw_c = prepped['ck_w'].shape[1]                    # conv kernel width (= height)
    wk_feat = k_nhwc.shape[2] - kw_c + 1               # true template-feature width
    ws_feat = s_nhwc.shape[2] - kw_c + 1               # true search-feature width

    kf = conv_bn_relu_nhwc(k_nhwc, prepped['ck_w'], prepped['ck_s'])
    sf = conv_bn_relu_nhwc(s_nhwc, prepped['cs_w'], prepped['cs_s'])

    feat = xcorr_depthwise_nhwc(sf, kf, ws_true=ws_feat, wk_true=wk_feat)

    out = head_nhwc(feat, prepped['h1_w'], prepped['h1_s'],
                    prepped['h2_w'], prepped['h2_b'], out_channels)
    return jnp.transpose(out, (0, 3, 1, 2)).astype(jnp.float32)


# ----------------------------------------------------------------------------
# Pure-JAX reference (lax.conv, f32 HIGHEST), for correctness checking only
# ----------------------------------------------------------------------------
def _conv_ref(x, w, groups=1):
    return jax.lax.conv_general_dilated(
        x, w, (1, 1), 'VALID',
        dimension_numbers=('NCHW', 'OIHW', 'NCHW'),
        feature_group_count=groups,
        precision=jax.lax.Precision.HIGHEST)


def forward_ref(params, kernel_nchw, search_nchw):
    def bn_relu(y, g, b, m, v):
        scale = g / jnp.sqrt(v + EPS)
        shift = b - m * scale
        return jnp.maximum(y * scale[None, :, None, None] + shift[None, :, None, None], 0.0)

    kf = bn_relu(_conv_ref(kernel_nchw, params['ck_w']),
                 params['ck_g'], params['ck_b'], params['ck_m'], params['ck_v'])
    sf = bn_relu(_conv_ref(search_nchw, params['cs_w']),
                 params['cs_g'], params['cs_b'], params['cs_m'], params['cs_v'])

    B, C = kf.shape[0], kf.shape[1]
    x2 = sf.reshape(1, B * C, sf.shape[2], sf.shape[3])
    k2 = kf.reshape(B * C, 1, kf.shape[2], kf.shape[3])
    feat = _conv_ref(x2, k2, groups=B * C)
    feat = feat.reshape(B, C, feat.shape[2], feat.shape[3])

    y = bn_relu(_conv_ref(feat, params['h1_w']),
                params['h1_g'], params['h1_b'], params['h1_m'], params['h1_v'])
    out = _conv_ref(y, params['h2_w']) + params['h2_bias'][None, :, None, None]
    return out


# ----------------------------------------------------------------------------
# Deterministic parameter init (shapes from DepthwiseXCorr.__init__)
# ----------------------------------------------------------------------------
def init_params(key, in_channels, hidden, out_channels, kernel_size=3):
    ks = jax.random.split(key, 16)
    f32 = jnp.float32
    p = {}
    p['ck_w'] = 0.1 * jax.random.normal(ks[0], (hidden, in_channels, kernel_size, kernel_size), f32)
    p['ck_g'] = 1.0 + 0.1 * jax.random.normal(ks[1], (hidden,), f32)
    p['ck_b'] = 0.05 * jax.random.normal(ks[2], (hidden,), f32)
    p['ck_m'] = 0.01 * jax.random.normal(ks[3], (hidden,), f32)
    p['ck_v'] = 1.0 + 0.1 * jnp.abs(jax.random.normal(ks[4], (hidden,), f32))
    p['cs_w'] = 0.1 * jax.random.normal(ks[5], (hidden, in_channels, kernel_size, kernel_size), f32)
    p['cs_g'] = 1.0 + 0.1 * jax.random.normal(ks[6], (hidden,), f32)
    p['cs_b'] = 0.05 * jax.random.normal(ks[7], (hidden,), f32)
    p['cs_m'] = 0.01 * jax.random.normal(ks[8], (hidden,), f32)
    p['cs_v'] = 1.0 + 0.1 * jnp.abs(jax.random.normal(ks[9], (hidden,), f32))
    p['h1_w'] = 0.1 * jax.random.normal(ks[10], (hidden, hidden, 1, 1), f32)
    p['h1_g'] = 1.0 + 0.1 * jax.random.normal(ks[11], (hidden,), f32)
    p['h1_b'] = 0.05 * jax.random.normal(ks[12], (hidden,), f32)
    p['h1_m'] = 0.01 * jax.random.normal(ks[13], (hidden,), f32)
    p['h1_v'] = 1.0 + 0.1 * jnp.abs(jax.random.normal(ks[14], (hidden,), f32))
    p['h2_w'] = 0.1 * jax.random.normal(ks[15], (out_channels, hidden, 1, 1), f32)
    p['h2_bias'] = 0.01 * jnp.arange(out_channels, dtype=f32)
    return p


# ----------------------------------------------------------------------------
if __name__ == "__main__":
    B, Cin, hidden, Cout = 2, 4, 32, 8
    Hk = Wk = 8     # template ("kernel") input spatial
    Hs = Ws = 16    # search input spatial

    key = jax.random.PRNGKey(0)
    kp, ks_, kinit = jax.random.split(key, 3)
    kernel_in = jax.random.normal(kp, (B, Cin, Hk, Wk), jnp.float32)
    search_in = jax.random.normal(ks_, (B, Cin, Hs, Ws), jnp.float32)
    params = init_params(kinit, Cin, hidden, Cout)

    # Weight preprocessing hoisted out of the per-frame call (once per checkpoint).
    prepped = prepare_params(params)

    out = jax.block_until_ready(
        depthwise_xcorr_forward(prepped, kernel_in, search_in, out_channels=Cout))

    ref = jax.block_until_ready(forward_ref(params, kernel_in, search_in))
    assert out.shape == ref.shape == (B, Cout, Hs - Hk + 1, Ws - Wk + 1), out.shape
    # bf16 MXU operands / bf16 inter-stage storage (f32 accumulation) vs an
    # f32-HIGHEST reference -> slightly looser tolerance than pure f32.
    np.testing.assert_allclose(np.asarray(out), np.asarray(ref), rtol=3e-2, atol=3e-2)

    print("KERNEL_OK")
</pallas_src>

<mosaic_0001>
module attributes {stable_mosaic.version = 11 : i64} {
  func.func @_conv_bn_relu_kernel(%arg0: i32, %arg1: i32, %arg2: memref<1x16x16x4xbf16, #tpu.memory_space<vmem>>, %arg3: memref<3x3x4x128xbf16, #tpu.memory_space<vmem>>, %arg4: memref<1x128xf32, #tpu.memory_space<vmem>>, %arg5: memref<1x14x16x128xbf16, #tpu.memory_space<vmem>>) attributes {dimension_semantics = [#tpu.dimension_semantics<parallel>, #tpu.dimension_semantics<parallel>], iteration_bounds = array<i64: 2, 1>, scalar_prefetch = 0 : i64, scratch_operands = 0 : i64, tpu.core_type = #tpu.core_type<tc>, window_params = [{transform_indices = @transform_0, window_bounds = array<i64: 1, 16, 16, 4>}, {transform_indices = @transform_1, window_bounds = array<i64: 3, 3, 4, 128>}, {transform_indices = @transform_2, window_bounds = array<i64: 1, 128>}, {transform_indices = @transform_3, window_bounds = array<i64: 1, 14, 16, 128>}]} {
    %cst = arith.constant 0.000000e+00 : f32
    %0 = vector.broadcast %cst : f32 to vector<14x16x128xf32>
    %c0 = arith.constant 0 : index
    %c0_0 = arith.constant 0 : index
    %c0_1 = arith.constant 0 : index
    %c0_2 = arith.constant 0 : index
    %1 = vector.load %arg2[%c0, %c0_0, %c0_1, %c0_2] : memref<1x16x16x4xbf16, #tpu.memory_space<vmem>>, vector<1x14x16x4xbf16>
    %2 = vector.shape_cast %1 : vector<1x14x16x4xbf16> to vector<14x16x4xbf16>
    %3 = vector.shape_cast %2 : vector<14x16x4xbf16> to vector<224x4xbf16>
    %c0_3 = arith.constant 0 : index
    %c0_4 = arith.constant 0 : index
    %c0_5 = arith.constant 0 : index
    %c0_6 = arith.constant 0 : index
    %4 = vector.load %arg3[%c0_3, %c0_4, %c0_5, %c0_6] : memref<3x3x4x128xbf16, #tpu.memory_space<vmem>>, vector<1x1x4x128xbf16>
    %5 = vector.shape_cast %4 : vector<1x1x4x128xbf16> to vector<4x128xbf16>
    %cst_7 = arith.constant dense<0.000000e+00> : vector<224x128xf32>
    %6 = tpu.matmul %3, %5, %cst_7 {dimension_numbers = #tpu.dot_dimension_numbers<[1], [0], [0], [1], [0, 0, 1, 1], [], []>} : vector<224x4xbf16>, vector<4x128xbf16>, vector<224x128xf32> -> vector<224x128xf32>
    %7 = vector.shape_cast %6 : vector<224x128xf32> to vector<14x16x128xf32>
    %8 = arith.addf %0, %7 : vector<14x16x128xf32>
    %c0_8 = arith.constant 0 : index
    %c1 = arith.constant 1 : index
    %c0_9 = arith.constant 0 : index
    %c0_10 = arith.constant 0 : index
    %9 = vector.load %arg3[%c0_8, %c1, %c0_9, %c0_10] : memref<3x3x4x128xbf16, #tpu.memory_space<vmem>>, vector<1x1x4x128xbf16>
    %10 = vector.shape_cast %9 : vector<1x1x4x128xbf16> to vector<4x128xbf16>
    %cst_11 = arith.constant dense<0.000000e+00> : vector<224x128xf32>
    %11 = tpu.matmul %3, %10, %cst_11 {dimension_numbers = #tpu.dot_dimension_numbers<[1], [0], [0], [1], [0, 0, 1, 1], [], []>} : vector<224x4xbf16>, vector<4x128xbf16>, vector<224x128xf32> -> vector<224x128xf32>
    %12 = vector.shape_cast %11 : vector<224x128xf32> to vector<14x16x128xf32>
    %c15_i32 = arith.constant 15 : i32
    %13 = tpu.dynamic_rotate %12 by %c15_i32 dim 1 : vector<14x16x128xf32>, i32 -> vector<14x16x128xf32>
    %14 = arith.addf %8, %13 : vector<14x16x128xf32>
    %c0_12 = arith.constant 0 : index
    %c2 = arith.constant 2 : index
    %c0_13 = arith.constant 0 : index
    %c0_14 = arith.constant 0 : index
    %15 = vector.load %arg3[%c0_12, %c2, %c0_13, %c0_14] : memref<3x3x4x128xbf16, #tpu.memory_space<vmem>>, vector<1x1x4x128xbf16>
    %16 = vector.shape_cast %15 : vector<1x1x4x128xbf16> to vector<4x128xbf16>
    %cst_15 = arith.constant dense<0.000000e+00> : vector<224x128xf32>
    %17 = tpu.matmul %3, %16, %cst_15 {dimension_numbers = #tpu.dot_dimension_numbers<[1], [0], [0], [1], [0, 0, 1, 1], [], []>} : vector<224x4xbf16>, vector<4x128xbf16>, vector<224x128xf32> -> vector<224x128xf32>
    %18 = vector.shape_cast %17 : vector<224x128xf32> to vector<14x16x128xf32>
    %c14_i32 = arith.constant 14 : i32
    %19 = tpu.dynamic_rotate %18 by %c14_i32 dim 1 : vector<14x16x128xf32>, i32 -> vector<14x16x128xf32>
    %20 = arith.addf %14, %19 : vector<14x16x128xf32>
    %c0_16 = arith.constant 0 : index
    %c1_17 = arith.constant 1 : index
    %c0_18 = arith.constant 0 : index
    %c0_19 = arith.constant 0 : index
    %21 = vector.load %arg2[%c0_16, %c1_17, %c0_18, %c0_19] : memref<1x16x16x4xbf16, #tpu.memory_space<vmem>>, vector<1x14x16x4xbf16>
    %22 = vector.shape_cast %21 : vector<1x14x16x4xbf16> to vector<14x16x4xbf16>
    %23 = vector.shape_cast %22 : vector<14x16x4xbf16> to vector<224x4xbf16>
    %c1_20 = arith.constant 1 : index
    %c0_21 = arith.constant 0 : index
    %c0_22 = arith.constant 0 : index
    %c0_23 = arith.constant 0 : index
    %24 = vector.load %arg3[%c1_20, %c0_21, %c0_22, %c0_23] : memref<3x3x4x128xbf16, #tpu.memory_space<vmem>>, vector<1x1x4x128xbf16>
    %25 = vector.shape_cast %24 : vector<1x1x4x128xbf16> to vector<4x128xbf16>
    %cst_24 = arith.constant dense<0.000000e+00> : vector<224x128xf32>
    %26 = tpu.matmul %23, %25, %cst_24 {dimension_numbers = #tpu.dot_dimension_numbers<[1], [0], [0], [1], [0, 0, 1, 1], [], []>} : vector<224x4xbf16>, vector<4x128xbf16>, vector<224x128xf32> -> vector<224x128xf32>
    %27 = vector.shape_cast %26 : vector<224x128xf32> to vector<14x16x128xf32>
    %28 = arith.addf %20, %27 : vector<14x16x128xf32>
    %c1_25 = arith.constant 1 : index
    %c1_26 = arith.constant 1 : index
    %c0_27 = arith.constant 0 : index
    %c0_28 = arith.constant 0 : index
    %29 = vector.load %arg3[%c1_25, %c1_26, %c0_27, %c0_28] : memref<3x3x4x128xbf16, #tpu.memory_space<vmem>>, vector<1x1x4x128xbf16>
    %30 = vector.shape_cast %29 : vector<1x1x4x128xbf16> to vector<4x128xbf16>
    %cst_29 = arith.constant dense<0.000000e+00> : vector<224x128xf32>
    %31 = tpu.matmul %23, %30, %cst_29 {dimension_numbers = #tpu.dot_dimension_numbers<[1], [0], [0], [1], [0, 0, 1, 1], [], []>} : vector<224x4xbf16>, vector<4x128xbf16>, vector<224x128xf32> -> vector<224x128xf32>
    %32 = vector.shape_cast %31 : vector<224x128xf32> to vector<14x16x128xf32>
    %c15_i32_30 = arith.constant 15 : i32
    %33 = tpu.dynamic_rotate %32 by %c15_i32_30 dim 1 : vector<14x16x128xf32>, i32 -> vector<14x16x128xf32>
    %34 = arith.addf %28, %33 : vector<14x16x128xf32>
    %c1_31 = arith.constant 1 : index
    %c2_32 = arith.constant 2 : index
    %c0_33 = arith.constant 0 : index
    %c0_34 = arith.constant 0 : index
    %35 = vector.load %arg3[%c1_31, %c2_32, %c0_33, %c0_34] : memref<3x3x4x128xbf16, #tpu.memory_space<vmem>>, vector<1x1x4x128xbf16>
    %36 = vector.shape_cast %35 : vector<1x1x4x128xbf16> to vector<4x128xbf16>
    %cst_35 = arith.constant dense<0.000000e+00> : vector<224x128xf32>
    %37 = tpu.matmul %23, %36, %cst_35 {dimension_numbers = #tpu.dot_dimension_numbers<[1], [0], [0], [1], [0, 0, 1, 1], [], []>} : vector<224x4xbf16>, vector<4x128xbf16>, vector<224x128xf32> -> vector<224x128xf32>
    %38 = vector.shape_cast %37 : vector<224x128xf32> to vector<14x16x128xf32>
    %c14_i32_36 = arith.constant 14 : i32
    %39 = tpu.dynamic_rotate %38 by %c14_i32_36 dim 1 : vector<14x16x128xf32>, i32 -> vector<14x16x128xf32>
    %40 = arith.addf %34, %39 : vector<14x16x128xf32>
    %c0_37 = arith.constant 0 : index
    %c2_38 = arith.constant 2 : index
    %c0_39 = arith.constant 0 : index
    %c0_40 = arith.constant 0 : index
    %41 = vector.load %arg2[%c0_37, %c2_38, %c0_39, %c0_40] : memref<1x16x16x4xbf16, #tpu.memory_space<vmem>>, vector<1x14x16x4xbf16>
    %42 = vector.shape_cast %41 : vector<1x14x16x4xbf16> to vector<14x16x4xbf16>
    %43 = vector.shape_cast %42 : vector<14x16x4xbf16> to vector<224x4xbf16>
    %c2_41 = arith.constant 2 : index
    %c0_42 = arith.constant 0 : index
    %c0_43 = arith.constant 0 : index
    %c0_44 = arith.constant 0 : index
    %44 = vector.load %arg3[%c2_41, %c0_42, %c0_43, %c0_44] : memref<3x3x4x128xbf16, #tpu.memory_space<vmem>>, vector<1x1x4x128xbf16>
    %45 = vector.shape_cast %44 : vector<1x1x4x128xbf16> to vector<4x128xbf16>
    %cst_45 = arith.constant dense<0.000000e+00> : vector<224x128xf32>
    %46 = tpu.matmul %43, %45, %cst_45 {dimension_numbers = #tpu.dot_dimension_numbers<[1], [0], [0], [1], [0, 0, 1, 1], [], []>} : vector<224x4xbf16>, vector<4x128xbf16>, vector<224x128xf32> -> vector<224x128xf32>
    %47 = vector.shape_cast %46 : vector<224x128xf32> to vector<14x16x128xf32>
    %48 = arith.addf %40, %47 : vector<14x16x128xf32>
    %c2_46 = arith.constant 2 : index
    %c1_47 = arith.constant 1 : index
    %c0_48 = arith.constant 0 : index
    %c0_49 = arith.constant 0 : index
    %49 = vector.load %arg3[%c2_46, %c1_47, %c0_48, %c0_49] : memref<3x3x4x128xbf16, #tpu.memory_space<vmem>>, vector<1x1x4x128xbf16>
    %50 = vector.shape_cast %49 : vector<1x1x4x128xbf16> to vector<4x128xbf16>
    %cst_50 = arith.constant dense<0.000000e+00> : vector<224x128xf32>
    %51 = tpu.matmul %43, %50, %cst_50 {dimension_numbers = #tpu.dot_dimension_numbers<[1], [0], [0], [1], [0, 0, 1, 1], [], []>} : vector<224x4xbf16>, vector<4x128xbf16>, vector<224x128xf32> -> vector<224x128xf32>
    %52 = vector.shape_cast %51 : vector<224x128xf32> to vector<14x16x128xf32>
    %c15_i32_51 = arith.constant 15 : i32
    %53 = tpu.dynamic_rotate %52 by %c15_i32_51 dim 1 : vector<14x16x128xf32>, i32 -> vector<14x16x128xf32>
    %54 = arith.addf %48, %53 : vector<14x16x128xf32>
    %c2_52 = arith.constant 2 : index
    %c2_53 = arith.constant 2 : index
    %c0_54 = arith.constant 0 : index
    %c0_55 = arith.constant 0 : index
    %55 = vector.load %arg3[%c2_52, %c2_53, %c0_54, %c0_55] : memref<3x3x4x128xbf16, #tpu.memory_space<vmem>>, vector<1x1x4x128xbf16>
    %56 = vector.shape_cast %55 : vector<1x1x4x128xbf16> to vector<4x128xbf16>
    %cst_56 = arith.constant dense<0.000000e+00> : vector<224x128xf32>
    %57 = tpu.matmul %43, %56, %cst_56 {dimension_numbers = #tpu.dot_dimension_numbers<[1], [0], [0], [1], [0, 0, 1, 1], [], []>} : vector<224x4xbf16>, vector<4x128xbf16>, vector<224x128xf32> -> vector<224x128xf32>
    %58 = vector.shape_cast %57 : vector<224x128xf32> to vector<14x16x128xf32>
    %c14_i32_57 = arith.constant 14 : i32
    %59 = tpu.dynamic_rotate %58 by %c14_i32_57 dim 1 : vector<14x16x128xf32>, i32 -> vector<14x16x128xf32>
    %60 = arith.addf %54, %59 : vector<14x16x128xf32>
    %c0_58 = arith.constant 0 : index
    %c0_59 = arith.constant 0 : index
    %61 = vector.load %arg4[%c0_58, %c0_59] : memref<1x128xf32, #tpu.memory_space<vmem>>, vector<1x128xf32>
    %62 = vector.shape_cast %61 : vector<1x128xf32> to vector<1x1x128xf32>
    %63 = vector.broadcast %62 : vector<1x1x128xf32> to vector<14x16x128xf32>
    %64 = arith.addf %60, %63 : vector<14x16x128xf32>
    %cst_60 = arith.constant 0.000000e+00 : f32
    %65 = vector.broadcast %cst_60 : f32 to vector<14x16x128xf32>
    %66 = arith.maximumf %64, %65 : vector<14x16x128xf32>
    %67 = arith.truncf %66 : vector<14x16x128xf32> to vector<14x16x128xbf16>
    %c0_61 = arith.constant 0 : index
    %c0_62 = arith.constant 0 : index
    %c0_63 = arith.constant 0 : index
    %c0_64 = arith.constant 0 : index
    %68 = vector.load %arg5[%c0_61, %c0_62, %c0_63, %c0_64] : memref<1x14x16x128xbf16, #tpu.memory_space<vmem>>, vector<1x14x16x128xbf16>
    %69 = vector.shape_cast %68 : vector<1x14x16x128xbf16> to vector<14x16x128xbf16>
    %70 = vector.shape_cast %67 : vector<14x16x128xbf16> to vector<1x14x16x128xbf16>
    tpu.vector_store %arg5[%c0_61, %c0_62, %c0_63, %c0_64], %70 {strides = array<i32>} : memref<1x14x16x128xbf16, #tpu.memory_space<vmem>>, vector<1x14x16x128xbf16>,
    return
  }
  func.func @transform_0(%arg0: i32, %arg1: i32) -> (i32, i32, i32, i32) {
    %c0_i32 = arith.constant 0 : i32
    %c0_i32_0 = arith.constant 0 : i32
    %c0_i32_1 = arith.constant 0 : i32
    %c0_i32_2 = arith.constant 0 : i32
    return %arg0, %c0_i32, %c0_i32_0, %c0_i32_1 : i32, i32, i32, i32
  }
  func.func @transform_1(%arg0: i32, %arg1: i32) -> (i32, i32, i32, i32) {
    %c0_i32 = arith.constant 0 : i32
    %c0_i32_0 = arith.constant 0 : i32
    %c0_i32_1 = arith.constant 0 : i32
    %c0_i32_2 = arith.constant 0 : i32
    return %c0_i32, %c0_i32_0, %c0_i32_1, %arg1 : i32, i32, i32, i32
  }
  func.func @transform_2(%arg0: i32, %arg1: i32) -> (i32, i32) {
    %c0_i32 = arith.constant 0 : i32
    %c0_i32_0 = arith.constant 0 : i32
    return %c0_i32, %arg1 : i32, i32
  }
  func.func @transform_3(%arg0: i32, %arg1: i32) -> (i32, i32, i32, i32) {
    %c0_i32 = arith.constant 0 : i32
    %c0_i32_0 = arith.constant 0 : i32
    %c0_i32_1 = arith.constant 0 : i32
    return %arg0, %c0_i32, %c0_i32_0, %arg1 : i32, i32, i32, i32
  }
}

module attributes {stable_mosaic.version = 11 : i64} {
  func.func @_conv_bn_relu_kernel(%arg0: i32, %arg1: i32, %arg2: memref<1x8x8x4xbf16, #tpu.memory_space<vmem>>, %arg3: memref<3x3x4x128xbf16, #tpu.memory_space<vmem>>, %arg4: memref<1x128xf32, #tpu.memory_space<vmem>>, %arg5: memref<1x6x8x128xbf16, #tpu.memory_space<vmem>>) attributes {dimension_semantics = [#tpu.dimension_semantics<parallel>, #tpu.dimension_semantics<parallel>], iteration_bounds = array<i64: 2, 1>, scalar_prefetch = 0 : i64, scratch_operands = 0 : i64, tpu.core_type = #tpu.core_type<tc>, window_params = [{transform_indices = @transform_0, window_bounds = array<i64: 1, 8, 8, 4>}, {transform_indices = @transform_1, window_bounds = array<i64: 3, 3, 4, 128>}, {transform_indices = @transform_2, window_bounds = array<i64: 1, 128>}, {transform_indices = @transform_3, window_bounds = array<i64: 1, 6, 8, 128>}]} {
    %cst = arith.constant 0.000000e+00 : f32
    %0 = vector.broadcast %cst : f32 to vector<6x8x128xf32>
    %c0 = arith.constant 0 : index
    %c0_0 = arith.constant 0 : index
    %c0_1 = arith.constant 0 : index
    %c0_2 = arith.constant 0 : index
    %1 = vector.load %arg2[%c0, %c0_0, %c0_1, %c0_2] : memref<1x8x8x4xbf16, #tpu.memory_space<vmem>>, vector<1x6x8x4xbf16>
    %2 = vector.shape_cast %1 : vector<1x6x8x4xbf16> to vector<6x8x4xbf16>
    %3 = vector.shape_cast %2 : vector<6x8x4xbf16> to vector<48x4xbf16>
    %c0_3 = arith.constant 0 : index
    %c0_4 = arith.constant 0 : index
    %c0_5 = arith.constant 0 : index
    %c0_6 = arith.constant 0 : index
    %4 = vector.load %arg3[%c0_3, %c0_4, %c0_5, %c0_6] : memref<3x3x4x128xbf16, #tpu.memory_space<vmem>>, vector<1x1x4x128xbf16>
    %5 = vector.shape_cast %4 : vector<1x1x4x128xbf16> to vector<4x128xbf16>
    %cst_7 = arith.constant dense<0.000000e+00> : vector<48x128xf32>
    %6 = tpu.matmul %3, %5, %cst_7 {dimension_numbers = #tpu.dot_dimension_numbers<[1], [0], [0], [1], [0, 0, 1, 1], [], []>} : vector<48x4xbf16>, vector<4x128xbf16>, vector<48x128xf32> -> vector<48x128xf32>
    %7 = vector.shape_cast %6 : vector<48x128xf32> to vector<6x8x128xf32>
    %8 = arith.addf %0, %7 : vector<6x8x128xf32>
    %c0_8 = arith.constant 0 : index
    %c1 = arith.constant 1 : index
    %c0_9 = arith.constant 0 : index
    %c0_10 = arith.constant 0 : index
    %9 = vector.load %arg3[%c0_8, %c1, %c0_9, %c0_10] : memref<3x3x4x128xbf16, #tpu.memory_space<vmem>>, vector<1x1x4x128xbf16>
    %10 = vector.shape_cast %9 : vector<1x1x4x128xbf16> to vector<4x128xbf16>
    %cst_11 = arith.constant dense<0.000000e+00> : vector<48x128xf32>
    %11 = tpu.matmul %3, %10, %cst_11 {dimension_numbers = #tpu.dot_dimension_numbers<[1], [0], [0], [1], [0, 0, 1, 1], [], []>} : vector<48x4xbf16>, vector<4x128xbf16>, vector<48x128xf32> -> vector<48x128xf32>
    %12 = vector.shape_cast %11 : vector<48x128xf32> to vector<6x8x128xf32>
    %c7_i32 = arith.constant 7 : i32
    %13 = tpu.dynamic_rotate %12 by %c7_i32 dim 1 : vector<6x8x128xf32>, i32 -> vector<6x8x128xf32>
    %14 = arith.addf %8, %13 : vector<6x8x128xf32>
    %c0_12 = arith.constant 0 : index
    %c2 = arith.constant 2 : index
    %c0_13 = arith.constant 0 : index
    %c0_14 = arith.constant 0 : index
    %15 = vector.load %arg3[%c0_12, %c2, %c0_13, %c0_14] : memref<3x3x4x128xbf16, #tpu.memory_space<vmem>>, vector<1x1x4x128xbf16>
    %16 = vector.shape_cast %15 : vector<1x1x4x128xbf16> to vector<4x128xbf16>
    %cst_15 = arith.constant dense<0.000000e+00> : vector<48x128xf32>
    %17 = tpu.matmul %3, %16, %cst_15 {dimension_numbers = #tpu.dot_dimension_numbers<[1], [0], [0], [1], [0, 0, 1, 1], [], []>} : vector<48x4xbf16>, vector<4x128xbf16>, vector<48x128xf32> -> vector<48x128xf32>
    %18 = vector.shape_cast %17 : vector<48x128xf32> to vector<6x8x128xf32>
    %c6_i32 = arith.constant 6 : i32
    %19 = tpu.dynamic_rotate %18 by %c6_i32 dim 1 : vector<6x8x128xf32>, i32 -> vector<6x8x128xf32>
    %20 = arith.addf %14, %19 : vector<6x8x128xf32>
    %c0_16 = arith.constant 0 : index
    %c1_17 = arith.constant 1 : index
    %c0_18 = arith.constant 0 : index
    %c0_19 = arith.constant 0 : index
    %21 = vector.load %arg2[%c0_16, %c1_17, %c0_18, %c0_19] : memref<1x8x8x4xbf16, #tpu.memory_space<vmem>>, vector<1x6x8x4xbf16>
    %22 = vector.shape_cast %21 : vector<1x6x8x4xbf16> to vector<6x8x4xbf16>
    %23 = vector.shape_cast %22 : vector<6x8x4xbf16> to vector<48x4xbf16>
    %c1_20 = arith.constant 1 : index
    %c0_21 = arith.constant 0 : index
    %c0_22 = arith.constant 0 : index
    %c0_23 = arith.constant 0 : index
    %24 = vector.load %arg3[%c1_20, %c0_21, %c0_22, %c0_23] : memref<3x3x4x128xbf16, #tpu.memory_space<vmem>>, vector<1x1x4x128xbf16>
    %25 = vector.shape_cast %24 : vector<1x1x4x128xbf16> to vector<4x128xbf16>
    %cst_24 = arith.constant dense<0.000000e+00> : vector<48x128xf32>
    %26 = tpu.matmul %23, %25, %cst_24 {dimension_numbers = #tpu.dot_dimension_numbers<[1], [0], [0], [1], [0, 0, 1, 1], [], []>} : vector<48x4xbf16>, vector<4x128xbf16>, vector<48x128xf32> -> vector<48x128xf32>
    %27 = vector.shape_cast %26 : vector<48x128xf32> to vector<6x8x128xf32>
    %28 = arith.addf %20, %27 : vector<6x8x128xf32>
    %c1_25 = arith.constant 1 : index
    %c1_26 = arith.constant 1 : index
    %c0_27 = arith.constant 0 : index
    %c0_28 = arith.constant 0 : index
    %29 = vector.load %arg3[%c1_25, %c1_26, %c0_27, %c0_28] : memref<3x3x4x128xbf16, #tpu.memory_space<vmem>>, vector<1x1x4x128xbf16>
    %30 = vector.shape_cast %29 : vector<1x1x4x128xbf16> to vector<4x128xbf16>
    %cst_29 = arith.constant dense<0.000000e+00> : vector<48x128xf32>
    %31 = tpu.matmul %23, %30, %cst_29 {dimension_numbers = #tpu.dot_dimension_numbers<[1], [0], [0], [1], [0, 0, 1, 1], [], []>} : vector<48x4xbf16>, vector<4x128xbf16>, vector<48x128xf32> -> vector<48x128xf32>
    %32 = vector.shape_cast %31 : vector<48x128xf32> to vector<6x8x128xf32>
    %c7_i32_30 = arith.constant 7 : i32
    %33 = tpu.dynamic_rotate %32 by %c7_i32_30 dim 1 : vector<6x8x128xf32>, i32 -> vector<6x8x128xf32>
    %34 = arith.addf %28, %33 : vector<6x8x128xf32>
    %c1_31 = arith.constant 1 : index
    %c2_32 = arith.constant 2 : index
    %c0_33 = arith.constant 0 : index
    %c0_34 = arith.constant 0 : index
    %35 = vector.load %arg3[%c1_31, %c2_32, %c0_33, %c0_34] : memref<3x3x4x128xbf16, #tpu.memory_space<vmem>>, vector<1x1x4x128xbf16>
    %36 = vector.shape_cast %35 : vector<1x1x4x128xbf16> to vector<4x128xbf16>
    %cst_35 = arith.constant dense<0.000000e+00> : vector<48x128xf32>
    %37 = tpu.matmul %23, %36, %cst_35 {dimension_numbers = #tpu.dot_dimension_numbers<[1], [0], [0], [1], [0, 0, 1, 1], [], []>} : vector<48x4xbf16>, vector<4x128xbf16>, vector<48x128xf32> -> vector<48x128xf32>
    %38 = vector.shape_cast %37 : vector<48x128xf32> to vector<6x8x128xf32>
    %c6_i32_36 = arith.constant 6 : i32
    %39 = tpu.dynamic_rotate %38 by %c6_i32_36 dim 1 : vector<6x8x128xf32>, i32 -> vector<6x8x128xf32>
    %40 = arith.addf %34, %39 : vector<6x8x128xf32>
    %c0_37 = arith.constant 0 : index
    %c2_38 = arith.constant 2 : index
    %c0_39 = arith.constant 0 : index
    %c0_40 = arith.constant 0 : index
    %41 = vector.load %arg2[%c0_37, %c2_38, %c0_39, %c0_40] : memref<1x8x8x4xbf16, #tpu.memory_space<vmem>>, vector<1x6x8x4xbf16>
    %42 = vector.shape_cast %41 : vector<1x6x8x4xbf16> to vector<6x8x4xbf16>
    %43 = vector.shape_cast %42 : vector<6x8x4xbf16> to vector<48x4xbf16>
    %c2_41 = arith.constant 2 : index
    %c0_42 = arith.constant 0 : index
    %c0_43 = arith.constant 0 : index
    %c0_44 = arith.constant 0 : index
    %44 = vector.load %arg3[%c2_41, %c0_42, %c0_43, %c0_44] : memref<3x3x4x128xbf16, #tpu.memory_space<vmem>>, vector<1x1x4x128xbf16>
    %45 = vector.shape_cast %44 : vector<1x1x4x128xbf16> to vector<4x128xbf16>
    %cst_45 = arith.constant dense<0.000000e+00> : vector<48x128xf32>
    %46 = tpu.matmul %43, %45, %cst_45 {dimension_numbers = #tpu.dot_dimension_numbers<[1], [0], [0], [1], [0, 0, 1, 1], [], []>} : vector<48x4xbf16>, vector<4x128xbf16>, vector<48x128xf32> -> vector<48x128xf32>
    %47 = vector.shape_cast %46 : vector<48x128xf32> to vector<6x8x128xf32>
    %48 = arith.addf %40, %47 : vector<6x8x128xf32>
    %c2_46 = arith.constant 2 : index
    %c1_47 = arith.constant 1 : index
    %c0_48 = arith.constant 0 : index
    %c0_49 = arith.constant 0 : index
    %49 = vector.load %arg3[%c2_46, %c1_47, %c0_48, %c0_49] : memref<3x3x4x128xbf16, #tpu.memory_space<vmem>>, vector<1x1x4x128xbf16>
    %50 = vector.shape_cast %49 : vector<1x1x4x128xbf16> to vector<4x128xbf16>
    %cst_50 = arith.constant dense<0.000000e+00> : vector<48x128xf32>
    %51 = tpu.matmul %43, %50, %cst_50 {dimension_numbers = #tpu.dot_dimension_numbers<[1], [0], [0], [1], [0, 0, 1, 1], [], []>} : vector<48x4xbf16>, vector<4x128xbf16>, vector<48x128xf32> -> vector<48x128xf32>
    %52 = vector.shape_cast %51 : vector<48x128xf32> to vector<6x8x128xf32>
    %c7_i32_51 = arith.constant 7 : i32
    %53 = tpu.dynamic_rotate %52 by %c7_i32_51 dim 1 : vector<6x8x128xf32>, i32 -> vector<6x8x128xf32>
    %54 = arith.addf %48, %53 : vector<6x8x128xf32>
    %c2_52 = arith.constant 2 : index
    %c2_53 = arith.constant 2 : index
    %c0_54 = arith.constant 0 : index
    %c0_55 = arith.constant 0 : index
    %55 = vector.load %arg3[%c2_52, %c2_53, %c0_54, %c0_55] : memref<3x3x4x128xbf16, #tpu.memory_space<vmem>>, vector<1x1x4x128xbf16>
    %56 = vector.shape_cast %55 : vector<1x1x4x128xbf16> to vector<4x128xbf16>
    %cst_56 = arith.constant dense<0.000000e+00> : vector<48x128xf32>
    %57 = tpu.matmul %43, %56, %cst_56 {dimension_numbers = #tpu.dot_dimension_numbers<[1], [0], [0], [1], [0, 0, 1, 1], [], []>} : vector<48x4xbf16>, vector<4x128xbf16>, vector<48x128xf32> -> vector<48x128xf32>
    %58 = vector.shape_cast %57 : vector<48x128xf32> to vector<6x8x128xf32>
    %c6_i32_57 = arith.constant 6 : i32
    %59 = tpu.dynamic_rotate %58 by %c6_i32_57 dim 1 : vector<6x8x128xf32>, i32 -> vector<6x8x128xf32>
    %60 = arith.addf %54, %59 : vector<6x8x128xf32>
    %c0_58 = arith.constant 0 : index
    %c0_59 = arith.constant 0 : index
    %61 = vector.load %arg4[%c0_58, %c0_59] : memref<1x128xf32, #tpu.memory_space<vmem>>, vector<1x128xf32>
    %62 = vector.shape_cast %61 : vector<1x128xf32> to vector<1x1x128xf32>
    %63 = vector.broadcast %62 : vector<1x1x128xf32> to vector<6x8x128xf32>
    %64 = arith.addf %60, %63 : vector<6x8x128xf32>
    %cst_60 = arith.constant 0.000000e+00 : f32
    %65 = vector.broadcast %cst_60 : f32 to vector<6x8x128xf32>
    %66 = arith.maximumf %64, %65 : vector<6x8x128xf32>
    %67 = arith.truncf %66 : vector<6x8x128xf32> to vector<6x8x128xbf16>
    %c0_61 = arith.constant 0 : index
    %c0_62 = arith.constant 0 : index
    %c0_63 = arith.constant 0 : index
    %c0_64 = arith.constant 0 : index
    %68 = vector.load %arg5[%c0_61, %c0_62, %c0_63, %c0_64] : memref<1x6x8x128xbf16, #tpu.memory_space<vmem>>, vector<1x6x8x128xbf16>
    %69 = vector.shape_cast %68 : vector<1x6x8x128xbf16> to vector<6x8x128xbf16>
    %70 = vector.shape_cast %67 : vector<6x8x128xbf16> to vector<1x6x8x128xbf16>
    tpu.vector_store %arg5[%c0_61, %c0_62, %c0_63, %c0_64], %70 {strides = array<i32>} : memref<1x6x8x128xbf16, #tpu.memory_space<vmem>>, vector<1x6x8x128xbf16>,
    return
  }
  func.func @transform_0(%arg0: i32, %arg1: i32) -> (i32, i32, i32, i32) {
    %c0_i32 = arith.constant 0 : i32
    %c0_i32_0 = arith.constant 0 : i32
    %c0_i32_1 = arith.constant 0 : i32
    %c0_i32_2 = arith.constant 0 : i32
    return %arg0, %c0_i32, %c0_i32_0, %c0_i32_1 : i32, i32, i32, i32
  }
  func.func @transform_1(%arg0: i32, %arg1: i32) -> (i32, i32, i32, i32) {
    %c0_i32 = arith.constant 0 : i32
    %c0_i32_0 = arith.constant 0 : i32
    %c0_i32_1 = arith.constant 0 : i32
    %c0_i32_2 = arith.constant 0 : i32
    return %c0_i32, %c0_i32_0, %c0_i32_1, %arg1 : i32, i32, i32, i32
  }
  func.func @transform_2(%arg0: i32, %arg1: i32) -> (i32, i32) {
    %c0_i32 = arith.constant 0 : i32
    %c0_i32_0 = arith.constant 0 : i32
    return %c0_i32, %arg1 : i32, i32
  }
  func.func @transform_3(%arg0: i32, %arg1: i32) -> (i32, i32, i32, i32) {
    %c0_i32 = arith.constant 0 : i32
    %c0_i32_0 = arith.constant 0 : i32
    %c0_i32_1 = arith.constant 0 : i32
    return %arg0, %c0_i32, %c0_i32_0, %arg1 : i32, i32, i32, i32
  }
}

module attributes {stable_mosaic.version = 11 : i64} {
  func.func @_xcorr_kernel(%arg0: i32, %arg1: i32, %arg2: memref<1x14x16x128xbf16, #tpu.memory_space<vmem>>, %arg3: memref<1x6x8x128xbf16, #tpu.memory_space<vmem>>, %arg4: memref<1x9x9x128xbf16, #tpu.memory_space<vmem>>) attributes {dimension_semantics = [#tpu.dimension_semantics<parallel>, #tpu.dimension_semantics<parallel>], iteration_bounds = array<i64: 2, 1>, scalar_prefetch = 0 : i64, scratch_operands = 0 : i64, tpu.core_type = #tpu.core_type<tc>, window_params = [{transform_indices = @transform_0, window_bounds = array<i64: 1, 14, 16, 128>}, {transform_indices = @transform_1, window_bounds = array<i64: 1, 6, 8, 128>}, {transform_indices = @transform_2, window_bounds = array<i64: 1, 9, 9, 128>}]} {
    %c0 = arith.constant 0 : index
    %c0_0 = arith.constant 0 : index
    %c0_1 = arith.constant 0 : index
    %c0_2 = arith.constant 0 : index
    %0 = vector.load %arg2[%c0, %c0_0, %c0_1, %c0_2] : memref<1x14x16x128xbf16, #tpu.memory_space<vmem>>, vector<1x14x16x128xbf16>
    %1 = vector.shape_cast %0 : vector<1x14x16x128xbf16> to vector<14x16x128xbf16>
    %2 = arith.extf %1 : vector<14x16x128xbf16> to vector<14x16x128xf32>
    %c0_3 = arith.constant 0 : index
    %c0_4 = arith.constant 0 : index
    %c0_5 = arith.constant 0 : index
    %c0_6 = arith.constant 0 : index
    %3 = vector.load %arg3[%c0_3, %c0_4, %c0_5, %c0_6] : memref<1x6x8x128xbf16, #tpu.memory_space<vmem>>, vector<1x6x8x128xbf16>
    %4 = vector.shape_cast %3 : vector<1x6x8x128xbf16> to vector<6x8x128xbf16>
    %5 = arith.extf %4 : vector<6x8x128xbf16> to vector<6x8x128xf32>
    %cst = arith.constant 0.000000e+00 : f32
    %6 = vector.broadcast %cst : f32 to vector<9x16x128xf32>
    %7 = vector.extract_strided_slice %2 {offsets = [0, 0, 0], sizes = [9, 16, 128], strides = [1, 1, 1]} : vector<14x16x128xf32> to vector<9x16x128xf32>
    %8 = vector.extract_strided_slice %5 {offsets = [0, 0, 0], sizes = [1, 1, 128], strides = [1, 1, 1]} : vector<6x8x128xf32> to vector<1x1x128xf32>
    %9 = vector.shape_cast %8 : vector<1x1x128xf32> to vector<128xf32>
    %10 = vector.shape_cast %9 : vector<128xf32> to vector<1x1x128xf32>
    %11 = vector.broadcast %10 : vector<1x1x128xf32> to vector<9x16x128xf32>
    %12 = arith.mulf %7, %11 : vector<9x16x128xf32>
    %13 = arith.addf %6, %12 : vector<9x16x128xf32>
    %14 = vector.extract_strided_slice %2 {offsets = [1, 0, 0], sizes = [9, 16, 128], strides = [1, 1, 1]} : vector<14x16x128xf32> to vector<9x16x128xf32>
    %15 = vector.extract_strided_slice %5 {offsets = [1, 0, 0], sizes = [1, 1, 128], strides = [1, 1, 1]} : vector<6x8x128xf32> to vector<1x1x128xf32>
    %16 = vector.shape_cast %15 : vector<1x1x128xf32> to vector<128xf32>
    %17 = vector.shape_cast %16 : vector<128xf32> to vector<1x1x128xf32>
    %18 = vector.broadcast %17 : vector<1x1x128xf32> to vector<9x16x128xf32>
    %19 = arith.mulf %14, %18 : vector<9x16x128xf32>
    %20 = arith.addf %13, %19 : vector<9x16x128xf32>
    %21 = vector.extract_strided_slice %2 {offsets = [2, 0, 0], sizes = [9, 16, 128], strides = [1, 1, 1]} : vector<14x16x128xf32> to vector<9x16x128xf32>
    %22 = vector.extract_strided_slice %5 {offsets = [2, 0, 0], sizes = [1, 1, 128], strides = [1, 1, 1]} : vector<6x8x128xf32> to vector<1x1x128xf32>
    %23 = vector.shape_cast %22 : vector<1x1x128xf32> to vector<128xf32>
    %24 = vector.shape_cast %23 : vector<128xf32> to vector<1x1x128xf32>
    %25 = vector.broadcast %24 : vector<1x1x128xf32> to vector<9x16x128xf32>
    %26 = arith.mulf %21, %25 : vector<9x16x128xf32>
    %27 = arith.addf %20, %26 : vector<9x16x128xf32>
    %28 = vector.extract_strided_slice %2 {offsets = [3, 0, 0], sizes = [9, 16, 128], strides = [1, 1, 1]} : vector<14x16x128xf32> to vector<9x16x128xf32>
    %29 = vector.extract_strided_slice %5 {offsets = [3, 0, 0], sizes = [1, 1, 128], strides = [1, 1, 1]} : vector<6x8x128xf32> to vector<1x1x128xf32>
    %30 = vector.shape_cast %29 : vector<1x1x128xf32> to vector<128xf32>
    %31 = vector.shape_cast %30 : vector<128xf32> to vector<1x1x128xf32>
    %32 = vector.broadcast %31 : vector<1x1x128xf32> to vector<9x16x128xf32>
    %33 = arith.mulf %28, %32 : vector<9x16x128xf32>
    %34 = arith.addf %27, %33 : vector<9x16x128xf32>
    %35 = vector.extract_strided_slice %2 {offsets = [4, 0, 0], sizes = [9, 16, 128], strides = [1, 1, 1]} : vector<14x16x128xf32> to vector<9x16x128xf32>
    %36 = vector.extract_strided_slice %5 {offsets = [4, 0, 0], sizes = [1, 1, 128], strides = [1, 1, 1]} : vector<6x8x128xf32> to vector<1x1x128xf32>
    %37 = vector.shape_cast %36 : vector<1x1x128xf32> to vector<128xf32>
    %38 = vector.shape_cast %37 : vector<128xf32> to vector<1x1x128xf32>
    %39 = vector.broadcast %38 : vector<1x1x128xf32> to vector<9x16x128xf32>
    %40 = arith.mulf %35, %39 : vector<9x16x128xf32>
    %41 = arith.addf %34, %40 : vector<9x16x128xf32>
    %42 = vector.extract_strided_slice %2 {offsets = [5, 0, 0], sizes = [9, 16, 128], strides = [1, 1, 1]} : vector<14x16x128xf32> to vector<9x16x128xf32>
    %43 = vector.extract_strided_slice %5 {offsets = [5, 0, 0], sizes = [1, 1, 128], strides = [1, 1, 1]} : vector<6x8x128xf32> to vector<1x1x128xf32>
    %44 = vector.shape_cast %43 : vector<1x1x128xf32> to vector<128xf32>
    %45 = vector.shape_cast %44 : vector<128xf32> to vector<1x1x128xf32>
    %46 = vector.broadcast %45 : vector<1x1x128xf32> to vector<9x16x128xf32>
    %47 = arith.mulf %42, %46 : vector<9x16x128xf32>
    %48 = arith.addf %41, %47 : vector<9x16x128xf32>
    %c15_i32 = arith.constant 15 : i32
    %49 = tpu.dynamic_rotate %2 by %c15_i32 dim 1 : vector<14x16x128xf32>, i32 -> vector<14x16x128xf32>
    %50 = vector.extract_strided_slice %49 {offsets = [0, 0, 0], sizes = [9, 16, 128], strides = [1, 1, 1]} : vector<14x16x128xf32> to vector<9x16x128xf32>
    %51 = vector.extract_strided_slice %5 {offsets = [0, 1, 0], sizes = [1, 1, 128], strides = [1, 1, 1]} : vector<6x8x128xf32> to vector<1x1x128xf32>
    %52 = vector.shape_cast %51 : vector<1x1x128xf32> to vector<128xf32>
    %53 = vector.shape_cast %52 : vector<128xf32> to vector<1x1x128xf32>
    %54 = vector.broadcast %53 : vector<1x1x128xf32> to vector<9x16x128xf32>
    %55 = arith.mulf %50, %54 : vector<9x16x128xf32>
    %56 = arith.addf %48, %55 : vector<9x16x128xf32>
    %57 = vector.extract_strided_slice %49 {offsets = [1, 0, 0], sizes = [9, 16, 128], strides = [1, 1, 1]} : vector<14x16x128xf32> to vector<9x16x128xf32>
    %58 = vector.extract_strided_slice %5 {offsets = [1, 1, 0], sizes = [1, 1, 128], strides = [1, 1, 1]} : vector<6x8x128xf32> to vector<1x1x128xf32>
    %59 = vector.shape_cast %58 : vector<1x1x128xf32> to vector<128xf32>
    %60 = vector.shape_cast %59 : vector<128xf32> to vector<1x1x128xf32>
    %61 = vector.broadcast %60 : vector<1x1x128xf32> to vector<9x16x128xf32>
    %62 = arith.mulf %57, %61 : vector<9x16x128xf32>
    %63 = arith.addf %56, %62 : vector<9x16x128xf32>
    %64 = vector.extract_strided_slice %49 {offsets = [2, 0, 0], sizes = [9, 16, 128], strides = [1, 1, 1]} : vector<14x16x128xf32> to vector<9x16x128xf32>
    %65 = vector.extract_strided_slice %5 {offsets = [2, 1, 0], sizes = [1, 1, 128], strides = [1, 1, 1]} : vector<6x8x128xf32> to vector<1x1x128xf32>
    %66 = vector.shape_cast %65 : vector<1x1x128xf32> to vector<128xf32>
    %67 = vector.shape_cast %66 : vector<128xf32> to vector<1x1x128xf32>
    %68 = vector.broadcast %67 : vector<1x1x128xf32> to vector<9x16x128xf32>
    %69 = arith.mulf %64, %68 : vector<9x16x128xf32>
    %70 = arith.addf %63, %69 : vector<9x16x128xf32>
    %71 = vector.extract_strided_slice %49 {offsets = [3, 0, 0], sizes = [9, 16, 128], strides = [1, 1, 1]} : vector<14x16x128xf32> to vector<9x16x128xf32>
    %72 = vector.extract_strided_slice %5 {offsets = [3, 1, 0], sizes = [1, 1, 128], strides = [1, 1, 1]} : vector<6x8x128xf32> to vector<1x1x128xf32>
    %73 = vector.shape_cast %72 : vector<1x1x128xf32> to vector<128xf32>
    %74 = vector.shape_cast %73 : vector<128xf32> to vector<1x1x128xf32>
    %75 = vector.broadcast %74 : vector<1x1x128xf32> to vector<9x16x128xf32>
    %76 = arith.mulf %71, %75 : vector<9x16x128xf32>
    %77 = arith.addf %70, %76 : vector<9x16x128xf32>
    %78 = vector.extract_strided_slice %49 {offsets = [4, 0, 0], sizes = [9, 16, 128], strides = [1, 1, 1]} : vector<14x16x128xf32> to vector<9x16x128xf32>
    %79 = vector.extract_strided_slice %5 {offsets = [4, 1, 0], sizes = [1, 1, 128], strides = [1, 1, 1]} : vector<6x8x128xf32> to vector<1x1x128xf32>
    %80 = vector.shape_cast %79 : vector<1x1x128xf32> to vector<128xf32>
    %81 = vector.shape_cast %80 : vector<128xf32> to vector<1x1x128xf32>
    %82 = vector.broadcast %81 : vector<1x1x128xf32> to vector<9x16x128xf32>
    %83 = arith.mulf %78, %82 : vector<9x16x128xf32>
    %84 = arith.addf %77, %83 : vector<9x16x128xf32>
    %85 = vector.extract_strided_slice %49 {offsets = [5, 0, 0], sizes = [9, 16, 128], strides = [1, 1, 1]} : vector<14x16x128xf32> to vector<9x16x128xf32>
    %86 = vector.extract_strided_slice %5 {offsets = [5, 1, 0], sizes = [1, 1, 128], strides = [1, 1, 1]} : vector<6x8x128xf32> to vector<1x1x128xf32>
    %87 = vector.shape_cast %86 : vector<1x1x128xf32> to vector<128xf32>
    %88 = vector.shape_cast %87 : vector<128xf32> to vector<1x1x128xf32>
    %89 = vector.broadcast %88 : vector<1x1x128xf32> to vector<9x16x128xf32>
    %90 = arith.mulf %85, %89 : vector<9x16x128xf32>
    %91 = arith.addf %84, %90 : vector<9x16x128xf32>
    %c14_i32 = arith.constant 14 : i32
    %92 = tpu.dynamic_rotate %2 by %c14_i32 dim 1 : vector<14x16x128xf32>, i32 -> vector<14x16x128xf32>
    %93 = vector.extract_strided_slice %92 {offsets = [0, 0, 0], sizes = [9, 16, 128], strides = [1, 1, 1]} : vector<14x16x128xf32> to vector<9x16x128xf32>
    %94 = vector.extract_strided_slice %5 {offsets = [0, 2, 0], sizes = [1, 1, 128], strides = [1, 1, 1]} : vector<6x8x128xf32> to vector<1x1x128xf32>
    %95 = vector.shape_cast %94 : vector<1x1x128xf32> to vector<128xf32>
    %96 = vector.shape_cast %95 : vector<128xf32> to vector<1x1x128xf32>
    %97 = vector.broadcast %96 : vector<1x1x128xf32> to vector<9x16x128xf32>
    %98 = arith.mulf %93, %97 : vector<9x16x128xf32>
    %99 = arith.addf %91, %98 : vector<9x16x128xf32>
    %100 = vector.extract_strided_slice %92 {offsets = [1, 0, 0], sizes = [9, 16, 128], strides = [1, 1, 1]} : vector<14x16x128xf32> to vector<9x16x128xf32>
    %101 = vector.extract_strided_slice %5 {offsets = [1, 2, 0], sizes = [1, 1, 128], strides = [1, 1, 1]} : vector<6x8x128xf32> to vector<1x1x128xf32>
    %102 = vector.shape_cast %101 : vector<1x1x128xf32> to vector<128xf32>
    %103 = vector.shape_cast %102 : vector<128xf32> to vector<1x1x128xf32>
    %104 = vector.broadcast %103 : vector<1x1x128xf32> to vector<9x16x128xf32>
    %105 = arith.mulf %100, %104 : vector<9x16x128xf32>
    %106 = arith.addf %99, %105 : vector<9x16x128xf32>
    %107 = vector.extract_strided_slice %92 {offsets = [2, 0, 0], sizes = [9, 16, 128], strides = [1, 1, 1]} : vector<14x16x128xf32> to vector<9x16x128xf32>
    %108 = vector.extract_strided_slice %5 {offsets = [2, 2, 0], sizes = [1, 1, 128], strides = [1, 1, 1]} : vector<6x8x128xf32> to vector<1x1x128xf32>
    %109 = vector.shape_cast %108 : vector<1x1x128xf32> to vector<128xf32>
    %110 = vector.shape_cast %109 : vector<128xf32> to vector<1x1x128xf32>
    %111 = vector.broadcast %110 : vector<1x1x128xf32> to vector<9x16x128xf32>
    %112 = arith.mulf %107, %111 : vector<9x16x128xf32>
    %113 = arith.addf %106, %112 : vector<9x16x128xf32>
    %114 = vector.extract_strided_slice %92 {offsets = [3, 0, 0], sizes = [9, 16, 128], strides = [1, 1, 1]} : vector<14x16x128xf32> to vector<9x16x128xf32>
    %115 = vector.extract_strided_slice %5 {offsets = [3, 2, 0], sizes = [1, 1, 128], strides = [1, 1, 1]} : vector<6x8x128xf32> to vector<1x1x128xf32>
    %116 = vector.shape_cast %115 : vector<1x1x128xf32> to vector<128xf32>
    %117 = vector.shape_cast %116 : vector<128xf32> to vector<1x1x128xf32>
    %118 = vector.broadcast %117 : vector<1x1x128xf32> to vector<9x16x128xf32>
    %119 = arith.mulf %114, %118 : vector<9x16x128xf32>
    %120 = arith.addf %113, %119 : vector<9x16x128xf32>
    %121 = vector.extract_strided_slice %92 {offsets = [4, 0, 0], sizes = [9, 16, 128], strides = [1, 1, 1]} : vector<14x16x128xf32> to vector<9x16x128xf32>
    %122 = vector.extract_strided_slice %5 {offsets = [4, 2, 0], sizes = [1, 1, 128], strides = [1, 1, 1]} : vector<6x8x128xf32> to vector<1x1x128xf32>
    %123 = vector.shape_cast %122 : vector<1x1x128xf32> to vector<128xf32>
    %124 = vector.shape_cast %123 : vector<128xf32> to vector<1x1x128xf32>
    %125 = vector.broadcast %124 : vector<1x1x128xf32> to vector<9x16x128xf32>
    %126 = arith.mulf %121, %125 : vector<9x16x128xf32>
    %127 = arith.addf %120, %126 : vector<9x16x128xf32>
    %128 = vector.extract_strided_slice %92 {offsets = [5, 0, 0], sizes = [9, 16, 128], strides = [1, 1, 1]} : vector<14x16x128xf32> to vector<9x16x128xf32>
    %129 = vector.extract_strided_slice %5 {offsets = [5, 2, 0], sizes = [1, 1, 128], strides = [1, 1, 1]} : vector<6x8x128xf32> to vector<1x1x128xf32>
    %130 = vector.shape_cast %129 : vector<1x1x128xf32> to vector<128xf32>
    %131 = vector.shape_cast %130 : vector<128xf32> to vector<1x1x128xf32>
    %132 = vector.broadcast %131 : vector<1x1x128xf32> to vector<9x16x128xf32>
    %133 = arith.mulf %128, %132 : vector<9x16x128xf32>
    %134 = arith.addf %127, %133 : vector<9x16x128xf32>
    %c13_i32 = arith.constant 13 : i32
    %135 = tpu.dynamic_rotate %2 by %c13_i32 dim 1 : vector<14x16x128xf32>, i32 -> vector<14x16x128xf32>
    %136 = vector.extract_strided_slice %135 {offsets = [0, 0, 0], sizes = [9, 16, 128], strides = [1, 1, 1]} : vector<14x16x128xf32> to vector<9x16x128xf32>
    %137 = vector.extract_strided_slice %5 {offsets = [0, 3, 0], sizes = [1, 1, 128], strides = [1, 1, 1]} : vector<6x8x128xf32> to vector<1x1x128xf32>
    %138 = vector.shape_cast %137 : vector<1x1x128xf32> to vector<128xf32>
    %139 = vector.shape_cast %138 : vector<128xf32> to vector<1x1x128xf32>
    %140 = vector.broadcast %139 : vector<1x1x128xf32> to vector<9x16x128xf32>
    %141 = arith.mulf %136, %140 : vector<9x16x128xf32>
    %142 = arith.addf %134, %141 : vector<9x16x128xf32>
    %143 = vector.extract_strided_slice %135 {offsets = [1, 0, 0], sizes = [9, 16, 128], strides = [1, 1, 1]} : vector<14x16x128xf32> to vector<9x16x128xf32>
    %144 = vector.extract_strided_slice %5 {offsets = [1, 3, 0], sizes = [1, 1, 128], strides = [1, 1, 1]} : vector<6x8x128xf32> to vector<1x1x128xf32>
    %145 = vector.shape_cast %144 : vector<1x1x128xf32> to vector<128xf32>
    %146 = vector.shape_cast %145 : vector<128xf32> to vector<1x1x128xf32>
    %147 = vector.broadcast %146 : vector<1x1x128xf32> to vector<9x16x128xf32>
    %148 = arith.mulf %143, %147 : vector<9x16x128xf32>
    %149 = arith.addf %142, %148 : vector<9x16x128xf32>
    %150 = vector.extract_strided_slice %135 {offsets = [2, 0, 0], sizes = [9, 16, 128], strides = [1, 1, 1]} : vector<14x16x128xf32> to vector<9x16x128xf32>
    %151 = vector.extract_strided_slice %5 {offsets = [2, 3, 0], sizes = [1, 1, 128], strides = [1, 1, 1]} : vector<6x8x128xf32> to vector<1x1x128xf32>
    %152 = vector.shape_cast %151 : vector<1x1x128xf32> to vector<128xf32>
    %153 = vector.shape_cast %152 : vector<128xf32> to vector<1x1x128xf32>
    %154 = vector.broadcast %153 : vector<1x1x128xf32> to vector<9x16x128xf32>
    %155 = arith.mulf %150, %154 : vector<9x16x128xf32>
    %156 = arith.addf %149, %155 : vector<9x16x128xf32>
    %157 = vector.extract_strided_slice %135 {offsets = [3, 0, 0], sizes = [9, 16, 128], strides = [1, 1, 1]} : vector<14x16x128xf32> to vector<9x16x128xf32>
    %158 = vector.extract_strided_slice %5 {offsets = [3, 3, 0], sizes = [1, 1, 128], strides = [1, 1, 1]} : vector<6x8x128xf32> to vector<1x1x128xf32>
    %159 = vector.shape_cast %158 : vector<1x1x128xf32> to vector<128xf32>
    %160 = vector.shape_cast %159 : vector<128xf32> to vector<1x1x128xf32>
    %161 = vector.broadcast %160 : vector<1x1x128xf32> to vector<9x16x128xf32>
    %162 = arith.mulf %157, %161 : vector<9x16x128xf32>
    %163 = arith.addf %156, %162 : vector<9x16x128xf32>
    %164 = vector.extract_strided_slice %135 {offsets = [4, 0, 0], sizes = [9, 16, 128], strides = [1, 1, 1]} : vector<14x16x128xf32> to vector<9x16x128xf32>
    %165 = vector.extract_strided_slice %5 {offsets = [4, 3, 0], sizes = [1, 1, 128], strides = [1, 1, 1]} : vector<6x8x128xf32> to vector<1x1x128xf32>
    %166 = vector.shape_cast %165 : vector<1x1x128xf32> to vector<128xf32>
    %167 = vector.shape_cast %166 : vector<128xf32> to vector<1x1x128xf32>
    %168 = vector.broadcast %167 : vector<1x1x128xf32> to vector<9x16x128xf32>
    %169 = arith.mulf %164, %168 : vector<9x16x128xf32>
    %170 = arith.addf %163, %169 : vector<9x16x128xf32>
    %171 = vector.extract_strided_slice %135 {offsets = [5, 0, 0], sizes = [9, 16, 128], strides = [1, 1, 1]} : vector<14x16x128xf32> to vector<9x16x128xf32>
    %172 = vector.extract_strided_slice %5 {offsets = [5, 3, 0], sizes = [1, 1, 128], strides = [1, 1, 1]} : vector<6x8x128xf32> to vector<1x1x128xf32>
    %173 = vector.shape_cast %172 : vector<1x1x128xf32> to vector<128xf32>
    %174 = vector.shape_cast %173 : vector<128xf32> to vector<1x1x128xf32>
    %175 = vector.broadcast %174 : vector<1x1x128xf32> to vector<9x16x128xf32>
    %176 = arith.mulf %171, %175 : vector<9x16x128xf32>
    %177 = arith.addf %170, %176 : vector<9x16x128xf32>
    %c12_i32 = arith.constant 12 : i32
    %178 = tpu.dynamic_rotate %2 by %c12_i32 dim 1 : vector<14x16x128xf32>, i32 -> vector<14x16x128xf32>
    %179 = vector.extract_strided_slice %178 {offsets = [0, 0, 0], sizes = [9, 16, 128], strides = [1, 1, 1]} : vector<14x16x128xf32> to vector<9x16x128xf32>
    %180 = vector.extract_strided_slice %5 {offsets = [0, 4, 0], sizes = [1, 1, 128], strides = [1, 1, 1]} : vector<6x8x128xf32> to vector<1x1x128xf32>
    %181 = vector.shape_cast %180 : vector<1x1x128xf32> to vector<128xf32>
    %182 = vector.shape_cast %181 : vector<128xf32> to vector<1x1x128xf32>
    %183 = vector.broadcast %182 : vector<1x1x128xf32> to vector<9x16x128xf32>
    %184 = arith.mulf %179, %183 : vector<9x16x128xf32>
    %185 = arith.addf %177, %184 : vector<9x16x128xf32>
    %186 = vector.extract_strided_slice %178 {offsets = [1, 0, 0], sizes = [9, 16, 128], strides = [1, 1, 1]} : vector<14x16x128xf32> to vector<9x16x128xf32>
    %187 = vector.extract_strided_slice %5 {offsets = [1, 4, 0], sizes = [1, 1, 128], strides = [1, 1, 1]} : vector<6x8x128xf32> to vector<1x1x128xf32>
    %188 = vector.shape_cast %187 : vector<1x1x128xf32> to vector<128xf32>
    %189 = vector.shape_cast %188 : vector<128xf32> to vector<1x1x128xf32>
    %190 = vector.broadcast %189 : vector<1x1x128xf32> to vector<9x16x128xf32>
    %191 = arith.mulf %186, %190 : vector<9x16x128xf32>
    %192 = arith.addf %185, %191 : vector<9x16x128xf32>
    %193 = vector.extract_strided_slice %178 {offsets = [2, 0, 0], sizes = [9, 16, 128], strides = [1, 1, 1]} : vector<14x16x128xf32> to vector<9x16x128xf32>
    %194 = vector.extract_strided_slice %5 {offsets = [2, 4, 0], sizes = [1, 1, 128], strides = [1, 1, 1]} : vector<6x8x128xf32> to vector<1x1x128xf32>
    %195 = vector.shape_cast %194 : vector<1x1x128xf32> to vector<128xf32>
    %196 = vector.shape_cast %195 : vector<128xf32> to vector<1x1x128xf32>
    %197 = vector.broadcast %196 : vector<1x1x128xf32> to vector<9x16x128xf32>
    %198 = arith.mulf %193, %197 : vector<9x16x128xf32>
    %199 = arith.addf %192, %198 : vector<9x16x128xf32>
    %200 = vector.extract_strided_slice %178 {offsets = [3, 0, 0], sizes = [9, 16, 128], strides = [1, 1, 1]} : vector<14x16x128xf32> to vector<9x16x128xf32>
    %201 = vector.extract_strided_slice %5 {offsets = [3, 4, 0], sizes = [1, 1, 128], strides = [1, 1, 1]} : vector<6x8x128xf32> to vector<1x1x128xf32>
    %202 = vector.shape_cast %201 : vector<1x1x128xf32> to vector<128xf32>
    %203 = vector.shape_cast %202 : vector<128xf32> to vector<1x1x128xf32>
    %204 = vector.broadcast %203 : vector<1x1x128xf32> to vector<9x16x128xf32>
    %205 = arith.mulf %200, %204 : vector<9x16x128xf32>
    %206 = arith.addf %199, %205 : vector<9x16x128xf32>
    %207 = vector.extract_strided_slice %178 {offsets = [4, 0, 0], sizes = [9, 16, 128], strides = [1, 1, 1]} : vector<14x16x128xf32> to vector<9x16x128xf32>
    %208 = vector.extract_strided_slice %5 {offsets = [4, 4, 0], sizes = [1, 1, 128], strides = [1, 1, 1]} : vector<6x8x128xf32> to vector<1x1x128xf32>
    %209 = vector.shape_cast %208 : vector<1x1x128xf32> to vector<128xf32>
    %210 = vector.shape_cast %209 : vector<128xf32> to vector<1x1x128xf32>
    %211 = vector.broadcast %210 : vector<1x1x128xf32> to vector<9x16x128xf32>
    %212 = arith.mulf %207, %211 : vector<9x16x128xf32>
    %213 = arith.addf %206, %212 : vector<9x16x128xf32>
    %214 = vector.extract_strided_slice %178 {offsets = [5, 0, 0], sizes = [9, 16, 128], strides = [1, 1, 1]} : vector<14x16x128xf32> to vector<9x16x128xf32>
    %215 = vector.extract_strided_slice %5 {offsets = [5, 4, 0], sizes = [1, 1, 128], strides = [1, 1, 1]} : vector<6x8x128xf32> to vector<1x1x128xf32>
    %216 = vector.shape_cast %215 : vector<1x1x128xf32> to vector<128xf32>
    %217 = vector.shape_cast %216 : vector<128xf32> to vector<1x1x128xf32>
    %218 = vector.broadcast %217 : vector<1x1x128xf32> to vector<9x16x128xf32>
    %219 = arith.mulf %214, %218 : vector<9x16x128xf32>
    %220 = arith.addf %213, %219 : vector<9x16x128xf32>
    %c11_i32 = arith.constant 11 : i32
    %221 = tpu.dynamic_rotate %2 by %c11_i32 dim 1 : vector<14x16x128xf32>, i32 -> vector<14x16x128xf32>
    %222 = vector.extract_strided_slice %221 {offsets = [0, 0, 0], sizes = [9, 16, 128], strides = [1, 1, 1]} : vector<14x16x128xf32> to vector<9x16x128xf32>
    %223 = vector.extract_strided_slice %5 {offsets = [0, 5, 0], sizes = [1, 1, 128], strides = [1, 1, 1]} : vector<6x8x128xf32> to vector<1x1x128xf32>
    %224 = vector.shape_cast %223 : vector<1x1x128xf32> to vector<128xf32>
    %225 = vector.shape_cast %224 : vector<128xf32> to vector<1x1x128xf32>
    %226 = vector.broadcast %225 : vector<1x1x128xf32> to vector<9x16x128xf32>
    %227 = arith.mulf %222, %226 : vector<9x16x128xf32>
    %228 = arith.addf %220, %227 : vector<9x16x128xf32>
    %229 = vector.extract_strided_slice %221 {offsets = [1, 0, 0], sizes = [9, 16, 128], strides = [1, 1, 1]} : vector<14x16x128xf32> to vector<9x16x128xf32>
    %230 = vector.extract_strided_slice %5 {offsets = [1, 5, 0], sizes = [1, 1, 128], strides = [1, 1, 1]} : vector<6x8x128xf32> to vector<1x1x128xf32>
    %231 = vector.shape_cast %230 : vector<1x1x128xf32> to vector<128xf32>
    %232 = vector.shape_cast %231 : vector<128xf32> to vector<1x1x128xf32>
    %233 = vector.broadcast %232 : vector<1x1x128xf32> to vector<9x16x128xf32>
    %234 = arith.mulf %229, %233 : vector<9x16x128xf32>
    %235 = arith.addf %228, %234 : vector<9x16x128xf32>
    %236 = vector.extract_strided_slice %221 {offsets = [2, 0, 0], sizes = [9, 16, 128], strides = [1, 1, 1]} : vector<14x16x128xf32> to vector<9x16x128xf32>
    %237 = vector.extract_strided_slice %5 {offsets = [2, 5, 0], sizes = [1, 1, 128], strides = [1, 1, 1]} : vector<6x8x128xf32> to vector<1x1x128xf32>
    %238 = vector.shape_cast %237 : vector<1x1x128xf32> to vector<128xf32>
    %239 = vector.shape_cast %238 : vector<128xf32> to vector<1x1x128xf32>
    %240 = vector.broadcast %239 : vector<1x1x128xf32> to vector<9x16x128xf32>
    %241 = arith.mulf %236, %240 : vector<9x16x128xf32>
    %242 = arith.addf %235, %241 : vector<9x16x128xf32>
    %243 = vector.extract_strided_slice %221 {offsets = [3, 0, 0], sizes = [9, 16, 128], strides = [1, 1, 1]} : vector<14x16x128xf32> to vector<9x16x128xf32>
    %244 = vector.extract_strided_slice %5 {offsets = [3, 5, 0], sizes = [1, 1, 128], strides = [1, 1, 1]} : vector<6x8x128xf32> to vector<1x1x128xf32>
    %245 = vector.shape_cast %244 : vector<1x1x128xf32> to vector<128xf32>
    %246 = vector.shape_cast %245 : vector<128xf32> to vector<1x1x128xf32>
    %247 = vector.broadcast %246 : vector<1x1x128xf32> to vector<9x16x128xf32>
    %248 = arith.mulf %243, %247 : vector<9x16x128xf32>
    %249 = arith.addf %242, %248 : vector<9x16x128xf32>
    %250 = vector.extract_strided_slice %221 {offsets = [4, 0, 0], sizes = [9, 16, 128], strides = [1, 1, 1]} : vector<14x16x128xf32> to vector<9x16x128xf32>
    %251 = vector.extract_strided_slice %5 {offsets = [4, 5, 0], sizes = [1, 1, 128], strides = [1, 1, 1]} : vector<6x8x128xf32> to vector<1x1x128xf32>
    %252 = vector.shape_cast %251 : vector<1x1x128xf32> to vector<128xf32>
    %253 = vector.shape_cast %252 : vector<128xf32> to vector<1x1x128xf32>
    %254 = vector.broadcast %253 : vector<1x1x128xf32> to vector<9x16x128xf32>
    %255 = arith.mulf %250, %254 : vector<9x16x128xf32>
    %256 = arith.addf %249, %255 : vector<9x16x128xf32>
    %257 = vector.extract_strided_slice %221 {offsets = [5, 0, 0], sizes = [9, 16, 128], strides = [1, 1, 1]} : vector<14x16x128xf32> to vector<9x16x128xf32>
    %258 = vector.extract_strided_slice %5 {offsets = [5, 5, 0], sizes = [1, 1, 128], strides = [1, 1, 1]} : vector<6x8x128xf32> to vector<1x1x128xf32>
    %259 = vector.shape_cast %258 : vector<1x1x128xf32> to vector<128xf32>
    %260 = vector.shape_cast %259 : vector<128xf32> to vector<1x1x128xf32>
    %261 = vector.broadcast %260 : vector<1x1x128xf32> to vector<9x16x128xf32>
    %262 = arith.mulf %257, %261 : vector<9x16x128xf32>
    %263 = arith.addf %256, %262 : vector<9x16x128xf32>
    %264 = vector.extract_strided_slice %263 {offsets = [0, 0, 0], sizes = [9, 9, 128], strides = [1, 1, 1]} : vector<9x16x128xf32> to vector<9x9x128xf32>
    %265 = arith.truncf %264 : vector<9x9x128xf32> to vector<9x9x128xbf16>
    %c0_7 = arith.constant 0 : index
    %c0_8 = arith.constant 0 : index
    %c0_9 = arith.constant 0 : index
    %c0_10 = arith.constant 0 : index
    %266 = vector.load %arg4[%c0_7, %c0_8, %c0_9, %c0_10] : memref<1x9x9x128xbf16, #tpu.memory_space<vmem>>, vector<1x9x9x128xbf16>
    %267 = vector.shape_cast %266 : vector<1x9x9x128xbf16> to vector<9x9x128xbf16>
    %268 = vector.shape_cast %265 : vector<9x9x128xbf16> to vector<1x9x9x128xbf16>
    tpu.vector_store %arg4[%c0_7, %c0_8, %c0_9, %c0_10], %268 {strides = array<i32>} : memref<1x9x9x128xbf16, #tpu.memory_space<vmem>>, vector<1x9x9x128xbf16>,
    return
  }
  func.func @transform_0(%arg0: i32, %arg1: i32) -> (i32, i32, i32, i32) {
    %c0_i32 = arith.constant 0 : i32
    %c0_i32_0 = arith.constant 0 : i32
    %c0_i32_1 = arith.constant 0 : i32
    return %arg0, %c0_i32, %c0_i32_0, %arg1 : i32, i32, i32, i32
  }
  func.func @transform_1(%arg0: i32, %arg1: i32) -> (i32, i32, i32, i32) {
    %c0_i32 = arith.constant 0 : i32
    %c0_i32_0 = arith.constant 0 : i32
    %c0_i32_1 = arith.constant 0 : i32
    return %arg0, %c0_i32, %c0_i32_0, %arg1 : i32, i32, i32, i32
  }
  func.func @transform_2(%arg0: i32, %arg1: i32) -> (i32, i32, i32, i32) {
    %c0_i32 = arith.constant 0 : i32
    %c0_i32_0 = arith.constant 0 : i32
    %c0_i32_1 = arith.constant 0 : i32
    return %arg0, %c0_i32, %c0_i32_0, %arg1 : i32, i32, i32, i32
  }
}

module attributes {stable_mosaic.version = 11 : i64} {
  func.func @_head_kernel(%arg0: i32, %arg1: memref<168x128xbf16, #tpu.memory_space<vmem>>, %arg2: memref<128x128xbf16, #tpu.memory_space<vmem>>, %arg3: memref<1x128xf32, #tpu.memory_space<vmem>>, %arg4: memref<128x128xbf16, #tpu.memory_space<vmem>>, %arg5: memref<1x128xf32, #tpu.memory_space<vmem>>, %arg6: memref<168x128xf32, #tpu.memory_space<vmem>>) attributes {dimension_semantics = [#tpu.dimension_semantics<parallel>], iteration_bounds = array<i64: 1>, scalar_prefetch = 0 : i64, scratch_operands = 0 : i64, tpu.core_type = #tpu.core_type<tc>, window_params = [{transform_indices = @transform_0, window_bounds = array<i64: 168, 128>}, {pipeline_mode = #tpu.pipeline_mode<synchronous>, transform_indices = @transform_1, window_bounds = array<i64: 128, 128>}, {pipeline_mode = #tpu.pipeline_mode<synchronous>, transform_indices = @transform_2, window_bounds = array<i64: 1, 128>}, {pipeline_mode = #tpu.pipeline_mode<synchronous>, transform_indices = @transform_3, window_bounds = array<i64: 128, 128>}, {pipeline_mode = #tpu.pipeline_mode<synchronous>, transform_indices = @transform_4, window_bounds = array<i64: 1, 128>}, {transform_indices = @transform_5, window_bounds = array<i64: 168, 128>}]} {
    %c0 = arith.constant 0 : index
    %c0_0 = arith.constant 0 : index
    %0 = vector.load %arg1[%c0, %c0_0] : memref<168x128xbf16, #tpu.memory_space<vmem>>, vector<168x128xbf16>
    %c0_1 = arith.constant 0 : index
    %c0_2 = arith.constant 0 : index
    %1 = vector.load %arg2[%c0_1, %c0_2] : memref<128x128xbf16, #tpu.memory_space<vmem>>, vector<128x128xbf16>
    %cst = arith.constant dense<0.000000e+00> : vector<168x128xf32>
    %2 = tpu.matmul %0, %1, %cst {dimension_numbers = #tpu.dot_dimension_numbers<[1], [0], [0], [1], [0, 0, 1, 1], [], []>} : vector<168x128xbf16>, vector<128x128xbf16>, vector<168x128xf32> -> vector<168x128xf32>
    %c0_3 = arith.constant 0 : index
    %c0_4 = arith.constant 0 : index
    %3 = vector.load %arg3[%c0_3, %c0_4] : memref<1x128xf32, #tpu.memory_space<vmem>>, vector<1x128xf32>
    %4 = vector.broadcast %3 : vector<1x128xf32> to vector<168x128xf32>
    %5 = arith.addf %2, %4 : vector<168x128xf32>
    %cst_5 = arith.constant 0.000000e+00 : f32
    %6 = vector.broadcast %cst_5 : f32 to vector<168x128xf32>
    %7 = arith.maximumf %5, %6 : vector<168x128xf32>
    %8 = arith.truncf %7 : vector<168x128xf32> to vector<168x128xbf16>
    %c0_6 = arith.constant 0 : index
    %c0_7 = arith.constant 0 : index
    %9 = vector.load %arg4[%c0_6, %c0_7] : memref<128x128xbf16, #tpu.memory_space<vmem>>, vector<128x128xbf16>
    %cst_8 = arith.constant dense<0.000000e+00> : vector<168x128xf32>
    %10 = tpu.matmul %8, %9, %cst_8 {dimension_numbers = #tpu.dot_dimension_numbers<[1], [0], [0], [1], [0, 0, 1, 1], [], []>} : vector<168x128xbf16>, vector<128x128xbf16>, vector<168x128xf32> -> vector<168x128xf32>
    %c0_9 = arith.constant 0 : index
    %c0_10 = arith.constant 0 : index
    %11 = vector.load %arg5[%c0_9, %c0_10] : memref<1x128xf32, #tpu.memory_space<vmem>>, vector<1x128xf32>
    %12 = vector.broadcast %11 : vector<1x128xf32> to vector<168x128xf32>
    %13 = arith.addf %10, %12 : vector<168x128xf32>
    %c0_11 = arith.constant 0 : index
    %c0_12 = arith.constant 0 : index
    %14 = vector.load %arg6[%c0_11, %c0_12] : memref<168x128xf32, #tpu.memory_space<vmem>>, vector<168x128xf32>
    tpu.vector_store %arg6[%c0_11, %c0_12], %13 {strides = array<i32>} : memref<168x128xf32, #tpu.memory_space<vmem>>, vector<168x128xf32>,
    return
  }
  func.func @transform_0(%arg0: i32) -> (i32, i32) {
    %c0_i32 = arith.constant 0 : i32
    %c0_i32_0 = arith.constant 0 : i32
    return %arg0, %c0_i32 : i32, i32
  }
  func.func @transform_1(%arg0: i32) -> (i32, i32) {
    %c0_i32 = arith.constant 0 : i32
    %c0_i32_0 = arith.constant 0 : i32
    %c0_i32_1 = arith.constant 0 : i32
    return %c0_i32, %c0_i32_0 : i32, i32
  }
  func.func @transform_2(%arg0: i32) -> (i32, i32) {
    %c0_i32 = arith.constant 0 : i32
    %c0_i32_0 = arith.constant 0 : i32
    %c0_i32_1 = arith.constant 0 : i32
    return %c0_i32, %c0_i32_0 : i32, i32
  }
  func.func @transform_3(%arg0: i32) -> (i32, i32) {
    %c0_i32 = arith.constant 0 : i32
    %c0_i32_0 = arith.constant 0 : i32
    %c0_i32_1 = arith.constant 0 : i32
    return %c0_i32, %c0_i32_0 : i32, i32
  }
  func.func @transform_4(%arg0: i32) -> (i32, i32) {
    %c0_i32 = arith.constant 0 : i32
    %c0_i32_0 = arith.constant 0 : i32
    %c0_i32_1 = arith.constant 0 : i32
    return %c0_i32, %c0_i32_0 : i32, i32
  }
  func.func @transform_5(%arg0: i32) -> (i32, i32) {
    %c0_i32 = arith.constant 0 : i32
    %c0_i32_0 = arith.constant 0 : i32
    return %arg0, %c0_i32 : i32, i32
  }
}

</mosaic_0001>

<llo_original>
// kernel: depthwise_xcorr_forward.4
$region0: #{depthwise_xcorr_forward.4}
  #allocation0 [shape = 'u32[]', space=smem, size = 0x4, offset = 0x4, fixed_abs, tag = 'smem constant byte address 0x4 - core index']
  #allocation1 [shape = 'u32[144,128]{1,0:T(1,128)}', space=vmem, size = 0x12000, scoped, tag = 'internal scratch']
  %s0 = inlined_call_operand.vmem [shape: bf16[2,8,8,4], index: 0, kind: input, shape index: {}]
  %s1 = inlined_call_operand.vmem [shape: bf16[3,3,4,128], index: 1, kind: input, shape index: {}]
  %s2 = inlined_call_operand.vmem [shape: f32[1,128], index: 2, kind: input, shape index: {}]
  %s3 = inlined_call_operand.vmem [shape: bf16[2,6,8,128], index: 3, kind: output, shape index: {}]
  %s4 = sld [smem:[#allocation0]]
  $region45: #{depthwise_xcorr_forward.4} parent=0
    _
  %s6 = ssub.s32 1, %s4
  %s7 = scalar_select 0, %s6, %s4
  loop: start=0, step=1, limit=4
  $region2: #{depthwise_xcorr_forward.4} parent=0 // loop_pre_header
    _
  $region3: #{depthwise_xcorr_forward.4} parent=0 // loop_header
    %s9 = sphi 0, %s13
    %p10 = scmp.ge.s32.totalorder %s9, 4
    %s16 = sphi 0, %s28
    %s17 = sphi 0, %s24
    %s18 = sphi 0, %s16
    %s19 = sphi 0, %s17
    %s20 = sphi 0, %s18
    %s21 = sphi 0, %s19
    %s31 = sphi 0, %s33
    %s34 = sphi 0, %s31
    %s35 = sphi 0, %s34
    %s51 = sphi 0, %s35
    %s57 = sphi 0, %s59
    %s60 = sphi 0, %s57
    %s61 = sphi 0, %s60
    %s77 = sphi 0, %s61
    %s83 = sphi 0, %s85
    %s86 = sphi 0, %s83
    %s87 = sphi 0, %s86
    %s103 = sphi 0, %s87
    %s111 = sphi 0, %s113
    %s114 = sphi 0, %s111
    %s115 = sphi 0, %s114
    %s131 = sphi 0, %s115
  $region4: #{depthwise_xcorr_forward.4} parent=0 // loop_header_branch
    %12 = sbr.rel (%p10) target = $region8
  $region5: #{depthwise_xcorr_forward.4} parent=0 // loop_body
    %s14 = ssub.s32 %s9, 1
    %s15 = ssub.s32 %s9, 2
    %s22 = sadd.s32 1, %s17
    %p23 = scmp.ge.s32.totalorder %s22, 1
    %s24 = scalar_select %p23, 0, %s22
    %s25 = sadd.s32 1, %s16
    %s26 = scalar_select %p23, %s25, %s16
    %p27 = scmp.ge.s32.totalorder %s26, 2
    %s28 = scalar_select %p27, 0, %s26
    %s29 = ssub.s32 %s16, %s28
    %p30 = scmp.eq.s32.totalorder %s29, 0
    %s32 = sadd.s32 %s31, 1
    %s33 = scalar_select %p30, %s31, %s32
    %p36 = pneg %p30
    %p37 = scmp.eq.s32.totalorder %s9, 1
    %p38 = por %p36, %p37
    %p39 = scmp.ne.s32.totalorder %s31, %s34
    %p40 = scmp.eq.s32.totalorder %s9, 0
    %p41 = por %p39, %p40
    %p42 = scmp.ne.s32.totalorder %s31, %s34
    %p43 = scmp.eq.s32.totalorder %s14, 1
    %p44 = por %p42, %p43
    %p45 = scmp.ne.s32.totalorder %s34, %s35
    %p46 = scmp.eq.s32.totalorder %s14, 0
    %p47 = por %p45, %p46
    %p48 = scmp.ne.s32.totalorder %s34, %s35
    %p49 = scmp.eq.s32.totalorder %s15, 1
    %p50 = por %p48, %p49
    %p52 = scmp.ne.s32.totalorder %s35, %s51
    %p53 = scmp.eq.s32.totalorder %s15, 0
    %p54 = por %p52, %p53
    %s55 = ssub.s32 %s17, %s24
    %p56 = scmp.eq.s32.totalorder %s55, 0
    %s58 = sadd.s32 %s57, 1
    %s59 = scalar_select %p56, %s57, %s58
    %p62 = pneg %p56
    %p63 = scmp.eq.s32.totalorder %s9, 1
    %p64 = por %p62, %p63
    %p65 = scmp.ne.s32.totalorder %s57, %s60
    %p66 = scmp.eq.s32.totalorder %s9, 0
    %p67 = por %p65, %p66
    %p68 = scmp.ne.s32.totalorder %s57, %s60
    %p69 = scmp.eq.s32.totalorder %s14, 1
    %p70 = por %p68, %p69
    %p71 = scmp.ne.s32.totalorder %s60, %s61
    %p72 = scmp.eq.s32.totalorder %s14, 0
    %p73 = por %p71, %p72
    %p74 = scmp.ne.s32.totalorder %s60, %s61
    %p75 = scmp.eq.s32.totalorder %s15, 1
    %p76 = por %p74, %p75
    %p78 = scmp.ne.s32.totalorder %s61, %s77
    %p79 = scmp.eq.s32.totalorder %s15, 0
    %p80 = por %p78, %p79
    %s81 = ssub.s32 %s17, %s24
    %p82 = scmp.eq.s32.totalorder %s81, 0
    %s84 = sadd.s32 %s83, 1
    %s85 = scalar_select %p82, %s83, %s84
    %p88 = pneg %p82
    %p89 = scmp.eq.s32.totalorder %s9, 1
    %p90 = por %p88, %p89
    %p91 = scmp.ne.s32.totalorder %s83, %s86
    %p92 = scmp.eq.s32.totalorder %s9, 0
    %p93 = por %p91, %p92
    %p94 = scmp.ne.s32.totalorder %s83, %s86
    %p95 = scmp.eq.s32.totalorder %s14, 1
    %p96 = por %p94, %p95
    %p97 = scmp.ne.s32.totalorder %s86, %s87
    %p98 = scmp.eq.s32.totalorder %s14, 0
    %p99 = por %p97, %p98
    %p100 = scmp.ne.s32.totalorder %s86, %s87
    %p101 = scmp.eq.s32.totalorder %s15, 1
    %p102 = por %p100, %p101
    %p104 = scmp.ne.s32.totalorder %s87, %s103
    %p105 = scmp.eq.s32.totalorder %s15, 0
    %p106 = por %p104, %p105
    %s107 = ssub.s32 %s16, %s28
    %s108 = ssub.s32 %s17, %s24
    %s109 = sor.u32 %s107, %s108
    %p110 = scmp.eq.s32.totalorder %s109, 0
    %s112 = sadd.s32 %s111, 1
    %s113 = scalar_select %p110, %s111, %s112
    %p116 = pneg %p110
    %p117 = scmp.eq.s32.totalorder %s9, 1
    %p118 = por %p116, %p117
    %p119 = scmp.ne.s32.totalorder %s111, %s114
    %p120 = scmp.eq.s32.totalorder %s9, 0
    %p121 = por %p119, %p120
    %p122 = scmp.ne.s32.totalorder %s111, %s114
    %p123 = scmp.eq.s32.totalorder %s14, 1
    %p124 = por %p122, %p123
    %p125 = scmp.ne.s32.totalorder %s114, %s115
    %p126 = scmp.eq.s32.totalorder %s14, 0
    %p127 = por %p125, %p126
    %p128 = scmp.ne.s32.totalorder %s114, %s115
    %p129 = scmp.eq.s32.totalorder %s15, 1
    %p130 = por %p128, %p129
    %p132 = scmp.ne.s32.totalorder %s115, %s131
    %p133 = scmp.eq.s32.totalorder %s15, 0
    %p134 = por %p132, %p133
    %p135 = scmp.le.s32.totalorder 1, %s9
    %p136 = scmp.lt.s32.totalorder %s9, 3
    %p137 = pnand %p135, %p136
    %p138 = pneg %p137
    // Predicated region
    $region9: #{depthwise_xcorr_forward.4} parent=5 // pred_check
      _
    $region10: #{depthwise_xcorr_forward.4} parent=5 // pred_check_branch
      %140 = sbr.rel (%p137) target = $region12
    $region11: #{depthwise_xcorr_forward.4} parent=5 // pred_region
      %s141 = ssub.s32 %s9, 1
      // Predicated region
      $region13: #{depthwise_xcorr_forward.4} parent=11 // pred_check
        %p142 = pneg %p73
      $region14: #{depthwise_xcorr_forward.4} parent=11 // pred_check_branch
        %144 = sbr.rel (%p142) target = $region16
      $region15: #{depthwise_xcorr_forward.4} parent=11 // pred_region
        %p145 = scmp.lt.s32.totalorder %s19, 0
        %s146 = scalar_select %p145, %s19, 0
        %s147 = smul.addr %s146, 2
        %s148 = scalar_lea.vmem %s1, %s147
      $region16: #{depthwise_xcorr_forward.4} parent=11 // pred_fallthru
        _
      // Predicated region
      $region17: #{depthwise_xcorr_forward.4} parent=11 // pred_check
        %p149 = pneg %p99
      $region18: #{depthwise_xcorr_forward.4} parent=11 // pred_check_branch
        %151 = sbr.rel (%p149) target = $region20
      $region19: #{depthwise_xcorr_forward.4} parent=11 // pred_region
        %p152 = scmp.lt.s32.totalorder %s19, 0
        %s153 = scalar_select %p152, %s19, 0
        %s154 = scalar_lea.vmem %s2, %s153
      $region20: #{depthwise_xcorr_forward.4} parent=11 // pred_fallthru
        _
    $region12: #{depthwise_xcorr_forward.4} parent=5 // pred_fallthru
      _
    %p155 = scmp.lt.s32.totalorder %s9, 2
    // Predicated region
    $region21: #{depthwise_xcorr_forward.4} parent=5 // pred_check
      %p156 = pneg %p155
    $region22: #{depthwise_xcorr_forward.4} parent=5 // pred_check_branch
      %158 = sbr.rel (%p156) target = $region24
    $region23: #{depthwise_xcorr_forward.4} parent=5 // pred_region
      // Predicated region
      $region25: #{depthwise_xcorr_forward.4} parent=23 // pred_check
        %p159 = pneg %p41
      $region26: #{depthwise_xcorr_forward.4} parent=23 // pred_check_branch
        %161 = sbr.rel (%p159) target = $region28
      $region27: #{depthwise_xcorr_forward.4} parent=23 // pred_region
        %p162 = scmp.lt.s32.totalorder %s16, 1
        %s163 = scalar_select %p162, %s16, 1
        %s164 = smul.addr %s163, 8
        %s165 = smul.addr %s164, 4
        %s166 = scalar_lea.vmem %s0, %s165
      $region28: #{depthwise_xcorr_forward.4} parent=23 // pred_fallthru
        _
    $region24: #{depthwise_xcorr_forward.4} parent=5 // pred_fallthru
      _
    %p167 = scmp.le.s32.totalorder 1, %s9
    %p168 = scmp.lt.s32.totalorder %s9, 3
    %p169 = pnand %p167, %p168
    %p170 = pneg %p169
    // Predicated region
    $region29: #{depthwise_xcorr_forward.4} parent=5 // pred_check
      _
    $region30: #{depthwise_xcorr_forward.4} parent=5 // pred_check_branch
      %172 = sbr.rel (%p169) target = $region32
    $region31: #{depthwise_xcorr_forward.4} parent=5 // pred_region
      %s173 = ssub.s32 %s9, 1
      %p174 = scmp.lt.s32.totalorder %s18, 1
      %s175 = scalar_select %p174, %s18, 1
      %s176 = smul.addr %s175, 8
      %s177 = smul.addr %s176, 4
      %s178 = scalar_lea.vmem %s0, %s177
      %p179 = pneg %p47
      %p180 = pneg %p44
      %p181 = scmp.lt.s32.totalorder %s19, 0
      %s182 = scalar_select %p181, %s19, 0
      %s183 = smul.addr %s182, 2
      %s184 = scalar_lea.vmem %s1, %s183
      %p185 = pneg %p73
      %p186 = pneg %p70
      %p187 = scmp.lt.s32.totalorder %s19, 0
      %s188 = scalar_select %p187, %s19, 0
      %s189 = scalar_lea.vmem %s2, %s188
      %p190 = pneg %p99
      %p191 = pneg %p96
      %p192 = pneg %p127
      %p193 = pneg %p124
      %p194 = scmp.lt.s32.totalorder %s18, 1
      %s195 = scalar_select %p194, %s18, 1
      %p196 = scmp.lt.s32.totalorder %s19, 0
      %s197 = scalar_select %p196, %s19, 0
      %s198 = smul.addr %s195, 6
      %s199 = sadd.s32 %s197, %s198
      %s200 = smul.addr %s199, 4
      %s201 = scalar_lea.vmem %s3, %s200
      %p202 = scmp.lt.s32.totalorder %s18, 1
      %s203 = scalar_select %p202, %s18, 1
      %s204 = smul.addr %s203, 8
      %s205 = smul.addr %s204, 4
      %s206 = scalar_lea.vmem %s0, %s205
      %p207 = scmp.lt.s32.totalorder %s19, 0
      %s208 = scalar_select %p207, %s19, 0
      %s209 = smul.addr %s208, 2
      %s210 = scalar_lea.vmem %s1, %s209
      %p211 = scmp.lt.s32.totalorder %s19, 0
      %s212 = scalar_select %p211, %s19, 0
      %s213 = scalar_lea.vmem %s2, %s212
      %p214 = scmp.lt.s32.totalorder %s18, 1
      %s215 = scalar_select %p214, %s18, 1
      %p216 = scmp.lt.s32.totalorder %s19, 0
      %s217 = scalar_select %p216, %s19, 0
      %s218 = smul.addr %s215, 6
      %s219 = sadd.s32 %s217, %s218
      %s220 = smul.addr %s219, 4
      %s221 = scalar_lea.vmem %s3, %s220
      %v223 = vld [vmem:[%s206] sm:$0xf]
      %v224 = vld [vmem:[%s206 + $0x4] sm:$0xf]
      %v225 = vld [vmem:[%s206 + $0x8] sm:$0xf]
      %v226 = vld [vmem:[%s206 + $0xc] sm:$0xf]
      %v227 = vld [vmem:[%s206 + $0x10] sm:$0xf]
      %v228 = vld [vmem:[%s206 + $0x14] sm:$0xf]
      %v229 = vld [vmem:[%s210] sm:$0x3]
      %v236 = vunpack.c.l.b16 %v223
      %v237 = vunpack.c.l.b16 %v224
      %v238 = vunpack.c.l.b16 %v225
      %v239 = vunpack.c.l.b16 %v226
      %v240 = vunpack.c.l.b16 %v227
      %v241 = vunpack.c.l.b16 %v228
      %v242 = vpack.c.b16 %v237, %v236
      %v243 = vpack.c.b16 %v239, %v238
      %v244 = vpack.c.b16 %v241, %v240
      %vm245 = vcmask 31744
      %v247 = vsel %vm245, %v242, 0
      %v250 = vsel %vm245, %v243, 0
      %v253 = vsel %vm245, %v244, 0
      %vm255 = vcmask 1041408
      %v257 = vsel %vm255, %v229, 0
      %259 = vmatprep.subr.bf16.mxu0 0
      %260 = vmatpush1.bf16.msra.mxu0 %v257
      %261 = vmatprep.subr.bf16.mxu0 0
      %262 = vmatpush1.bf16.msra.mxu0 0
      %263 = vmatprep.subr.bf16.mxu0 0
      %264 = vmatpush1.bf16.msra.mxu0 0
      %265 = vmatprep.subr.bf16.mxu0 0
      %266 = vmatpush1.bf16.msra.mxu0 0
      %267 = vmatprep.subr.bf16.mxu0 0
      %268 = vmatpush1.bf16.msra.mxu0 0
      %269 = vmatprep.subr.bf16.mxu0 0
      %270 = vmatpush1.bf16.msra.mxu0 0
      %271 = vmatprep.subr.bf16.mxu0 0
      %272 = vmatpush1.bf16.msra.mxu0 0
      %273 = vmatprep.subr.bf16.mxu0 0
      %274 = vmatpush1.bf16.msra.mxu0 0
      %275 = vmatprep.subr.bf16.mxu0 0
      %276 = vmatpush1.bf16.msra.mxu0 0
      %277 = vmatprep.subr.bf16.mxu0 0
      %278 = vmatpush1.bf16.msra.mxu0 0
      %279 = vmatprep.subr.bf16.mxu0 0
      %280 = vmatpush1.bf16.msra.mxu0 0
      %281 = vmatprep.subr.bf16.mxu0 0
      %282 = vmatpush1.bf16.msra.mxu0 0
      %283 = vmatprep.subr.bf16.mxu0 0
      %284 = vmatpush1.bf16.msra.mxu0 0
      %285 = vmatprep.subr.bf16.mxu0 0
      %286 = vmatpush1.bf16.msra.mxu0 0
      %287 = vmatprep.subr.bf16.mxu0 0
      %288 = vmatpush1.bf16.msra.mxu0 0
      %289 = vmatprep.subr.bf16.mxu0 0
      %290 = vmatpush1.bf16.msra.mxu0 0
      %291 = vmatprep.mubr.bf16.mxu0 0
      %292 = vmatmul.mubr.bf16.gmra.mrb[0].mxu0 %v247
      %v293 = vpop.f32.mrb[0].mxu0
      %v294 = vadd.f32 0.0, %v293
      %v295 = vpop.f32.mrb[0].mxu0
      %v296 = vpop.f32.mrb[0].mxu0
      %v297 = vadd.f32 0.0, %v296
      %v298 = vpop.f32.mrb[0].mxu0
      %299 = vmatprep.mubr.bf16.mxu0 0
      %300 = vmatmul.mubr.bf16.gmra.mrb[0].mxu0 %v250
      %v301 = vpop.f32.mrb[0].mxu0
      %v302 = vadd.f32 0.0, %v301
      %v303 = vpop.f32.mrb[0].mxu0
      %v304 = vpop.f32.mrb[0].mxu0
      %v305 = vadd.f32 0.0, %v304
      %v306 = vpop.f32.mrb[0].mxu0
      %307 = vmatprep.mubr.bf16.mxu0 0
      %308 = vmatmul.mubr.bf16.gmra.mrb[0].mxu0 %v253
      %v309 = vpop.f32.mrb[0].mxu0
      %v310 = vadd.f32 0.0, %v309
      %v311 = vpop.f32.mrb[0].mxu0
      %v312 = vpop.f32.mrb[0].mxu0
      %v313 = vadd.f32 0.0, %v312
      %v314 = vpop.f32.mrb[0].mxu0
      %315 = vdwg.mxu0
      %v316 = vadd.f32 %v294, 0.0
      %v317 = vadd.f32 %v297, 0.0
      %v318 = vadd.f32 %v302, 0.0
      %v319 = vadd.f32 %v305, 0.0
      %v320 = vadd.f32 %v310, 0.0
      %v321 = vadd.f32 %v313, 0.0
      %s322 = scalar_lea.vmem %s210, 2
      %v323 = vld [vmem:[%s322] sm:$0x3]
      %v325 = vsel %vm255, %v323, 0
      %327 = vmatprep.subr.bf16.mxu0 0
      %328 = vmatpush1.bf16.msra.mxu0 %v325
      %329 = vmatprep.subr.bf16.mxu0 0
      %330 = vmatpush1.bf16.msra.mxu0 0
      %331 = vmatprep.subr.bf16.mxu0 0
      %332 = vmatpush1.bf16.msra.mxu0 0
      %333 = vmatprep.subr.bf16.mxu0 0
      %334 = vmatpush1.bf16.msra.mxu0 0
      %335 = vmatprep.subr.bf16.mxu0 0
      %336 = vmatpush1.bf16.msra.mxu0 0
      %337 = vmatprep.subr.bf16.mxu0 0
      %338 = vmatpush1.bf16.msra.mxu0 0
      %339 = vmatprep.subr.bf16.mxu0 0
      %340 = vmatpush1.bf16.msra.mxu0 0
      %341 = vmatprep.subr.bf16.mxu0 0
      %342 = vmatpush1.bf16.msra.mxu0 0
      %343 = vmatprep.subr.bf16.mxu0 0
      %344 = vmatpush1.bf16.msra.mxu0 0
      %345 = vmatprep.subr.bf16.mxu0 0
      %346 = vmatpush1.bf16.msra.mxu0 0
      %347 = vmatprep.subr.bf16.mxu0 0
      %348 = vmatpush1.bf16.msra.mxu0 0
      %349 = vmatprep.subr.bf16.mxu0 0
      %350 = vmatpush1.bf16.msra.mxu0 0
      %351 = vmatprep.subr.bf16.mxu0 0
      %352 = vmatpush1.bf16.msra.mxu0 0
      %353 = vmatprep.subr.bf16.mxu0 0
      %354 = vmatpush1.bf16.msra.mxu0 0
      %355 = vmatprep.subr.bf16.mxu0 0
      %356 = vmatpush1.bf16.msra.mxu0 0
      %357 = vmatprep.subr.bf16.mxu0 0
      %358 = vmatpush1.bf16.msra.mxu0 0
      %359 = vmatprep.mubr.bf16.mxu0 0
      %360 = vmatmul.mubr.bf16.gmra.mrb[0].mxu0 %v247
      %v361 = vpop.f32.mrb[0].mxu0
      %v362 = vadd.f32 0.0, %v361
      %v363 = vpop.f32.mrb[0].mxu0
      %v364 = vpop.f32.mrb[0].mxu0
      %v365 = vadd.f32 0.0, %v364
      %v366 = vpop.f32.mrb[0].mxu0
      %367 = vmatprep.mubr.bf16.mxu0 0
      %368 = vmatmul.mubr.bf16.gmra.mrb[0].mxu0 %v250
      %v369 = vpop.f32.mrb[0].mxu0
      %v370 = vadd.f32 0.0, %v369
      %v371 = vpop.f32.mrb[0].mxu0
      %v372 = vpop.f32.mrb[0].mxu0
      %v373 = vadd.f32 0.0, %v372
      %v374 = vpop.f32.mrb[0].mxu0
      %375 = vmatprep.mubr.bf16.mxu0 0
      %376 = vmatmul.mubr.bf16.gmra.mrb[0].mxu0 %v253
      %v377 = vpop.f32.mrb[0].mxu0
      %v378 = vadd.f32 0.0, %v377
      %v379 = vpop.f32.mrb[0].mxu0
      %v380 = vpop.f32.mrb[0].mxu0
      %v381 = vadd.f32 0.0, %v380
      %v382 = vpop.f32.mrb[0].mxu0
      %383 = vdwg.mxu0
      %v384 = vrot.slane %v362, 1
      %v385 = vrot.slane %v365, 1
      %v386 = vrot.slane %v370, 1
      %v387 = vrot.slane %v373, 1
      %v388 = vrot.slane %v378, 1
      %v389 = vrot.slane %v381, 1
      %v390 = vadd.f32 %v316, %v384
      %v391 = vadd.f32 %v317, %v385
      %v392 = vadd.f32 %v318, %v386
      %v393 = vadd.f32 %v319, %v387
      %v394 = vadd.f32 %v320, %v388
      %v395 = vadd.f32 %v321, %v389
      %s396 = scalar_lea.vmem %s210, 4
      %v397 = vld [vmem:[%s396] sm:$0x3]
      %v399 = vsel %vm255, %v397, 0
      %401 = vmatprep.subr.bf16.mxu0 0
      %402 = vmatpush1.bf16.msra.mxu0 %v399
      %403 = vmatprep.subr.bf16.mxu0 0
      %404 = vmatpush1.bf16.msra.mxu0 0
      %405 = vmatprep.subr.bf16.mxu0 0
      %406 = vmatpush1.bf16.msra.mxu0 0
      %407 = vmatprep.subr.bf16.mxu0 0
      %408 = vmatpush1.bf16.msra.mxu0 0
      %409 = vmatprep.subr.bf16.mxu0 0
      %410 = vmatpush1.bf16.msra.mxu0 0
      %411 = vmatprep.subr.bf16.mxu0 0
      %412 = vmatpush1.bf16.msra.mxu0 0
      %413 = vmatprep.subr.bf16.mxu0 0
      %414 = vmatpush1.bf16.msra.mxu0 0
      %415 = vmatprep.subr.bf16.mxu0 0
      %416 = vmatpush1.bf16.msra.mxu0 0
      %417 = vmatprep.subr.bf16.mxu0 0
      %418 = vmatpush1.bf16.msra.mxu0 0
      %419 = vmatprep.subr.bf16.mxu0 0
      %420 = vmatpush1.bf16.msra.mxu0 0
      %421 = vmatprep.subr.bf16.mxu0 0
      %422 = vmatpush1.bf16.msra.mxu0 0
      %423 = vmatprep.subr.bf16.mxu0 0
      %424 = vmatpush1.bf16.msra.mxu0 0
      %425 = vmatprep.subr.bf16.mxu0 0
      %426 = vmatpush1.bf16.msra.mxu0 0
      %427 = vmatprep.subr.bf16.mxu0 0
      %428 = vmatpush1.bf16.msra.mxu0 0
      %429 = vmatprep.subr.bf16.mxu0 0
      %430 = vmatpush1.bf16.msra.mxu0 0
      %431 = vmatprep.subr.bf16.mxu0 0
      %432 = vmatpush1.bf16.msra.mxu0 0
      %433 = vmatprep.mubr.bf16.mxu0 0
      %434 = vmatmul.mubr.bf16.gmra.mrb[0].mxu0 %v247
      %v435 = vpop.f32.mrb[0].mxu0
      %v436 = vadd.f32 0.0, %v435
      %v437 = vpop.f32.mrb[0].mxu0
      %v438 = vpop.f32.mrb[0].mxu0
      %v439 = vadd.f32 0.0, %v438
      %v440 = vpop.f32.mrb[0].mxu0
      %441 = vmatprep.mubr.bf16.mxu0 0
      %442 = vmatmul.mubr.bf16.gmra.mrb[0].mxu0 %v250
      %v443 = vpop.f32.mrb[0].mxu0
      %v444 = vadd.f32 0.0, %v443
      %v445 = vpop.f32.mrb[0].mxu0
      %v446 = vpop.f32.mrb[0].mxu0
      %v447 = vadd.f32 0.0, %v446
      %v448 = vpop.f32.mrb[0].mxu0
      %449 = vmatprep.mubr.bf16.mxu0 0
      %450 = vmatmul.mubr.bf16.gmra.mrb[0].mxu0 %v253
      %v451 = vpop.f32.mrb[0].mxu0
      %v452 = vadd.f32 0.0, %v451
      %v453 = vpop.f32.mrb[0].mxu0
      %v454 = vpop.f32.mrb[0].mxu0
      %v455 = vadd.f32 0.0, %v454
      %v456 = vpop.f32.mrb[0].mxu0
      %457 = vdwg.mxu0
      %v458 = vrot.slane %v436, 2
      %v459 = vrot.slane %v439, 2
      %v460 = vrot.slane %v444, 2
      %v461 = vrot.slane %v447, 2
      %v462 = vrot.slane %v452, 2
      %v463 = vrot.slane %v455, 2
      %v464 = vadd.f32 %v390, %v458
      %v465 = vadd.f32 %v391, %v459
      %v466 = vadd.f32 %v392, %v460
      %v467 = vadd.f32 %v393, %v461
      %v468 = vadd.f32 %v394, %v462
      %v469 = vadd.f32 %v395, %v463
      %s470 = scalar_lea.vmem %s206, 4
      %v471 = vld [vmem:[%s470] sm:$0xf]
      %v472 = vld [vmem:[%s470 + $0x4] sm:$0xf]
      %v473 = vld [vmem:[%s470 + $0x8] sm:$0xf]
      %v474 = vld [vmem:[%s470 + $0xc] sm:$0xf]
      %v475 = vld [vmem:[%s470 + $0x10] sm:$0xf]
      %v476 = vld [vmem:[%s470 + $0x14] sm:$0xf]
      %s477 = scalar_lea.vmem %s210, 6
      %v478 = vld [vmem:[%s477] sm:$0x3]
      %v485 = vunpack.c.l.b16 %v471
      %v486 = vunpack.c.l.b16 %v472
      %v487 = vunpack.c.l.b16 %v473
      %v488 = vunpack.c.l.b16 %v474
      %v489 = vunpack.c.l.b16 %v475
      %v490 = vunpack.c.l.b16 %v476
      %v491 = vpack.c.b16 %v486, %v485
      %v492 = vpack.c.b16 %v488, %v487
      %v493 = vpack.c.b16 %v490, %v489
      %v495 = vsel %vm245, %v491, 0
      %v498 = vsel %vm245, %v492, 0
      %v501 = vsel %vm245, %v493, 0
      %v504 = vsel %vm255, %v478, 0
      %506 = vmatprep.subr.bf16.mxu0 0
      %507 = vmatpush1.bf16.msra.mxu0 %v504
      %508 = vmatprep.subr.bf16.mxu0 0
      %509 = vmatpush1.bf16.msra.mxu0 0
      %510 = vmatprep.subr.bf16.mxu0 0
      %511 = vmatpush1.bf16.msra.mxu0 0
      %512 = vmatprep.subr.bf16.mxu0 0
      %513 = vmatpush1.bf16.msra.mxu0 0
      %514 = vmatprep.subr.bf16.mxu0 0
      %515 = vmatpush1.bf16.msra.mxu0 0
      %516 = vmatprep.subr.bf16.mxu0 0
      %517 = vmatpush1.bf16.msra.mxu0 0
      %518 = vmatprep.subr.bf16.mxu0 0
      %519 = vmatpush1.bf16.msra.mxu0 0
      %520 = vmatprep.subr.bf16.mxu0 0
      %521 = vmatpush1.bf16.msra.mxu0 0
      %522 = vmatprep.subr.bf16.mxu0 0
      %523 = vmatpush1.bf16.msra.mxu0 0
      %524 = vmatprep.subr.bf16.mxu0 0
      %525 = vmatpush1.bf16.msra.mxu0 0
      %526 = vmatprep.subr.bf16.mxu0 0
      %527 = vmatpush1.bf16.msra.mxu0 0
      %528 = vmatprep.subr.bf16.mxu0 0
      %529 = vmatpush1.bf16.msra.mxu0 0
      %530 = vmatprep.subr.bf16.mxu0 0
      %531 = vmatpush1.bf16.msra.mxu0 0
      %532 = vmatprep.subr.bf16.mxu0 0
      %533 = vmatpush1.bf16.msra.mxu0 0
      %534 = vmatprep.subr.bf16.mxu0 0
      %535 = vmatpush1.bf16.msra.mxu0 0
      %536 = vmatprep.subr.bf16.mxu0 0
      %537 = vmatpush1.bf16.msra.mxu0 0
      %538 = vmatprep.mubr.bf16.mxu0 0
      %539 = vmatmul.mubr.bf16.gmra.mrb[0].mxu0 %v495
      %v540 = vpop.f32.mrb[0].mxu0
      %v541 = vadd.f32 0.0, %v540
      %v542 = vpop.f32.mrb[0].mxu0
      %v543 = vpop.f32.mrb[0].mxu0
      %v544 = vadd.f32 0.0, %v543
      %v545 = vpop.f32.mrb[0].mxu0
      %546 = vmatprep.mubr.bf16.mxu0 0
      %547 = vmatmul.mubr.bf16.gmra.mrb[0].mxu0 %v498
      %v548 = vpop.f32.mrb[0].mxu0
      %v549 = vadd.f32 0.0, %v548
      %v550 = vpop.f32.mrb[0].mxu0
      %v551 = vpop.f32.mrb[0].mxu0
      %v552 = vadd.f32 0.0, %v551
      %v553 = vpop.f32.mrb[0].mxu0
      %554 = vmatprep.mubr.bf16.mxu0 0
      %555 = vmatmul.mubr.bf16.gmra.mrb[0].mxu0 %v501
      %v556 = vpop.f32.mrb[0].mxu0
      %v557 = vadd.f32 0.0, %v556
      %v558 = vpop.f32.mrb[0].mxu0
      %v559 = vpop.f32.mrb[0].mxu0
      %v560 = vadd.f32 0.0, %v559
      %v561 = vpop.f32.mrb[0].mxu0
      %562 = vdwg.mxu0
      %v563 = vadd.f32 %v464, %v541
      %v564 = vadd.f32 %v465, %v544
      %v565 = vadd.f32 %v466, %v549
      %v566 = vadd.f32 %v467, %v552
      %v567 = vadd.f32 %v468, %v557
      %v568 = vadd.f32 %v469, %v560
      %s569 = scalar_lea.vmem %s210, 8
      %v570 = vld [vmem:[%s569] sm:$0x3]
      %v572 = vsel %vm255, %v570, 0
      %574 = vmatprep.subr.bf16.mxu0 0
      %575 = vmatpush1.bf16.msra.mxu0 %v572
      %576 = vmatprep.subr.bf16.mxu0 0
      %577 = vmatpush1.bf16.msra.mxu0 0
      %578 = vmatprep.subr.bf16.mxu0 0
      %579 = vmatpush1.bf16.msra.mxu0 0
      %580 = vmatprep.subr.bf16.mxu0 0
      %581 = vmatpush1.bf16.msra.mxu0 0
      %582 = vmatprep.subr.bf16.mxu0 0
      %583 = vmatpush1.bf16.msra.mxu0 0
      %584 = vmatprep.subr.bf16.mxu0 0
      %585 = vmatpush1.bf16.msra.mxu0 0
      %586 = vmatprep.subr.bf16.mxu0 0
      %587 = vmatpush1.bf16.msra.mxu0 0
      %588 = vmatprep.subr.bf16.mxu0 0
      %589 = vmatpush1.bf16.msra.mxu0 0
      %590 = vmatprep.subr.bf16.mxu0 0
      %591 = vmatpush1.bf16.msra.mxu0 0
      %592 = vmatprep.subr.bf16.mxu0 0
      %593 = vmatpush1.bf16.msra.mxu0 0
      %594 = vmatprep.subr.bf16.mxu0 0
      %595 = vmatpush1.bf16.msra.mxu0 0
      %596 = vmatprep.subr.bf16.mxu0 0
      %597 = vmatpush1.bf16.msra.mxu0 0
      %598 = vmatprep.subr.bf16.mxu0 0
      %599 = vmatpush1.bf16.msra.mxu0 0
      %600 = vmatprep.subr.bf16.mxu0 0
      %601 = vmatpush1.bf16.msra.mxu0 0
      %602 = vmatprep.subr.bf16.mxu0 0
      %603 = vmatpush1.bf16.msra.mxu0 0
      %604 = vmatprep.subr.bf16.mxu0 0
      %605 = vmatpush1.bf16.msra.mxu0 0
      %606 = vmatprep.mubr.bf16.mxu0 0
      %607 = vmatmul.mubr.bf16.gmra.mrb[0].mxu0 %v495
      %v608 = vpop.f32.mrb[0].mxu0
      %v609 = vadd.f32 0.0, %v608
      %v610 = vpop.f32.mrb[0].mxu0
      %v611 = vpop.f32.mrb[0].mxu0
      %v612 = vadd.f32 0.0, %v611
      %v613 = vpop.f32.mrb[0].mxu0
      %614 = vmatprep.mubr.bf16.mxu0 0
      %615 = vmatmul.mubr.bf16.gmra.mrb[0].mxu0 %v498
      %v616 = vpop.f32.mrb[0].mxu0
      %v617 = vadd.f32 0.0, %v616
      %v618 = vpop.f32.mrb[0].mxu0
      %v619 = vpop.f32.mrb[0].mxu0
      %v620 = vadd.f32 0.0, %v619
      %v621 = vpop.f32.mrb[0].mxu0
      %622 = vmatprep.mubr.bf16.mxu0 0
      %623 = vmatmul.mubr.bf16.gmra.mrb[0].mxu0 %v501
      %v624 = vpop.f32.mrb[0].mxu0
      %v625 = vadd.f32 0.0, %v624
      %v626 = vpop.f32.mrb[0].mxu0
      %v627 = vpop.f32.mrb[0].mxu0
      %v628 = vadd.f32 0.0, %v627
      %v629 = vpop.f32.mrb[0].mxu0
      %630 = vdwg.mxu0
      %v631 = vrot.slane %v609, 1
      %v632 = vrot.slane %v612, 1
      %v633 = vrot.slane %v617, 1
      %v634 = vrot.slane %v620, 1
      %v635 = vrot.slane %v625, 1
      %v636 = vrot.slane %v628, 1
      %v637 = vadd.f32 %v563, %v631
      %v638 = vadd.f32 %v564, %v632
      %v639 = vadd.f32 %v565, %v633
      %v640 = vadd.f32 %v566, %v634
      %v641 = vadd.f32 %v567, %v635
      %v642 = vadd.f32 %v568, %v636
      %s643 = scalar_lea.vmem %s210, 10
      %v644 = vld [vmem:[%s643] sm:$0x3]
      %v646 = vsel %vm255, %v644, 0
      %648 = vmatprep.subr.bf16.mxu0 0
      %649 = vmatpush1.bf16.msra.mxu0 %v646
      %650 = vmatprep.subr.bf16.mxu0 0
      %651 = vmatpush1.bf16.msra.mxu0 0
      %652 = vmatprep.subr.bf16.mxu0 0
      %653 = vmatpush1.bf16.msra.mxu0 0
      %654 = vmatprep.subr.bf16.mxu0 0
      %655 = vmatpush1.bf16.msra.mxu0 0
      %656 = vmatprep.subr.bf16.mxu0 0
      %657 = vmatpush1.bf16.msra.mxu0 0
      %658 = vmatprep.subr.bf16.mxu0 0
      %659 = vmatpush1.bf16.msra.mxu0 0
      %660 = vmatprep.subr.bf16.mxu0 0
      %661 = vmatpush1.bf16.msra.mxu0 0
      %662 = vmatprep.subr.bf16.mxu0 0
      %663 = vmatpush1.bf16.msra.mxu0 0
      %664 = vmatprep.subr.bf16.mxu0 0
      %665 = vmatpush1.bf16.msra.mxu0 0
      %666 = vmatprep.subr.bf16.mxu0 0
      %667 = vmatpush1.bf16.msra.mxu0 0
      %668 = vmatprep.subr.bf16.mxu0 0
      %669 = vmatpush1.bf16.msra.mxu0 0
      %670 = vmatprep.subr.bf16.mxu0 0
      %671 = vmatpush1.bf16.msra.mxu0 0
      %672 = vmatprep.subr.bf16.mxu0 0
      %673 = vmatpush1.bf16.msra.mxu0 0
      %674 = vmatprep.subr.bf16.mxu0 0
      %675 = vmatpush1.bf16.msra.mxu0 0
      %676 = vmatprep.subr.bf16.mxu0 0
      %677 = vmatpush1.bf16.msra.mxu0 0
      %678 = vmatprep.subr.bf16.mxu0 0
      %679 = vmatpush1.bf16.msra.mxu0 0
      %680 = vmatprep.mubr.bf16.mxu0 0
      %681 = vmatmul.mubr.bf16.gmra.mrb[0].mxu0 %v495
      %v682 = vpop.f32.mrb[0].mxu0
      %v683 = vadd.f32 0.0, %v682
      %v684 = vpop.f32.mrb[0].mxu0
      %v685 = vpop.f32.mrb[0].mxu0
      %v686 = vadd.f32 0.0, %v685
      %v687 = vpop.f32.mrb[0].mxu0
      %688 = vmatprep.mubr.bf16.mxu0 0
      %689 = vmatmul.mubr.bf16.gmra.mrb[0].mxu0 %v498
      %v690 = vpop.f32.mrb[0].mxu0
      %v691 = vadd.f32 0.0, %v690
      %v692 = vpop.f32.mrb[0].mxu0
      %v693 = vpop.f32.mrb[0].mxu0
      %v694 = vadd.f32 0.0, %v693
      %v695 = vpop.f32.mrb[0].mxu0
      %696 = vmatprep.mubr.bf16.mxu0 0
      %697 = vmatmul.mubr.bf16.gmra.mrb[0].mxu0 %v501
      %v698 = vpop.f32.mrb[0].mxu0
      %v699 = vadd.f32 0.0, %v698
      %v700 = vpop.f32.mrb[0].mxu0
      %v701 = vpop.f32.mrb[0].mxu0
      %v702 = vadd.f32 0.0, %v701
      %v703 = vpop.f32.mrb[0].mxu0
      %704 = vdwg.mxu0
      %v705 = vrot.slane %v683, 2
      %v706 = vrot.slane %v686, 2
      %v707 = vrot.slane %v691, 2
      %v708 = vrot.slane %v694, 2
      %v709 = vrot.slane %v699, 2
      %v710 = vrot.slane %v702, 2
      %v711 = vadd.f32 %v637, %v705
      %v712 = vadd.f32 %v638, %v706
      %v713 = vadd.f32 %v639, %v707
      %v714 = vadd.f32 %v640, %v708
      %v715 = vadd.f32 %v641, %v709
      %v716 = vadd.f32 %v642, %v710
      %s717 = scalar_lea.vmem %s206, 8
      %v718 = vld [vmem:[%s717] sm:$0xf]
      %v719 = vld [vmem:[%s717 + $0x4] sm:$0xf]
      %v720 = vld [vmem:[%s717 + $0x8] sm:$0xf]
      %v721 = vld [vmem:[%s717 + $0xc] sm:$0xf]
      %v722 = vld [vmem:[%s717 + $0x10] sm:$0xf]
      %v723 = vld [vmem:[%s717 + $0x14] sm:$0xf]
      %s724 = scalar_lea.vmem %s210, 12
      %v725 = vld [vmem:[%s724] sm:$0x3]
      %v732 = vunpack.c.l.b16 %v718
      %v733 = vunpack.c.l.b16 %v719
      %v734 = vunpack.c.l.b16 %v720
      %v735 = vunpack.c.l.b16 %v721
      %v736 = vunpack.c.l.b16 %v722
      %v737 = vunpack.c.l.b16 %v723
      %v738 = vpack.c.b16 %v733, %v732
      %v739 = vpack.c.b16 %v735, %v734
      %v740 = vpack.c.b16 %v737, %v736
      %v742 = vsel %vm245, %v738, 0
      %v745 = vsel %vm245, %v739, 0
      %v748 = vsel %vm245, %v740, 0
      %v751 = vsel %vm255, %v725, 0
      %753 = vmatprep.subr.bf16.mxu0 0
      %754 = vmatpush1.bf16.msra.mxu0 %v751
      %755 = vmatprep.subr.bf16.mxu0 0
      %756 = vmatpush1.bf16.msra.mxu0 0
      %757 = vmatprep.subr.bf16.mxu0 0
      %758 = vmatpush1.bf16.msra.mxu0 0
      %759 = vmatprep.subr.bf16.mxu0 0
      %760 = vmatpush1.bf16.msra.mxu0 0
      %761 = vmatprep.subr.bf16.mxu0 0
      %762 = vmatpush1.bf16.msra.mxu0 0
      %763 = vmatprep.subr.bf16.mxu0 0
      %764 = vmatpush1.bf16.msra.mxu0 0
      %765 = vmatprep.subr.bf16.mxu0 0
      %766 = vmatpush1.bf16.msra.mxu0 0
      %767 = vmatprep.subr.bf16.mxu0 0
      %768 = vmatpush1.bf16.msra.mxu0 0
      %769 = vmatprep.subr.bf16.mxu0 0
      %770 = vmatpush1.bf16.msra.mxu0 0
      %771 = vmatprep.subr.bf16.mxu0 0
      %772 = vmatpush1.bf16.msra.mxu0 0
      %773 = vmatprep.subr.bf16.mxu0 0
      %774 = vmatpush1.bf16.msra.mxu0 0
      %775 = vmatprep.subr.bf16.mxu0 0
      %776 = vmatpush1.bf16.msra.mxu0 0
      %777 = vmatprep.subr.bf16.mxu0 0
      %778 = vmatpush1.bf16.msra.mxu0 0
      %779 = vmatprep.subr.bf16.mxu0 0
      %780 = vmatpush1.bf16.msra.mxu0 0
      %781 = vmatprep.subr.bf16.mxu0 0
      %782 = vmatpush1.bf16.msra.mxu0 0
      %783 = vmatprep.subr.bf16.mxu0 0
      %784 = vmatpush1.bf16.msra.mxu0 0
      %785 = vmatprep.mubr.bf16.mxu0 0
      %786 = vmatmul.mubr.bf16.gmra.mrb[0].mxu0 %v742
      %v787 = vpop.f32.mrb[0].mxu0
      %v788 = vadd.f32 0.0, %v787
      %v789 = vpop.f32.mrb[0].mxu0
      %v790 = vpop.f32.mrb[0].mxu0
      %v791 = vadd.f32 0.0, %v790
      %v792 = vpop.f32.mrb[0].mxu0
      %793 = vmatprep.mubr.bf16.mxu0 0
      %794 = vmatmul.mubr.bf16.gmra.mrb[0].mxu0 %v745
      %v795 = vpop.f32.mrb[0].mxu0
      %v796 = vadd.f32 0.0, %v795
      %v797 = vpop.f32.mrb[0].mxu0
      %v798 = vpop.f32.mrb[0].mxu0
      %v799 = vadd.f32 0.0, %v798
      %v800 = vpop.f32.mrb[0].mxu0
      %801 = vmatprep.mubr.bf16.mxu0 0
      %802 = vmatmul.mubr.bf16.gmra.mrb[0].mxu0 %v748
      %v803 = vpop.f32.mrb[0].mxu0
      %v804 = vadd.f32 0.0, %v803
      %v805 = vpop.f32.mrb[0].mxu0
      %v806 = vpop.f32.mrb[0].mxu0
      %v807 = vadd.f32 0.0, %v806
      %v808 = vpop.f32.mrb[0].mxu0
      %809 = vdwg.mxu0
      %v810 = vadd.f32 %v711, %v788
      %v811 = vadd.f32 %v712, %v791
      %v812 = vadd.f32 %v713, %v796
      %v813 = vadd.f32 %v714, %v799
      %v814 = vadd.f32 %v715, %v804
      %v815 = vadd.f32 %v716, %v807
      %s816 = scalar_lea.vmem %s210, 14
      %v817 = vld [vmem:[%s816] sm:$0x3]
      %v819 = vsel %vm255, %v817, 0
      %821 = vmatprep.subr.bf16.mxu0 0
      %822 = vmatpush1.bf16.msra.mxu0 %v819
      %823 = vmatprep.subr.bf16.mxu0 0
      %824 = vmatpush1.bf16.msra.mxu0 0
      %825 = vmatprep.subr.bf16.mxu0 0
      %826 = vmatpush1.bf16.msra.mxu0 0
      %827 = vmatprep.subr.bf16.mxu0 0
      %828 = vmatpush1.bf16.msra.mxu0 0
      %829 = vmatprep.subr.bf16.mxu0 0
      %830 = vmatpush1.bf16.msra.mxu0 0
      %831 = vmatprep.subr.bf16.mxu0 0
      %832 = vmatpush1.bf16.msra.mxu0 0
      %833 = vmatprep.subr.bf16.mxu0 0
      %834 = vmatpush1.bf16.msra.mxu0 0
      %835 = vmatprep.subr.bf16.mxu0 0
      %836 = vmatpush1.bf16.msra.mxu0 0
      %837 = vmatprep.subr.bf16.mxu0 0
      %838 = vmatpush1.bf16.msra.mxu0 0
      %839 = vmatprep.subr.bf16.mxu0 0
      %840 = vmatpush1.bf16.msra.mxu0 0
      %841 = vmatprep.subr.bf16.mxu0 0
      %842 = vmatpush1.bf16.msra.mxu0 0
      %843 = vmatprep.subr.bf16.mxu0 0
      %844 = vmatpush1.bf16.msra.mxu0 0
      %845 = vmatprep.subr.bf16.mxu0 0
      %846 = vmatpush1.bf16.msra.mxu0 0
      %847 = vmatprep.subr.bf16.mxu0 0
      %848 = vmatpush1.bf16.msra.mxu0 0
      %849 = vmatprep.subr.bf16.mxu0 0
      %850 = vmatpush1.bf16.msra.mxu0 0
      %851 = vmatprep.subr.bf16.mxu0 0
      %852 = vmatpush1.bf16.msra.mxu0 0
      %853 = vmatprep.mubr.bf16.mxu0 0
      %854 = vmatmul.mubr.bf16.gmra.mrb[0].mxu0 %v742
      %v855 = vpop.f32.mrb[0].mxu0
      %v856 = vadd.f32 0.0, %v855
      %v857 = vpop.f32.mrb[0].mxu0
      %v858 = vpop.f32.mrb[0].mxu0
      %v859 = vadd.f32 0.0, %v858
      %v860 = vpop.f32.mrb[0].mxu0
      %861 = vmatprep.mubr.bf16.mxu0 0
      %862 = vmatmul.mubr.bf16.gmra.mrb[0].mxu0 %v745
      %v863 = vpop.f32.mrb[0].mxu0
      %v864 = vadd.f32 0.0, %v863
      %v865 = vpop.f32.mrb[0].mxu0
      %v866 = vpop.f32.mrb[0].mxu0
      %v867 = vadd.f32 0.0, %v866
      %v868 = vpop.f32.mrb[0].mxu0
      %869 = vmatprep.mubr.bf16.mxu0 0
      %870 = vmatmul.mubr.bf16.gmra.mrb[0].mxu0 %v748
      %v871 = vpop.f32.mrb[0].mxu0
      %v872 = vadd.f32 0.0, %v871
      %v873 = vpop.f32.mrb[0].mxu0
      %v874 = vpop.f32.mrb[0].mxu0
      %v875 = vadd.f32 0.0, %v874
      %v876 = vpop.f32.mrb[0].mxu0
      %877 = vdwg.mxu0
      %v878 = vrot.slane %v856, 1
      %v879 = vrot.slane %v859, 1
      %v880 = vrot.slane %v864, 1
      %v881 = vrot.slane %v867, 1
      %v882 = vrot.slane %v872, 1
      %v883 = vrot.slane %v875, 1
      %v884 = vadd.f32 %v810, %v878
      %v885 = vadd.f32 %v811, %v879
      %v886 = vadd.f32 %v812, %v880
      %v887 = vadd.f32 %v813, %v881
      %v888 = vadd.f32 %v814, %v882
      %v889 = vadd.f32 %v815, %v883
      %s890 = scalar_lea.vmem %s210, 16
      %v891 = vld [vmem:[%s890] sm:$0x3]
      %v893 = vsel %vm255, %v891, 0
      %895 = vmatprep.subr.bf16.mxu0 0
      %896 = vmatpush1.bf16.msra.mxu0 %v893
      %897 = vmatprep.subr.bf16.mxu0 0
      %898 = vmatpush1.bf16.msra.mxu0 0
      %899 = vmatprep.subr.bf16.mxu0 0
      %900 = vmatpush1.bf16.msra.mxu0 0
      %901 = vmatprep.subr.bf16.mxu0 0
      %902 = vmatpush1.bf16.msra.mxu0 0
      %903 = vmatprep.subr.bf16.mxu0 0
      %904 = vmatpush1.bf16.msra.mxu0 0
      %905 = vmatprep.subr.bf16.mxu0 0
      %906 = vmatpush1.bf16.msra.mxu0 0
      %907 = vmatprep.subr.bf16.mxu0 0
      %908 = vmatpush1.bf16.msra.mxu0 0
      %909 = vmatprep.subr.bf16.mxu0 0
      %910 = vmatpush1.bf16.msra.mxu0 0
      %911 = vmatprep.subr.bf16.mxu0 0
      %912 = vmatpush1.bf16.msra.mxu0 0
      %913 = vmatprep.subr.bf16.mxu0 0
      %914 = vmatpush1.bf16.msra.mxu0 0
      %915 = vmatprep.subr.bf16.mxu0 0
      %916 = vmatpush1.bf16.msra.mxu0 0
      %917 = vmatprep.subr.bf16.mxu0 0
      %918 = vmatpush1.bf16.msra.mxu0 0
      %919 = vmatprep.subr.bf16.mxu0 0
      %920 = vmatpush1.bf16.msra.mxu0 0
      %921 = vmatprep.subr.bf16.mxu0 0
      %922 = vmatpush1.bf16.msra.mxu0 0
      %923 = vmatprep.subr.bf16.mxu0 0
      %924 = vmatpush1.bf16.msra.mxu0 0
      %925 = vmatprep.subr.bf16.mxu0 0
      %926 = vmatpush1.bf16.msra.mxu0 0
      %927 = vmatprep.mubr.bf16.mxu0 0
      %928 = vmatmul.mubr.bf16.gmra.mrb[0].mxu0 %v742
      %v929 = vpop.f32.mrb[0].mxu0
      %v930 = vadd.f32 0.0, %v929
      %v931 = vpop.f32.mrb[0].mxu0
      %v932 = vpop.f32.mrb[0].mxu0
      %v933 = vadd.f32 0.0, %v932
      %v934 = vpop.f32.mrb[0].mxu0
      %935 = vmatprep.mubr.bf16.mxu0 0
      %936 = vmatmul.mubr.bf16.gmra.mrb[0].mxu0 %v745
      %v937 = vpop.f32.mrb[0].mxu0
      %v938 = vadd.f32 0.0, %v937
      %v939 = vpop.f32.mrb[0].mxu0
      %v940 = vpop.f32.mrb[0].mxu0
      %v941 = vadd.f32 0.0, %v940
      %v942 = vpop.f32.mrb[0].mxu0
      %943 = vmatprep.mubr.bf16.mxu0 0
      %944 = vmatmul.mubr.bf16.gmra.mrb[0].mxu0 %v748
      %v945 = vpop.f32.mrb[0].mxu0
      %v946 = vadd.f32 0.0, %v945
      %v947 = vpop.f32.mrb[0].mxu0
      %v948 = vpop.f32.mrb[0].mxu0
      %v949 = vadd.f32 0.0, %v948
      %v950 = vpop.f32.mrb[0].mxu0
      %951 = vdwg.mxu0
      %v952 = vrot.slane %v930, 2
      %v953 = vrot.slane %v933, 2
      %v954 = vrot.slane %v938, 2
      %v955 = vrot.slane %v941, 2
      %v956 = vrot.slane %v946, 2
      %v957 = vrot.slane %v949, 2
      %v958 = vadd.f32 %v884, %v952
      %v959 = vadd.f32 %v885, %v953
      %v960 = vadd.f32 %v886, %v954
      %v961 = vadd.f32 %v887, %v955
      %v962 = vadd.f32 %v888, %v956
      %v963 = vadd.f32 %v889, %v957
      %v964 = vld [vmem:[%s213] sm:$0x1]
      %v966 = vlaneseq
      %v967 = vshrl.u32 %v966, 7
      %v968 = vsub.s32 0, %v967
      %v969 = vrot.slane %v964, %v968
      %v971 = vadd.f32 %v958, %v969
      %v972 = vadd.f32 %v959, %v969
      %v973 = vadd.f32 %v960, %v969
      %v974 = vadd.f32 %v961, %v969
      %v975 = vadd.f32 %v962, %v969
      %v976 = vadd.f32 %v963, %v969
      %v977 = vmax.f32 %v971, 0.0
      %v978 = vmax.f32 %v972, 0.0
      %v979 = vmax.f32 %v973, 0.0
      %v980 = vmax.f32 %v974, 0.0
      %v981 = vmax.f32 %v975, 0.0
      %v982 = vmax.f32 %v976, 0.0
      %v983 = vpack.c.bf16 %v977, %v977
      %v984 = vpack.c.bf16 %v978, %v978
      %v985 = vpack.c.bf16 %v979, %v979
      %v986 = vpack.c.bf16 %v980, %v980
      %v987 = vpack.c.bf16 %v981, %v981
      %v988 = vpack.c.bf16 %v982, %v982
      %989 = vst [vmem:[%s221] sm:$0xf] %v983
      %990 = vst [vmem:[%s221 + $0x4] sm:$0xf] %v984
      %991 = vst [vmem:[%s221 + $0x8] sm:$0xf] %v985
      %992 = vst [vmem:[%s221 + $0xc] sm:$0xf] %v986
      %993 = vst [vmem:[%s221 + $0x10] sm:$0xf] %v987
      %994 = vst [vmem:[%s221 + $0x14] sm:$0xf] %v988
      %p995 = scmp.lt.s32.totalorder %s18, 1
      %s996 = scalar_select %p995, %s18, 1
      %p997 = scmp.lt.s32.totalorder %s19, 0
      %s998 = scalar_select %p997, %s19, 0
      %s999 = smul.addr %s996, 6
      %s1000 = sadd.s32 %s998, %s999
      %s1001 = smul.addr %s1000, 4
      %s1002 = scalar_lea.vmem %s3, %s1001
      // Predicated region
      $region33: #{depthwise_xcorr_forward.4} parent=31 // pred_check
        %p1003 = pneg %p124
      $region34: #{depthwise_xcorr_forward.4} parent=31 // pred_check_branch
        %1005 = sbr.rel (%p1003) target = $region36
      $region35: #{depthwise_xcorr_forward.4} parent=31 // pred_region
        _
      $region36: #{depthwise_xcorr_forward.4} parent=31 // pred_fallthru
        _
    $region32: #{depthwise_xcorr_forward.4} parent=5 // pred_fallthru
      _
    %p1006 = scmp.le.s32.totalorder 2, %s9
    // Predicated region
    $region37: #{depthwise_xcorr_forward.4} parent=5 // pred_check
      %p1007 = pneg %p1006
    $region38: #{depthwise_xcorr_forward.4} parent=5 // pred_check_branch
      %1009 = sbr.rel (%p1007) target = $region40
    $region39: #{depthwise_xcorr_forward.4} parent=5 // pred_region
      %s1010 = ssub.s32 %s9, 2
      // Predicated region
      $region41: #{depthwise_xcorr_forward.4} parent=39 // pred_check
        %p1011 = pneg %p130
      $region42: #{depthwise_xcorr_forward.4} parent=39 // pred_check_branch
        %1013 = sbr.rel (%p1011) target = $region44
      $region43: #{depthwise_xcorr_forward.4} parent=39 // pred_region
        %p1014 = scmp.lt.s32.totalorder %s20, 1
        %s1015 = scalar_select %p1014, %s20, 1
        %p1016 = scmp.lt.s32.totalorder %s21, 0
        %s1017 = scalar_select %p1016, %s21, 0
        %s1018 = smul.addr %s1015, 6
        %s1019 = sadd.s32 %s1017, %s1018
        %s1020 = smul.addr %s1019, 4
        %s1021 = scalar_lea.vmem %s3, %s1020
      $region44: #{depthwise_xcorr_forward.4} parent=39 // pred_fallthru
        _
    $region40: #{depthwise_xcorr_forward.4} parent=5 // pred_fallthru
      _
  $region6: #{depthwise_xcorr_forward.4} parent=0 // loop_footer
    %s13 = sadd.s32 1, %s9
  $region7: #{depthwise_xcorr_forward.4} parent=0 // loop_footer_branch
    %8 = sbr.rel target = $region3
  $region8: #{depthwise_xcorr_forward.4} parent=0 // loop_exit
    _

// kernel: depthwise_xcorr_forward.7
$region0: #{depthwise_xcorr_forward.7}
  #allocation0 [shape = 'u32[]', space=smem, size = 0x4, offset = 0x4, fixed_abs, tag = 'smem constant byte address 0x4 - core index']
  #allocation1 [shape = 'u32[144,128]{1,0:T(1,128)}', space=vmem, size = 0x12000, scoped, tag = 'internal scratch']
  %s0 = inlined_call_operand.vmem [shape: bf16[168,128], index: 0, kind: input, shape index: {}]
  %s1 = inlined_call_operand.vmem [shape: bf16[128,128], index: 1, kind: input, shape index: {}]
  %s2 = inlined_call_operand.vmem [shape: f32[1,128], index: 2, kind: input, shape index: {}]
  %s3 = inlined_call_operand.vmem [shape: bf16[128,128], index: 3, kind: input, shape index: {}]
  %s4 = inlined_call_operand.vmem [shape: f32[1,128], index: 4, kind: input, shape index: {}]
  %s5 = inlined_call_operand.vmem [shape: f32[168,128], index: 5, kind: output, shape index: {}]
  %s6 = sld [smem:[#allocation0]]
  $region30: #{depthwise_xcorr_forward.7} parent=0
    _
  %s8 = ssub.s32 1, %s6
  %s9 = scalar_select 0, %s8, %s6
  // Predicated region
  $region2: #{depthwise_xcorr_forward.7} parent=0 // pred_check
    _
  $region3: #{depthwise_xcorr_forward.7} parent=0 // pred_check_branch
    %11 = sbr.rel (0) target = $region5
  $region4: #{depthwise_xcorr_forward.7} parent=0 // pred_region
    _
  $region5: #{depthwise_xcorr_forward.7} parent=0 // pred_fallthru
    _
  // Predicated region
  $region6: #{depthwise_xcorr_forward.7} parent=0 // pred_check
    _
  $region7: #{depthwise_xcorr_forward.7} parent=0 // pred_check_branch
    %13 = sbr.rel (0) target = $region9
  $region8: #{depthwise_xcorr_forward.7} parent=0 // pred_region
    _
  $region9: #{depthwise_xcorr_forward.7} parent=0 // pred_fallthru
    _
  // Predicated region
  $region10: #{depthwise_xcorr_forward.7} parent=0 // pred_check
    _
  $region11: #{depthwise_xcorr_forward.7} parent=0 // pred_check_branch
    %15 = sbr.rel (0) target = $region13
  $region12: #{depthwise_xcorr_forward.7} parent=0 // pred_region
    _
  $region13: #{depthwise_xcorr_forward.7} parent=0 // pred_fallthru
    _
  // Predicated region
  $region14: #{depthwise_xcorr_forward.7} parent=0 // pred_check
    _
  $region15: #{depthwise_xcorr_forward.7} parent=0 // pred_check_branch
    %17 = sbr.rel (0) target = $region17
  $region16: #{depthwise_xcorr_forward.7} parent=0 // pred_region
    _
  $region17: #{depthwise_xcorr_forward.7} parent=0 // pred_fallthru
    _
  // Predicated region
  $region18: #{depthwise_xcorr_forward.7} parent=0 // pred_check
    _
  $region19: #{depthwise_xcorr_forward.7} parent=0 // pred_check_branch
    %19 = sbr.rel (0) target = $region21
  $region20: #{depthwise_xcorr_forward.7} parent=0 // pred_region
    _
  $region21: #{depthwise_xcorr_forward.7} parent=0 // pred_fallthru
    _
  %v21 = vld [vmem:[%s0] sm:$0xf]
  %v22 = vld [vmem:[%s0 + $0x4] sm:$0xf]
  %v23 = vld [vmem:[%s0 + $0x8] sm:$0xf]
  %v24 = vld [vmem:[%s0 + $0xc] sm:$0xf]
  %v25 = vld [vmem:[%s0 + $0x10] sm:$0xf]
  %v26 = vld [vmem:[%s0 + $0x14] sm:$0xf]
  %v27 = vld [vmem:[%s0 + $0x18] sm:$0xf]
  %v28 = vld [vmem:[%s0 + $0x1c] sm:$0xf]
  %v29 = vld [vmem:[%s0 + $0x20] sm:$0xf]
  %v30 = vld [vmem:[%s0 + $0x24] sm:$0xf]
  %v31 = vld [vmem:[%s0 + $0x28] sm:$0xf]
  %v32 = vld [vmem:[%s0 + $0x2c] sm:$0xf]
  %v33 = vld [vmem:[%s0 + $0x30] sm:$0xf]
  %v34 = vld [vmem:[%s0 + $0x34] sm:$0xf]
  %v35 = vld [vmem:[%s0 + $0x38] sm:$0xf]
  %v36 = vld [vmem:[%s0 + $0x3c] sm:$0xf]
  %v37 = vld [vmem:[%s0 + $0x40] sm:$0xf]
  %v38 = vld [vmem:[%s0 + $0x44] sm:$0xf]
  %v39 = vld [vmem:[%s0 + $0x48] sm:$0xf]
  %v40 = vld [vmem:[%s0 + $0x4c] sm:$0xf]
  %v41 = vld [vmem:[%s0 + $0x50] sm:$0xf]
  %v42 = vld [vmem:[%s1] sm:$0xf]
  %v43 = vld [vmem:[%s1 + $0x4] sm:$0xf]
  %v44 = vld [vmem:[%s1 + $0x8] sm:$0xf]
  %v45 = vld [vmem:[%s1 + $0xc] sm:$0xf]
  %v46 = vld [vmem:[%s1 + $0x10] sm:$0xf]
  %v47 = vld [vmem:[%s1 + $0x14] sm:$0xf]
  %v48 = vld [vmem:[%s1 + $0x18] sm:$0xf]
  %v49 = vld [vmem:[%s1 + $0x1c] sm:$0xf]
  %v50 = vld [vmem:[%s1 + $0x20] sm:$0xf]
  %v51 = vld [vmem:[%s1 + $0x24] sm:$0xf]
  %v52 = vld [vmem:[%s1 + $0x28] sm:$0xf]
  %v53 = vld [vmem:[%s1 + $0x2c] sm:$0xf]
  %v54 = vld [vmem:[%s1 + $0x30] sm:$0xf]
  %v55 = vld [vmem:[%s1 + $0x34] sm:$0xf]
  %v56 = vld [vmem:[%s1 + $0x38] sm:$0xf]
  %v57 = vld [vmem:[%s1 + $0x3c] sm:$0xf]
  %v58 = vld [vmem:[%s2] sm:$0x1]
  %v60 = vlaneseq
  %v61 = vshrl.u32 %v60, 7
  %v62 = vsub.s32 0, %v61
  %v63 = vrot.slane %v58, %v62
  %v86 = vunpack.c.l.b16 %v21
  %v87 = vunpack.c.l.b16 %v22
  %v88 = vunpack.c.l.b16 %v23
  %v89 = vunpack.c.l.b16 %v24
  %v90 = vunpack.c.l.b16 %v25
  %v91 = vunpack.c.l.b16 %v26
  %v92 = vunpack.c.l.b16 %v27
  %v93 = vunpack.c.l.b16 %v28
  %v94 = vunpack.c.l.b16 %v29
  %v95 = vunpack.c.l.b16 %v30
  %v96 = vunpack.c.l.b16 %v31
  %v97 = vunpack.c.l.b16 %v32
  %v98 = vunpack.c.l.b16 %v33
  %v99 = vunpack.c.l.b16 %v34
  %v100 = vunpack.c.l.b16 %v35
  %v101 = vunpack.c.l.b16 %v36
  %v102 = vunpack.c.l.b16 %v37
  %v103 = vunpack.c.l.b16 %v38
  %v104 = vunpack.c.l.b16 %v39
  %v105 = vunpack.c.l.b16 %v40
  %v106 = vunpack.c.l.b16 %v41
  %v107 = vpack.c.b16 %v87, %v86
  %v108 = vpack.c.b16 %v89, %v88
  %v109 = vpack.c.b16 %v91, %v90
  %v110 = vpack.c.b16 %v93, %v92
  %v111 = vpack.c.b16 %v95, %v94
  %v112 = vpack.c.b16 %v97, %v96
  %v113 = vpack.c.b16 %v99, %v98
  %v114 = vpack.c.b16 %v101, %v100
  %v115 = vpack.c.b16 %v103, %v102
  %v116 = vpack.c.b16 %v105, %v104
  %v117 = vpack.c.b16 %v106, %v106
  %v145 = vunpack.c.l.b16 %v42
  %v146 = vunpack.c.l.b16 %v43
  %v147 = vunpack.c.l.b16 %v44
  %v148 = vunpack.c.l.b16 %v45
  %v149 = vunpack.c.l.b16 %v46
  %v150 = vunpack.c.l.b16 %v47
  %v151 = vunpack.c.l.b16 %v48
  %v152 = vunpack.c.l.b16 %v49
  %v153 = vunpack.c.l.b16 %v50
  %v154 = vunpack.c.l.b16 %v51
  %v155 = vunpack.c.l.b16 %v52
  %v156 = vunpack.c.l.b16 %v53
  %v157 = vunpack.c.l.b16 %v54
  %v158 = vunpack.c.l.b16 %v55
  %v159 = vunpack.c.l.b16 %v56
  %v160 = vunpack.c.l.b16 %v57
  %v161 = vpack.c.b16 %v146, %v145
  %v162 = vpack.c.b16 %v148, %v147
  %v163 = vpack.c.b16 %v150, %v149
  %v164 = vpack.c.b16 %v152, %v151
  %v165 = vpack.c.b16 %v154, %v153
  %v166 = vpack.c.b16 %v156, %v155
  %v167 = vpack.c.b16 %v158, %v157
  %v168 = vpack.c.b16 %v160, %v159
  %177 = vmatprep.subr.bf16.mxu0 0
  %178 = vmatpush1.bf16.msra.mxu0 %v161
  %179 = vmatprep.subr.bf16.mxu0 0
  %180 = vmatpush1.bf16.msra.mxu0 %v162
  %181 = vmatprep.subr.bf16.mxu0 0
  %182 = vmatpush1.bf16.msra.mxu0 %v163
  %183 = vmatprep.subr.bf16.mxu0 0
  %184 = vmatpush1.bf16.msra.mxu0 %v164
  %185 = vmatprep.subr.bf16.mxu0 0
  %186 = vmatpush1.bf16.msra.mxu0 %v165
  %187 = vmatprep.subr.bf16.mxu0 0
  %188 = vmatpush1.bf16.msra.mxu0 %v166
  %189 = vmatprep.subr.bf16.mxu0 0
  %190 = vmatpush1.bf16.msra.mxu0 %v167
  %191 = vmatprep.subr.bf16.mxu0 0
  %192 = vmatpush1.bf16.msra.mxu0 %v168
  %193 = vmatprep.subr.bf16.mxu0 0
  %194 = vmatpush1.bf16.msra.mxu0 0
  %195 = vmatprep.subr.bf16.mxu0 0
  %196 = vmatpush1.bf16.msra.mxu0 0
  %197 = vmatprep.subr.bf16.mxu0 0
  %198 = vmatpush1.bf16.msra.mxu0 0
  %199 = vmatprep.subr.bf16.mxu0 0
  %200 = vmatpush1.bf16.msra.mxu0 0
  %201 = vmatprep.subr.bf16.mxu0 0
  %202 = vmatpush1.bf16.msra.mxu0 0
  %203 = vmatprep.subr.bf16.mxu0 0
  %204 = vmatpush1.bf16.msra.mxu0 0
  %205 = vmatprep.subr.bf16.mxu0 0
  %206 = vmatpush1.bf16.msra.mxu0 0
  %207 = vmatprep.subr.bf16.mxu0 0
  %208 = vmatpush1.bf16.msra.mxu0 0
  %209 = vmatprep.mubr.bf16.mxu0 0
  %210 = vmatmul.mubr.bf16.gmra.mrb[0].mxu0 %v107
  %v211 = vpop.f32.mrb[0].mxu0
  %v212 = vadd.f32 %v63, %v211
  %v213 = vpop.f32.mrb[0].mxu0
  %v214 = vpop.f32.mrb[0].mxu0
  %v215 = vadd.f32 %v63, %v214
  %v216 = vpop.f32.mrb[0].mxu0
  %217 = vmatprep.mubr.bf16.mxu0 0
  %218 = vmatmul.mubr.bf16.gmra.mrb[0].mxu0 %v108
  %v219 = vpop.f32.mrb[0].mxu0
  %v220 = vadd.f32 %v63, %v219
  %v221 = vpop.f32.mrb[0].mxu0
  %v222 = vpop.f32.mrb[0].mxu0
  %v223 = vadd.f32 %v63, %v222
  %v224 = vpop.f32.mrb[0].mxu0
  %225 = vmatprep.mubr.bf16.mxu0 0
  %226 = vmatmul.mubr.bf16.gmra.mrb[0].mxu0 %v109
  %v227 = vpop.f32.mrb[0].mxu0
  %v228 = vadd.f32 %v63, %v227
  %v229 = vpop.f32.mrb[0].mxu0
  %v230 = vpop.f32.mrb[0].mxu0
  %v231 = vadd.f32 %v63, %v230
  %v232 = vpop.f32.mrb[0].mxu0
  %233 = vmatprep.mubr.bf16.mxu0 0
  %234 = vmatmul.mubr.bf16.gmra.mrb[0].mxu0 %v110
  %v235 = vpop.f32.mrb[0].mxu0
  %v236 = vadd.f32 %v63, %v235
  %v237 = vpop.f32.mrb[0].mxu0
  %v238 = vpop.f32.mrb[0].mxu0
  %v239 = vadd.f32 %v63, %v238
  %v240 = vpop.f32.mrb[0].mxu0
  %241 = vmatprep.mubr.bf16.mxu0 0
  %242 = vmatmul.mubr.bf16.gmra.mrb[0].mxu0 %v111
  %v243 = vpop.f32.mrb[0].mxu0
  %v244 = vadd.f32 %v63, %v243
  %v245 = vpop.f32.mrb[0].mxu0
  %v246 = vpop.f32.mrb[0].mxu0
  %v247 = vadd.f32 %v63, %v246
  %v248 = vpop.f32.mrb[0].mxu0
  %249 = vmatprep.mubr.bf16.mxu0 0
  %250 = vmatmul.mubr.bf16.gmra.mrb[0].mxu0 %v112
  %v251 = vpop.f32.mrb[0].mxu0
  %v252 = vadd.f32 %v63, %v251
  %v253 = vpop.f32.mrb[0].mxu0
  %v254 = vpop.f32.mrb[0].mxu0
  %v255 = vadd.f32 %v63, %v254
  %v256 = vpop.f32.mrb[0].mxu0
  %257 = vmatprep.mubr.bf16.mxu0 0
  %258 = vmatmul.mubr.bf16.gmra.mrb[0].mxu0 %v113
  %v259 = vpop.f32.mrb[0].mxu0
  %v260 = vadd.f32 %v63, %v259
  %v261 = vpop.f32.mrb[0].mxu0
  %v262 = vpop.f32.mrb[0].mxu0
  %v263 = vadd.f32 %v63, %v262
  %v264 = vpop.f32.mrb[0].mxu0
  %265 = vmatprep.mubr.bf16.mxu0 0
  %266 = vmatmul.mubr.bf16.gmra.mrb[0].mxu0 %v114
  %v267 = vpop.f32.mrb[0].mxu0
  %v268 = vadd.f32 %v63, %v267
  %v269 = vpop.f32.mrb[0].mxu0
  %v270 = vpop.f32.mrb[0].mxu0
  %v271 = vadd.f32 %v63, %v270
  %v272 = vpop.f32.mrb[0].mxu0
  %273 = vmatprep.mubr.bf16.mxu0 0
  %274 = vmatmul.mubr.bf16.gmra.mrb[0].mxu0 %v115
  %v275 = vpop.f32.mrb[0].mxu0
  %v276 = vadd.f32 %v63, %v275
  %v277 = vpop.f32.mrb[0].mxu0
  %v278 = vpop.f32.mrb[0].mxu0
  %v279 = vadd.f32 %v63, %v278
  %v280 = vpop.f32.mrb[0].mxu0
  %281 = vmatprep.mubr.bf16.mxu0 0
  %282 = vmatmul.mubr.bf16.gmra.mrb[0].mxu0 %v116
  %v283 = vpop.f32.mrb[0].mxu0
  %v284 = vadd.f32 %v63, %v283
  %v285 = vpop.f32.mrb[0].mxu0
  %v286 = vpop.f32.mrb[0].mxu0
  %v287 = vadd.f32 %v63, %v286
  %v288 = vpop.f32.mrb[0].mxu0
  %289 = vmatprep.mubr.bf16.mxu0 0
  %290 = vmatmul.mubr.bf16.gmra.mrb[0].mxu0 %v117
  %v291 = vpop.f32.mrb[0].mxu0
  %v292 = vadd.f32 %v63, %v291
  %v293 = vpop.f32.mrb[0].mxu0
  %v294 = vpop.f32.mrb[0].mxu0
  %v295 = vpop.f32.mrb[0].mxu0
  %296 = vdwg.mxu0
  %v297 = vmax.f32 %v212, 0.0
  %v298 = vmax.f32 %v215, 0.0
  %v299 = vmax.f32 %v220, 0.0
  %v300 = vmax.f32 %v223, 0.0
  %v301 = vmax.f32 %v228, 0.0
  %v302 = vmax.f32 %v231, 0.0
  %v303 = vmax.f32 %v236, 0.0
  %v304 = vmax.f32 %v239, 0.0
  %v305 = vmax.f32 %v244, 0.0
  %v306 = vmax.f32 %v247, 0.0
  %v307 = vmax.f32 %v252, 0.0
  %v308 = vmax.f32 %v255, 0.0
  %v309 = vmax.f32 %v260, 0.0
  %v310 = vmax.f32 %v263, 0.0
  %v311 = vmax.f32 %v268, 0.0
  %v312 = vmax.f32 %v271, 0.0
  %v313 = vmax.f32 %v276, 0.0
  %v314 = vmax.f32 %v279, 0.0
  %v315 = vmax.f32 %v284, 0.0
  %v316 = vmax.f32 %v287, 0.0
  %v317 = vmax.f32 %v292, 0.0
  %v318 = vpack.c.bf16 %v298, %v297
  %v319 = vpack.c.bf16 %v300, %v299
  %v320 = vpack.c.bf16 %v302, %v301
  %v321 = vpack.c.bf16 %v304, %v303
  %v322 = vpack.c.bf16 %v306, %v305
  %v323 = vpack.c.bf16 %v308, %v307
  %v324 = vpack.c.bf16 %v310, %v309
  %v325 = vpack.c.bf16 %v312, %v311
  %v326 = vpack.c.bf16 %v314, %v313
  %v327 = vpack.c.bf16 %v316, %v315
  %v328 = vpack.c.bf16 %v317, %v317
  %v329 = vld [vmem:[%s3] sm:$0xf]
  %v330 = vld [vmem:[%s3 + $0x4] sm:$0xf]
  %v331 = vld [vmem:[%s3 + $0x8] sm:$0xf]
  %v332 = vld [vmem:[%s3 + $0xc] sm:$0xf]
  %v333 = vld [vmem:[%s3 + $0x10] sm:$0xf]
  %v334 = vld [vmem:[%s3 + $0x14] sm:$0xf]
  %v335 = vld [vmem:[%s3 + $0x18] sm:$0xf]
  %v336 = vld [vmem:[%s3 + $0x1c] sm:$0xf]
  %v337 = vld [vmem:[%s3 + $0x20] sm:$0xf]
  %v338 = vld [vmem:[%s3 + $0x24] sm:$0xf]
  %v339 = vld [vmem:[%s3 + $0x28] sm:$0xf]
  %v340 = vld [vmem:[%s3 + $0x2c] sm:$0xf]
  %v341 = vld [vmem:[%s3 + $0x30] sm:$0xf]
  %v342 = vld [vmem:[%s3 + $0x34] sm:$0xf]
  %v343 = vld [vmem:[%s3 + $0x38] sm:$0xf]
  %v344 = vld [vmem:[%s3 + $0x3c] sm:$0xf]
  %v345 = vld [vmem:[%s4] sm:$0x1]
  %v347 = vlaneseq
  %v348 = vshrl.u32 %v347, 7
  %v349 = vsub.s32 0, %v348
  %v350 = vrot.slane %v345, %v349
  %v368 = vunpack.c.l.b16 %v329
  %v369 = vunpack.c.l.b16 %v330
  %v370 = vunpack.c.l.b16 %v331
  %v371 = vunpack.c.l.b16 %v332
  %v372 = vunpack.c.l.b16 %v333
  %v373 = vunpack.c.l.b16 %v334
  %v374 = vunpack.c.l.b16 %v335
  %v375 = vunpack.c.l.b16 %v336
  %v376 = vunpack.c.l.b16 %v337
  %v377 = vunpack.c.l.b16 %v338
  %v378 = vunpack.c.l.b16 %v339
  %v379 = vunpack.c.l.b16 %v340
  %v380 = vunpack.c.l.b16 %v341
  %v381 = vunpack.c.l.b16 %v342
  %v382 = vunpack.c.l.b16 %v343
  %v383 = vunpack.c.l.b16 %v344
  %v384 = vpack.c.b16 %v369, %v368
  %v385 = vpack.c.b16 %v371, %v370
  %v386 = vpack.c.b16 %v373, %v372
  %v387 = vpack.c.b16 %v375, %v374
  %v388 = vpack.c.b16 %v377, %v376
  %v389 = vpack.c.b16 %v379, %v378
  %v390 = vpack.c.b16 %v381, %v380
  %v391 = vpack.c.b16 %v383, %v382
  %400 = vmatprep.subr.bf16.mxu0 0
  %401 = vmatpush1.bf16.msra.mxu0 %v384
  %402 = vmatprep.subr.bf16.mxu0 0
  %403 = vmatpush1.bf16.msra.mxu0 %v385
  %404 = vmatprep.subr.bf16.mxu0 0
  %405 = vmatpush1.bf16.msra.mxu0 %v386
  %406 = vmatprep.subr.bf16.mxu0 0
  %407 = vmatpush1.bf16.msra.mxu0 %v387
  %408 = vmatprep.subr.bf16.mxu0 0
  %409 = vmatpush1.bf16.msra.mxu0 %v388
  %410 = vmatprep.subr.bf16.mxu0 0
  %411 = vmatpush1.bf16.msra.mxu0 %v389
  %412 = vmatprep.subr.bf16.mxu0 0
  %413 = vmatpush1.bf16.msra.mxu0 %v390
  %414 = vmatprep.subr.bf16.mxu0 0
  %415 = vmatpush1.bf16.msra.mxu0 %v391
  %416 = vmatprep.subr.bf16.mxu0 0
  %417 = vmatpush1.bf16.msra.mxu0 0
  %418 = vmatprep.subr.bf16.mxu0 0
  %419 = vmatpush1.bf16.msra.mxu0 0
  %420 = vmatprep.subr.bf16.mxu0 0
  %421 = vmatpush1.bf16.msra.mxu0 0
  %422 = vmatprep.subr.bf16.mxu0 0
  %423 = vmatpush1.bf16.msra.mxu0 0
  %424 = vmatprep.subr.bf16.mxu0 0
  %425 = vmatpush1.bf16.msra.mxu0 0
  %426 = vmatprep.subr.bf16.mxu0 0
  %427 = vmatpush1.bf16.msra.mxu0 0
  %428 = vmatprep.subr.bf16.mxu0 0
  %429 = vmatpush1.bf16.msra.mxu0 0
  %430 = vmatprep.subr.bf16.mxu0 0
  %431 = vmatpush1.bf16.msra.mxu0 0
  %432 = vmatprep.mubr.bf16.mxu0 0
  %433 = vmatmul.mubr.bf16.gmra.mrb[0].mxu0 %v318
  %v434 = vpop.f32.mrb[0].mxu0
  %v435 = vadd.f32 %v350, %v434
  %v436 = vpop.f32.mrb[0].mxu0
  %v437 = vpop.f32.mrb[0].mxu0
  %v438 = vadd.f32 %v350, %v437
  %v439 = vpop.f32.mrb[0].mxu0
  %440 = vmatprep.mubr.bf16.mxu0 0
  %441 = vmatmul.mubr.bf16.gmra.mrb[0].mxu0 %v319
  %v442 = vpop.f32.mrb[0].mxu0
  %v443 = vadd.f32 %v350, %v442
  %v444 = vpop.f32.mrb[0].mxu0
  %v445 = vpop.f32.mrb[0].mxu0
  %v446 = vadd.f32 %v350, %v445
  %v447 = vpop.f32.mrb[0].mxu0
  %448 = vmatprep.mubr.bf16.mxu0 0
  %449 = vmatmul.mubr.bf16.gmra.mrb[0].mxu0 %v320
  %v450 = vpop.f32.mrb[0].mxu0
  %v451 = vadd.f32 %v350, %v450
  %v452 = vpop.f32.mrb[0].mxu0
  %v453 = vpop.f32.mrb[0].mxu0
  %v454 = vadd.f32 %v350, %v453
  %v455 = vpop.f32.mrb[0].mxu0
  %456 = vmatprep.mubr.bf16.mxu0 0
  %457 = vmatmul.mubr.bf16.gmra.mrb[0].mxu0 %v321
  %v458 = vpop.f32.mrb[0].mxu0
  %v459 = vadd.f32 %v350, %v458
  %v460 = vpop.f32.mrb[0].mxu0
  %v461 = vpop.f32.mrb[0].mxu0
  %v462 = vadd.f32 %v350, %v461
  %v463 = vpop.f32.mrb[0].mxu0
  %464 = vmatprep.mubr.bf16.mxu0 0
  %465 = vmatmul.mubr.bf16.gmra.mrb[0].mxu0 %v322
  %v466 = vpop.f32.mrb[0].mxu0
  %v467 = vadd.f32 %v350, %v466
  %v468 = vpop.f32.mrb[0].mxu0
  %v469 = vpop.f32.mrb[0].mxu0
  %v470 = vadd.f32 %v350, %v469
  %v471 = vpop.f32.mrb[0].mxu0
  %472 = vmatprep.mubr.bf16.mxu0 0
  %473 = vmatmul.mubr.bf16.gmra.mrb[0].mxu0 %v323
  %v474 = vpop.f32.mrb[0].mxu0
  %v475 = vadd.f32 %v350, %v474
  %v476 = vpop.f32.mrb[0].mxu0
  %v477 = vpop.f32.mrb[0].mxu0
  %v478 = vadd.f32 %v350, %v477
  %v479 = vpop.f32.mrb[0].mxu0
  %480 = vmatprep.mubr.bf16.mxu0 0
  %481 = vmatmul.mubr.bf16.gmra.mrb[0].mxu0 %v324
  %v482 = vpop.f32.mrb[0].mxu0
  %v483 = vadd.f32 %v350, %v482
  %v484 = vpop.f32.mrb[0].mxu0
  %v485 = vpop.f32.mrb[0].mxu0
  %v486 = vadd.f32 %v350, %v485
  %v487 = vpop.f32.mrb[0].mxu0
  %488 = vmatprep.mubr.bf16.mxu0 0
  %489 = vmatmul.mubr.bf16.gmra.mrb[0].mxu0 %v325
  %v490 = vpop.f32.mrb[0].mxu0
  %v491 = vadd.f32 %v350, %v490
  %v492 = vpop.f32.mrb[0].mxu0
  %v493 = vpop.f32.mrb[0].mxu0
  %v494 = vadd.f32 %v350, %v493
  %v495 = vpop.f32.mrb[0].mxu0
  %496 = vmatprep.mubr.bf16.mxu0 0
  %497 = vmatmul.mubr.bf16.gmra.mrb[0].mxu0 %v326
  %v498 = vpop.f32.mrb[0].mxu0
  %v499 = vadd.f32 %v350, %v498
  %v500 = vpop.f32.mrb[0].mxu0
  %v501 = vpop.f32.mrb[0].mxu0
  %v502 = vadd.f32 %v350, %v501
  %v503 = vpop.f32.mrb[0].mxu0
  %504 = vmatprep.mubr.bf16.mxu0 0
  %505 = vmatmul.mubr.bf16.gmra.mrb[0].mxu0 %v327
  %v506 = vpop.f32.mrb[0].mxu0
  %v507 = vadd.f32 %v350, %v506
  %v508 = vpop.f32.mrb[0].mxu0
  %v509 = vpop.f32.mrb[0].mxu0
  %v510 = vadd.f32 %v350, %v509
  %v511 = vpop.f32.mrb[0].mxu0
  %512 = vmatprep.mubr.bf16.mxu0 0
  %513 = vmatmul.mubr.bf16.gmra.mrb[0].mxu0 %v328
  %v514 = vpop.f32.mrb[0].mxu0
  %v515 = vadd.f32 %v350, %v514
  %v516 = vpop.f32.mrb[0].mxu0
  %v517 = vpop.f32.mrb[0].mxu0
  %v518 = vpop.f32.mrb[0].mxu0
  %519 = vdwg.mxu0
  %520 = vst [vmem:[%s5] sm:$0xff] %v435
  %521 = vst [vmem:[%s5 + $0x8] sm:$0xff] %v438
  %522 = vst [vmem:[%s5 + $0x10] sm:$0xff] %v443
  %523 = vst [vmem:[%s5 + $0x18] sm:$0xff] %v446
  %524 = vst [vmem:[%s5 + $0x20] sm:$0xff] %v451
  %525 = vst [vmem:[%s5 + $0x28] sm:$0xff] %v454
  %526 = vst [vmem:[%s5 + $0x30] sm:$0xff] %v459
  %527 = vst [vmem:[%s5 + $0x38] sm:$0xff] %v462
  %528 = vst [vmem:[%s5 + $0x40] sm:$0xff] %v467
  %529 = vst [vmem:[%s5 + $0x48] sm:$0xff] %v470
  %530 = vst [vmem:[%s5 + $0x50] sm:$0xff] %v475
  %531 = vst [vmem:[%s5 + $0x58] sm:$0xff] %v478
  %532 = vst [vmem:[%s5 + $0x60] sm:$0xff] %v483
  %533 = vst [vmem:[%s5 + $0x68] sm:$0xff] %v486
  %534 = vst [vmem:[%s5 + $0x70] sm:$0xff] %v491
  %535 = vst [vmem:[%s5 + $0x78] sm:$0xff] %v494
  %536 = vst [vmem:[%s5 + $0x80] sm:$0xff] %v499
  %537 = vst [vmem:[%s5 + $0x88] sm:$0xff] %v502
  %538 = vst [vmem:[%s5 + $0x90] sm:$0xff] %v507
  %539 = vst [vmem:[%s5 + $0x98] sm:$0xff] %v510
  %540 = vst [vmem:[%s5 + $0xa0] sm:$0xff] %v515
  // Predicated region
  $region22: #{depthwise_xcorr_forward.7} parent=0 // pred_check
    _
  $region23: #{depthwise_xcorr_forward.7} parent=0 // pred_check_branch
    %542 = sbr.rel (0) target = $region25
  $region24: #{depthwise_xcorr_forward.7} parent=0 // pred_region
    _
  $region25: #{depthwise_xcorr_forward.7} parent=0 // pred_fallthru
    _
  // Predicated region
  $region26: #{depthwise_xcorr_forward.7} parent=0 // pred_check
    _
  $region27: #{depthwise_xcorr_forward.7} parent=0 // pred_check_branch
    %544 = sbr.rel (0) target = $region29
  $region28: #{depthwise_xcorr_forward.7} parent=0 // pred_region
    _
  $region29: #{depthwise_xcorr_forward.7} parent=0 // pred_fallthru
    _

// kernel: depthwise_xcorr_forward.6
$region0: #{depthwise_xcorr_forward.6}
  #allocation0 [shape = 'u32[]', space=smem, size = 0x4, offset = 0x4, fixed_abs, tag = 'smem constant byte address 0x4 - core index']
  #allocation1 [shape = 'u32[144,128]{1,0:T(1,128)}', space=vmem, size = 0x12000, scoped, tag = 'internal scratch']
  %s0 = inlined_call_operand.vmem [shape: bf16[2,14,16,128], index: 0, kind: input, shape index: {}]
  %s1 = inlined_call_operand.vmem [shape: bf16[2,6,8,128], index: 1, kind: input, shape index: {}]
  %s2 = inlined_call_operand.vmem [shape: bf16[2,9,9,128], index: 2, kind: output, shape index: {}]
  %s3 = sld [smem:[#allocation0]]
  $region41: #{depthwise_xcorr_forward.6} parent=0
    _
  %s5 = ssub.s32 1, %s3
  %s6 = scalar_select 0, %s5, %s3
  loop: start=0, step=1, limit=4
  $region2: #{depthwise_xcorr_forward.6} parent=0 // loop_pre_header
    _
  $region3: #{depthwise_xcorr_forward.6} parent=0 // loop_header
    %s8 = sphi 0, %s12
    %p9 = scmp.ge.s32.totalorder %s8, 4
    %s15 = sphi 0, %s27
    %s16 = sphi 0, %s23
    %s17 = sphi 0, %s15
    %s18 = sphi 0, %s16
    %s19 = sphi 0, %s17
    %s20 = sphi 0, %s18
    %s32 = sphi 0, %s34
    %s35 = sphi 0, %s32
    %s36 = sphi 0, %s35
    %s52 = sphi 0, %s36
    %s60 = sphi 0, %s62
    %s63 = sphi 0, %s60
    %s64 = sphi 0, %s63
    %s80 = sphi 0, %s64
    %s88 = sphi 0, %s90
    %s91 = sphi 0, %s88
    %s92 = sphi 0, %s91
    %s108 = sphi 0, %s92
  $region4: #{depthwise_xcorr_forward.6} parent=0 // loop_header_branch
    %11 = sbr.rel (%p9) target = $region8
  $region5: #{depthwise_xcorr_forward.6} parent=0 // loop_body
    %s13 = ssub.s32 %s8, 1
    %s14 = ssub.s32 %s8, 2
    %s21 = sadd.s32 1, %s16
    %p22 = scmp.ge.s32.totalorder %s21, 1
    %s23 = scalar_select %p22, 0, %s21
    %s24 = sadd.s32 1, %s15
    %s25 = scalar_select %p22, %s24, %s15
    %p26 = scmp.ge.s32.totalorder %s25, 2
    %s27 = scalar_select %p26, 0, %s25
    %s28 = ssub.s32 %s15, %s27
    %s29 = ssub.s32 %s16, %s23
    %s30 = sor.u32 %s28, %s29
    %p31 = scmp.eq.s32.totalorder %s30, 0
    %s33 = sadd.s32 %s32, 1
    %s34 = scalar_select %p31, %s32, %s33
    %p37 = pneg %p31
    %p38 = scmp.eq.s32.totalorder %s8, 1
    %p39 = por %p37, %p38
    %p40 = scmp.ne.s32.totalorder %s32, %s35
    %p41 = scmp.eq.s32.totalorder %s8, 0
    %p42 = por %p40, %p41
    %p43 = scmp.ne.s32.totalorder %s32, %s35
    %p44 = scmp.eq.s32.totalorder %s13, 1
    %p45 = por %p43, %p44
    %p46 = scmp.ne.s32.totalorder %s35, %s36
    %p47 = scmp.eq.s32.totalorder %s13, 0
    %p48 = por %p46, %p47
    %p49 = scmp.ne.s32.totalorder %s35, %s36
    %p50 = scmp.eq.s32.totalorder %s14, 1
    %p51 = por %p49, %p50
    %p53 = scmp.ne.s32.totalorder %s36, %s52
    %p54 = scmp.eq.s32.totalorder %s14, 0
    %p55 = por %p53, %p54
    %s56 = ssub.s32 %s15, %s27
    %s57 = ssub.s32 %s16, %s23
    %s58 = sor.u32 %s56, %s57
    %p59 = scmp.eq.s32.totalorder %s58, 0
    %s61 = sadd.s32 %s60, 1
    %s62 = scalar_select %p59, %s60, %s61
    %p65 = pneg %p59
    %p66 = scmp.eq.s32.totalorder %s8, 1
    %p67 = por %p65, %p66
    %p68 = scmp.ne.s32.totalorder %s60, %s63
    %p69 = scmp.eq.s32.totalorder %s8, 0
    %p70 = por %p68, %p69
    %p71 = scmp.ne.s32.totalorder %s60, %s63
    %p72 = scmp.eq.s32.totalorder %s13, 1
    %p73 = por %p71, %p72
    %p74 = scmp.ne.s32.totalorder %s63, %s64
    %p75 = scmp.eq.s32.totalorder %s13, 0
    %p76 = por %p74, %p75
    %p77 = scmp.ne.s32.totalorder %s63, %s64
    %p78 = scmp.eq.s32.totalorder %s14, 1
    %p79 = por %p77, %p78
    %p81 = scmp.ne.s32.totalorder %s64, %s80
    %p82 = scmp.eq.s32.totalorder %s14, 0
    %p83 = por %p81, %p82
    %s84 = ssub.s32 %s15, %s27
    %s85 = ssub.s32 %s16, %s23
    %s86 = sor.u32 %s84, %s85
    %p87 = scmp.eq.s32.totalorder %s86, 0
    %s89 = sadd.s32 %s88, 1
    %s90 = scalar_select %p87, %s88, %s89
    %p93 = pneg %p87
    %p94 = scmp.eq.s32.totalorder %s8, 1
    %p95 = por %p93, %p94
    %p96 = scmp.ne.s32.totalorder %s88, %s91
    %p97 = scmp.eq.s32.totalorder %s8, 0
    %p98 = por %p96, %p97
    %p99 = scmp.ne.s32.totalorder %s88, %s91
    %p100 = scmp.eq.s32.totalorder %s13, 1
    %p101 = por %p99, %p100
    %p102 = scmp.ne.s32.totalorder %s91, %s92
    %p103 = scmp.eq.s32.totalorder %s13, 0
    %p104 = por %p102, %p103
    %p105 = scmp.ne.s32.totalorder %s91, %s92
    %p106 = scmp.eq.s32.totalorder %s14, 1
    %p107 = por %p105, %p106
    %p109 = scmp.ne.s32.totalorder %s92, %s108
    %p110 = scmp.eq.s32.totalorder %s14, 0
    %p111 = por %p109, %p110
    %p112 = scmp.le.s32.totalorder 1, %s8
    %p113 = scmp.lt.s32.totalorder %s8, 3
    %p114 = pnand %p112, %p113
    %p115 = pneg %p114
    // Predicated region
    $region9: #{depthwise_xcorr_forward.6} parent=5 // pred_check
      _
    $region10: #{depthwise_xcorr_forward.6} parent=5 // pred_check_branch
      %117 = sbr.rel (%p114) target = $region12
    $region11: #{depthwise_xcorr_forward.6} parent=5 // pred_region
      %s118 = ssub.s32 %s8, 1
    $region12: #{depthwise_xcorr_forward.6} parent=5 // pred_fallthru
      _
    %p119 = scmp.lt.s32.totalorder %s8, 2
    // Predicated region
    $region13: #{depthwise_xcorr_forward.6} parent=5 // pred_check
      %p120 = pneg %p119
    $region14: #{depthwise_xcorr_forward.6} parent=5 // pred_check_branch
      %122 = sbr.rel (%p120) target = $region16
    $region15: #{depthwise_xcorr_forward.6} parent=5 // pred_region
      // Predicated region
      $region17: #{depthwise_xcorr_forward.6} parent=15 // pred_check
        %p123 = pneg %p42
      $region18: #{depthwise_xcorr_forward.6} parent=15 // pred_check_branch
        %125 = sbr.rel (%p123) target = $region20
      $region19: #{depthwise_xcorr_forward.6} parent=15 // pred_region
        %p126 = scmp.lt.s32.totalorder %s15, 1
        %s127 = scalar_select %p126, %s15, 1
        %p128 = scmp.lt.s32.totalorder %s16, 0
        %s129 = scalar_select %p128, %s16, 0
        %s130 = smul.addr %s127, 28
        %s131 = sadd.s32 %s129, %s130
        %s132 = smul.addr %s131, 4
        %s133 = scalar_lea.vmem %s0, %s132
      $region20: #{depthwise_xcorr_forward.6} parent=15 // pred_fallthru
        _
      // Predicated region
      $region21: #{depthwise_xcorr_forward.6} parent=15 // pred_check
        %p134 = pneg %p70
      $region22: #{depthwise_xcorr_forward.6} parent=15 // pred_check_branch
        %136 = sbr.rel (%p134) target = $region24
      $region23: #{depthwise_xcorr_forward.6} parent=15 // pred_region
        %p137 = scmp.lt.s32.totalorder %s15, 1
        %s138 = scalar_select %p137, %s15, 1
        %p139 = scmp.lt.s32.totalorder %s16, 0
        %s140 = scalar_select %p139, %s16, 0
        %s141 = smul.addr %s138, 6
        %s142 = sadd.s32 %s140, %s141
        %s143 = smul.addr %s142, 4
        %s144 = scalar_lea.vmem %s1, %s143
      $region24: #{depthwise_xcorr_forward.6} parent=15 // pred_fallthru
        _
    $region16: #{depthwise_xcorr_forward.6} parent=5 // pred_fallthru
      _
    %p145 = scmp.le.s32.totalorder 1, %s8
    %p146 = scmp.lt.s32.totalorder %s8, 3
    %p147 = pnand %p145, %p146
    %p148 = pneg %p147
    // Predicated region
    $region25: #{depthwise_xcorr_forward.6} parent=5 // pred_check
      _
    $region26: #{depthwise_xcorr_forward.6} parent=5 // pred_check_branch
      %150 = sbr.rel (%p147) target = $region28
    $region27: #{depthwise_xcorr_forward.6} parent=5 // pred_region
      %s151 = ssub.s32 %s8, 1
      %p152 = scmp.lt.s32.totalorder %s17, 1
      %s153 = scalar_select %p152, %s17, 1
      %p154 = scmp.lt.s32.totalorder %s18, 0
      %s155 = scalar_select %p154, %s18, 0
      %s156 = smul.addr %s153, 28
      %s157 = sadd.s32 %s155, %s156
      %s158 = smul.addr %s157, 4
      %s159 = scalar_lea.vmem %s0, %s158
      %p160 = pneg %p48
      %p161 = pneg %p45
      %p162 = scmp.lt.s32.totalorder %s17, 1
      %s163 = scalar_select %p162, %s17, 1
      %p164 = scmp.lt.s32.totalorder %s18, 0
      %s165 = scalar_select %p164, %s18, 0
      %s166 = smul.addr %s163, 6
      %s167 = sadd.s32 %s165, %s166
      %s168 = smul.addr %s167, 4
      %s169 = scalar_lea.vmem %s1, %s168
      %p170 = pneg %p76
      %p171 = pneg %p73
      %p172 = pneg %p104
      %p173 = pneg %p101
      %p174 = scmp.lt.s32.totalorder %s17, 1
      %s175 = scalar_select %p174, %s17, 1
      %p176 = scmp.lt.s32.totalorder %s18, 0
      %s177 = scalar_select %p176, %s18, 0
      %s178 = smul.addr %s175, 18
      %s179 = sadd.s32 %s177, %s178
      %s180 = smul.addr %s179, 4
      %s181 = scalar_lea.vmem %s2, %s180
      %p182 = scmp.lt.s32.totalorder %s17, 1
      %s183 = scalar_select %p182, %s17, 1
      %p184 = scmp.lt.s32.totalorder %s18, 0
      %s185 = scalar_select %p184, %s18, 0
      %s186 = smul.addr %s183, 28
      %s187 = sadd.s32 %s185, %s186
      %s188 = smul.addr %s187, 4
      %s189 = scalar_lea.vmem %s0, %s188
      %p190 = scmp.lt.s32.totalorder %s17, 1
      %s191 = scalar_select %p190, %s17, 1
      %p192 = scmp.lt.s32.totalorder %s18, 0
      %s193 = scalar_select %p192, %s18, 0
      %s194 = smul.addr %s191, 6
      %s195 = sadd.s32 %s193, %s194
      %s196 = smul.addr %s195, 4
      %s197 = scalar_lea.vmem %s1, %s196
      %p198 = scmp.lt.s32.totalorder %s17, 1
      %s199 = scalar_select %p198, %s17, 1
      %p200 = scmp.lt.s32.totalorder %s18, 0
      %s201 = scalar_select %p200, %s18, 0
      %s202 = smul.addr %s199, 18
      %s203 = sadd.s32 %s201, %s202
      %s204 = smul.addr %s203, 4
      %s205 = scalar_lea.vmem %s2, %s204
      %v206 = vld [vmem:[%s189] sm:$0xf]
      %v207 = vld [vmem:[%s189 + $0x4] sm:$0xf]
      %v208 = vld [vmem:[%s189 + $0x8] sm:$0xf]
      %v209 = vld [vmem:[%s189 + $0xc] sm:$0xf]
      %v210 = vld [vmem:[%s189 + $0x10] sm:$0xf]
      %v211 = vld [vmem:[%s189 + $0x14] sm:$0xf]
      %v212 = vld [vmem:[%s189 + $0x18] sm:$0xf]
      %v213 = vld [vmem:[%s189 + $0x1c] sm:$0xf]
      %v214 = vld [vmem:[%s189 + $0x20] sm:$0xf]
      %v215 = vld [vmem:[%s189 + $0x24] sm:$0xf]
      %v216 = vld [vmem:[%s189 + $0x28] sm:$0xf]
      %v217 = vld [vmem:[%s189 + $0x2c] sm:$0xf]
      %v218 = vld [vmem:[%s189 + $0x30] sm:$0xf]
      %v219 = vld [vmem:[%s189 + $0x34] sm:$0xf]
      %v220 = vld [vmem:[%s189 + $0x38] sm:$0xf]
      %v221 = vld [vmem:[%s189 + $0x3c] sm:$0xf]
      %v222 = vld [vmem:[%s189 + $0x40] sm:$0xf]
      %v223 = vld [vmem:[%s189 + $0x44] sm:$0xf]
      %v224 = vld [vmem:[%s189 + $0x48] sm:$0xf]
      %v225 = vld [vmem:[%s189 + $0x4c] sm:$0xf]
      %v226 = vld [vmem:[%s189 + $0x50] sm:$0xf]
      %v227 = vld [vmem:[%s189 + $0x54] sm:$0xf]
      %v228 = vld [vmem:[%s189 + $0x58] sm:$0xf]
      %v229 = vld [vmem:[%s189 + $0x5c] sm:$0xf]
      %v230 = vld [vmem:[%s189 + $0x60] sm:$0xf]
      %v231 = vld [vmem:[%s189 + $0x64] sm:$0xf]
      %v232 = vld [vmem:[%s189 + $0x68] sm:$0xf]
      %v233 = vld [vmem:[%s189 + $0x6c] sm:$0xf]
      %v234 = vunpack.c.l.bf16 %v206
      %v235 = vunpack.c.l.bf16 %v207
      %v236 = vunpack.c.l.bf16 %v208
      %v237 = vunpack.c.l.bf16 %v209
      %v238 = vunpack.c.l.bf16 %v210
      %v239 = vunpack.c.l.bf16 %v211
      %v240 = vunpack.c.l.bf16 %v212
      %v241 = vunpack.c.l.bf16 %v213
      %v242 = vunpack.c.l.bf16 %v214
      %v243 = vunpack.c.l.bf16 %v215
      %v244 = vunpack.c.l.bf16 %v216
      %v245 = vunpack.c.l.bf16 %v217
      %v246 = vunpack.c.l.bf16 %v218
      %v247 = vunpack.c.l.bf16 %v219
      %v248 = vunpack.c.l.bf16 %v220
      %v249 = vunpack.c.l.bf16 %v221
      %v250 = vunpack.c.l.bf16 %v222
      %v251 = vunpack.c.l.bf16 %v223
      %v252 = vunpack.c.l.bf16 %v224
      %v253 = vunpack.c.l.bf16 %v225
      %v254 = vunpack.c.l.bf16 %v226
      %v255 = vunpack.c.l.bf16 %v227
      %v256 = vunpack.c.l.bf16 %v228
      %v257 = vunpack.c.l.bf16 %v229
      %v258 = vunpack.c.l.bf16 %v230
      %v259 = vunpack.c.l.bf16 %v231
      %v260 = vunpack.c.l.bf16 %v232
      %v261 = vunpack.c.l.bf16 %v233
      %v262 = vld [vmem:[%s197] sm:$0xf]
      %v263 = vld [vmem:[%s197 + $0x4] sm:$0xf]
      %v264 = vld [vmem:[%s197 + $0x8] sm:$0xf]
      %v265 = vld [vmem:[%s197 + $0xc] sm:$0xf]
      %v266 = vld [vmem:[%s197 + $0x10] sm:$0xf]
      %v267 = vld [vmem:[%s197 + $0x14] sm:$0xf]
      %v268 = vunpack.c.l.bf16 %v262
      %v269 = vunpack.c.l.bf16 %v263
      %v270 = vunpack.c.l.bf16 %v264
      %v271 = vunpack.c.l.bf16 %v265
      %v272 = vunpack.c.l.bf16 %v266
      %v273 = vunpack.c.l.bf16 %v267
      %v274 = vlaneseq
      %v275 = vshrl.u32 %v274, 7
      %v276 = vsub.s32 0, %v275
      %v277 = vrot.slane %v268, %v276
      %v278 = vmul.f32 %v234, %v277
      %v279 = vmul.f32 %v235, %v277
      %v280 = vmul.f32 %v236, %v277
      %v281 = vmul.f32 %v237, %v277
      %v282 = vmul.f32 %v238, %v277
      %v283 = vmul.f32 %v239, %v277
      %v284 = vmul.f32 %v240, %v277
      %v285 = vmul.f32 %v241, %v277
      %v286 = vmul.f32 %v242, %v277
      %v287 = vmul.f32 %v243, %v277
      %v288 = vmul.f32 %v244, %v277
      %v289 = vmul.f32 %v245, %v277
      %v290 = vmul.f32 %v246, %v277
      %v291 = vmul.f32 %v247, %v277
      %v292 = vmul.f32 %v248, %v277
      %v293 = vmul.f32 %v249, %v277
      %v294 = vmul.f32 %v250, %v277
      %v295 = vmul.f32 %v251, %v277
      %v296 = vadd.f32 %v278, 0.0
      %v297 = vadd.f32 %v279, 0.0
      %v298 = vadd.f32 %v280, 0.0
      %v299 = vadd.f32 %v281, 0.0
      %v300 = vadd.f32 %v282, 0.0
      %v301 = vadd.f32 %v283, 0.0
      %v302 = vadd.f32 %v284, 0.0
      %v303 = vadd.f32 %v285, 0.0
      %v304 = vadd.f32 %v286, 0.0
      %v305 = vadd.f32 %v287, 0.0
      %v306 = vadd.f32 %v288, 0.0
      %v307 = vadd.f32 %v289, 0.0
      %v308 = vadd.f32 %v290, 0.0
      %v309 = vadd.f32 %v291, 0.0
      %v310 = vadd.f32 %v292, 0.0
      %v311 = vadd.f32 %v293, 0.0
      %v312 = vadd.f32 %v294, 0.0
      %v313 = vadd.f32 %v295, 0.0
      %v314 = vlaneseq
      %v315 = vshrl.u32 %v314, 7
      %v316 = vsub.s32 0, %v315
      %v317 = vrot.slane %v269, %v316
      %v318 = vmul.f32 %v236, %v317
      %v319 = vmul.f32 %v237, %v317
      %v320 = vmul.f32 %v238, %v317
      %v321 = vmul.f32 %v239, %v317
      %v322 = vmul.f32 %v240, %v317
      %v323 = vmul.f32 %v241, %v317
      %v324 = vmul.f32 %v242, %v317
      %v325 = vmul.f32 %v243, %v317
      %v326 = vmul.f32 %v244, %v317
      %v327 = vmul.f32 %v245, %v317
      %v328 = vmul.f32 %v246, %v317
      %v329 = vmul.f32 %v247, %v317
      %v330 = vmul.f32 %v248, %v317
      %v331 = vmul.f32 %v249, %v317
      %v332 = vmul.f32 %v250, %v317
      %v333 = vmul.f32 %v251, %v317
      %v334 = vmul.f32 %v252, %v317
      %v335 = vmul.f32 %v253, %v317
      %v336 = vadd.f32 %v296, %v318
      %v337 = vadd.f32 %v297, %v319
      %v338 = vadd.f32 %v298, %v320
      %v339 = vadd.f32 %v299, %v321
      %v340 = vadd.f32 %v300, %v322
      %v341 = vadd.f32 %v301, %v323
      %v342 = vadd.f32 %v302, %v324
      %v343 = vadd.f32 %v303, %v325
      %v344 = vadd.f32 %v304, %v326
      %v345 = vadd.f32 %v305, %v327
      %v346 = vadd.f32 %v306, %v328
      %v347 = vadd.f32 %v307, %v329
      %v348 = vadd.f32 %v308, %v330
      %v349 = vadd.f32 %v309, %v331
      %v350 = vadd.f32 %v310, %v332
      %v351 = vadd.f32 %v311, %v333
      %v352 = vadd.f32 %v312, %v334
      %v353 = vadd.f32 %v313, %v335
      %v354 = vlaneseq
      %v355 = vshrl.u32 %v354, 7
      %v356 = vsub.s32 0, %v355
      %v357 = vrot.slane %v270, %v356
      %v358 = vmul.f32 %v238, %v357
      %v359 = vmul.f32 %v239, %v357
      %v360 = vmul.f32 %v240, %v357
      %v361 = vmul.f32 %v241, %v357
      %v362 = vmul.f32 %v242, %v357
      %v363 = vmul.f32 %v243, %v357
      %v364 = vmul.f32 %v244, %v357
      %v365 = vmul.f32 %v245, %v357
      %v366 = vmul.f32 %v246, %v357
      %v367 = vmul.f32 %v247, %v357
      %v368 = vmul.f32 %v248, %v357
      %v369 = vmul.f32 %v249, %v357
      %v370 = vmul.f32 %v250, %v357
      %v371 = vmul.f32 %v251, %v357
      %v372 = vmul.f32 %v252, %v357
      %v373 = vmul.f32 %v253, %v357
      %v374 = vmul.f32 %v254, %v357
      %v375 = vmul.f32 %v255, %v357
      %v376 = vadd.f32 %v336, %v358
      %v377 = vadd.f32 %v337, %v359
      %v378 = vadd.f32 %v338, %v360
      %v379 = vadd.f32 %v339, %v361
      %v380 = vadd.f32 %v340, %v362
      %v381 = vadd.f32 %v341, %v363
      %v382 = vadd.f32 %v342, %v364
      %v383 = vadd.f32 %v343, %v365
      %v384 = vadd.f32 %v344, %v366
      %v385 = vadd.f32 %v345, %v367
      %v386 = vadd.f32 %v346, %v368
      %v387 = vadd.f32 %v347, %v369
      %v388 = vadd.f32 %v348, %v370
      %v389 = vadd.f32 %v349, %v371
      %v390 = vadd.f32 %v350, %v372
      %v391 = vadd.f32 %v351, %v373
      %v392 = vadd.f32 %v352, %v374
      %v393 = vadd.f32 %v353, %v375
      %v394 = vlaneseq
      %v395 = vshrl.u32 %v394, 7
      %v396 = vsub.s32 0, %v395
      %v397 = vrot.slane %v271, %v396
      %v398 = vmul.f32 %v240, %v397
      %v399 = vmul.f32 %v241, %v397
      %v400 = vmul.f32 %v242, %v397
      %v401 = vmul.f32 %v243, %v397
      %v402 = vmul.f32 %v244, %v397
      %v403 = vmul.f32 %v245, %v397
      %v404 = vmul.f32 %v246, %v397
      %v405 = vmul.f32 %v247, %v397
      %v406 = vmul.f32 %v248, %v397
      %v407 = vmul.f32 %v249, %v397
      %v408 = vmul.f32 %v250, %v397
      %v409 = vmul.f32 %v251, %v397
      %v410 = vmul.f32 %v252, %v397
      %v411 = vmul.f32 %v253, %v397
      %v412 = vmul.f32 %v254, %v397
      %v413 = vmul.f32 %v255, %v397
      %v414 = vmul.f32 %v256, %v397
      %v415 = vmul.f32 %v257, %v397
      %v416 = vadd.f32 %v376, %v398
      %v417 = vadd.f32 %v377, %v399
      %v418 = vadd.f32 %v378, %v400
      %v419 = vadd.f32 %v379, %v401
      %v420 = vadd.f32 %v380, %v402
      %v421 = vadd.f32 %v381, %v403
      %v422 = vadd.f32 %v382, %v404
      %v423 = vadd.f32 %v383, %v405
      %v424 = vadd.f32 %v384, %v406
      %v425 = vadd.f32 %v385, %v407
      %v426 = vadd.f32 %v386, %v408
      %v427 = vadd.f32 %v387, %v409
      %v428 = vadd.f32 %v388, %v410
      %v429 = vadd.f32 %v389, %v411
      %v430 = vadd.f32 %v390, %v412
      %v431 = vadd.f32 %v391, %v413
      %v432 = vadd.f32 %v392, %v414
      %v433 = vadd.f32 %v393, %v415
      %v434 = vlaneseq
      %v435 = vshrl.u32 %v434, 7
      %v436 = vsub.s32 0, %v435
      %v437 = vrot.slane %v272, %v436
      %v438 = vmul.f32 %v242, %v437
      %v439 = vmul.f32 %v243, %v437
      %v440 = vmul.f32 %v244, %v437
      %v441 = vmul.f32 %v245, %v437
      %v442 = vmul.f32 %v246, %v437
      %v443 = vmul.f32 %v247, %v437
      %v444 = vmul.f32 %v248, %v437
      %v445 = vmul.f32 %v249, %v437
      %v446 = vmul.f32 %v250, %v437
      %v447 = vmul.f32 %v251, %v437
      %v448 = vmul.f32 %v252, %v437
      %v449 = vmul.f32 %v253, %v437
      %v450 = vmul.f32 %v254, %v437
      %v451 = vmul.f32 %v255, %v437
      %v452 = vmul.f32 %v256, %v437
      %v453 = vmul.f32 %v257, %v437
      %v454 = vmul.f32 %v258, %v437
      %v455 = vmul.f32 %v259, %v437
      %v456 = vadd.f32 %v416, %v438
      %v457 = vadd.f32 %v417, %v439
      %v458 = vadd.f32 %v418, %v440
      %v459 = vadd.f32 %v419, %v441
      %v460 = vadd.f32 %v420, %v442
      %v461 = vadd.f32 %v421, %v443
      %v462 = vadd.f32 %v422, %v444
      %v463 = vadd.f32 %v423, %v445
      %v464 = vadd.f32 %v424, %v446
      %v465 = vadd.f32 %v425, %v447
      %v466 = vadd.f32 %v426, %v448
      %v467 = vadd.f32 %v427, %v449
      %v468 = vadd.f32 %v428, %v450
      %v469 = vadd.f32 %v429, %v451
      %v470 = vadd.f32 %v430, %v452
      %v471 = vadd.f32 %v431, %v453
      %v472 = vadd.f32 %v432, %v454
      %v473 = vadd.f32 %v433, %v455
      %v474 = vlaneseq
      %v475 = vshrl.u32 %v474, 7
      %v476 = vsub.s32 0, %v475
      %v477 = vrot.slane %v273, %v476
      %v478 = vmul.f32 %v244, %v477
      %v479 = vmul.f32 %v245, %v477
      %v480 = vmul.f32 %v246, %v477
      %v481 = vmul.f32 %v247, %v477
      %v482 = vmul.f32 %v248, %v477
      %v483 = vmul.f32 %v249, %v477
      %v484 = vmul.f32 %v250, %v477
      %v485 = vmul.f32 %v251, %v477
      %v486 = vmul.f32 %v252, %v477
      %v487 = vmul.f32 %v253, %v477
      %v488 = vmul.f32 %v254, %v477
      %v489 = vmul.f32 %v255, %v477
      %v490 = vmul.f32 %v256, %v477
      %v491 = vmul.f32 %v257, %v477
      %v492 = vmul.f32 %v258, %v477
      %v493 = vmul.f32 %v259, %v477
      %v494 = vmul.f32 %v260, %v477
      %v495 = vmul.f32 %v261, %v477
      %v496 = vadd.f32 %v456, %v478
      %v497 = vadd.f32 %v457, %v479
      %v498 = vadd.f32 %v458, %v480
      %v499 = vadd.f32 %v459, %v481
      %v500 = vadd.f32 %v460, %v482
      %v501 = vadd.f32 %v461, %v483
      %v502 = vadd.f32 %v462, %v484
      %v503 = vadd.f32 %v463, %v485
      %v504 = vadd.f32 %v464, %v486
      %v505 = vadd.f32 %v465, %v487
      %v506 = vadd.f32 %v466, %v488
      %v507 = vadd.f32 %v467, %v489
      %v508 = vadd.f32 %v468, %v490
      %v509 = vadd.f32 %v469, %v491
      %v510 = vadd.f32 %v470, %v492
      %v511 = vadd.f32 %v471, %v493
      %v512 = vadd.f32 %v472, %v494
      %v513 = vadd.f32 %v473, %v495
      %v514 = vrot.slane %v234, 1
      %v515 = vrot.slane %v236, 1
      %v516 = vrot.slane %v238, 1
      %v517 = vrot.slane %v240, 1
      %v518 = vrot.slane %v242, 1
      %v519 = vrot.slane %v244, 1
      %v520 = vrot.slane %v246, 1
      %v521 = vrot.slane %v248, 1
      %v522 = vrot.slane %v250, 1
      %v523 = vrot.slane %v252, 1
      %v524 = vrot.slane %v254, 1
      %v525 = vrot.slane %v256, 1
      %v526 = vrot.slane %v258, 1
      %v527 = vrot.slane %v260, 1
      %v528 = vrot.slane %v235, 1
      %v529 = vrot.slane %v237, 1
      %v530 = vrot.slane %v239, 1
      %v531 = vrot.slane %v241, 1
      %v532 = vrot.slane %v243, 1
      %v533 = vrot.slane %v245, 1
      %v534 = vrot.slane %v247, 1
      %v535 = vrot.slane %v249, 1
      %v536 = vrot.slane %v251, 1
      %v537 = vrot.slane %v253, 1
      %v538 = vrot.slane %v255, 1
      %v539 = vrot.slane %v257, 1
      %v540 = vrot.slane %v259, 1
      %v541 = vrot.slane %v261, 1
      %v542 = vlaneseq
      %v543 = vshrl.u32 %v542, 7
      %vm544 = vcmp.lt.s32.totalorder %v543, 7
      %v545 = vsel %vm544, %v514, %v528
      %v546 = vsel %vm544, %v515, %v529
      %v547 = vsel %vm544, %v516, %v530
      %v548 = vsel %vm544, %v517, %v531
      %v549 = vsel %vm544, %v518, %v532
      %v550 = vsel %vm544, %v519, %v533
      %v551 = vsel %vm544, %v520, %v534
      %v552 = vsel %vm544, %v521, %v535
      %v553 = vsel %vm544, %v522, %v536
      %v554 = vsel %vm544, %v523, %v537
      %v555 = vsel %vm544, %v524, %v538
      %v556 = vsel %vm544, %v525, %v539
      %v557 = vsel %vm544, %v526, %v540
      %v558 = vsel %vm544, %v527, %v541
      %v559 = vsel %vm544, %v528, %v514
      %v560 = vsel %vm544, %v529, %v515
      %v561 = vsel %vm544, %v530, %v516
      %v562 = vsel %vm544, %v531, %v517
      %v563 = vsel %vm544, %v532, %v518
      %v564 = vsel %vm544, %v533, %v519
      %v565 = vsel %vm544, %v534, %v520
      %v566 = vsel %vm544, %v535, %v521
      %v567 = vsel %vm544, %v536, %v522
      %v568 = vsel %vm544, %v537, %v523
      %v569 = vsel %vm544, %v538, %v524
      %v570 = vsel %vm544, %v539, %v525
      %v571 = vsel %vm544, %v540, %v526
      %v572 = vsel %vm544, %v541, %v527
      %v573 = vlaneseq
      %v574 = vshrl.u32 %v573, 7
      %v575 = vsub.s32 1, %v574
      %v576 = vrot.slane %v268, %v575
      %v577 = vmul.f32 %v545, %v576
      %v578 = vmul.f32 %v559, %v576
      %v579 = vmul.f32 %v546, %v576
      %v580 = vmul.f32 %v560, %v576
      %v581 = vmul.f32 %v547, %v576
      %v582 = vmul.f32 %v561, %v576
      %v583 = vmul.f32 %v548, %v576
      %v584 = vmul.f32 %v562, %v576
      %v585 = vmul.f32 %v549, %v576
      %v586 = vmul.f32 %v563, %v576
      %v587 = vmul.f32 %v550, %v576
      %v588 = vmul.f32 %v564, %v576
      %v589 = vmul.f32 %v551, %v576
      %v590 = vmul.f32 %v565, %v576
      %v591 = vmul.f32 %v552, %v576
      %v592 = vmul.f32 %v566, %v576
      %v593 = vmul.f32 %v553, %v576
      %v594 = vmul.f32 %v567, %v576
      %v595 = vadd.f32 %v496, %v577
      %v596 = vadd.f32 %v497, %v578
      %v597 = vadd.f32 %v498, %v579
      %v598 = vadd.f32 %v499, %v580
      %v599 = vadd.f32 %v500, %v581
      %v600 = vadd.f32 %v501, %v582
      %v601 = vadd.f32 %v502, %v583
      %v602 = vadd.f32 %v503, %v584
      %v603 = vadd.f32 %v504, %v585
      %v604 = vadd.f32 %v505, %v586
      %v605 = vadd.f32 %v506, %v587
      %v606 = vadd.f32 %v507, %v588
      %v607 = vadd.f32 %v508, %v589
      %v608 = vadd.f32 %v509, %v590
      %v609 = vadd.f32 %v510, %v591
      %v610 = vadd.f32 %v511, %v592
      %v611 = vadd.f32 %v512, %v593
      %v612 = vadd.f32 %v513, %v594
      %v613 = vlaneseq
      %v614 = vshrl.u32 %v613, 7
      %v615 = vsub.s32 1, %v614
      %v616 = vrot.slane %v269, %v615
      %v617 = vmul.f32 %v546, %v616
      %v618 = vmul.f32 %v560, %v616
      %v619 = vmul.f32 %v547, %v616
      %v620 = vmul.f32 %v561, %v616
      %v621 = vmul.f32 %v548, %v616
      %v622 = vmul.f32 %v562, %v616
      %v623 = vmul.f32 %v549, %v616
      %v624 = vmul.f32 %v563, %v616
      %v625 = vmul.f32 %v550, %v616
      %v626 = vmul.f32 %v564, %v616
      %v627 = vmul.f32 %v551, %v616
      %v628 = vmul.f32 %v565, %v616
      %v629 = vmul.f32 %v552, %v616
      %v630 = vmul.f32 %v566, %v616
      %v631 = vmul.f32 %v553, %v616
      %v632 = vmul.f32 %v567, %v616
      %v633 = vmul.f32 %v554, %v616
      %v634 = vmul.f32 %v568, %v616
      %v635 = vadd.f32 %v595, %v617
      %v636 = vadd.f32 %v596, %v618
      %v637 = vadd.f32 %v597, %v619
      %v638 = vadd.f32 %v598, %v620
      %v639 = vadd.f32 %v599, %v621
      %v640 = vadd.f32 %v600, %v622
      %v641 = vadd.f32 %v601, %v623
      %v642 = vadd.f32 %v602, %v624
      %v643 = vadd.f32 %v603, %v625
      %v644 = vadd.f32 %v604, %v626
      %v645 = vadd.f32 %v605, %v627
      %v646 = vadd.f32 %v606, %v628
      %v647 = vadd.f32 %v607, %v629
      %v648 = vadd.f32 %v608, %v630
      %v649 = vadd.f32 %v609, %v631
      %v650 = vadd.f32 %v610, %v632
      %v651 = vadd.f32 %v611, %v633
      %v652 = vadd.f32 %v612, %v634
      %v653 = vlaneseq
      %v654 = vshrl.u32 %v653, 7
      %v655 = vsub.s32 1, %v654
      %v656 = vrot.slane %v270, %v655
      %v657 = vmul.f32 %v547, %v656
      %v658 = vmul.f32 %v561, %v656
      %v659 = vmul.f32 %v548, %v656
      %v660 = vmul.f32 %v562, %v656
      %v661 = vmul.f32 %v549, %v656
      %v662 = vmul.f32 %v563, %v656
      %v663 = vmul.f32 %v550, %v656
      %v664 = vmul.f32 %v564, %v656
      %v665 = vmul.f32 %v551, %v656
      %v666 = vmul.f32 %v565, %v656
      %v667 = vmul.f32 %v552, %v656
      %v668 = vmul.f32 %v566, %v656
      %v669 = vmul.f32 %v553, %v656
      %v670 = vmul.f32 %v567, %v656
      %v671 = vmul.f32 %v554, %v656
      %v672 = vmul.f32 %v568, %v656
      %v673 = vmul.f32 %v555, %v656
      %v674 = vmul.f32 %v569, %v656
      %v675 = vadd.f32 %v635, %v657
      %v676 = vadd.f32 %v636, %v658
      %v677 = vadd.f32 %v637, %v659
      %v678 = vadd.f32 %v638, %v660
      %v679 = vadd.f32 %v639, %v661
      %v680 = vadd.f32 %v640, %v662
      %v681 = vadd.f32 %v641, %v663
      %v682 = vadd.f32 %v642, %v664
      %v683 = vadd.f32 %v643, %v665
      %v684 = vadd.f32 %v644, %v666
      %v685 = vadd.f32 %v645, %v667
      %v686 = vadd.f32 %v646, %v668
      %v687 = vadd.f32 %v647, %v669
      %v688 = vadd.f32 %v648, %v670
      %v689 = vadd.f32 %v649, %v671
      %v690 = vadd.f32 %v650, %v672
      %v691 = vadd.f32 %v651, %v673
      %v692 = vadd.f32 %v652, %v674
      %v693 = vlaneseq
      %v694 = vshrl.u32 %v693, 7
      %v695 = vsub.s32 1, %v694
      %v696 = vrot.slane %v271, %v695
      %v697 = vmul.f32 %v548, %v696
      %v698 = vmul.f32 %v562, %v696
      %v699 = vmul.f32 %v549, %v696
      %v700 = vmul.f32 %v563, %v696
      %v701 = vmul.f32 %v550, %v696
      %v702 = vmul.f32 %v564, %v696
      %v703 = vmul.f32 %v551, %v696
      %v704 = vmul.f32 %v565, %v696
      %v705 = vmul.f32 %v552, %v696
      %v706 = vmul.f32 %v566, %v696
      %v707 = vmul.f32 %v553, %v696
      %v708 = vmul.f32 %v567, %v696
      %v709 = vmul.f32 %v554, %v696
      %v710 = vmul.f32 %v568, %v696
      %v711 = vmul.f32 %v555, %v696
      %v712 = vmul.f32 %v569, %v696
      %v713 = vmul.f32 %v556, %v696
      %v714 = vmul.f32 %v570, %v696
      %v715 = vadd.f32 %v675, %v697
      %v716 = vadd.f32 %v676, %v698
      %v717 = vadd.f32 %v677, %v699
      %v718 = vadd.f32 %v678, %v700
      %v719 = vadd.f32 %v679, %v701
      %v720 = vadd.f32 %v680, %v702
      %v721 = vadd.f32 %v681, %v703
      %v722 = vadd.f32 %v682, %v704
      %v723 = vadd.f32 %v683, %v705
      %v724 = vadd.f32 %v684, %v706
      %v725 = vadd.f32 %v685, %v707
      %v726 = vadd.f32 %v686, %v708
      %v727 = vadd.f32 %v687, %v709
      %v728 = vadd.f32 %v688, %v710
      %v729 = vadd.f32 %v689, %v711
      %v730 = vadd.f32 %v690, %v712
      %v731 = vadd.f32 %v691, %v713
      %v732 = vadd.f32 %v692, %v714
      %v733 = vlaneseq
      %v734 = vshrl.u32 %v733, 7
      %v735 = vsub.s32 1, %v734
      %v736 = vrot.slane %v272, %v735
      %v737 = vmul.f32 %v549, %v736
      %v738 = vmul.f32 %v563, %v736
      %v739 = vmul.f32 %v550, %v736
      %v740 = vmul.f32 %v564, %v736
      %v741 = vmul.f32 %v551, %v736
      %v742 = vmul.f32 %v565, %v736
      %v743 = vmul.f32 %v552, %v736
      %v744 = vmul.f32 %v566, %v736
      %v745 = vmul.f32 %v553, %v736
      %v746 = vmul.f32 %v567, %v736
      %v747 = vmul.f32 %v554, %v736
      %v748 = vmul.f32 %v568, %v736
      %v749 = vmul.f32 %v555, %v736
      %v750 = vmul.f32 %v569, %v736
      %v751 = vmul.f32 %v556, %v736
      %v752 = vmul.f32 %v570, %v736
      %v753 = vmul.f32 %v557, %v736
      %v754 = vmul.f32 %v571, %v736
      %v755 = vadd.f32 %v715, %v737
      %v756 = vadd.f32 %v716, %v738
      %v757 = vadd.f32 %v717, %v739
      %v758 = vadd.f32 %v718, %v740
      %v759 = vadd.f32 %v719, %v741
      %v760 = vadd.f32 %v720, %v742
      %v761 = vadd.f32 %v721, %v743
      %v762 = vadd.f32 %v722, %v744
      %v763 = vadd.f32 %v723, %v745
      %v764 = vadd.f32 %v724, %v746
      %v765 = vadd.f32 %v725, %v747
      %v766 = vadd.f32 %v726, %v748
      %v767 = vadd.f32 %v727, %v749
      %v768 = vadd.f32 %v728, %v750
      %v769 = vadd.f32 %v729, %v751
      %v770 = vadd.f32 %v730, %v752
      %v771 = vadd.f32 %v731, %v753
      %v772 = vadd.f32 %v732, %v754
      %v773 = vlaneseq
      %v774 = vshrl.u32 %v773, 7
      %v775 = vsub.s32 1, %v774
      %v776 = vrot.slane %v273, %v775
      %v777 = vmul.f32 %v550, %v776
      %v778 = vmul.f32 %v564, %v776
      %v779 = vmul.f32 %v551, %v776
      %v780 = vmul.f32 %v565, %v776
      %v781 = vmul.f32 %v552, %v776
      %v782 = vmul.f32 %v566, %v776
      %v783 = vmul.f32 %v553, %v776
      %v784 = vmul.f32 %v567, %v776
      %v785 = vmul.f32 %v554, %v776
      %v786 = vmul.f32 %v568, %v776
      %v787 = vmul.f32 %v555, %v776
      %v788 = vmul.f32 %v569, %v776
      %v789 = vmul.f32 %v556, %v776
      %v790 = vmul.f32 %v570, %v776
      %v791 = vmul.f32 %v557, %v776
      %v792 = vmul.f32 %v571, %v776
      %v793 = vmul.f32 %v558, %v776
      %v794 = vmul.f32 %v572, %v776
      %v795 = vadd.f32 %v755, %v777
      %v796 = vadd.f32 %v756, %v778
      %v797 = vadd.f32 %v757, %v779
      %v798 = vadd.f32 %v758, %v780
      %v799 = vadd.f32 %v759, %v781
      %v800 = vadd.f32 %v760, %v782
      %v801 = vadd.f32 %v761, %v783
      %v802 = vadd.f32 %v762, %v784
      %v803 = vadd.f32 %v763, %v785
      %v804 = vadd.f32 %v764, %v786
      %v805 = vadd.f32 %v765, %v787
      %v806 = vadd.f32 %v766, %v788
      %v807 = vadd.f32 %v767, %v789
      %v808 = vadd.f32 %v768, %v790
      %v809 = vadd.f32 %v769, %v791
      %v810 = vadd.f32 %v770, %v792
      %v811 = vadd.f32 %v771, %v793
      %v812 = vadd.f32 %v772, %v794
      %v813 = vrot.slane %v234, 2
      %v814 = vrot.slane %v236, 2
      %v815 = vrot.slane %v238, 2
      %v816 = vrot.slane %v240, 2
      %v817 = vrot.slane %v242, 2
      %v818 = vrot.slane %v244, 2
      %v819 = vrot.slane %v246, 2
      %v820 = vrot.slane %v248, 2
      %v821 = vrot.slane %v250, 2
      %v822 = vrot.slane %v252, 2
      %v823 = vrot.slane %v254, 2
      %v824 = vrot.slane %v256, 2
      %v825 = vrot.slane %v258, 2
      %v826 = vrot.slane %v260, 2
      %v827 = vrot.slane %v235, 2
      %v828 = vrot.slane %v237, 2
      %v829 = vrot.slane %v239, 2
      %v830 = vrot.slane %v241, 2
      %v831 = vrot.slane %v243, 2
      %v832 = vrot.slane %v245, 2
      %v833 = vrot.slane %v247, 2
      %v834 = vrot.slane %v249, 2
      %v835 = vrot.slane %v251, 2
      %v836 = vrot.slane %v253, 2
      %v837 = vrot.slane %v255, 2
      %v838 = vrot.slane %v257, 2
      %v839 = vrot.slane %v259, 2
      %v840 = vrot.slane %v261, 2
      %vm841 = vcmp.lt.s32.totalorder %v543, 6
      %v842 = vsel %vm841, %v813, %v827
      %v843 = vsel %vm841, %v814, %v828
      %v844 = vsel %vm841, %v815, %v829
      %v845 = vsel %vm841, %v816, %v830
      %v846 = vsel %vm841, %v817, %v831
      %v847 = vsel %vm841, %v818, %v832
      %v848 = vsel %vm841, %v819, %v833
      %v849 = vsel %vm841, %v820, %v834
      %v850 = vsel %vm841, %v821, %v835
      %v851 = vsel %vm841, %v822, %v836
      %v852 = vsel %vm841, %v823, %v837
      %v853 = vsel %vm841, %v824, %v838
      %v854 = vsel %vm841, %v825, %v839
      %v855 = vsel %vm841, %v826, %v840
      %v856 = vsel %vm841, %v827, %v813
      %v857 = vsel %vm841, %v828, %v814
      %v858 = vsel %vm841, %v829, %v815
      %v859 = vsel %vm841, %v830, %v816
      %v860 = vsel %vm841, %v831, %v817
      %v861 = vsel %vm841, %v832, %v818
      %v862 = vsel %vm841, %v833, %v819
      %v863 = vsel %vm841, %v834, %v820
      %v864 = vsel %vm841, %v835, %v821
      %v865 = vsel %vm841, %v836, %v822
      %v866 = vsel %vm841, %v837, %v823
      %v867 = vsel %vm841, %v838, %v824
      %v868 = vsel %vm841, %v839, %v825
      %v869 = vsel %vm841, %v840, %v826
      %v870 = vlaneseq
      %v871 = vshrl.u32 %v870, 7
      %v872 = vsub.s32 2, %v871
      %v873 = vrot.slane %v268, %v872
      %v874 = vmul.f32 %v842, %v873
      %v875 = vmul.f32 %v856, %v873
      %v876 = vmul.f32 %v843, %v873
      %v877 = vmul.f32 %v857, %v873
      %v878 = vmul.f32 %v844, %v873
      %v879 = vmul.f32 %v858, %v873
      %v880 = vmul.f32 %v845, %v873
      %v881 = vmul.f32 %v859, %v873
      %v882 = vmul.f32 %v846, %v873
      %v883 = vmul.f32 %v860, %v873
      %v884 = vmul.f32 %v847, %v873
      %v885 = vmul.f32 %v861, %v873
      %v886 = vmul.f32 %v848, %v873
      %v887 = vmul.f32 %v862, %v873
      %v888 = vmul.f32 %v849, %v873
      %v889 = vmul.f32 %v863, %v873
      %v890 = vmul.f32 %v850, %v873
      %v891 = vmul.f32 %v864, %v873
      %v892 = vadd.f32 %v795, %v874
      %v893 = vadd.f32 %v796, %v875
      %v894 = vadd.f32 %v797, %v876
      %v895 = vadd.f32 %v798, %v877
      %v896 = vadd.f32 %v799, %v878
      %v897 = vadd.f32 %v800, %v879
      %v898 = vadd.f32 %v801, %v880
      %v899 = vadd.f32 %v802, %v881
      %v900 = vadd.f32 %v803, %v882
      %v901 = vadd.f32 %v804, %v883
      %v902 = vadd.f32 %v805, %v884
      %v903 = vadd.f32 %v806, %v885
      %v904 = vadd.f32 %v807, %v886
      %v905 = vadd.f32 %v808, %v887
      %v906 = vadd.f32 %v809, %v888
      %v907 = vadd.f32 %v810, %v889
      %v908 = vadd.f32 %v811, %v890
      %v909 = vadd.f32 %v812, %v891
      %v910 = vlaneseq
      %v911 = vshrl.u32 %v910, 7
      %v912 = vsub.s32 2, %v911
      %v913 = vrot.slane %v269, %v912
      %v914 = vmul.f32 %v843, %v913
      %v915 = vmul.f32 %v857, %v913
      %v916 = vmul.f32 %v844, %v913
      %v917 = vmul.f32 %v858, %v913
      %v918 = vmul.f32 %v845, %v913
      %v919 = vmul.f32 %v859, %v913
      %v920 = vmul.f32 %v846, %v913
      %v921 = vmul.f32 %v860, %v913
      %v922 = vmul.f32 %v847, %v913
      %v923 = vmul.f32 %v861, %v913
      %v924 = vmul.f32 %v848, %v913
      %v925 = vmul.f32 %v862, %v913
      %v926 = vmul.f32 %v849, %v913
      %v927 = vmul.f32 %v863, %v913
      %v928 = vmul.f32 %v850, %v913
      %v929 = vmul.f32 %v864, %v913
      %v930 = vmul.f32 %v851, %v913
      %v931 = vmul.f32 %v865, %v913
      %v932 = vadd.f32 %v892, %v914
      %v933 = vadd.f32 %v893, %v915
      %v934 = vadd.f32 %v894, %v916
      %v935 = vadd.f32 %v895, %v917
      %v936 = vadd.f32 %v896, %v918
      %v937 = vadd.f32 %v897, %v919
      %v938 = vadd.f32 %v898, %v920
      %v939 = vadd.f32 %v899, %v921
      %v940 = vadd.f32 %v900, %v922
      %v941 = vadd.f32 %v901, %v923
      %v942 = vadd.f32 %v902, %v924
      %v943 = vadd.f32 %v903, %v925
      %v944 = vadd.f32 %v904, %v926
      %v945 = vadd.f32 %v905, %v927
      %v946 = vadd.f32 %v906, %v928
      %v947 = vadd.f32 %v907, %v929
      %v948 = vadd.f32 %v908, %v930
      %v949 = vadd.f32 %v909, %v931
      %v950 = vlaneseq
      %v951 = vshrl.u32 %v950, 7
      %v952 = vsub.s32 2, %v951
      %v953 = vrot.slane %v270, %v952
      %v954 = vmul.f32 %v844, %v953
      %v955 = vmul.f32 %v858, %v953
      %v956 = vmul.f32 %v845, %v953
      %v957 = vmul.f32 %v859, %v953
      %v958 = vmul.f32 %v846, %v953
      %v959 = vmul.f32 %v860, %v953
      %v960 = vmul.f32 %v847, %v953
      %v961 = vmul.f32 %v861, %v953
      %v962 = vmul.f32 %v848, %v953
      %v963 = vmul.f32 %v862, %v953
      %v964 = vmul.f32 %v849, %v953
      %v965 = vmul.f32 %v863, %v953
      %v966 = vmul.f32 %v850, %v953
      %v967 = vmul.f32 %v864, %v953
      %v968 = vmul.f32 %v851, %v953
      %v969 = vmul.f32 %v865, %v953
      %v970 = vmul.f32 %v852, %v953
      %v971 = vmul.f32 %v866, %v953
      %v972 = vadd.f32 %v932, %v954
      %v973 = vadd.f32 %v933, %v955
      %v974 = vadd.f32 %v934, %v956
      %v975 = vadd.f32 %v935, %v957
      %v976 = vadd.f32 %v936, %v958
      %v977 = vadd.f32 %v937, %v959
      %v978 = vadd.f32 %v938, %v960
      %v979 = vadd.f32 %v939, %v961
      %v980 = vadd.f32 %v940, %v962
      %v981 = vadd.f32 %v941, %v963
      %v982 = vadd.f32 %v942, %v964
      %v983 = vadd.f32 %v943, %v965
      %v984 = vadd.f32 %v944, %v966
      %v985 = vadd.f32 %v945, %v967
      %v986 = vadd.f32 %v946, %v968
      %v987 = vadd.f32 %v947, %v969
      %v988 = vadd.f32 %v948, %v970
      %v989 = vadd.f32 %v949, %v971
      %v990 = vlaneseq
      %v991 = vshrl.u32 %v990, 7
      %v992 = vsub.s32 2, %v991
      %v993 = vrot.slane %v271, %v992
      %v994 = vmul.f32 %v845, %v993
      %v995 = vmul.f32 %v859, %v993
      %v996 = vmul.f32 %v846, %v993
      %v997 = vmul.f32 %v860, %v993
      %v998 = vmul.f32 %v847, %v993
      %v999 = vmul.f32 %v861, %v993
      %v1000 = vmul.f32 %v848, %v993
      %v1001 = vmul.f32 %v862, %v993
      %v1002 = vmul.f32 %v849, %v993
      %v1003 = vmul.f32 %v863, %v993
      %v1004 = vmul.f32 %v850, %v993
      %v1005 = vmul.f32 %v864, %v993
      %v1006 = vmul.f32 %v851, %v993
      %v1007 = vmul.f32 %v865, %v993
      %v1008 = vmul.f32 %v852, %v993
      %v1009 = vmul.f32 %v866, %v993
      %v1010 = vmul.f32 %v853, %v993
      %v1011 = vmul.f32 %v867, %v993
      %v1012 = vadd.f32 %v972, %v994
      %v1013 = vadd.f32 %v973, %v995
      %v1014 = vadd.f32 %v974, %v996
      %v1015 = vadd.f32 %v975, %v997
      %v1016 = vadd.f32 %v976, %v998
      %v1017 = vadd.f32 %v977, %v999
      %v1018 = vadd.f32 %v978, %v1000
      %v1019 = vadd.f32 %v979, %v1001
      %v1020 = vadd.f32 %v980, %v1002
      %v1021 = vadd.f32 %v981, %v1003
      %v1022 = vadd.f32 %v982, %v1004
      %v1023 = vadd.f32 %v983, %v1005
      %v1024 = vadd.f32 %v984, %v1006
      %v1025 = vadd.f32 %v985, %v1007
      %v1026 = vadd.f32 %v986, %v1008
      %v1027 = vadd.f32 %v987, %v1009
      %v1028 = vadd.f32 %v988, %v1010
      %v1029 = vadd.f32 %v989, %v1011
      %v1030 = vlaneseq
      %v1031 = vshrl.u32 %v1030, 7
      %v1032 = vsub.s32 2, %v1031
      %v1033 = vrot.slane %v272, %v1032
      %v1034 = vmul.f32 %v846, %v1033
      %v1035 = vmul.f32 %v860, %v1033
      %v1036 = vmul.f32 %v847, %v1033
      %v1037 = vmul.f32 %v861, %v1033
      %v1038 = vmul.f32 %v848, %v1033
      %v1039 = vmul.f32 %v862, %v1033
      %v1040 = vmul.f32 %v849, %v1033
      %v1041 = vmul.f32 %v863, %v1033
      %v1042 = vmul.f32 %v850, %v1033
      %v1043 = vmul.f32 %v864, %v1033
      %v1044 = vmul.f32 %v851, %v1033
      %v1045 = vmul.f32 %v865, %v1033
      %v1046 = vmul.f32 %v852, %v1033
      %v1047 = vmul.f32 %v866, %v1033
      %v1048 = vmul.f32 %v853, %v1033
      %v1049 = vmul.f32 %v867, %v1033
      %v1050 = vmul.f32 %v854, %v1033
      %v1051 = vmul.f32 %v868, %v1033
      %v1052 = vadd.f32 %v1012, %v1034
      %v1053 = vadd.f32 %v1013, %v1035
      %v1054 = vadd.f32 %v1014, %v1036
      %v1055 = vadd.f32 %v1015, %v1037
      %v1056 = vadd.f32 %v1016, %v1038
      %v1057 = vadd.f32 %v1017, %v1039
      %v1058 = vadd.f32 %v1018, %v1040
      %v1059 = vadd.f32 %v1019, %v1041
      %v1060 = vadd.f32 %v1020, %v1042
      %v1061 = vadd.f32 %v1021, %v1043
      %v1062 = vadd.f32 %v1022, %v1044
      %v1063 = vadd.f32 %v1023, %v1045
      %v1064 = vadd.f32 %v1024, %v1046
      %v1065 = vadd.f32 %v1025, %v1047
      %v1066 = vadd.f32 %v1026, %v1048
      %v1067 = vadd.f32 %v1027, %v1049
      %v1068 = vadd.f32 %v1028, %v1050
      %v1069 = vadd.f32 %v1029, %v1051
      %v1070 = vlaneseq
      %v1071 = vshrl.u32 %v1070, 7
      %v1072 = vsub.s32 2, %v1071
      %v1073 = vrot.slane %v273, %v1072
      %v1074 = vmul.f32 %v847, %v1073
      %v1075 = vmul.f32 %v861, %v1073
      %v1076 = vmul.f32 %v848, %v1073
      %v1077 = vmul.f32 %v862, %v1073
      %v1078 = vmul.f32 %v849, %v1073
      %v1079 = vmul.f32 %v863, %v1073
      %v1080 = vmul.f32 %v850, %v1073
      %v1081 = vmul.f32 %v864, %v1073
      %v1082 = vmul.f32 %v851, %v1073
      %v1083 = vmul.f32 %v865, %v1073
      %v1084 = vmul.f32 %v852, %v1073
      %v1085 = vmul.f32 %v866, %v1073
      %v1086 = vmul.f32 %v853, %v1073
      %v1087 = vmul.f32 %v867, %v1073
      %v1088 = vmul.f32 %v854, %v1073
      %v1089 = vmul.f32 %v868, %v1073
      %v1090 = vmul.f32 %v855, %v1073
      %v1091 = vmul.f32 %v869, %v1073
      %v1092 = vadd.f32 %v1052, %v1074
      %v1093 = vadd.f32 %v1053, %v1075
      %v1094 = vadd.f32 %v1054, %v1076
      %v1095 = vadd.f32 %v1055, %v1077
      %v1096 = vadd.f32 %v1056, %v1078
      %v1097 = vadd.f32 %v1057, %v1079
      %v1098 = vadd.f32 %v1058, %v1080
      %v1099 = vadd.f32 %v1059, %v1081
      %v1100 = vadd.f32 %v1060, %v1082
      %v1101 = vadd.f32 %v1061, %v1083
      %v1102 = vadd.f32 %v1062, %v1084
      %v1103 = vadd.f32 %v1063, %v1085
      %v1104 = vadd.f32 %v1064, %v1086
      %v1105 = vadd.f32 %v1065, %v1087
      %v1106 = vadd.f32 %v1066, %v1088
      %v1107 = vadd.f32 %v1067, %v1089
      %v1108 = vadd.f32 %v1068, %v1090
      %v1109 = vadd.f32 %v1069, %v1091
      %v1110 = vrot.slane %v234, 3
      %v1111 = vrot.slane %v236, 3
      %v1112 = vrot.slane %v238, 3
      %v1113 = vrot.slane %v240, 3
      %v1114 = vrot.slane %v242, 3
      %v1115 = vrot.slane %v244, 3
      %v1116 = vrot.slane %v246, 3
      %v1117 = vrot.slane %v248, 3
      %v1118 = vrot.slane %v250, 3
      %v1119 = vrot.slane %v252, 3
      %v1120 = vrot.slane %v254, 3
      %v1121 = vrot.slane %v256, 3
      %v1122 = vrot.slane %v258, 3
      %v1123 = vrot.slane %v260, 3
      %v1124 = vrot.slane %v235, 3
      %v1125 = vrot.slane %v237, 3
      %v1126 = vrot.slane %v239, 3
      %v1127 = vrot.slane %v241, 3
      %v1128 = vrot.slane %v243, 3
      %v1129 = vrot.slane %v245, 3
      %v1130 = vrot.slane %v247, 3
      %v1131 = vrot.slane %v249, 3
      %v1132 = vrot.slane %v251, 3
      %v1133 = vrot.slane %v253, 3
      %v1134 = vrot.slane %v255, 3
      %v1135 = vrot.slane %v257, 3
      %v1136 = vrot.slane %v259, 3
      %v1137 = vrot.slane %v261, 3
      %vm1138 = vcmp.lt.s32.totalorder %v543, 5
      %v1139 = vsel %vm1138, %v1110, %v1124
      %v1140 = vsel %vm1138, %v1111, %v1125
      %v1141 = vsel %vm1138, %v1112, %v1126
      %v1142 = vsel %vm1138, %v1113, %v1127
      %v1143 = vsel %vm1138, %v1114, %v1128
      %v1144 = vsel %vm1138, %v1115, %v1129
      %v1145 = vsel %vm1138, %v1116, %v1130
      %v1146 = vsel %vm1138, %v1117, %v1131
      %v1147 = vsel %vm1138, %v1118, %v1132
      %v1148 = vsel %vm1138, %v1119, %v1133
      %v1149 = vsel %vm1138, %v1120, %v1134
      %v1150 = vsel %vm1138, %v1121, %v1135
      %v1151 = vsel %vm1138, %v1122, %v1136
      %v1152 = vsel %vm1138, %v1123, %v1137
      %v1153 = vsel %vm1138, %v1124, %v1110
      %v1154 = vsel %vm1138, %v1125, %v1111
      %v1155 = vsel %vm1138, %v1126, %v1112
      %v1156 = vsel %vm1138, %v1127, %v1113
      %v1157 = vsel %vm1138, %v1128, %v1114
      %v1158 = vsel %vm1138, %v1129, %v1115
      %v1159 = vsel %vm1138, %v1130, %v1116
      %v1160 = vsel %vm1138, %v1131, %v1117
      %v1161 = vsel %vm1138, %v1132, %v1118
      %v1162 = vsel %vm1138, %v1133, %v1119
      %v1163 = vsel %vm1138, %v1134, %v1120
      %v1164 = vsel %vm1138, %v1135, %v1121
      %v1165 = vsel %vm1138, %v1136, %v1122
      %v1166 = vsel %vm1138, %v1137, %v1123
      %v1167 = vlaneseq
      %v1168 = vshrl.u32 %v1167, 7
      %v1169 = vsub.s32 3, %v1168
      %v1170 = vrot.slane %v268, %v1169
      %v1171 = vmul.f32 %v1139, %v1170
      %v1172 = vmul.f32 %v1153, %v1170
      %v1173 = vmul.f32 %v1140, %v1170
      %v1174 = vmul.f32 %v1154, %v1170
      %v1175 = vmul.f32 %v1141, %v1170
      %v1176 = vmul.f32 %v1155, %v1170
      %v1177 = vmul.f32 %v1142, %v1170
      %v1178 = vmul.f32 %v1156, %v1170
      %v1179 = vmul.f32 %v1143, %v1170
      %v1180 = vmul.f32 %v1157, %v1170
      %v1181 = vmul.f32 %v1144, %v1170
      %v1182 = vmul.f32 %v1158, %v1170
      %v1183 = vmul.f32 %v1145, %v1170
      %v1184 = vmul.f32 %v1159, %v1170
      %v1185 = vmul.f32 %v1146, %v1170
      %v1186 = vmul.f32 %v1160, %v1170
      %v1187 = vmul.f32 %v1147, %v1170
      %v1188 = vmul.f32 %v1161, %v1170
      %v1189 = vadd.f32 %v1092, %v1171
      %v1190 = vadd.f32 %v1093, %v1172
      %v1191 = vadd.f32 %v1094, %v1173
      %v1192 = vadd.f32 %v1095, %v1174
      %v1193 = vadd.f32 %v1096, %v1175
      %v1194 = vadd.f32 %v1097, %v1176
      %v1195 = vadd.f32 %v1098, %v1177
      %v1196 = vadd.f32 %v1099, %v1178
      %v1197 = vadd.f32 %v1100, %v1179
      %v1198 = vadd.f32 %v1101, %v1180
      %v1199 = vadd.f32 %v1102, %v1181
      %v1200 = vadd.f32 %v1103, %v1182
      %v1201 = vadd.f32 %v1104, %v1183
      %v1202 = vadd.f32 %v1105, %v1184
      %v1203 = vadd.f32 %v1106, %v1185
      %v1204 = vadd.f32 %v1107, %v1186
      %v1205 = vadd.f32 %v1108, %v1187
      %v1206 = vadd.f32 %v1109, %v1188
      %v1207 = vlaneseq
      %v1208 = vshrl.u32 %v1207, 7
      %v1209 = vsub.s32 3, %v1208
      %v1210 = vrot.slane %v269, %v1209
      %v1211 = vmul.f32 %v1140, %v1210
      %v1212 = vmul.f32 %v1154, %v1210
      %v1213 = vmul.f32 %v1141, %v1210
      %v1214 = vmul.f32 %v1155, %v1210
      %v1215 = vmul.f32 %v1142, %v1210
      %v1216 = vmul.f32 %v1156, %v1210
      %v1217 = vmul.f32 %v1143, %v1210
      %v1218 = vmul.f32 %v1157, %v1210
      %v1219 = vmul.f32 %v1144, %v1210
      %v1220 = vmul.f32 %v1158, %v1210
      %v1221 = vmul.f32 %v1145, %v1210
      %v1222 = vmul.f32 %v1159, %v1210
      %v1223 = vmul.f32 %v1146, %v1210
      %v1224 = vmul.f32 %v1160, %v1210
      %v1225 = vmul.f32 %v1147, %v1210
      %v1226 = vmul.f32 %v1161, %v1210
      %v1227 = vmul.f32 %v1148, %v1210
      %v1228 = vmul.f32 %v1162, %v1210
      %v1229 = vadd.f32 %v1189, %v1211
      %v1230 = vadd.f32 %v1190, %v1212
      %v1231 = vadd.f32 %v1191, %v1213
      %v1232 = vadd.f32 %v1192, %v1214
      %v1233 = vadd.f32 %v1193, %v1215
      %v1234 = vadd.f32 %v1194, %v1216
      %v1235 = vadd.f32 %v1195, %v1217
      %v1236 = vadd.f32 %v1196, %v1218
      %v1237 = vadd.f32 %v1197, %v1219
      %v1238 = vadd.f32 %v1198, %v1220
      %v1239 = vadd.f32 %v1199, %v1221
      %v1240 = vadd.f32 %v1200, %v1222
      %v1241 = vadd.f32 %v1201, %v1223
      %v1242 = vadd.f32 %v1202, %v1224
      %v1243 = vadd.f32 %v1203, %v1225
      %v1244 = vadd.f32 %v1204, %v1226
      %v1245 = vadd.f32 %v1205, %v1227
      %v1246 = vadd.f32 %v1206, %v1228
      %v1247 = vlaneseq
      %v1248 = vshrl.u32 %v1247, 7
      %v1249 = vsub.s32 3, %v1248
      %v1250 = vrot.slane %v270, %v1249
      %v1251 = vmul.f32 %v1141, %v1250
      %v1252 = vmul.f32 %v1155, %v1250
      %v1253 = vmul.f32 %v1142, %v1250
      %v1254 = vmul.f32 %v1156, %v1250
      %v1255 = vmul.f32 %v1143, %v1250
      %v1256 = vmul.f32 %v1157, %v1250
      %v1257 = vmul.f32 %v1144, %v1250
      %v1258 = vmul.f32 %v1158, %v1250
      %v1259 = vmul.f32 %v1145, %v1250
      %v1260 = vmul.f32 %v1159, %v1250
      %v1261 = vmul.f32 %v1146, %v1250
      %v1262 = vmul.f32 %v1160, %v1250
      %v1263 = vmul.f32 %v1147, %v1250
      %v1264 = vmul.f32 %v1161, %v1250
      %v1265 = vmul.f32 %v1148, %v1250
      %v1266 = vmul.f32 %v1162, %v1250
      %v1267 = vmul.f32 %v1149, %v1250
      %v1268 = vmul.f32 %v1163, %v1250
      %v1269 = vadd.f32 %v1229, %v1251
      %v1270 = vadd.f32 %v1230, %v1252
      %v1271 = vadd.f32 %v1231, %v1253
      %v1272 = vadd.f32 %v1232, %v1254
      %v1273 = vadd.f32 %v1233, %v1255
      %v1274 = vadd.f32 %v1234, %v1256
      %v1275 = vadd.f32 %v1235, %v1257
      %v1276 = vadd.f32 %v1236, %v1258
      %v1277 = vadd.f32 %v1237, %v1259
      %v1278 = vadd.f32 %v1238, %v1260
      %v1279 = vadd.f32 %v1239, %v1261
      %v1280 = vadd.f32 %v1240, %v1262
      %v1281 = vadd.f32 %v1241, %v1263
      %v1282 = vadd.f32 %v1242, %v1264
      %v1283 = vadd.f32 %v1243, %v1265
      %v1284 = vadd.f32 %v1244, %v1266
      %v1285 = vadd.f32 %v1245, %v1267
      %v1286 = vadd.f32 %v1246, %v1268
      %v1287 = vlaneseq
      %v1288 = vshrl.u32 %v1287, 7
      %v1289 = vsub.s32 3, %v1288
      %v1290 = vrot.slane %v271, %v1289
      %v1291 = vmul.f32 %v1142, %v1290
      %v1292 = vmul.f32 %v1156, %v1290
      %v1293 = vmul.f32 %v1143, %v1290
      %v1294 = vmul.f32 %v1157, %v1290
      %v1295 = vmul.f32 %v1144, %v1290
      %v1296 = vmul.f32 %v1158, %v1290
      %v1297 = vmul.f32 %v1145, %v1290
      %v1298 = vmul.f32 %v1159, %v1290
      %v1299 = vmul.f32 %v1146, %v1290
      %v1300 = vmul.f32 %v1160, %v1290
      %v1301 = vmul.f32 %v1147, %v1290
      %v1302 = vmul.f32 %v1161, %v1290
      %v1303 = vmul.f32 %v1148, %v1290
      %v1304 = vmul.f32 %v1162, %v1290
      %v1305 = vmul.f32 %v1149, %v1290
      %v1306 = vmul.f32 %v1163, %v1290
      %v1307 = vmul.f32 %v1150, %v1290
      %v1308 = vmul.f32 %v1164, %v1290
      %v1309 = vadd.f32 %v1269, %v1291
      %v1310 = vadd.f32 %v1270, %v1292
      %v1311 = vadd.f32 %v1271, %v1293
      %v1312 = vadd.f32 %v1272, %v1294
      %v1313 = vadd.f32 %v1273, %v1295
      %v1314 = vadd.f32 %v1274, %v1296
      %v1315 = vadd.f32 %v1275, %v1297
      %v1316 = vadd.f32 %v1276, %v1298
      %v1317 = vadd.f32 %v1277, %v1299
      %v1318 = vadd.f32 %v1278, %v1300
      %v1319 = vadd.f32 %v1279, %v1301
      %v1320 = vadd.f32 %v1280, %v1302
      %v1321 = vadd.f32 %v1281, %v1303
      %v1322 = vadd.f32 %v1282, %v1304
      %v1323 = vadd.f32 %v1283, %v1305
      %v1324 = vadd.f32 %v1284, %v1306
      %v1325 = vadd.f32 %v1285, %v1307
      %v1326 = vadd.f32 %v1286, %v1308
      %v1327 = vlaneseq
      %v1328 = vshrl.u32 %v1327, 7
      %v1329 = vsub.s32 3, %v1328
      %v1330 = vrot.slane %v272, %v1329
      %v1331 = vmul.f32 %v1143, %v1330
      %v1332 = vmul.f32 %v1157, %v1330
      %v1333 = vmul.f32 %v1144, %v1330
      %v1334 = vmul.f32 %v1158, %v1330
      %v1335 = vmul.f32 %v1145, %v1330
      %v1336 = vmul.f32 %v1159, %v1330
      %v1337 = vmul.f32 %v1146, %v1330
      %v1338 = vmul.f32 %v1160, %v1330
      %v1339 = vmul.f32 %v1147, %v1330
      %v1340 = vmul.f32 %v1161, %v1330
      %v1341 = vmul.f32 %v1148, %v1330
      %v1342 = vmul.f32 %v1162, %v1330
      %v1343 = vmul.f32 %v1149, %v1330
      %v1344 = vmul.f32 %v1163, %v1330
      %v1345 = vmul.f32 %v1150, %v1330
      %v1346 = vmul.f32 %v1164, %v1330
      %v1347 = vmul.f32 %v1151, %v1330
      %v1348 = vmul.f32 %v1165, %v1330
      %v1349 = vadd.f32 %v1309, %v1331
      %v1350 = vadd.f32 %v1310, %v1332
      %v1351 = vadd.f32 %v1311, %v1333
      %v1352 = vadd.f32 %v1312, %v1334
      %v1353 = vadd.f32 %v1313, %v1335
      %v1354 = vadd.f32 %v1314, %v1336
      %v1355 = vadd.f32 %v1315, %v1337
      %v1356 = vadd.f32 %v1316, %v1338
      %v1357 = vadd.f32 %v1317, %v1339
      %v1358 = vadd.f32 %v1318, %v1340
      %v1359 = vadd.f32 %v1319, %v1341
      %v1360 = vadd.f32 %v1320, %v1342
      %v1361 = vadd.f32 %v1321, %v1343
      %v1362 = vadd.f32 %v1322, %v1344
      %v1363 = vadd.f32 %v1323, %v1345
      %v1364 = vadd.f32 %v1324, %v1346
      %v1365 = vadd.f32 %v1325, %v1347
      %v1366 = vadd.f32 %v1326, %v1348
      %v1367 = vlaneseq
      %v1368 = vshrl.u32 %v1367, 7
      %v1369 = vsub.s32 3, %v1368
      %v1370 = vrot.slane %v273, %v1369
      %v1371 = vmul.f32 %v1144, %v1370
      %v1372 = vmul.f32 %v1158, %v1370
      %v1373 = vmul.f32 %v1145, %v1370
      %v1374 = vmul.f32 %v1159, %v1370
      %v1375 = vmul.f32 %v1146, %v1370
      %v1376 = vmul.f32 %v1160, %v1370
      %v1377 = vmul.f32 %v1147, %v1370
      %v1378 = vmul.f32 %v1161, %v1370
      %v1379 = vmul.f32 %v1148, %v1370
      %v1380 = vmul.f32 %v1162, %v1370
      %v1381 = vmul.f32 %v1149, %v1370
      %v1382 = vmul.f32 %v1163, %v1370
      %v1383 = vmul.f32 %v1150, %v1370
      %v1384 = vmul.f32 %v1164, %v1370
      %v1385 = vmul.f32 %v1151, %v1370
      %v1386 = vmul.f32 %v1165, %v1370
      %v1387 = vmul.f32 %v1152, %v1370
      %v1388 = vmul.f32 %v1166, %v1370
      %v1389 = vadd.f32 %v1349, %v1371
      %v1390 = vadd.f32 %v1350, %v1372
      %v1391 = vadd.f32 %v1351, %v1373
      %v1392 = vadd.f32 %v1352, %v1374
      %v1393 = vadd.f32 %v1353, %v1375
      %v1394 = vadd.f32 %v1354, %v1376
      %v1395 = vadd.f32 %v1355, %v1377
      %v1396 = vadd.f32 %v1356, %v1378
      %v1397 = vadd.f32 %v1357, %v1379
      %v1398 = vadd.f32 %v1358, %v1380
      %v1399 = vadd.f32 %v1359, %v1381
      %v1400 = vadd.f32 %v1360, %v1382
      %v1401 = vadd.f32 %v1361, %v1383
      %v1402 = vadd.f32 %v1362, %v1384
      %v1403 = vadd.f32 %v1363, %v1385
      %v1404 = vadd.f32 %v1364, %v1386
      %v1405 = vadd.f32 %v1365, %v1387
      %v1406 = vadd.f32 %v1366, %v1388
      %v1407 = vrot.slane %v234, 4
      %v1408 = vrot.slane %v236, 4
      %v1409 = vrot.slane %v238, 4
      %v1410 = vrot.slane %v240, 4
      %v1411 = vrot.slane %v242, 4
      %v1412 = vrot.slane %v244, 4
      %v1413 = vrot.slane %v246, 4
      %v1414 = vrot.slane %v248, 4
      %v1415 = vrot.slane %v250, 4
      %v1416 = vrot.slane %v252, 4
      %v1417 = vrot.slane %v254, 4
      %v1418 = vrot.slane %v256, 4
      %v1419 = vrot.slane %v258, 4
      %v1420 = vrot.slane %v260, 4
      %v1421 = vrot.slane %v235, 4
      %v1422 = vrot.slane %v237, 4
      %v1423 = vrot.slane %v239, 4
      %v1424 = vrot.slane %v241, 4
      %v1425 = vrot.slane %v243, 4
      %v1426 = vrot.slane %v245, 4
      %v1427 = vrot.slane %v247, 4
      %v1428 = vrot.slane %v249, 4
      %v1429 = vrot.slane %v251, 4
      %v1430 = vrot.slane %v253, 4
      %v1431 = vrot.slane %v255, 4
      %v1432 = vrot.slane %v257, 4
      %v1433 = vrot.slane %v259, 4
      %v1434 = vrot.slane %v261, 4
      %vm1435 = vcmp.lt.s32.totalorder %v543, 4
      %v1436 = vsel %vm1435, %v1407, %v1421
      %v1437 = vsel %vm1435, %v1408, %v1422
      %v1438 = vsel %vm1435, %v1409, %v1423
      %v1439 = vsel %vm1435, %v1410, %v1424
      %v1440 = vsel %vm1435, %v1411, %v1425
      %v1441 = vsel %vm1435, %v1412, %v1426
      %v1442 = vsel %vm1435, %v1413, %v1427
      %v1443 = vsel %vm1435, %v1414, %v1428
      %v1444 = vsel %vm1435, %v1415, %v1429
      %v1445 = vsel %vm1435, %v1416, %v1430
      %v1446 = vsel %vm1435, %v1417, %v1431
      %v1447 = vsel %vm1435, %v1418, %v1432
      %v1448 = vsel %vm1435, %v1419, %v1433
      %v1449 = vsel %vm1435, %v1420, %v1434
      %v1450 = vsel %vm1435, %v1421, %v1407
      %v1451 = vsel %vm1435, %v1422, %v1408
      %v1452 = vsel %vm1435, %v1423, %v1409
      %v1453 = vsel %vm1435, %v1424, %v1410
      %v1454 = vsel %vm1435, %v1425, %v1411
      %v1455 = vsel %vm1435, %v1426, %v1412
      %v1456 = vsel %vm1435, %v1427, %v1413
      %v1457 = vsel %vm1435, %v1428, %v1414
      %v1458 = vsel %vm1435, %v1429, %v1415
      %v1459 = vsel %vm1435, %v1430, %v1416
      %v1460 = vsel %vm1435, %v1431, %v1417
      %v1461 = vsel %vm1435, %v1432, %v1418
      %v1462 = vsel %vm1435, %v1433, %v1419
      %v1463 = vsel %vm1435, %v1434, %v1420
      %v1464 = vlaneseq
      %v1465 = vshrl.u32 %v1464, 7
      %v1466 = vsub.s32 4, %v1465
      %v1467 = vrot.slane %v268, %v1466
      %v1468 = vmul.f32 %v1436, %v1467
      %v1469 = vmul.f32 %v1450, %v1467
      %v1470 = vmul.f32 %v1437, %v1467
      %v1471 = vmul.f32 %v1451, %v1467
      %v1472 = vmul.f32 %v1438, %v1467
      %v1473 = vmul.f32 %v1452, %v1467
      %v1474 = vmul.f32 %v1439, %v1467
      %v1475 = vmul.f32 %v1453, %v1467
      %v1476 = vmul.f32 %v1440, %v1467
      %v1477 = vmul.f32 %v1454, %v1467
      %v1478 = vmul.f32 %v1441, %v1467
      %v1479 = vmul.f32 %v1455, %v1467
      %v1480 = vmul.f32 %v1442, %v1467
      %v1481 = vmul.f32 %v1456, %v1467
      %v1482 = vmul.f32 %v1443, %v1467
      %v1483 = vmul.f32 %v1457, %v1467
      %v1484 = vmul.f32 %v1444, %v1467
      %v1485 = vmul.f32 %v1458, %v1467
      %v1486 = vadd.f32 %v1389, %v1468
      %v1487 = vadd.f32 %v1390, %v1469
      %v1488 = vadd.f32 %v1391, %v1470
      %v1489 = vadd.f32 %v1392, %v1471
      %v1490 = vadd.f32 %v1393, %v1472
      %v1491 = vadd.f32 %v1394, %v1473
      %v1492 = vadd.f32 %v1395, %v1474
      %v1493 = vadd.f32 %v1396, %v1475
      %v1494 = vadd.f32 %v1397, %v1476
      %v1495 = vadd.f32 %v1398, %v1477
      %v1496 = vadd.f32 %v1399, %v1478
      %v1497 = vadd.f32 %v1400, %v1479
      %v1498 = vadd.f32 %v1401, %v1480
      %v1499 = vadd.f32 %v1402, %v1481
      %v1500 = vadd.f32 %v1403, %v1482
      %v1501 = vadd.f32 %v1404, %v1483
      %v1502 = vadd.f32 %v1405, %v1484
      %v1503 = vadd.f32 %v1406, %v1485
      %v1504 = vlaneseq
      %v1505 = vshrl.u32 %v1504, 7
      %v1506 = vsub.s32 4, %v1505
      %v1507 = vrot.slane %v269, %v1506
      %v1508 = vmul.f32 %v1437, %v1507
      %v1509 = vmul.f32 %v1451, %v1507
      %v1510 = vmul.f32 %v1438, %v1507
      %v1511 = vmul.f32 %v1452, %v1507
      %v1512 = vmul.f32 %v1439, %v1507
      %v1513 = vmul.f32 %v1453, %v1507
      %v1514 = vmul.f32 %v1440, %v1507
      %v1515 = vmul.f32 %v1454, %v1507
      %v1516 = vmul.f32 %v1441, %v1507
      %v1517 = vmul.f32 %v1455, %v1507
      %v1518 = vmul.f32 %v1442, %v1507
      %v1519 = vmul.f32 %v1456, %v1507
      %v1520 = vmul.f32 %v1443, %v1507
      %v1521 = vmul.f32 %v1457, %v1507
      %v1522 = vmul.f32 %v1444, %v1507
      %v1523 = vmul.f32 %v1458, %v1507
      %v1524 = vmul.f32 %v1445, %v1507
      %v1525 = vmul.f32 %v1459, %v1507
      %v1526 = vadd.f32 %v1486, %v1508
      %v1527 = vadd.f32 %v1487, %v1509
      %v1528 = vadd.f32 %v1488, %v1510
      %v1529 = vadd.f32 %v1489, %v1511
      %v1530 = vadd.f32 %v1490, %v1512
      %v1531 = vadd.f32 %v1491, %v1513
      %v1532 = vadd.f32 %v1492, %v1514
      %v1533 = vadd.f32 %v1493, %v1515
      %v1534 = vadd.f32 %v1494, %v1516
      %v1535 = vadd.f32 %v1495, %v1517
      %v1536 = vadd.f32 %v1496, %v1518
      %v1537 = vadd.f32 %v1497, %v1519
      %v1538 = vadd.f32 %v1498, %v1520
      %v1539 = vadd.f32 %v1499, %v1521
      %v1540 = vadd.f32 %v1500, %v1522
      %v1541 = vadd.f32 %v1501, %v1523
      %v1542 = vadd.f32 %v1502, %v1524
      %v1543 = vadd.f32 %v1503, %v1525
      %v1544 = vlaneseq
      %v1545 = vshrl.u32 %v1544, 7
      %v1546 = vsub.s32 4, %v1545
      %v1547 = vrot.slane %v270, %v1546
      %v1548 = vmul.f32 %v1438, %v1547
      %v1549 = vmul.f32 %v1452, %v1547
      %v1550 = vmul.f32 %v1439, %v1547
      %v1551 = vmul.f32 %v1453, %v1547
      %v1552 = vmul.f32 %v1440, %v1547
      %v1553 = vmul.f32 %v1454, %v1547
      %v1554 = vmul.f32 %v1441, %v1547
      %v1555 = vmul.f32 %v1455, %v1547
      %v1556 = vmul.f32 %v1442, %v1547
      %v1557 = vmul.f32 %v1456, %v1547
      %v1558 = vmul.f32 %v1443, %v1547
      %v1559 = vmul.f32 %v1457, %v1547
      %v1560 = vmul.f32 %v1444, %v1547
      %v1561 = vmul.f32 %v1458, %v1547
      %v1562 = vmul.f32 %v1445, %v1547
      %v1563 = vmul.f32 %v1459, %v1547
      %v1564 = vmul.f32 %v1446, %v1547
      %v1565 = vmul.f32 %v1460, %v1547
      %v1566 = vadd.f32 %v1526, %v1548
      %v1567 = vadd.f32 %v1527, %v1549
      %v1568 = vadd.f32 %v1528, %v1550
      %v1569 = vadd.f32 %v1529, %v1551
      %v1570 = vadd.f32 %v1530, %v1552
      %v1571 = vadd.f32 %v1531, %v1553
      %v1572 = vadd.f32 %v1532, %v1554
      %v1573 = vadd.f32 %v1533, %v1555
      %v1574 = vadd.f32 %v1534, %v1556
      %v1575 = vadd.f32 %v1535, %v1557
      %v1576 = vadd.f32 %v1536, %v1558
      %v1577 = vadd.f32 %v1537, %v1559
      %v1578 = vadd.f32 %v1538, %v1560
      %v1579 = vadd.f32 %v1539, %v1561
      %v1580 = vadd.f32 %v1540, %v1562
      %v1581 = vadd.f32 %v1541, %v1563
      %v1582 = vadd.f32 %v1542, %v1564
      %v1583 = vadd.f32 %v1543, %v1565
      %v1584 = vlaneseq
      %v1585 = vshrl.u32 %v1584, 7
      %v1586 = vsub.s32 4, %v1585
      %v1587 = vrot.slane %v271, %v1586
      %v1588 = vmul.f32 %v1439, %v1587
      %v1589 = vmul.f32 %v1453, %v1587
      %v1590 = vmul.f32 %v1440, %v1587
      %v1591 = vmul.f32 %v1454, %v1587
      %v1592 = vmul.f32 %v1441, %v1587
      %v1593 = vmul.f32 %v1455, %v1587
      %v1594 = vmul.f32 %v1442, %v1587
      %v1595 = vmul.f32 %v1456, %v1587
      %v1596 = vmul.f32 %v1443, %v1587
      %v1597 = vmul.f32 %v1457, %v1587
      %v1598 = vmul.f32 %v1444, %v1587
      %v1599 = vmul.f32 %v1458, %v1587
      %v1600 = vmul.f32 %v1445, %v1587
      %v1601 = vmul.f32 %v1459, %v1587
      %v1602 = vmul.f32 %v1446, %v1587
      %v1603 = vmul.f32 %v1460, %v1587
      %v1604 = vmul.f32 %v1447, %v1587
      %v1605 = vmul.f32 %v1461, %v1587
      %v1606 = vadd.f32 %v1566, %v1588
      %v1607 = vadd.f32 %v1567, %v1589
      %v1608 = vadd.f32 %v1568, %v1590
      %v1609 = vadd.f32 %v1569, %v1591
      %v1610 = vadd.f32 %v1570, %v1592
      %v1611 = vadd.f32 %v1571, %v1593
      %v1612 = vadd.f32 %v1572, %v1594
      %v1613 = vadd.f32 %v1573, %v1595
      %v1614 = vadd.f32 %v1574, %v1596
      %v1615 = vadd.f32 %v1575, %v1597
      %v1616 = vadd.f32 %v1576, %v1598
      %v1617 = vadd.f32 %v1577, %v1599
      %v1618 = vadd.f32 %v1578, %v1600
      %v1619 = vadd.f32 %v1579, %v1601
      %v1620 = vadd.f32 %v1580, %v1602
      %v1621 = vadd.f32 %v1581, %v1603
      %v1622 = vadd.f32 %v1582, %v1604
      %v1623 = vadd.f32 %v1583, %v1605
      %v1624 = vlaneseq
      %v1625 = vshrl.u32 %v1624, 7
      %v1626 = vsub.s32 4, %v1625
      %v1627 = vrot.slane %v272, %v1626
      %v1628 = vmul.f32 %v1440, %v1627
      %v1629 = vmul.f32 %v1454, %v1627
      %v1630 = vmul.f32 %v1441, %v1627
      %v1631 = vmul.f32 %v1455, %v1627
      %v1632 = vmul.f32 %v1442, %v1627
      %v1633 = vmul.f32 %v1456, %v1627
      %v1634 = vmul.f32 %v1443, %v1627
      %v1635 = vmul.f32 %v1457, %v1627
      %v1636 = vmul.f32 %v1444, %v1627
      %v1637 = vmul.f32 %v1458, %v1627
      %v1638 = vmul.f32 %v1445, %v1627
      %v1639 = vmul.f32 %v1459, %v1627
      %v1640 = vmul.f32 %v1446, %v1627
      %v1641 = vmul.f32 %v1460, %v1627
      %v1642 = vmul.f32 %v1447, %v1627
      %v1643 = vmul.f32 %v1461, %v1627
      %v1644 = vmul.f32 %v1448, %v1627
      %v1645 = vmul.f32 %v1462, %v1627
      %v1646 = vadd.f32 %v1606, %v1628
      %v1647 = vadd.f32 %v1607, %v1629
      %v1648 = vadd.f32 %v1608, %v1630
      %v1649 = vadd.f32 %v1609, %v1631
      %v1650 = vadd.f32 %v1610, %v1632
      %v1651 = vadd.f32 %v1611, %v1633
      %v1652 = vadd.f32 %v1612, %v1634
      %v1653 = vadd.f32 %v1613, %v1635
      %v1654 = vadd.f32 %v1614, %v1636
      %v1655 = vadd.f32 %v1615, %v1637
      %v1656 = vadd.f32 %v1616, %v1638
      %v1657 = vadd.f32 %v1617, %v1639
      %v1658 = vadd.f32 %v1618, %v1640
      %v1659 = vadd.f32 %v1619, %v1641
      %v1660 = vadd.f32 %v1620, %v1642
      %v1661 = vadd.f32 %v1621, %v1643
      %v1662 = vadd.f32 %v1622, %v1644
      %v1663 = vadd.f32 %v1623, %v1645
      %v1664 = vlaneseq
      %v1665 = vshrl.u32 %v1664, 7
      %v1666 = vsub.s32 4, %v1665
      %v1667 = vrot.slane %v273, %v1666
      %v1668 = vmul.f32 %v1441, %v1667
      %v1669 = vmul.f32 %v1455, %v1667
      %v1670 = vmul.f32 %v1442, %v1667
      %v1671 = vmul.f32 %v1456, %v1667
      %v1672 = vmul.f32 %v1443, %v1667
      %v1673 = vmul.f32 %v1457, %v1667
      %v1674 = vmul.f32 %v1444, %v1667
      %v1675 = vmul.f32 %v1458, %v1667
      %v1676 = vmul.f32 %v1445, %v1667
      %v1677 = vmul.f32 %v1459, %v1667
      %v1678 = vmul.f32 %v1446, %v1667
      %v1679 = vmul.f32 %v1460, %v1667
      %v1680 = vmul.f32 %v1447, %v1667
      %v1681 = vmul.f32 %v1461, %v1667
      %v1682 = vmul.f32 %v1448, %v1667
      %v1683 = vmul.f32 %v1462, %v1667
      %v1684 = vmul.f32 %v1449, %v1667
      %v1685 = vmul.f32 %v1463, %v1667
      %v1686 = vadd.f32 %v1646, %v1668
      %v1687 = vadd.f32 %v1647, %v1669
      %v1688 = vadd.f32 %v1648, %v1670
      %v1689 = vadd.f32 %v1649, %v1671
      %v1690 = vadd.f32 %v1650, %v1672
      %v1691 = vadd.f32 %v1651, %v1673
      %v1692 = vadd.f32 %v1652, %v1674
      %v1693 = vadd.f32 %v1653, %v1675
      %v1694 = vadd.f32 %v1654, %v1676
      %v1695 = vadd.f32 %v1655, %v1677
      %v1696 = vadd.f32 %v1656, %v1678
      %v1697 = vadd.f32 %v1657, %v1679
      %v1698 = vadd.f32 %v1658, %v1680
      %v1699 = vadd.f32 %v1659, %v1681
      %v1700 = vadd.f32 %v1660, %v1682
      %v1701 = vadd.f32 %v1661, %v1683
      %v1702 = vadd.f32 %v1662, %v1684
      %v1703 = vadd.f32 %v1663, %v1685
      %v1704 = vrot.slane %v234, 5
      %v1705 = vrot.slane %v236, 5
      %v1706 = vrot.slane %v238, 5
      %v1707 = vrot.slane %v240, 5
      %v1708 = vrot.slane %v242, 5
      %v1709 = vrot.slane %v244, 5
      %v1710 = vrot.slane %v246, 5
      %v1711 = vrot.slane %v248, 5
      %v1712 = vrot.slane %v250, 5
      %v1713 = vrot.slane %v252, 5
      %v1714 = vrot.slane %v254, 5
      %v1715 = vrot.slane %v256, 5
      %v1716 = vrot.slane %v258, 5
      %v1717 = vrot.slane %v260, 5
      %v1718 = vrot.slane %v235, 5
      %v1719 = vrot.slane %v237, 5
      %v1720 = vrot.slane %v239, 5
      %v1721 = vrot.slane %v241, 5
      %v1722 = vrot.slane %v243, 5
      %v1723 = vrot.slane %v245, 5
      %v1724 = vrot.slane %v247, 5
      %v1725 = vrot.slane %v249, 5
      %v1726 = vrot.slane %v251, 5
      %v1727 = vrot.slane %v253, 5
      %v1728 = vrot.slane %v255, 5
      %v1729 = vrot.slane %v257, 5
      %v1730 = vrot.slane %v259, 5
      %v1731 = vrot.slane %v261, 5
      %vm1732 = vcmp.lt.s32.totalorder %v543, 3
      %v1733 = vsel %vm1732, %v1704, %v1718
      %v1734 = vsel %vm1732, %v1705, %v1719
      %v1735 = vsel %vm1732, %v1706, %v1720
      %v1736 = vsel %vm1732, %v1707, %v1721
      %v1737 = vsel %vm1732, %v1708, %v1722
      %v1738 = vsel %vm1732, %v1709, %v1723
      %v1739 = vsel %vm1732, %v1710, %v1724
      %v1740 = vsel %vm1732, %v1711, %v1725
      %v1741 = vsel %vm1732, %v1712, %v1726
      %v1742 = vsel %vm1732, %v1713, %v1727
      %v1743 = vsel %vm1732, %v1714, %v1728
      %v1744 = vsel %vm1732, %v1715, %v1729
      %v1745 = vsel %vm1732, %v1716, %v1730
      %v1746 = vsel %vm1732, %v1717, %v1731
      %v1747 = vsel %vm1732, %v1718, %v1704
      %v1748 = vsel %vm1732, %v1719, %v1705
      %v1749 = vsel %vm1732, %v1720, %v1706
      %v1750 = vsel %vm1732, %v1721, %v1707
      %v1751 = vsel %vm1732, %v1722, %v1708
      %v1752 = vsel %vm1732, %v1723, %v1709
      %v1753 = vsel %vm1732, %v1724, %v1710
      %v1754 = vsel %vm1732, %v1725, %v1711
      %v1755 = vsel %vm1732, %v1726, %v1712
      %v1756 = vsel %vm1732, %v1727, %v1713
      %v1757 = vsel %vm1732, %v1728, %v1714
      %v1758 = vsel %vm1732, %v1729, %v1715
      %v1759 = vsel %vm1732, %v1730, %v1716
      %v1760 = vsel %vm1732, %v1731, %v1717
      %v1761 = vlaneseq
      %v1762 = vshrl.u32 %v1761, 7
      %v1763 = vsub.s32 5, %v1762
      %v1764 = vrot.slane %v268, %v1763
      %v1765 = vmul.f32 %v1733, %v1764
      %v1766 = vmul.f32 %v1747, %v1764
      %v1767 = vmul.f32 %v1734, %v1764
      %v1768 = vmul.f32 %v1748, %v1764
      %v1769 = vmul.f32 %v1735, %v1764
      %v1770 = vmul.f32 %v1749, %v1764
      %v1771 = vmul.f32 %v1736, %v1764
      %v1772 = vmul.f32 %v1750, %v1764
      %v1773 = vmul.f32 %v1737, %v1764
      %v1774 = vmul.f32 %v1751, %v1764
      %v1775 = vmul.f32 %v1738, %v1764
      %v1776 = vmul.f32 %v1752, %v1764
      %v1777 = vmul.f32 %v1739, %v1764
      %v1778 = vmul.f32 %v1753, %v1764
      %v1779 = vmul.f32 %v1740, %v1764
      %v1780 = vmul.f32 %v1754, %v1764
      %v1781 = vmul.f32 %v1741, %v1764
      %v1782 = vmul.f32 %v1755, %v1764
      %v1783 = vadd.f32 %v1686, %v1765
      %v1784 = vadd.f32 %v1687, %v1766
      %v1785 = vadd.f32 %v1688, %v1767
      %v1786 = vadd.f32 %v1689, %v1768
      %v1787 = vadd.f32 %v1690, %v1769
      %v1788 = vadd.f32 %v1691, %v1770
      %v1789 = vadd.f32 %v1692, %v1771
      %v1790 = vadd.f32 %v1693, %v1772
      %v1791 = vadd.f32 %v1694, %v1773
      %v1792 = vadd.f32 %v1695, %v1774
      %v1793 = vadd.f32 %v1696, %v1775
      %v1794 = vadd.f32 %v1697, %v1776
      %v1795 = vadd.f32 %v1698, %v1777
      %v1796 = vadd.f32 %v1699, %v1778
      %v1797 = vadd.f32 %v1700, %v1779
      %v1798 = vadd.f32 %v1701, %v1780
      %v1799 = vadd.f32 %v1702, %v1781
      %v1800 = vadd.f32 %v1703, %v1782
      %v1801 = vlaneseq
      %v1802 = vshrl.u32 %v1801, 7
      %v1803 = vsub.s32 5, %v1802
      %v1804 = vrot.slane %v269, %v1803
      %v1805 = vmul.f32 %v1734, %v1804
      %v1806 = vmul.f32 %v1748, %v1804
      %v1807 = vmul.f32 %v1735, %v1804
      %v1808 = vmul.f32 %v1749, %v1804
      %v1809 = vmul.f32 %v1736, %v1804
      %v1810 = vmul.f32 %v1750, %v1804
      %v1811 = vmul.f32 %v1737, %v1804
      %v1812 = vmul.f32 %v1751, %v1804
      %v1813 = vmul.f32 %v1738, %v1804
      %v1814 = vmul.f32 %v1752, %v1804
      %v1815 = vmul.f32 %v1739, %v1804
      %v1816 = vmul.f32 %v1753, %v1804
      %v1817 = vmul.f32 %v1740, %v1804
      %v1818 = vmul.f32 %v1754, %v1804
      %v1819 = vmul.f32 %v1741, %v1804
      %v1820 = vmul.f32 %v1755, %v1804
      %v1821 = vmul.f32 %v1742, %v1804
      %v1822 = vmul.f32 %v1756, %v1804
      %v1823 = vadd.f32 %v1783, %v1805
      %v1824 = vadd.f32 %v1784, %v1806
      %v1825 = vadd.f32 %v1785, %v1807
      %v1826 = vadd.f32 %v1786, %v1808
      %v1827 = vadd.f32 %v1787, %v1809
      %v1828 = vadd.f32 %v1788, %v1810
      %v1829 = vadd.f32 %v1789, %v1811
      %v1830 = vadd.f32 %v1790, %v1812
      %v1831 = vadd.f32 %v1791, %v1813
      %v1832 = vadd.f32 %v1792, %v1814
      %v1833 = vadd.f32 %v1793, %v1815
      %v1834 = vadd.f32 %v1794, %v1816
      %v1835 = vadd.f32 %v1795, %v1817
      %v1836 = vadd.f32 %v1796, %v1818
      %v1837 = vadd.f32 %v1797, %v1819
      %v1838 = vadd.f32 %v1798, %v1820
      %v1839 = vadd.f32 %v1799, %v1821
      %v1840 = vadd.f32 %v1800, %v1822
      %v1841 = vlaneseq
      %v1842 = vshrl.u32 %v1841, 7
      %v1843 = vsub.s32 5, %v1842
      %v1844 = vrot.slane %v270, %v1843
      %v1845 = vmul.f32 %v1735, %v1844
      %v1846 = vmul.f32 %v1749, %v1844
      %v1847 = vmul.f32 %v1736, %v1844
      %v1848 = vmul.f32 %v1750, %v1844
      %v1849 = vmul.f32 %v1737, %v1844
      %v1850 = vmul.f32 %v1751, %v1844
      %v1851 = vmul.f32 %v1738, %v1844
      %v1852 = vmul.f32 %v1752, %v1844
      %v1853 = vmul.f32 %v1739, %v1844
      %v1854 = vmul.f32 %v1753, %v1844
      %v1855 = vmul.f32 %v1740, %v1844
      %v1856 = vmul.f32 %v1754, %v1844
      %v1857 = vmul.f32 %v1741, %v1844
      %v1858 = vmul.f32 %v1755, %v1844
      %v1859 = vmul.f32 %v1742, %v1844
      %v1860 = vmul.f32 %v1756, %v1844
      %v1861 = vmul.f32 %v1743, %v1844
      %v1862 = vmul.f32 %v1757, %v1844
      %v1863 = vadd.f32 %v1823, %v1845
      %v1864 = vadd.f32 %v1824, %v1846
      %v1865 = vadd.f32 %v1825, %v1847
      %v1866 = vadd.f32 %v1826, %v1848
      %v1867 = vadd.f32 %v1827, %v1849
      %v1868 = vadd.f32 %v1828, %v1850
      %v1869 = vadd.f32 %v1829, %v1851
      %v1870 = vadd.f32 %v1830, %v1852
      %v1871 = vadd.f32 %v1831, %v1853
      %v1872 = vadd.f32 %v1832, %v1854
      %v1873 = vadd.f32 %v1833, %v1855
      %v1874 = vadd.f32 %v1834, %v1856
      %v1875 = vadd.f32 %v1835, %v1857
      %v1876 = vadd.f32 %v1836, %v1858
      %v1877 = vadd.f32 %v1837, %v1859
      %v1878 = vadd.f32 %v1838, %v1860
      %v1879 = vadd.f32 %v1839, %v1861
      %v1880 = vadd.f32 %v1840, %v1862
      %v1881 = vlaneseq
      %v1882 = vshrl.u32 %v1881, 7
      %v1883 = vsub.s32 5, %v1882
      %v1884 = vrot.slane %v271, %v1883
      %v1885 = vmul.f32 %v1736, %v1884
      %v1886 = vmul.f32 %v1750, %v1884
      %v1887 = vmul.f32 %v1737, %v1884
      %v1888 = vmul.f32 %v1751, %v1884
      %v1889 = vmul.f32 %v1738, %v1884
      %v1890 = vmul.f32 %v1752, %v1884
      %v1891 = vmul.f32 %v1739, %v1884
      %v1892 = vmul.f32 %v1753, %v1884
      %v1893 = vmul.f32 %v1740, %v1884
      %v1894 = vmul.f32 %v1754, %v1884
      %v1895 = vmul.f32 %v1741, %v1884
      %v1896 = vmul.f32 %v1755, %v1884
      %v1897 = vmul.f32 %v1742, %v1884
      %v1898 = vmul.f32 %v1756, %v1884
      %v1899 = vmul.f32 %v1743, %v1884
      %v1900 = vmul.f32 %v1757, %v1884
      %v1901 = vmul.f32 %v1744, %v1884
      %v1902 = vmul.f32 %v1758, %v1884
      %v1903 = vadd.f32 %v1863, %v1885
      %v1904 = vadd.f32 %v1864, %v1886
      %v1905 = vadd.f32 %v1865, %v1887
      %v1906 = vadd.f32 %v1866, %v1888
      %v1907 = vadd.f32 %v1867, %v1889
      %v1908 = vadd.f32 %v1868, %v1890
      %v1909 = vadd.f32 %v1869, %v1891
      %v1910 = vadd.f32 %v1870, %v1892
      %v1911 = vadd.f32 %v1871, %v1893
      %v1912 = vadd.f32 %v1872, %v1894
      %v1913 = vadd.f32 %v1873, %v1895
      %v1914 = vadd.f32 %v1874, %v1896
      %v1915 = vadd.f32 %v1875, %v1897
      %v1916 = vadd.f32 %v1876, %v1898
      %v1917 = vadd.f32 %v1877, %v1899
      %v1918 = vadd.f32 %v1878, %v1900
      %v1919 = vadd.f32 %v1879, %v1901
      %v1920 = vadd.f32 %v1880, %v1902
      %v1921 = vlaneseq
      %v1922 = vshrl.u32 %v1921, 7
      %v1923 = vsub.s32 5, %v1922
      %v1924 = vrot.slane %v272, %v1923
      %v1925 = vmul.f32 %v1737, %v1924
      %v1926 = vmul.f32 %v1751, %v1924
      %v1927 = vmul.f32 %v1738, %v1924
      %v1928 = vmul.f32 %v1752, %v1924
      %v1929 = vmul.f32 %v1739, %v1924
      %v1930 = vmul.f32 %v1753, %v1924
      %v1931 = vmul.f32 %v1740, %v1924
      %v1932 = vmul.f32 %v1754, %v1924
      %v1933 = vmul.f32 %v1741, %v1924
      %v1934 = vmul.f32 %v1755, %v1924
      %v1935 = vmul.f32 %v1742, %v1924
      %v1936 = vmul.f32 %v1756, %v1924
      %v1937 = vmul.f32 %v1743, %v1924
      %v1938 = vmul.f32 %v1757, %v1924
      %v1939 = vmul.f32 %v1744, %v1924
      %v1940 = vmul.f32 %v1758, %v1924
      %v1941 = vmul.f32 %v1745, %v1924
      %v1942 = vmul.f32 %v1759, %v1924
      %v1943 = vadd.f32 %v1903, %v1925
      %v1944 = vadd.f32 %v1904, %v1926
      %v1945 = vadd.f32 %v1905, %v1927
      %v1946 = vadd.f32 %v1906, %v1928
      %v1947 = vadd.f32 %v1907, %v1929
      %v1948 = vadd.f32 %v1908, %v1930
      %v1949 = vadd.f32 %v1909, %v1931
      %v1950 = vadd.f32 %v1910, %v1932
      %v1951 = vadd.f32 %v1911, %v1933
      %v1952 = vadd.f32 %v1912, %v1934
      %v1953 = vadd.f32 %v1913, %v1935
      %v1954 = vadd.f32 %v1914, %v1936
      %v1955 = vadd.f32 %v1915, %v1937
      %v1956 = vadd.f32 %v1916, %v1938
      %v1957 = vadd.f32 %v1917, %v1939
      %v1958 = vadd.f32 %v1918, %v1940
      %v1959 = vadd.f32 %v1919, %v1941
      %v1960 = vadd.f32 %v1920, %v1942
      %v1961 = vlaneseq
      %v1962 = vshrl.u32 %v1961, 7
      %v1963 = vsub.s32 5, %v1962
      %v1964 = vrot.slane %v273, %v1963
      %v1965 = vmul.f32 %v1738, %v1964
      %v1966 = vmul.f32 %v1752, %v1964
      %v1967 = vmul.f32 %v1739, %v1964
      %v1968 = vmul.f32 %v1753, %v1964
      %v1969 = vmul.f32 %v1740, %v1964
      %v1970 = vmul.f32 %v1754, %v1964
      %v1971 = vmul.f32 %v1741, %v1964
      %v1972 = vmul.f32 %v1755, %v1964
      %v1973 = vmul.f32 %v1742, %v1964
      %v1974 = vmul.f32 %v1756, %v1964
      %v1975 = vmul.f32 %v1743, %v1964
      %v1976 = vmul.f32 %v1757, %v1964
      %v1977 = vmul.f32 %v1744, %v1964
      %v1978 = vmul.f32 %v1758, %v1964
      %v1979 = vmul.f32 %v1745, %v1964
      %v1980 = vmul.f32 %v1759, %v1964
      %v1981 = vmul.f32 %v1746, %v1964
      %v1982 = vmul.f32 %v1760, %v1964
      %v1983 = vadd.f32 %v1943, %v1965
      %v1984 = vadd.f32 %v1944, %v1966
      %v1985 = vadd.f32 %v1945, %v1967
      %v1986 = vadd.f32 %v1946, %v1968
      %v1987 = vadd.f32 %v1947, %v1969
      %v1988 = vadd.f32 %v1948, %v1970
      %v1989 = vadd.f32 %v1949, %v1971
      %v1990 = vadd.f32 %v1950, %v1972
      %v1991 = vadd.f32 %v1951, %v1973
      %v1992 = vadd.f32 %v1952, %v1974
      %v1993 = vadd.f32 %v1953, %v1975
      %v1994 = vadd.f32 %v1954, %v1976
      %v1995 = vadd.f32 %v1955, %v1977
      %v1996 = vadd.f32 %v1956, %v1978
      %v1997 = vadd.f32 %v1957, %v1979
      %v1998 = vadd.f32 %v1958, %v1980
      %v1999 = vadd.f32 %v1959, %v1981
      %v2000 = vadd.f32 %v1960, %v1982
      %v2001 = vpack.c.bf16 %v1984, %v1983
      %v2002 = vpack.c.bf16 %v1986, %v1985
      %v2003 = vpack.c.bf16 %v1988, %v1987
      %v2004 = vpack.c.bf16 %v1990, %v1989
      %v2005 = vpack.c.bf16 %v1992, %v1991
      %v2006 = vpack.c.bf16 %v1994, %v1993
      %v2007 = vpack.c.bf16 %v1996, %v1995
      %v2008 = vpack.c.bf16 %v1998, %v1997
      %v2009 = vpack.c.bf16 %v2000, %v1999
      %v2019 = vunpack.c.l.b16 %v2001
      %v2020 = vunpack.c.h.b16 %v2001
      %v2021 = vunpack.c.l.b16 %v2002
      %v2022 = vunpack.c.h.b16 %v2002
      %v2023 = vunpack.c.l.b16 %v2003
      %v2024 = vunpack.c.h.b16 %v2003
      %v2025 = vunpack.c.l.b16 %v2004
      %v2026 = vunpack.c.h.b16 %v2004
      %v2027 = vunpack.c.l.b16 %v2005
      %v2028 = vunpack.c.h.b16 %v2005
      %v2029 = vunpack.c.l.b16 %v2006
      %v2030 = vunpack.c.h.b16 %v2006
      %v2031 = vunpack.c.l.b16 %v2007
      %v2032 = vunpack.c.h.b16 %v2007
      %v2033 = vunpack.c.l.b16 %v2008
      %v2034 = vunpack.c.h.b16 %v2008
      %v2035 = vunpack.c.l.b16 %v2009
      %v2036 = vunpack.c.h.b16 %v2009
      %v2037 = vpack.c.b16 %v2019, %v2019
      %v2038 = vpack.c.b16 %v2020, %v2020
      %v2039 = vpack.c.b16 %v2021, %v2021
      %v2040 = vpack.c.b16 %v2022, %v2022
      %v2041 = vpack.c.b16 %v2023, %v2023
      %v2042 = vpack.c.b16 %v2024, %v2024
      %v2043 = vpack.c.b16 %v2025, %v2025
      %v2044 = vpack.c.b16 %v2026, %v2026
      %v2045 = vpack.c.b16 %v2027, %v2027
      %v2046 = vpack.c.b16 %v2028, %v2028
      %v2047 = vpack.c.b16 %v2029, %v2029
      %v2048 = vpack.c.b16 %v2030, %v2030
      %v2049 = vpack.c.b16 %v2031, %v2031
      %v2050 = vpack.c.b16 %v2032, %v2032
      %v2051 = vpack.c.b16 %v2033, %v2033
      %v2052 = vpack.c.b16 %v2034, %v2034
      %v2053 = vpack.c.b16 %v2035, %v2035
      %v2054 = vpack.c.b16 %v2036, %v2036
      %2073 = vst [vmem:[%s205] sm:$0xf] %v2037
      %vm2074 = vcmask 1040384
      %vm2075 = vsmask.f32 256
      %vm2076 = vmand %vm2074, %vm2075
      %v2077 = vld [vmem:[%s205 + $0x4] sm:$0x1]
      %v2078 = vsel %vm2076, %v2038, %v2077
      %2079 = vst [vmem:[%s205 + $0x4] sm:$0x1] %v2078
      %2080 = vst [vmem:[%s205 + $0x8] sm:$0xf] %v2039
      %v2081 = vld [vmem:[%s205 + $0xc] sm:$0x1]
      %v2082 = vsel %vm2076, %v2040, %v2081
      %2083 = vst [vmem:[%s205 + $0xc] sm:$0x1] %v2082
      %2084 = vst [vmem:[%s205 + $0x10] sm:$0xf] %v2041
      %v2085 = vld [vmem:[%s205 + $0x14] sm:$0x1]
      %v2086 = vsel %vm2076, %v2042, %v2085
      %2087 = vst [vmem:[%s205 + $0x14] sm:$0x1] %v2086
      %2088 = vst [vmem:[%s205 + $0x18] sm:$0xf] %v2043
      %v2089 = vld [vmem:[%s205 + $0x1c] sm:$0x1]
      %v2090 = vsel %vm2076, %v2044, %v2089
      %2091 = vst [vmem:[%s205 + $0x1c] sm:$0x1] %v2090
      %2092 = vst [vmem:[%s205 + $0x20] sm:$0xf] %v2045
      %v2093 = vld [vmem:[%s205 + $0x24] sm:$0x1]
      %v2094 = vsel %vm2076, %v2046, %v2093
      %2095 = vst [vmem:[%s205 + $0x24] sm:$0x1] %v2094
      %2096 = vst [vmem:[%s205 + $0x28] sm:$0xf] %v2047
      %v2097 = vld [vmem:[%s205 + $0x2c] sm:$0x1]
      %v2098 = vsel %vm2076, %v2048, %v2097
      %2099 = vst [vmem:[%s205 + $0x2c] sm:$0x1] %v2098
      %2100 = vst [vmem:[%s205 + $0x30] sm:$0xf] %v2049
      %v2101 = vld [vmem:[%s205 + $0x34] sm:$0x1]
      %v2102 = vsel %vm2076, %v2050, %v2101
      %2103 = vst [vmem:[%s205 + $0x34] sm:$0x1] %v2102
      %2104 = vst [vmem:[%s205 + $0x38] sm:$0xf] %v2051
      %v2105 = vld [vmem:[%s205 + $0x3c] sm:$0x1]
      %v2106 = vsel %vm2076, %v2052, %v2105
      %2107 = vst [vmem:[%s205 + $0x3c] sm:$0x1] %v2106
      %2108 = vst [vmem:[%s205 + $0x40] sm:$0xf] %v2053
      %v2109 = vld [vmem:[%s205 + $0x44] sm:$0x1]
      %v2110 = vsel %vm2076, %v2054, %v2109
      %2111 = vst [vmem:[%s205 + $0x44] sm:$0x1] %v2110
      %p2112 = scmp.lt.s32.totalorder %s17, 1
      %s2113 = scalar_select %p2112, %s17, 1
      %p2114 = scmp.lt.s32.totalorder %s18, 0
      %s2115 = scalar_select %p2114, %s18, 0
      %s2116 = smul.addr %s2113, 18
      %s2117 = sadd.s32 %s2115, %s2116
      %s2118 = smul.addr %s2117, 4
      %s2119 = scalar_lea.vmem %s2, %s2118
      // Predicated region
      $region29: #{depthwise_xcorr_forward.6} parent=27 // pred_check
        %p2120 = pneg %p101
      $region30: #{depthwise_xcorr_forward.6} parent=27 // pred_check_branch
        %2122 = sbr.rel (%p2120) target = $region32
      $region31: #{depthwise_xcorr_forward.6} parent=27 // pred_region
        _
      $region32: #{depthwise_xcorr_forward.6} parent=27 // pred_fallthru
        _
    $region28: #{depthwise_xcorr_forward.6} parent=5 // pred_fallthru
      _
    %p2123 = scmp.le.s32.totalorder 2, %s8
    // Predicated region
    $region33: #{depthwise_xcorr_forward.6} parent=5 // pred_check
      %p2124 = pneg %p2123
    $region34: #{depthwise_xcorr_forward.6} parent=5 // pred_check_branch
      %2126 = sbr.rel (%p2124) target = $region36
    $region35: #{depthwise_xcorr_forward.6} parent=5 // pred_region
      %s2127 = ssub.s32 %s8, 2
      // Predicated region
      $region37: #{depthwise_xcorr_forward.6} parent=35 // pred_check
        %p2128 = pneg %p107
      $region38: #{depthwise_xcorr_forward.6} parent=35 // pred_check_branch
        %2130 = sbr.rel (%p2128) target = $region40
      $region39: #{depthwise_xcorr_forward.6} parent=35 // pred_region
        %p2131 = scmp.lt.s32.totalorder %s19, 1
        %s2132 = scalar_select %p2131, %s19, 1
        %p2133 = scmp.lt.s32.totalorder %s20, 0
        %s2134 = scalar_select %p2133, %s20, 0
        %s2135 = smul.addr %s2132, 18
        %s2136 = sadd.s32 %s2134, %s2135
        %s2137 = smul.addr %s2136, 4
        %s2138 = scalar_lea.vmem %s2, %s2137
      $region40: #{depthwise_xcorr_forward.6} parent=35 // pred_fallthru
        _
    $region36: #{depthwise_xcorr_forward.6} parent=5 // pred_fallthru
      _
  $region6: #{depthwise_xcorr_forward.6} parent=0 // loop_footer
    %s12 = sadd.s32 1, %s8
  $region7: #{depthwise_xcorr_forward.6} parent=0 // loop_footer_branch
    %7 = sbr.rel target = $region3
  $region8: #{depthwise_xcorr_forward.6} parent=0 // loop_exit
    _

// kernel: depthwise_xcorr_forward.5
$region0: #{depthwise_xcorr_forward.5}
  #allocation0 [shape = 'u32[]', space=smem, size = 0x4, offset = 0x4, fixed_abs, tag = 'smem constant byte address 0x4 - core index']
  #allocation1 [shape = 'u32[144,128]{1,0:T(1,128)}', space=vmem, size = 0x12000, scoped, tag = 'internal scratch']
  %s0 = inlined_call_operand.vmem [shape: bf16[2,16,16,4], index: 0, kind: input, shape index: {}]
  %s1 = inlined_call_operand.vmem [shape: bf16[3,3,4,128], index: 1, kind: input, shape index: {}]
  %s2 = inlined_call_operand.vmem [shape: f32[1,128], index: 2, kind: input, shape index: {}]
  %s3 = inlined_call_operand.vmem [shape: bf16[2,14,16,128], index: 3, kind: output, shape index: {}]
  %s4 = sld [smem:[#allocation0]]
  $region45: #{depthwise_xcorr_forward.5} parent=0
    _
  %s6 = ssub.s32 1, %s4
  %s7 = scalar_select 0, %s6, %s4
  loop: start=0, step=1, limit=4
  $region2: #{depthwise_xcorr_forward.5} parent=0 // loop_pre_header
    _
  $region3: #{depthwise_xcorr_forward.5} parent=0 // loop_header
    %s9 = sphi 0, %s13
    %p10 = scmp.ge.s32.totalorder %s9, 4
    %s16 = sphi 0, %s28
    %s17 = sphi 0, %s24
    %s18 = sphi 0, %s16
    %s19 = sphi 0, %s17
    %s20 = sphi 0, %s18
    %s21 = sphi 0, %s19
    %s31 = sphi 0, %s33
    %s34 = sphi 0, %s31
    %s35 = sphi 0, %s34
    %s51 = sphi 0, %s35
    %s57 = sphi 0, %s59
    %s60 = sphi 0, %s57
    %s61 = sphi 0, %s60
    %s77 = sphi 0, %s61
    %s83 = sphi 0, %s85
    %s86 = sphi 0, %s83
    %s87 = sphi 0, %s86
    %s103 = sphi 0, %s87
    %s111 = sphi 0, %s113
    %s114 = sphi 0, %s111
    %s115 = sphi 0, %s114
    %s131 = sphi 0, %s115
  $region4: #{depthwise_xcorr_forward.5} parent=0 // loop_header_branch
    %12 = sbr.rel (%p10) target = $region8
  $region5: #{depthwise_xcorr_forward.5} parent=0 // loop_body
    %s14 = ssub.s32 %s9, 1
    %s15 = ssub.s32 %s9, 2
    %s22 = sadd.s32 1, %s17
    %p23 = scmp.ge.s32.totalorder %s22, 1
    %s24 = scalar_select %p23, 0, %s22
    %s25 = sadd.s32 1, %s16
    %s26 = scalar_select %p23, %s25, %s16
    %p27 = scmp.ge.s32.totalorder %s26, 2
    %s28 = scalar_select %p27, 0, %s26
    %s29 = ssub.s32 %s16, %s28
    %p30 = scmp.eq.s32.totalorder %s29, 0
    %s32 = sadd.s32 %s31, 1
    %s33 = scalar_select %p30, %s31, %s32
    %p36 = pneg %p30
    %p37 = scmp.eq.s32.totalorder %s9, 1
    %p38 = por %p36, %p37
    %p39 = scmp.ne.s32.totalorder %s31, %s34
    %p40 = scmp.eq.s32.totalorder %s9, 0
    %p41 = por %p39, %p40
    %p42 = scmp.ne.s32.totalorder %s31, %s34
    %p43 = scmp.eq.s32.totalorder %s14, 1
    %p44 = por %p42, %p43
    %p45 = scmp.ne.s32.totalorder %s34, %s35
    %p46 = scmp.eq.s32.totalorder %s14, 0
    %p47 = por %p45, %p46
    %p48 = scmp.ne.s32.totalorder %s34, %s35
    %p49 = scmp.eq.s32.totalorder %s15, 1
    %p50 = por %p48, %p49
    %p52 = scmp.ne.s32.totalorder %s35, %s51
    %p53 = scmp.eq.s32.totalorder %s15, 0
    %p54 = por %p52, %p53
    %s55 = ssub.s32 %s17, %s24
    %p56 = scmp.eq.s32.totalorder %s55, 0
    %s58 = sadd.s32 %s57, 1
    %s59 = scalar_select %p56, %s57, %s58
    %p62 = pneg %p56
    %p63 = scmp.eq.s32.totalorder %s9, 1
    %p64 = por %p62, %p63
    %p65 = scmp.ne.s32.totalorder %s57, %s60
    %p66 = scmp.eq.s32.totalorder %s9, 0
    %p67 = por %p65, %p66
    %p68 = scmp.ne.s32.totalorder %s57, %s60
    %p69 = scmp.eq.s32.totalorder %s14, 1
    %p70 = por %p68, %p69
    %p71 = scmp.ne.s32.totalorder %s60, %s61
    %p72 = scmp.eq.s32.totalorder %s14, 0
    %p73 = por %p71, %p72
    %p74 = scmp.ne.s32.totalorder %s60, %s61
    %p75 = scmp.eq.s32.totalorder %s15, 1
    %p76 = por %p74, %p75
    %p78 = scmp.ne.s32.totalorder %s61, %s77
    %p79 = scmp.eq.s32.totalorder %s15, 0
    %p80 = por %p78, %p79
    %s81 = ssub.s32 %s17, %s24
    %p82 = scmp.eq.s32.totalorder %s81, 0
    %s84 = sadd.s32 %s83, 1
    %s85 = scalar_select %p82, %s83, %s84
    %p88 = pneg %p82
    %p89 = scmp.eq.s32.totalorder %s9, 1
    %p90 = por %p88, %p89
    %p91 = scmp.ne.s32.totalorder %s83, %s86
    %p92 = scmp.eq.s32.totalorder %s9, 0
    %p93 = por %p91, %p92
    %p94 = scmp.ne.s32.totalorder %s83, %s86
    %p95 = scmp.eq.s32.totalorder %s14, 1
    %p96 = por %p94, %p95
    %p97 = scmp.ne.s32.totalorder %s86, %s87
    %p98 = scmp.eq.s32.totalorder %s14, 0
    %p99 = por %p97, %p98
    %p100 = scmp.ne.s32.totalorder %s86, %s87
    %p101 = scmp.eq.s32.totalorder %s15, 1
    %p102 = por %p100, %p101
    %p104 = scmp.ne.s32.totalorder %s87, %s103
    %p105 = scmp.eq.s32.totalorder %s15, 0
    %p106 = por %p104, %p105
    %s107 = ssub.s32 %s16, %s28
    %s108 = ssub.s32 %s17, %s24
    %s109 = sor.u32 %s107, %s108
    %p110 = scmp.eq.s32.totalorder %s109, 0
    %s112 = sadd.s32 %s111, 1
    %s113 = scalar_select %p110, %s111, %s112
    %p116 = pneg %p110
    %p117 = scmp.eq.s32.totalorder %s9, 1
    %p118 = por %p116, %p117
    %p119 = scmp.ne.s32.totalorder %s111, %s114
    %p120 = scmp.eq.s32.totalorder %s9, 0
    %p121 = por %p119, %p120
    %p122 = scmp.ne.s32.totalorder %s111, %s114
    %p123 = scmp.eq.s32.totalorder %s14, 1
    %p124 = por %p122, %p123
    %p125 = scmp.ne.s32.totalorder %s114, %s115
    %p126 = scmp.eq.s32.totalorder %s14, 0
    %p127 = por %p125, %p126
    %p128 = scmp.ne.s32.totalorder %s114, %s115
    %p129 = scmp.eq.s32.totalorder %s15, 1
    %p130 = por %p128, %p129
    %p132 = scmp.ne.s32.totalorder %s115, %s131
    %p133 = scmp.eq.s32.totalorder %s15, 0
    %p134 = por %p132, %p133
    %p135 = scmp.le.s32.totalorder 1, %s9
    %p136 = scmp.lt.s32.totalorder %s9, 3
    %p137 = pnand %p135, %p136
    %p138 = pneg %p137
    // Predicated region
    $region9: #{depthwise_xcorr_forward.5} parent=5 // pred_check
      _
    $region10: #{depthwise_xcorr_forward.5} parent=5 // pred_check_branch
      %140 = sbr.rel (%p137) target = $region12
    $region11: #{depthwise_xcorr_forward.5} parent=5 // pred_region
      %s141 = ssub.s32 %s9, 1
      // Predicated region
      $region13: #{depthwise_xcorr_forward.5} parent=11 // pred_check
        %p142 = pneg %p73
      $region14: #{depthwise_xcorr_forward.5} parent=11 // pred_check_branch
        %144 = sbr.rel (%p142) target = $region16
      $region15: #{depthwise_xcorr_forward.5} parent=11 // pred_region
        %p145 = scmp.lt.s32.totalorder %s19, 0
        %s146 = scalar_select %p145, %s19, 0
        %s147 = smul.addr %s146, 2
        %s148 = scalar_lea.vmem %s1, %s147
      $region16: #{depthwise_xcorr_forward.5} parent=11 // pred_fallthru
        _
      // Predicated region
      $region17: #{depthwise_xcorr_forward.5} parent=11 // pred_check
        %p149 = pneg %p99
      $region18: #{depthwise_xcorr_forward.5} parent=11 // pred_check_branch
        %151 = sbr.rel (%p149) target = $region20
      $region19: #{depthwise_xcorr_forward.5} parent=11 // pred_region
        %p152 = scmp.lt.s32.totalorder %s19, 0
        %s153 = scalar_select %p152, %s19, 0
        %s154 = scalar_lea.vmem %s2, %s153
      $region20: #{depthwise_xcorr_forward.5} parent=11 // pred_fallthru
        _
    $region12: #{depthwise_xcorr_forward.5} parent=5 // pred_fallthru
      _
    %p155 = scmp.lt.s32.totalorder %s9, 2
    // Predicated region
    $region21: #{depthwise_xcorr_forward.5} parent=5 // pred_check
      %p156 = pneg %p155
    $region22: #{depthwise_xcorr_forward.5} parent=5 // pred_check_branch
      %158 = sbr.rel (%p156) target = $region24
    $region23: #{depthwise_xcorr_forward.5} parent=5 // pred_region
      // Predicated region
      $region25: #{depthwise_xcorr_forward.5} parent=23 // pred_check
        %p159 = pneg %p41
      $region26: #{depthwise_xcorr_forward.5} parent=23 // pred_check_branch
        %161 = sbr.rel (%p159) target = $region28
      $region27: #{depthwise_xcorr_forward.5} parent=23 // pred_region
        %p162 = scmp.lt.s32.totalorder %s16, 1
        %s163 = scalar_select %p162, %s16, 1
        %s164 = smul.addr %s163, 32
        %s165 = smul.addr %s164, 4
        %s166 = scalar_lea.vmem %s0, %s165
      $region28: #{depthwise_xcorr_forward.5} parent=23 // pred_fallthru
        _
    $region24: #{depthwise_xcorr_forward.5} parent=5 // pred_fallthru
      _
    %p167 = scmp.le.s32.totalorder 1, %s9
    %p168 = scmp.lt.s32.totalorder %s9, 3
    %p169 = pnand %p167, %p168
    %p170 = pneg %p169
    // Predicated region
    $region29: #{depthwise_xcorr_forward.5} parent=5 // pred_check
      _
    $region30: #{depthwise_xcorr_forward.5} parent=5 // pred_check_branch
      %172 = sbr.rel (%p169) target = $region32
    $region31: #{depthwise_xcorr_forward.5} parent=5 // pred_region
      %s173 = ssub.s32 %s9, 1
      %p174 = scmp.lt.s32.totalorder %s18, 1
      %s175 = scalar_select %p174, %s18, 1
      %s176 = smul.addr %s175, 32
      %s177 = smul.addr %s176, 4
      %s178 = scalar_lea.vmem %s0, %s177
      %p179 = pneg %p47
      %p180 = pneg %p44
      %p181 = scmp.lt.s32.totalorder %s19, 0
      %s182 = scalar_select %p181, %s19, 0
      %s183 = smul.addr %s182, 2
      %s184 = scalar_lea.vmem %s1, %s183
      %p185 = pneg %p73
      %p186 = pneg %p70
      %p187 = scmp.lt.s32.totalorder %s19, 0
      %s188 = scalar_select %p187, %s19, 0
      %s189 = scalar_lea.vmem %s2, %s188
      %p190 = pneg %p99
      %p191 = pneg %p96
      %p192 = pneg %p127
      %p193 = pneg %p124
      %p194 = scmp.lt.s32.totalorder %s18, 1
      %s195 = scalar_select %p194, %s18, 1
      %p196 = scmp.lt.s32.totalorder %s19, 0
      %s197 = scalar_select %p196, %s19, 0
      %s198 = smul.addr %s195, 28
      %s199 = sadd.s32 %s197, %s198
      %s200 = smul.addr %s199, 4
      %s201 = scalar_lea.vmem %s3, %s200
      %p202 = scmp.lt.s32.totalorder %s18, 1
      %s203 = scalar_select %p202, %s18, 1
      %s204 = smul.addr %s203, 32
      %s205 = smul.addr %s204, 4
      %s206 = scalar_lea.vmem %s0, %s205
      %p207 = scmp.lt.s32.totalorder %s19, 0
      %s208 = scalar_select %p207, %s19, 0
      %s209 = smul.addr %s208, 2
      %s210 = scalar_lea.vmem %s1, %s209
      %p211 = scmp.lt.s32.totalorder %s19, 0
      %s212 = scalar_select %p211, %s19, 0
      %s213 = scalar_lea.vmem %s2, %s212
      %p214 = scmp.lt.s32.totalorder %s18, 1
      %s215 = scalar_select %p214, %s18, 1
      %p216 = scmp.lt.s32.totalorder %s19, 0
      %s217 = scalar_select %p216, %s19, 0
      %s218 = smul.addr %s215, 28
      %s219 = sadd.s32 %s217, %s218
      %s220 = smul.addr %s219, 4
      %s221 = scalar_lea.vmem %s3, %s220
      %v223 = vld [vmem:[%s206] sm:$0xf]
      %v224 = vld [vmem:[%s206 + $0x4] sm:$0xf]
      %v225 = vld [vmem:[%s206 + $0x8] sm:$0xf]
      %v226 = vld [vmem:[%s206 + $0xc] sm:$0xf]
      %v227 = vld [vmem:[%s206 + $0x10] sm:$0xf]
      %v228 = vld [vmem:[%s206 + $0x14] sm:$0xf]
      %v229 = vld [vmem:[%s206 + $0x18] sm:$0xf]
      %v230 = vld [vmem:[%s206 + $0x1c] sm:$0xf]
      %v231 = vld [vmem:[%s206 + $0x20] sm:$0xf]
      %v232 = vld [vmem:[%s206 + $0x24] sm:$0xf]
      %v233 = vld [vmem:[%s206 + $0x28] sm:$0xf]
      %v234 = vld [vmem:[%s206 + $0x2c] sm:$0xf]
      %v235 = vld [vmem:[%s206 + $0x30] sm:$0xf]
      %v236 = vld [vmem:[%s206 + $0x34] sm:$0xf]
      %v237 = vld [vmem:[%s206 + $0x38] sm:$0xf]
      %v238 = vld [vmem:[%s206 + $0x3c] sm:$0xf]
      %v239 = vld [vmem:[%s206 + $0x40] sm:$0xf]
      %v240 = vld [vmem:[%s206 + $0x44] sm:$0xf]
      %v241 = vld [vmem:[%s206 + $0x48] sm:$0xf]
      %v242 = vld [vmem:[%s206 + $0x4c] sm:$0xf]
      %v243 = vld [vmem:[%s206 + $0x50] sm:$0xf]
      %v244 = vld [vmem:[%s206 + $0x54] sm:$0xf]
      %v245 = vld [vmem:[%s206 + $0x58] sm:$0xf]
      %v246 = vld [vmem:[%s206 + $0x5c] sm:$0xf]
      %v247 = vld [vmem:[%s206 + $0x60] sm:$0xf]
      %v248 = vld [vmem:[%s206 + $0x64] sm:$0xf]
      %v249 = vld [vmem:[%s206 + $0x68] sm:$0xf]
      %v250 = vld [vmem:[%s206 + $0x6c] sm:$0xf]
      %v251 = vld [vmem:[%s210] sm:$0x3]
      %v280 = vunpack.c.l.b16 %v223
      %v281 = vunpack.c.l.b16 %v224
      %v282 = vunpack.c.l.b16 %v225
      %v283 = vunpack.c.l.b16 %v226
      %v284 = vunpack.c.l.b16 %v227
      %v285 = vunpack.c.l.b16 %v228
      %v286 = vunpack.c.l.b16 %v229
      %v287 = vunpack.c.l.b16 %v230
      %v288 = vunpack.c.l.b16 %v231
      %v289 = vunpack.c.l.b16 %v232
      %v290 = vunpack.c.l.b16 %v233
      %v291 = vunpack.c.l.b16 %v234
      %v292 = vunpack.c.l.b16 %v235
      %v293 = vunpack.c.l.b16 %v236
      %v294 = vunpack.c.l.b16 %v237
      %v295 = vunpack.c.l.b16 %v238
      %v296 = vunpack.c.l.b16 %v239
      %v297 = vunpack.c.l.b16 %v240
      %v298 = vunpack.c.l.b16 %v241
      %v299 = vunpack.c.l.b16 %v242
      %v300 = vunpack.c.l.b16 %v243
      %v301 = vunpack.c.l.b16 %v244
      %v302 = vunpack.c.l.b16 %v245
      %v303 = vunpack.c.l.b16 %v246
      %v304 = vunpack.c.l.b16 %v247
      %v305 = vunpack.c.l.b16 %v248
      %v306 = vunpack.c.l.b16 %v249
      %v307 = vunpack.c.l.b16 %v250
      %v308 = vpack.c.b16 %v281, %v280
      %v309 = vpack.c.b16 %v283, %v282
      %v310 = vpack.c.b16 %v285, %v284
      %v311 = vpack.c.b16 %v287, %v286
      %v312 = vpack.c.b16 %v289, %v288
      %v313 = vpack.c.b16 %v291, %v290
      %v314 = vpack.c.b16 %v293, %v292
      %v315 = vpack.c.b16 %v295, %v294
      %v316 = vpack.c.b16 %v297, %v296
      %v317 = vpack.c.b16 %v299, %v298
      %v318 = vpack.c.b16 %v301, %v300
      %v319 = vpack.c.b16 %v303, %v302
      %v320 = vpack.c.b16 %v305, %v304
      %v321 = vpack.c.b16 %v307, %v306
      %vm322 = vcmask 31744
      %v324 = vsel %vm322, %v308, 0
      %v327 = vsel %vm322, %v309, 0
      %v330 = vsel %vm322, %v310, 0
      %v333 = vsel %vm322, %v311, 0
      %v336 = vsel %vm322, %v312, 0
      %v339 = vsel %vm322, %v313, 0
      %v342 = vsel %vm322, %v314, 0
      %v345 = vsel %vm322, %v315, 0
      %v348 = vsel %vm322, %v316, 0
      %v351 = vsel %vm322, %v317, 0
      %v354 = vsel %vm322, %v318, 0
      %v357 = vsel %vm322, %v319, 0
      %v360 = vsel %vm322, %v320, 0
      %v363 = vsel %vm322, %v321, 0
      %vm365 = vcmask 1041408
      %v367 = vsel %vm365, %v251, 0
      %369 = vmatprep.subr.bf16.mxu0 0
      %370 = vmatpush1.bf16.msra.mxu0 %v367
      %371 = vmatprep.subr.bf16.mxu0 0
      %372 = vmatpush1.bf16.msra.mxu0 0
      %373 = vmatprep.subr.bf16.mxu0 0
      %374 = vmatpush1.bf16.msra.mxu0 0
      %375 = vmatprep.subr.bf16.mxu0 0
      %376 = vmatpush1.bf16.msra.mxu0 0
      %377 = vmatprep.subr.bf16.mxu0 0
      %378 = vmatpush1.bf16.msra.mxu0 0
      %379 = vmatprep.subr.bf16.mxu0 0
      %380 = vmatpush1.bf16.msra.mxu0 0
      %381 = vmatprep.subr.bf16.mxu0 0
      %382 = vmatpush1.bf16.msra.mxu0 0
      %383 = vmatprep.subr.bf16.mxu0 0
      %384 = vmatpush1.bf16.msra.mxu0 0
      %385 = vmatprep.subr.bf16.mxu0 0
      %386 = vmatpush1.bf16.msra.mxu0 0
      %387 = vmatprep.subr.bf16.mxu0 0
      %388 = vmatpush1.bf16.msra.mxu0 0
      %389 = vmatprep.subr.bf16.mxu0 0
      %390 = vmatpush1.bf16.msra.mxu0 0
      %391 = vmatprep.subr.bf16.mxu0 0
      %392 = vmatpush1.bf16.msra.mxu0 0
      %393 = vmatprep.subr.bf16.mxu0 0
      %394 = vmatpush1.bf16.msra.mxu0 0
      %395 = vmatprep.subr.bf16.mxu0 0
      %396 = vmatpush1.bf16.msra.mxu0 0
      %397 = vmatprep.subr.bf16.mxu0 0
      %398 = vmatpush1.bf16.msra.mxu0 0
      %399 = vmatprep.subr.bf16.mxu0 0
      %400 = vmatpush1.bf16.msra.mxu0 0
      %401 = vmatprep.mubr.bf16.mxu0 0
      %402 = vmatmul.mubr.bf16.gmra.mrb[0].mxu0 %v324
      %v403 = vpop.f32.mrb[0].mxu0
      %v404 = vadd.f32 0.0, %v403
      %v405 = vpop.f32.mrb[0].mxu0
      %v406 = vpop.f32.mrb[0].mxu0
      %v407 = vadd.f32 0.0, %v406
      %v408 = vpop.f32.mrb[0].mxu0
      %409 = vmatprep.mubr.bf16.mxu0 0
      %410 = vmatmul.mubr.bf16.gmra.mrb[0].mxu0 %v327
      %v411 = vpop.f32.mrb[0].mxu0
      %v412 = vadd.f32 0.0, %v411
      %v413 = vpop.f32.mrb[0].mxu0
      %v414 = vpop.f32.mrb[0].mxu0
      %v415 = vadd.f32 0.0, %v414
      %v416 = vpop.f32.mrb[0].mxu0
      %417 = vmatprep.mubr.bf16.mxu0 0
      %418 = vmatmul.mubr.bf16.gmra.mrb[0].mxu0 %v330
      %v419 = vpop.f32.mrb[0].mxu0
      %v420 = vadd.f32 0.0, %v419
      %v421 = vpop.f32.mrb[0].mxu0
      %v422 = vpop.f32.mrb[0].mxu0
      %v423 = vadd.f32 0.0, %v422
      %v424 = vpop.f32.mrb[0].mxu0
      %425 = vmatprep.mubr.bf16.mxu0 0
      %426 = vmatmul.mubr.bf16.gmra.mrb[0].mxu0 %v333
      %v427 = vpop.f32.mrb[0].mxu0
      %v428 = vadd.f32 0.0, %v427
      %v429 = vpop.f32.mrb[0].mxu0
      %v430 = vpop.f32.mrb[0].mxu0
      %v431 = vadd.f32 0.0, %v430
      %v432 = vpop.f32.mrb[0].mxu0
      %433 = vmatprep.mubr.bf16.mxu0 0
      %434 = vmatmul.mubr.bf16.gmra.mrb[0].mxu0 %v336
      %v435 = vpop.f32.mrb[0].mxu0
      %v436 = vadd.f32 0.0, %v435
      %v437 = vpop.f32.mrb[0].mxu0
      %v438 = vpop.f32.mrb[0].mxu0
      %v439 = vadd.f32 0.0, %v438
      %v440 = vpop.f32.mrb[0].mxu0
      %441 = vmatprep.mubr.bf16.mxu0 0
      %442 = vmatmul.mubr.bf16.gmra.mrb[0].mxu0 %v339
      %v443 = vpop.f32.mrb[0].mxu0
      %v444 = vadd.f32 0.0, %v443
      %v445 = vpop.f32.mrb[0].mxu0
      %v446 = vpop.f32.mrb[0].mxu0
      %v447 = vadd.f32 0.0, %v446
      %v448 = vpop.f32.mrb[0].mxu0
      %449 = vmatprep.mubr.bf16.mxu0 0
      %450 = vmatmul.mubr.bf16.gmra.mrb[0].mxu0 %v342
      %v451 = vpop.f32.mrb[0].mxu0
      %v452 = vadd.f32 0.0, %v451
      %v453 = vpop.f32.mrb[0].mxu0
      %v454 = vpop.f32.mrb[0].mxu0
      %v455 = vadd.f32 0.0, %v454
      %v456 = vpop.f32.mrb[0].mxu0
      %457 = vmatprep.mubr.bf16.mxu0 0
      %458 = vmatmul.mubr.bf16.gmra.mrb[0].mxu0 %v345
      %v459 = vpop.f32.mrb[0].mxu0
      %v460 = vadd.f32 0.0, %v459
      %v461 = vpop.f32.mrb[0].mxu0
      %v462 = vpop.f32.mrb[0].mxu0
      %v463 = vadd.f32 0.0, %v462
      %v464 = vpop.f32.mrb[0].mxu0
      %465 = vmatprep.mubr.bf16.mxu0 0
      %466 = vmatmul.mubr.bf16.gmra.mrb[0].mxu0 %v348
      %v467 = vpop.f32.mrb[0].mxu0
      %v468 = vadd.f32 0.0, %v467
      %v469 = vpop.f32.mrb[0].mxu0
      %v470 = vpop.f32.mrb[0].mxu0
      %v471 = vadd.f32 0.0, %v470
      %v472 = vpop.f32.mrb[0].mxu0
      %473 = vmatprep.mubr.bf16.mxu0 0
      %474 = vmatmul.mubr.bf16.gmra.mrb[0].mxu0 %v351
      %v475 = vpop.f32.mrb[0].mxu0
      %v476 = vadd.f32 0.0, %v475
      %v477 = vpop.f32.mrb[0].mxu0
      %v478 = vpop.f32.mrb[0].mxu0
      %v479 = vadd.f32 0.0, %v478
      %v480 = vpop.f32.mrb[0].mxu0
      %481 = vmatprep.mubr.bf16.mxu0 0
      %482 = vmatmul.mubr.bf16.gmra.mrb[0].mxu0 %v354
      %v483 = vpop.f32.mrb[0].mxu0
      %v484 = vadd.f32 0.0, %v483
      %v485 = vpop.f32.mrb[0].mxu0
      %v486 = vpop.f32.mrb[0].mxu0
      %v487 = vadd.f32 0.0, %v486
      %v488 = vpop.f32.mrb[0].mxu0
      %489 = vmatprep.mubr.bf16.mxu0 0
      %490 = vmatmul.mubr.bf16.gmra.mrb[0].mxu0 %v357
      %v491 = vpop.f32.mrb[0].mxu0
      %v492 = vadd.f32 0.0, %v491
      %v493 = vpop.f32.mrb[0].mxu0
      %v494 = vpop.f32.mrb[0].mxu0
      %v495 = vadd.f32 0.0, %v494
      %v496 = vpop.f32.mrb[0].mxu0
      %497 = vmatprep.mubr.bf16.mxu0 0
      %498 = vmatmul.mubr.bf16.gmra.mrb[0].mxu0 %v360
      %v499 = vpop.f32.mrb[0].mxu0
      %v500 = vadd.f32 0.0, %v499
      %v501 = vpop.f32.mrb[0].mxu0
      %v502 = vpop.f32.mrb[0].mxu0
      %v503 = vadd.f32 0.0, %v502
      %v504 = vpop.f32.mrb[0].mxu0
      %505 = vmatprep.mubr.bf16.mxu0 0
      %506 = vmatmul.mubr.bf16.gmra.mrb[0].mxu0 %v363
      %v507 = vpop.f32.mrb[0].mxu0
      %v508 = vadd.f32 0.0, %v507
      %v509 = vpop.f32.mrb[0].mxu0
      %v510 = vpop.f32.mrb[0].mxu0
      %v511 = vadd.f32 0.0, %v510
      %v512 = vpop.f32.mrb[0].mxu0
      %513 = vdwg.mxu0
      %v514 = vadd.f32 %v404, 0.0
      %v515 = vadd.f32 %v407, 0.0
      %v516 = vadd.f32 %v412, 0.0
      %v517 = vadd.f32 %v415, 0.0
      %v518 = vadd.f32 %v420, 0.0
      %v519 = vadd.f32 %v423, 0.0
      %v520 = vadd.f32 %v428, 0.0
      %v521 = vadd.f32 %v431, 0.0
      %v522 = vadd.f32 %v436, 0.0
      %v523 = vadd.f32 %v439, 0.0
      %v524 = vadd.f32 %v444, 0.0
      %v525 = vadd.f32 %v447, 0.0
      %v526 = vadd.f32 %v452, 0.0
      %v527 = vadd.f32 %v455, 0.0
      %v528 = vadd.f32 %v460, 0.0
      %v529 = vadd.f32 %v463, 0.0
      %v530 = vadd.f32 %v468, 0.0
      %v531 = vadd.f32 %v471, 0.0
      %v532 = vadd.f32 %v476, 0.0
      %v533 = vadd.f32 %v479, 0.0
      %v534 = vadd.f32 %v484, 0.0
      %v535 = vadd.f32 %v487, 0.0
      %v536 = vadd.f32 %v492, 0.0
      %v537 = vadd.f32 %v495, 0.0
      %v538 = vadd.f32 %v500, 0.0
      %v539 = vadd.f32 %v503, 0.0
      %v540 = vadd.f32 %v508, 0.0
      %v541 = vadd.f32 %v511, 0.0
      %s542 = scalar_lea.vmem %s210, 2
      %v543 = vld [vmem:[%s542] sm:$0x3]
      %v545 = vsel %vm365, %v543, 0
      %547 = vmatprep.subr.bf16.mxu0 0
      %548 = vmatpush1.bf16.msra.mxu0 %v545
      %549 = vmatprep.subr.bf16.mxu0 0
      %550 = vmatpush1.bf16.msra.mxu0 0
      %551 = vmatprep.subr.bf16.mxu0 0
      %552 = vmatpush1.bf16.msra.mxu0 0
      %553 = vmatprep.subr.bf16.mxu0 0
      %554 = vmatpush1.bf16.msra.mxu0 0
      %555 = vmatprep.subr.bf16.mxu0 0
      %556 = vmatpush1.bf16.msra.mxu0 0
      %557 = vmatprep.subr.bf16.mxu0 0
      %558 = vmatpush1.bf16.msra.mxu0 0
      %559 = vmatprep.subr.bf16.mxu0 0
      %560 = vmatpush1.bf16.msra.mxu0 0
      %561 = vmatprep.subr.bf16.mxu0 0
      %562 = vmatpush1.bf16.msra.mxu0 0
      %563 = vmatprep.subr.bf16.mxu0 0
      %564 = vmatpush1.bf16.msra.mxu0 0
      %565 = vmatprep.subr.bf16.mxu0 0
      %566 = vmatpush1.bf16.msra.mxu0 0
      %567 = vmatprep.subr.bf16.mxu0 0
      %568 = vmatpush1.bf16.msra.mxu0 0
      %569 = vmatprep.subr.bf16.mxu0 0
      %570 = vmatpush1.bf16.msra.mxu0 0
      %571 = vmatprep.subr.bf16.mxu0 0
      %572 = vmatpush1.bf16.msra.mxu0 0
      %573 = vmatprep.subr.bf16.mxu0 0
      %574 = vmatpush1.bf16.msra.mxu0 0
      %575 = vmatprep.subr.bf16.mxu0 0
      %576 = vmatpush1.bf16.msra.mxu0 0
      %577 = vmatprep.subr.bf16.mxu0 0
      %578 = vmatpush1.bf16.msra.mxu0 0
      %579 = vmatprep.mubr.bf16.mxu0 0
      %580 = vmatmul.mubr.bf16.gmra.mrb[0].mxu0 %v324
      %v581 = vpop.f32.mrb[0].mxu0
      %v582 = vadd.f32 0.0, %v581
      %v583 = vpop.f32.mrb[0].mxu0
      %v584 = vpop.f32.mrb[0].mxu0
      %v585 = vadd.f32 0.0, %v584
      %v586 = vpop.f32.mrb[0].mxu0
      %587 = vmatprep.mubr.bf16.mxu0 0
      %588 = vmatmul.mubr.bf16.gmra.mrb[0].mxu0 %v327
      %v589 = vpop.f32.mrb[0].mxu0
      %v590 = vadd.f32 0.0, %v589
      %v591 = vpop.f32.mrb[0].mxu0
      %v592 = vpop.f32.mrb[0].mxu0
      %v593 = vadd.f32 0.0, %v592
      %v594 = vpop.f32.mrb[0].mxu0
      %595 = vmatprep.mubr.bf16.mxu0 0
      %596 = vmatmul.mubr.bf16.gmra.mrb[0].mxu0 %v330
      %v597 = vpop.f32.mrb[0].mxu0
      %v598 = vadd.f32 0.0, %v597
      %v599 = vpop.f32.mrb[0].mxu0
      %v600 = vpop.f32.mrb[0].mxu0
      %v601 = vadd.f32 0.0, %v600
      %v602 = vpop.f32.mrb[0].mxu0
      %603 = vmatprep.mubr.bf16.mxu0 0
      %604 = vmatmul.mubr.bf16.gmra.mrb[0].mxu0 %v333
      %v605 = vpop.f32.mrb[0].mxu0
      %v606 = vadd.f32 0.0, %v605
      %v607 = vpop.f32.mrb[0].mxu0
      %v608 = vpop.f32.mrb[0].mxu0
      %v609 = vadd.f32 0.0, %v608
      %v610 = vpop.f32.mrb[0].mxu0
      %611 = vmatprep.mubr.bf16.mxu0 0
      %612 = vmatmul.mubr.bf16.gmra.mrb[0].mxu0 %v336
      %v613 = vpop.f32.mrb[0].mxu0
      %v614 = vadd.f32 0.0, %v613
      %v615 = vpop.f32.mrb[0].mxu0
      %v616 = vpop.f32.mrb[0].mxu0
      %v617 = vadd.f32 0.0, %v616
      %v618 = vpop.f32.mrb[0].mxu0
      %619 = vmatprep.mubr.bf16.mxu0 0
      %620 = vmatmul.mubr.bf16.gmra.mrb[0].mxu0 %v339
      %v621 = vpop.f32.mrb[0].mxu0
      %v622 = vadd.f32 0.0, %v621
      %v623 = vpop.f32.mrb[0].mxu0
      %v624 = vpop.f32.mrb[0].mxu0
      %v625 = vadd.f32 0.0, %v624
      %v626 = vpop.f32.mrb[0].mxu0
      %627 = vmatprep.mubr.bf16.mxu0 0
      %628 = vmatmul.mubr.bf16.gmra.mrb[0].mxu0 %v342
      %v629 = vpop.f32.mrb[0].mxu0
      %v630 = vadd.f32 0.0, %v629
      %v631 = vpop.f32.mrb[0].mxu0
      %v632 = vpop.f32.mrb[0].mxu0
      %v633 = vadd.f32 0.0, %v632
      %v634 = vpop.f32.mrb[0].mxu0
      %635 = vmatprep.mubr.bf16.mxu0 0
      %636 = vmatmul.mubr.bf16.gmra.mrb[0].mxu0 %v345
      %v637 = vpop.f32.mrb[0].mxu0
      %v638 = vadd.f32 0.0, %v637
      %v639 = vpop.f32.mrb[0].mxu0
      %v640 = vpop.f32.mrb[0].mxu0
      %v641 = vadd.f32 0.0, %v640
      %v642 = vpop.f32.mrb[0].mxu0
      %643 = vmatprep.mubr.bf16.mxu0 0
      %644 = vmatmul.mubr.bf16.gmra.mrb[0].mxu0 %v348
      %v645 = vpop.f32.mrb[0].mxu0
      %v646 = vadd.f32 0.0, %v645
      %v647 = vpop.f32.mrb[0].mxu0
      %v648 = vpop.f32.mrb[0].mxu0
      %v649 = vadd.f32 0.0, %v648
      %v650 = vpop.f32.mrb[0].mxu0
      %651 = vmatprep.mubr.bf16.mxu0 0
      %652 = vmatmul.mubr.bf16.gmra.mrb[0].mxu0 %v351
      %v653 = vpop.f32.mrb[0].mxu0
      %v654 = vadd.f32 0.0, %v653
      %v655 = vpop.f32.mrb[0].mxu0
      %v656 = vpop.f32.mrb[0].mxu0
      %v657 = vadd.f32 0.0, %v656
      %v658 = vpop.f32.mrb[0].mxu0
      %659 = vmatprep.mubr.bf16.mxu0 0
      %660 = vmatmul.mubr.bf16.gmra.mrb[0].mxu0 %v354
      %v661 = vpop.f32.mrb[0].mxu0
      %v662 = vadd.f32 0.0, %v661
      %v663 = vpop.f32.mrb[0].mxu0
      %v664 = vpop.f32.mrb[0].mxu0
      %v665 = vadd.f32 0.0, %v664
      %v666 = vpop.f32.mrb[0].mxu0
      %667 = vmatprep.mubr.bf16.mxu0 0
      %668 = vmatmul.mubr.bf16.gmra.mrb[0].mxu0 %v357
      %v669 = vpop.f32.mrb[0].mxu0
      %v670 = vadd.f32 0.0, %v669
      %v671 = vpop.f32.mrb[0].mxu0
      %v672 = vpop.f32.mrb[0].mxu0
      %v673 = vadd.f32 0.0, %v672
      %v674 = vpop.f32.mrb[0].mxu0
      %675 = vmatprep.mubr.bf16.mxu0 0
      %676 = vmatmul.mubr.bf16.gmra.mrb[0].mxu0 %v360
      %v677 = vpop.f32.mrb[0].mxu0
      %v678 = vadd.f32 0.0, %v677
      %v679 = vpop.f32.mrb[0].mxu0
      %v680 = vpop.f32.mrb[0].mxu0
      %v681 = vadd.f32 0.0, %v680
      %v682 = vpop.f32.mrb[0].mxu0
      %683 = vmatprep.mubr.bf16.mxu0 0
      %684 = vmatmul.mubr.bf16.gmra.mrb[0].mxu0 %v363
      %v685 = vpop.f32.mrb[0].mxu0
      %v686 = vadd.f32 0.0, %v685
      %v687 = vpop.f32.mrb[0].mxu0
      %v688 = vpop.f32.mrb[0].mxu0
      %v689 = vadd.f32 0.0, %v688
      %v690 = vpop.f32.mrb[0].mxu0
      %691 = vdwg.mxu0
      %v692 = vrot.slane %v582, 1
      %v693 = vrot.slane %v590, 1
      %v694 = vrot.slane %v598, 1
      %v695 = vrot.slane %v606, 1
      %v696 = vrot.slane %v614, 1
      %v697 = vrot.slane %v622, 1
      %v698 = vrot.slane %v630, 1
      %v699 = vrot.slane %v638, 1
      %v700 = vrot.slane %v646, 1
      %v701 = vrot.slane %v654, 1
      %v702 = vrot.slane %v662, 1
      %v703 = vrot.slane %v670, 1
      %v704 = vrot.slane %v678, 1
      %v705 = vrot.slane %v686, 1
      %v706 = vrot.slane %v585, 1
      %v707 = vrot.slane %v593, 1
      %v708 = vrot.slane %v601, 1
      %v709 = vrot.slane %v609, 1
      %v710 = vrot.slane %v617, 1
      %v711 = vrot.slane %v625, 1
      %v712 = vrot.slane %v633, 1
      %v713 = vrot.slane %v641, 1
      %v714 = vrot.slane %v649, 1
      %v715 = vrot.slane %v657, 1
      %v716 = vrot.slane %v665, 1
      %v717 = vrot.slane %v673, 1
      %v718 = vrot.slane %v681, 1
      %v719 = vrot.slane %v689, 1
      %v720 = vlaneseq
      %v721 = vshrl.u32 %v720, 7
      %vm722 = vcmp.lt.s32.totalorder %v721, 7
      %v723 = vsel %vm722, %v692, %v706
      %v724 = vsel %vm722, %v693, %v707
      %v725 = vsel %vm722, %v694, %v708
      %v726 = vsel %vm722, %v695, %v709
      %v727 = vsel %vm722, %v696, %v710
      %v728 = vsel %vm722, %v697, %v711
      %v729 = vsel %vm722, %v698, %v712
      %v730 = vsel %vm722, %v699, %v713
      %v731 = vsel %vm722, %v700, %v714
      %v732 = vsel %vm722, %v701, %v715
      %v733 = vsel %vm722, %v702, %v716
      %v734 = vsel %vm722, %v703, %v717
      %v735 = vsel %vm722, %v704, %v718
      %v736 = vsel %vm722, %v705, %v719
      %v737 = vsel %vm722, %v706, %v692
      %v738 = vsel %vm722, %v707, %v693
      %v739 = vsel %vm722, %v708, %v694
      %v740 = vsel %vm722, %v709, %v695
      %v741 = vsel %vm722, %v710, %v696
      %v742 = vsel %vm722, %v711, %v697
      %v743 = vsel %vm722, %v712, %v698
      %v744 = vsel %vm722, %v713, %v699
      %v745 = vsel %vm722, %v714, %v700
      %v746 = vsel %vm722, %v715, %v701
      %v747 = vsel %vm722, %v716, %v702
      %v748 = vsel %vm722, %v717, %v703
      %v749 = vsel %vm722, %v718, %v704
      %v750 = vsel %vm722, %v719, %v705
      %v751 = vadd.f32 %v514, %v723
      %v752 = vadd.f32 %v515, %v737
      %v753 = vadd.f32 %v516, %v724
      %v754 = vadd.f32 %v517, %v738
      %v755 = vadd.f32 %v518, %v725
      %v756 = vadd.f32 %v519, %v739
      %v757 = vadd.f32 %v520, %v726
      %v758 = vadd.f32 %v521, %v740
      %v759 = vadd.f32 %v522, %v727
      %v760 = vadd.f32 %v523, %v741
      %v761 = vadd.f32 %v524, %v728
      %v762 = vadd.f32 %v525, %v742
      %v763 = vadd.f32 %v526, %v729
      %v764 = vadd.f32 %v527, %v743
      %v765 = vadd.f32 %v528, %v730
      %v766 = vadd.f32 %v529, %v744
      %v767 = vadd.f32 %v530, %v731
      %v768 = vadd.f32 %v531, %v745
      %v769 = vadd.f32 %v532, %v732
      %v770 = vadd.f32 %v533, %v746
      %v771 = vadd.f32 %v534, %v733
      %v772 = vadd.f32 %v535, %v747
      %v773 = vadd.f32 %v536, %v734
      %v774 = vadd.f32 %v537, %v748
      %v775 = vadd.f32 %v538, %v735
      %v776 = vadd.f32 %v539, %v749
      %v777 = vadd.f32 %v540, %v736
      %v778 = vadd.f32 %v541, %v750
      %s779 = scalar_lea.vmem %s210, 4
      %v780 = vld [vmem:[%s779] sm:$0x3]
      %v782 = vsel %vm365, %v780, 0
      %784 = vmatprep.subr.bf16.mxu0 0
      %785 = vmatpush1.bf16.msra.mxu0 %v782
      %786 = vmatprep.subr.bf16.mxu0 0
      %787 = vmatpush1.bf16.msra.mxu0 0
      %788 = vmatprep.subr.bf16.mxu0 0
      %789 = vmatpush1.bf16.msra.mxu0 0
      %790 = vmatprep.subr.bf16.mxu0 0
      %791 = vmatpush1.bf16.msra.mxu0 0
      %792 = vmatprep.subr.bf16.mxu0 0
      %793 = vmatpush1.bf16.msra.mxu0 0
      %794 = vmatprep.subr.bf16.mxu0 0
      %795 = vmatpush1.bf16.msra.mxu0 0
      %796 = vmatprep.subr.bf16.mxu0 0
      %797 = vmatpush1.bf16.msra.mxu0 0
      %798 = vmatprep.subr.bf16.mxu0 0
      %799 = vmatpush1.bf16.msra.mxu0 0
      %800 = vmatprep.subr.bf16.mxu0 0
      %801 = vmatpush1.bf16.msra.mxu0 0
      %802 = vmatprep.subr.bf16.mxu0 0
      %803 = vmatpush1.bf16.msra.mxu0 0
      %804 = vmatprep.subr.bf16.mxu0 0
      %805 = vmatpush1.bf16.msra.mxu0 0
      %806 = vmatprep.subr.bf16.mxu0 0
      %807 = vmatpush1.bf16.msra.mxu0 0
      %808 = vmatprep.subr.bf16.mxu0 0
      %809 = vmatpush1.bf16.msra.mxu0 0
      %810 = vmatprep.subr.bf16.mxu0 0
      %811 = vmatpush1.bf16.msra.mxu0 0
      %812 = vmatprep.subr.bf16.mxu0 0
      %813 = vmatpush1.bf16.msra.mxu0 0
      %814 = vmatprep.subr.bf16.mxu0 0
      %815 = vmatpush1.bf16.msra.mxu0 0
      %816 = vmatprep.mubr.bf16.mxu0 0
      %817 = vmatmul.mubr.bf16.gmra.mrb[0].mxu0 %v324
      %v818 = vpop.f32.mrb[0].mxu0
      %v819 = vadd.f32 0.0, %v818
      %v820 = vpop.f32.mrb[0].mxu0
      %v821 = vpop.f32.mrb[0].mxu0
      %v822 = vadd.f32 0.0, %v821
      %v823 = vpop.f32.mrb[0].mxu0
      %824 = vmatprep.mubr.bf16.mxu0 0
      %825 = vmatmul.mubr.bf16.gmra.mrb[0].mxu0 %v327
      %v826 = vpop.f32.mrb[0].mxu0
      %v827 = vadd.f32 0.0, %v826
      %v828 = vpop.f32.mrb[0].mxu0
      %v829 = vpop.f32.mrb[0].mxu0
      %v830 = vadd.f32 0.0, %v829
      %v831 = vpop.f32.mrb[0].mxu0
      %832 = vmatprep.mubr.bf16.mxu0 0
      %833 = vmatmul.mubr.bf16.gmra.mrb[0].mxu0 %v330
      %v834 = vpop.f32.mrb[0].mxu0
      %v835 = vadd.f32 0.0, %v834
      %v836 = vpop.f32.mrb[0].mxu0
      %v837 = vpop.f32.mrb[0].mxu0
      %v838 = vadd.f32 0.0, %v837
      %v839 = vpop.f32.mrb[0].mxu0
      %840 = vmatprep.mubr.bf16.mxu0 0
      %841 = vmatmul.mubr.bf16.gmra.mrb[0].mxu0 %v333
      %v842 = vpop.f32.mrb[0].mxu0
      %v843 = vadd.f32 0.0, %v842
      %v844 = vpop.f32.mrb[0].mxu0
      %v845 = vpop.f32.mrb[0].mxu0
      %v846 = vadd.f32 0.0, %v845
      %v847 = vpop.f32.mrb[0].mxu0
      %848 = vmatprep.mubr.bf16.mxu0 0
      %849 = vmatmul.mubr.bf16.gmra.mrb[0].mxu0 %v336
      %v850 = vpop.f32.mrb[0].mxu0
      %v851 = vadd.f32 0.0, %v850
      %v852 = vpop.f32.mrb[0].mxu0
      %v853 = vpop.f32.mrb[0].mxu0
      %v854 = vadd.f32 0.0, %v853
      %v855 = vpop.f32.mrb[0].mxu0
      %856 = vmatprep.mubr.bf16.mxu0 0
      %857 = vmatmul.mubr.bf16.gmra.mrb[0].mxu0 %v339
      %v858 = vpop.f32.mrb[0].mxu0
      %v859 = vadd.f32 0.0, %v858
      %v860 = vpop.f32.mrb[0].mxu0
      %v861 = vpop.f32.mrb[0].mxu0
      %v862 = vadd.f32 0.0, %v861
      %v863 = vpop.f32.mrb[0].mxu0
      %864 = vmatprep.mubr.bf16.mxu0 0
      %865 = vmatmul.mubr.bf16.gmra.mrb[0].mxu0 %v342
      %v866 = vpop.f32.mrb[0].mxu0
      %v867 = vadd.f32 0.0, %v866
      %v868 = vpop.f32.mrb[0].mxu0
      %v869 = vpop.f32.mrb[0].mxu0
      %v870 = vadd.f32 0.0, %v869
      %v871 = vpop.f32.mrb[0].mxu0
      %872 = vmatprep.mubr.bf16.mxu0 0
      %873 = vmatmul.mubr.bf16.gmra.mrb[0].mxu0 %v345
      %v874 = vpop.f32.mrb[0].mxu0
      %v875 = vadd.f32 0.0, %v874
      %v876 = vpop.f32.mrb[0].mxu0
      %v877 = vpop.f32.mrb[0].mxu0
      %v878 = vadd.f32 0.0, %v877
      %v879 = vpop.f32.mrb[0].mxu0
      %880 = vmatprep.mubr.bf16.mxu0 0
      %881 = vmatmul.mubr.bf16.gmra.mrb[0].mxu0 %v348
      %v882 = vpop.f32.mrb[0].mxu0
      %v883 = vadd.f32 0.0, %v882
      %v884 = vpop.f32.mrb[0].mxu0
      %v885 = vpop.f32.mrb[0].mxu0
      %v886 = vadd.f32 0.0, %v885
      %v887 = vpop.f32.mrb[0].mxu0
      %888 = vmatprep.mubr.bf16.mxu0 0
      %889 = vmatmul.mubr.bf16.gmra.mrb[0].mxu0 %v351
      %v890 = vpop.f32.mrb[0].mxu0
      %v891 = vadd.f32 0.0, %v890
      %v892 = vpop.f32.mrb[0].mxu0
      %v893 = vpop.f32.mrb[0].mxu0
      %v894 = vadd.f32 0.0, %v893
      %v895 = vpop.f32.mrb[0].mxu0
      %896 = vmatprep.mubr.bf16.mxu0 0
      %897 = vmatmul.mubr.bf16.gmra.mrb[0].mxu0 %v354
      %v898 = vpop.f32.mrb[0].mxu0
      %v899 = vadd.f32 0.0, %v898
      %v900 = vpop.f32.mrb[0].mxu0
      %v901 = vpop.f32.mrb[0].mxu0
      %v902 = vadd.f32 0.0, %v901
      %v903 = vpop.f32.mrb[0].mxu0
      %904 = vmatprep.mubr.bf16.mxu0 0
      %905 = vmatmul.mubr.bf16.gmra.mrb[0].mxu0 %v357
      %v906 = vpop.f32.mrb[0].mxu0
      %v907 = vadd.f32 0.0, %v906
      %v908 = vpop.f32.mrb[0].mxu0
      %v909 = vpop.f32.mrb[0].mxu0
      %v910 = vadd.f32 0.0, %v909
      %v911 = vpop.f32.mrb[0].mxu0
      %912 = vmatprep.mubr.bf16.mxu0 0
      %913 = vmatmul.mubr.bf16.gmra.mrb[0].mxu0 %v360
      %v914 = vpop.f32.mrb[0].mxu0
      %v915 = vadd.f32 0.0, %v914
      %v916 = vpop.f32.mrb[0].mxu0
      %v917 = vpop.f32.mrb[0].mxu0
      %v918 = vadd.f32 0.0, %v917
      %v919 = vpop.f32.mrb[0].mxu0
      %920 = vmatprep.mubr.bf16.mxu0 0
      %921 = vmatmul.mubr.bf16.gmra.mrb[0].mxu0 %v363
      %v922 = vpop.f32.mrb[0].mxu0
      %v923 = vadd.f32 0.0, %v922
      %v924 = vpop.f32.mrb[0].mxu0
      %v925 = vpop.f32.mrb[0].mxu0
      %v926 = vadd.f32 0.0, %v925
      %v927 = vpop.f32.mrb[0].mxu0
      %928 = vdwg.mxu0
      %v929 = vrot.slane %v819, 2
      %v930 = vrot.slane %v827, 2
      %v931 = vrot.slane %v835, 2
      %v932 = vrot.slane %v843, 2
      %v933 = vrot.slane %v851, 2
      %v934 = vrot.slane %v859, 2
      %v935 = vrot.slane %v867, 2
      %v936 = vrot.slane %v875, 2
      %v937 = vrot.slane %v883, 2
      %v938 = vrot.slane %v891, 2
      %v939 = vrot.slane %v899, 2
      %v940 = vrot.slane %v907, 2
      %v941 = vrot.slane %v915, 2
      %v942 = vrot.slane %v923, 2
      %v943 = vrot.slane %v822, 2
      %v944 = vrot.slane %v830, 2
      %v945 = vrot.slane %v838, 2
      %v946 = vrot.slane %v846, 2
      %v947 = vrot.slane %v854, 2
      %v948 = vrot.slane %v862, 2
      %v949 = vrot.slane %v870, 2
      %v950 = vrot.slane %v878, 2
      %v951 = vrot.slane %v886, 2
      %v952 = vrot.slane %v894, 2
      %v953 = vrot.slane %v902, 2
      %v954 = vrot.slane %v910, 2
      %v955 = vrot.slane %v918, 2
      %v956 = vrot.slane %v926, 2
      %vm957 = vcmp.lt.s32.totalorder %v721, 6
      %v958 = vsel %vm957, %v929, %v943
      %v959 = vsel %vm957, %v930, %v944
      %v960 = vsel %vm957, %v931, %v945
      %v961 = vsel %vm957, %v932, %v946
      %v962 = vsel %vm957, %v933, %v947
      %v963 = vsel %vm957, %v934, %v948
      %v964 = vsel %vm957, %v935, %v949
      %v965 = vsel %vm957, %v936, %v950
      %v966 = vsel %vm957, %v937, %v951
      %v967 = vsel %vm957, %v938, %v952
      %v968 = vsel %vm957, %v939, %v953
      %v969 = vsel %vm957, %v940, %v954
      %v970 = vsel %vm957, %v941, %v955
      %v971 = vsel %vm957, %v942, %v956
      %v972 = vsel %vm957, %v943, %v929
      %v973 = vsel %vm957, %v944, %v930
      %v974 = vsel %vm957, %v945, %v931
      %v975 = vsel %vm957, %v946, %v932
      %v976 = vsel %vm957, %v947, %v933
      %v977 = vsel %vm957, %v948, %v934
      %v978 = vsel %vm957, %v949, %v935
      %v979 = vsel %vm957, %v950, %v936
      %v980 = vsel %vm957, %v951, %v937
      %v981 = vsel %vm957, %v952, %v938
      %v982 = vsel %vm957, %v953, %v939
      %v983 = vsel %vm957, %v954, %v940
      %v984 = vsel %vm957, %v955, %v941
      %v985 = vsel %vm957, %v956, %v942
      %v986 = vadd.f32 %v751, %v958
      %v987 = vadd.f32 %v752, %v972
      %v988 = vadd.f32 %v753, %v959
      %v989 = vadd.f32 %v754, %v973
      %v990 = vadd.f32 %v755, %v960
      %v991 = vadd.f32 %v756, %v974
      %v992 = vadd.f32 %v757, %v961
      %v993 = vadd.f32 %v758, %v975
      %v994 = vadd.f32 %v759, %v962
      %v995 = vadd.f32 %v760, %v976
      %v996 = vadd.f32 %v761, %v963
      %v997 = vadd.f32 %v762, %v977
      %v998 = vadd.f32 %v763, %v964
      %v999 = vadd.f32 %v764, %v978
      %v1000 = vadd.f32 %v765, %v965
      %v1001 = vadd.f32 %v766, %v979
      %v1002 = vadd.f32 %v767, %v966
      %v1003 = vadd.f32 %v768, %v980
      %v1004 = vadd.f32 %v769, %v967
      %v1005 = vadd.f32 %v770, %v981
      %v1006 = vadd.f32 %v771, %v968
      %v1007 = vadd.f32 %v772, %v982
      %v1008 = vadd.f32 %v773, %v969
      %v1009 = vadd.f32 %v774, %v983
      %v1010 = vadd.f32 %v775, %v970
      %v1011 = vadd.f32 %v776, %v984
      %v1012 = vadd.f32 %v777, %v971
      %v1013 = vadd.f32 %v778, %v985
      %s1014 = scalar_lea.vmem %s206, 8
      %v1015 = vld [vmem:[%s1014] sm:$0xf]
      %v1016 = vld [vmem:[%s1014 + $0x4] sm:$0xf]
      %v1017 = vld [vmem:[%s1014 + $0x8] sm:$0xf]
      %v1018 = vld [vmem:[%s1014 + $0xc] sm:$0xf]
      %v1019 = vld [vmem:[%s1014 + $0x10] sm:$0xf]
      %v1020 = vld [vmem:[%s1014 + $0x14] sm:$0xf]
      %v1021 = vld [vmem:[%s1014 + $0x18] sm:$0xf]
      %v1022 = vld [vmem:[%s1014 + $0x1c] sm:$0xf]
      %v1023 = vld [vmem:[%s1014 + $0x20] sm:$0xf]
      %v1024 = vld [vmem:[%s1014 + $0x24] sm:$0xf]
      %v1025 = vld [vmem:[%s1014 + $0x28] sm:$0xf]
      %v1026 = vld [vmem:[%s1014 + $0x2c] sm:$0xf]
      %v1027 = vld [vmem:[%s1014 + $0x30] sm:$0xf]
      %v1028 = vld [vmem:[%s1014 + $0x34] sm:$0xf]
      %v1029 = vld [vmem:[%s1014 + $0x38] sm:$0xf]
      %v1030 = vld [vmem:[%s1014 + $0x3c] sm:$0xf]
      %v1031 = vld [vmem:[%s1014 + $0x40] sm:$0xf]
      %v1032 = vld [vmem:[%s1014 + $0x44] sm:$0xf]
      %v1033 = vld [vmem:[%s1014 + $0x48] sm:$0xf]
      %v1034 = vld [vmem:[%s1014 + $0x4c] sm:$0xf]
      %v1035 = vld [vmem:[%s1014 + $0x50] sm:$0xf]
      %v1036 = vld [vmem:[%s1014 + $0x54] sm:$0xf]
      %v1037 = vld [vmem:[%s1014 + $0x58] sm:$0xf]
      %v1038 = vld [vmem:[%s1014 + $0x5c] sm:$0xf]
      %v1039 = vld [vmem:[%s1014 + $0x60] sm:$0xf]
      %v1040 = vld [vmem:[%s1014 + $0x64] sm:$0xf]
      %v1041 = vld [vmem:[%s1014 + $0x68] sm:$0xf]
      %v1042 = vld [vmem:[%s1014 + $0x6c] sm:$0xf]
      %s1043 = scalar_lea.vmem %s210, 6
      %v1044 = vld [vmem:[%s1043] sm:$0x3]
      %v1073 = vunpack.c.l.b16 %v1015
      %v1074 = vunpack.c.l.b16 %v1016
      %v1075 = vunpack.c.l.b16 %v1017
      %v1076 = vunpack.c.l.b16 %v1018
      %v1077 = vunpack.c.l.b16 %v1019
      %v1078 = vunpack.c.l.b16 %v1020
      %v1079 = vunpack.c.l.b16 %v1021
      %v1080 = vunpack.c.l.b16 %v1022
      %v1081 = vunpack.c.l.b16 %v1023
      %v1082 = vunpack.c.l.b16 %v1024
      %v1083 = vunpack.c.l.b16 %v1025
      %v1084 = vunpack.c.l.b16 %v1026
      %v1085 = vunpack.c.l.b16 %v1027
      %v1086 = vunpack.c.l.b16 %v1028
      %v1087 = vunpack.c.l.b16 %v1029
      %v1088 = vunpack.c.l.b16 %v1030
      %v1089 = vunpack.c.l.b16 %v1031
      %v1090 = vunpack.c.l.b16 %v1032
      %v1091 = vunpack.c.l.b16 %v1033
      %v1092 = vunpack.c.l.b16 %v1034
      %v1093 = vunpack.c.l.b16 %v1035
      %v1094 = vunpack.c.l.b16 %v1036
      %v1095 = vunpack.c.l.b16 %v1037
      %v1096 = vunpack.c.l.b16 %v1038
      %v1097 = vunpack.c.l.b16 %v1039
      %v1098 = vunpack.c.l.b16 %v1040
      %v1099 = vunpack.c.l.b16 %v1041
      %v1100 = vunpack.c.l.b16 %v1042
      %v1101 = vpack.c.b16 %v1074, %v1073
      %v1102 = vpack.c.b16 %v1076, %v1075
      %v1103 = vpack.c.b16 %v1078, %v1077
      %v1104 = vpack.c.b16 %v1080, %v1079
      %v1105 = vpack.c.b16 %v1082, %v1081
      %v1106 = vpack.c.b16 %v1084, %v1083
      %v1107 = vpack.c.b16 %v1086, %v1085
      %v1108 = vpack.c.b16 %v1088, %v1087
      %v1109 = vpack.c.b16 %v1090, %v1089
      %v1110 = vpack.c.b16 %v1092, %v1091
      %v1111 = vpack.c.b16 %v1094, %v1093
      %v1112 = vpack.c.b16 %v1096, %v1095
      %v1113 = vpack.c.b16 %v1098, %v1097
      %v1114 = vpack.c.b16 %v1100, %v1099
      %v1116 = vsel %vm322, %v1101, 0
      %v1119 = vsel %vm322, %v1102, 0
      %v1122 = vsel %vm322, %v1103, 0
      %v1125 = vsel %vm322, %v1104, 0
      %v1128 = vsel %vm322, %v1105, 0
      %v1131 = vsel %vm322, %v1106, 0
      %v1134 = vsel %vm322, %v1107, 0
      %v1137 = vsel %vm322, %v1108, 0
      %v1140 = vsel %vm322, %v1109, 0
      %v1143 = vsel %vm322, %v1110, 0
      %v1146 = vsel %vm322, %v1111, 0
      %v1149 = vsel %vm322, %v1112, 0
      %v1152 = vsel %vm322, %v1113, 0
      %v1155 = vsel %vm322, %v1114, 0
      %v1158 = vsel %vm365, %v1044, 0
      %1160 = vmatprep.subr.bf16.mxu0 0
      %1161 = vmatpush1.bf16.msra.mxu0 %v1158
      %1162 = vmatprep.subr.bf16.mxu0 0
      %1163 = vmatpush1.bf16.msra.mxu0 0
      %1164 = vmatprep.subr.bf16.mxu0 0
      %1165 = vmatpush1.bf16.msra.mxu0 0
      %1166 = vmatprep.subr.bf16.mxu0 0
      %1167 = vmatpush1.bf16.msra.mxu0 0
      %1168 = vmatprep.subr.bf16.mxu0 0
      %1169 = vmatpush1.bf16.msra.mxu0 0
      %1170 = vmatprep.subr.bf16.mxu0 0
      %1171 = vmatpush1.bf16.msra.mxu0 0
      %1172 = vmatprep.subr.bf16.mxu0 0
      %1173 = vmatpush1.bf16.msra.mxu0 0
      %1174 = vmatprep.subr.bf16.mxu0 0
      %1175 = vmatpush1.bf16.msra.mxu0 0
      %1176 = vmatprep.subr.bf16.mxu0 0
      %1177 = vmatpush1.bf16.msra.mxu0 0
      %1178 = vmatprep.subr.bf16.mxu0 0
      %1179 = vmatpush1.bf16.msra.mxu0 0
      %1180 = vmatprep.subr.bf16.mxu0 0
      %1181 = vmatpush1.bf16.msra.mxu0 0
      %1182 = vmatprep.subr.bf16.mxu0 0
      %1183 = vmatpush1.bf16.msra.mxu0 0
      %1184 = vmatprep.subr.bf16.mxu0 0
      %1185 = vmatpush1.bf16.msra.mxu0 0
      %1186 = vmatprep.subr.bf16.mxu0 0
      %1187 = vmatpush1.bf16.msra.mxu0 0
      %1188 = vmatprep.subr.bf16.mxu0 0
      %1189 = vmatpush1.bf16.msra.mxu0 0
      %1190 = vmatprep.subr.bf16.mxu0 0
      %1191 = vmatpush1.bf16.msra.mxu0 0
      %1192 = vmatprep.mubr.bf16.mxu0 0
      %1193 = vmatmul.mubr.bf16.gmra.mrb[0].mxu0 %v1116
      %v1194 = vpop.f32.mrb[0].mxu0
      %v1195 = vadd.f32 0.0, %v1194
      %v1196 = vpop.f32.mrb[0].mxu0
      %v1197 = vpop.f32.mrb[0].mxu0
      %v1198 = vadd.f32 0.0, %v1197
      %v1199 = vpop.f32.mrb[0].mxu0
      %1200 = vmatprep.mubr.bf16.mxu0 0
      %1201 = vmatmul.mubr.bf16.gmra.mrb[0].mxu0 %v1119
      %v1202 = vpop.f32.mrb[0].mxu0
      %v1203 = vadd.f32 0.0, %v1202
      %v1204 = vpop.f32.mrb[0].mxu0
      %v1205 = vpop.f32.mrb[0].mxu0
      %v1206 = vadd.f32 0.0, %v1205
      %v1207 = vpop.f32.mrb[0].mxu0
      %1208 = vmatprep.mubr.bf16.mxu0 0
      %1209 = vmatmul.mubr.bf16.gmra.mrb[0].mxu0 %v1122
      %v1210 = vpop.f32.mrb[0].mxu0
      %v1211 = vadd.f32 0.0, %v1210
      %v1212 = vpop.f32.mrb[0].mxu0
      %v1213 = vpop.f32.mrb[0].mxu0
      %v1214 = vadd.f32 0.0, %v1213
      %v1215 = vpop.f32.mrb[0].mxu0
      %1216 = vmatprep.mubr.bf16.mxu0 0
      %1217 = vmatmul.mubr.bf16.gmra.mrb[0].mxu0 %v1125
      %v1218 = vpop.f32.mrb[0].mxu0
      %v1219 = vadd.f32 0.0, %v1218
      %v1220 = vpop.f32.mrb[0].mxu0
      %v1221 = vpop.f32.mrb[0].mxu0
      %v1222 = vadd.f32 0.0, %v1221
      %v1223 = vpop.f32.mrb[0].mxu0
      %1224 = vmatprep.mubr.bf16.mxu0 0
      %1225 = vmatmul.mubr.bf16.gmra.mrb[0].mxu0 %v1128
      %v1226 = vpop.f32.mrb[0].mxu0
      %v1227 = vadd.f32 0.0, %v1226
      %v1228 = vpop.f32.mrb[0].mxu0
      %v1229 = vpop.f32.mrb[0].mxu0
      %v1230 = vadd.f32 0.0, %v1229
      %v1231 = vpop.f32.mrb[0].mxu0
      %1232 = vmatprep.mubr.bf16.mxu0 0
      %1233 = vmatmul.mubr.bf16.gmra.mrb[0].mxu0 %v1131
      %v1234 = vpop.f32.mrb[0].mxu0
      %v1235 = vadd.f32 0.0, %v1234
      %v1236 = vpop.f32.mrb[0].mxu0
      %v1237 = vpop.f32.mrb[0].mxu0
      %v1238 = vadd.f32 0.0, %v1237
      %v1239 = vpop.f32.mrb[0].mxu0
      %1240 = vmatprep.mubr.bf16.mxu0 0
      %1241 = vmatmul.mubr.bf16.gmra.mrb[0].mxu0 %v1134
      %v1242 = vpop.f32.mrb[0].mxu0
      %v1243 = vadd.f32 0.0, %v1242
      %v1244 = vpop.f32.mrb[0].mxu0
      %v1245 = vpop.f32.mrb[0].mxu0
      %v1246 = vadd.f32 0.0, %v1245
      %v1247 = vpop.f32.mrb[0].mxu0
      %1248 = vmatprep.mubr.bf16.mxu0 0
      %1249 = vmatmul.mubr.bf16.gmra.mrb[0].mxu0 %v1137
      %v1250 = vpop.f32.mrb[0].mxu0
      %v1251 = vadd.f32 0.0, %v1250
      %v1252 = vpop.f32.mrb[0].mxu0
      %v1253 = vpop.f32.mrb[0].mxu0
      %v1254 = vadd.f32 0.0, %v1253
      %v1255 = vpop.f32.mrb[0].mxu0
      %1256 = vmatprep.mubr.bf16.mxu0 0
      %1257 = vmatmul.mubr.bf16.gmra.mrb[0].mxu0 %v1140
      %v1258 = vpop.f32.mrb[0].mxu0
      %v1259 = vadd.f32 0.0, %v1258
      %v1260 = vpop.f32.mrb[0].mxu0
      %v1261 = vpop.f32.mrb[0].mxu0
      %v1262 = vadd.f32 0.0, %v1261
      %v1263 = vpop.f32.mrb[0].mxu0
      %1264 = vmatprep.mubr.bf16.mxu0 0
      %1265 = vmatmul.mubr.bf16.gmra.mrb[0].mxu0 %v1143
      %v1266 = vpop.f32.mrb[0].mxu0
      %v1267 = vadd.f32 0.0, %v1266
      %v1268 = vpop.f32.mrb[0].mxu0
      %v1269 = vpop.f32.mrb[0].mxu0
      %v1270 = vadd.f32 0.0, %v1269
      %v1271 = vpop.f32.mrb[0].mxu0
      %1272 = vmatprep.mubr.bf16.mxu0 0
      %1273 = vmatmul.mubr.bf16.gmra.mrb[0].mxu0 %v1146
      %v1274 = vpop.f32.mrb[0].mxu0
      %v1275 = vadd.f32 0.0, %v1274
      %v1276 = vpop.f32.mrb[0].mxu0
      %v1277 = vpop.f32.mrb[0].mxu0
      %v1278 = vadd.f32 0.0, %v1277
      %v1279 = vpop.f32.mrb[0].mxu0
      %1280 = vmatprep.mubr.bf16.mxu0 0
      %1281 = vmatmul.mubr.bf16.gmra.mrb[0].mxu0 %v1149
      %v1282 = vpop.f32.mrb[0].mxu0
      %v1283 = vadd.f32 0.0, %v1282
      %v1284 = vpop.f32.mrb[0].mxu0
      %v1285 = vpop.f32.mrb[0].mxu0
      %v1286 = vadd.f32 0.0, %v1285
      %v1287 = vpop.f32.mrb[0].mxu0
      %1288 = vmatprep.mubr.bf16.mxu0 0
      %1289 = vmatmul.mubr.bf16.gmra.mrb[0].mxu0 %v1152
      %v1290 = vpop.f32.mrb[0].mxu0
      %v1291 = vadd.f32 0.0, %v1290
      %v1292 = vpop.f32.mrb[0].mxu0
      %v1293 = vpop.f32.mrb[0].mxu0
      %v1294 = vadd.f32 0.0, %v1293
      %v1295 = vpop.f32.mrb[0].mxu0
      %1296 = vmatprep.mubr.bf16.mxu0 0
      %1297 = vmatmul.mubr.bf16.gmra.mrb[0].mxu0 %v1155
      %v1298 = vpop.f32.mrb[0].mxu0
      %v1299 = vadd.f32 0.0, %v1298
      %v1300 = vpop.f32.mrb[0].mxu0
      %v1301 = vpop.f32.mrb[0].mxu0
      %v1302 = vadd.f32 0.0, %v1301
      %v1303 = vpop.f32.mrb[0].mxu0
      %1304 = vdwg.mxu0
      %v1305 = vadd.f32 %v986, %v1195
      %v1306 = vadd.f32 %v987, %v1198
      %v1307 = vadd.f32 %v988, %v1203
      %v1308 = vadd.f32 %v989, %v1206
      %v1309 = vadd.f32 %v990, %v1211
      %v1310 = vadd.f32 %v991, %v1214
      %v1311 = vadd.f32 %v992, %v1219
      %v1312 = vadd.f32 %v993, %v1222
      %v1313 = vadd.f32 %v994, %v1227
      %v1314 = vadd.f32 %v995, %v1230
      %v1315 = vadd.f32 %v996, %v1235
      %v1316 = vadd.f32 %v997, %v1238
      %v1317 = vadd.f32 %v998, %v1243
      %v1318 = vadd.f32 %v999, %v1246
      %v1319 = vadd.f32 %v1000, %v1251
      %v1320 = vadd.f32 %v1001, %v1254
      %v1321 = vadd.f32 %v1002, %v1259
      %v1322 = vadd.f32 %v1003, %v1262
      %v1323 = vadd.f32 %v1004, %v1267
      %v1324 = vadd.f32 %v1005, %v1270
      %v1325 = vadd.f32 %v1006, %v1275
      %v1326 = vadd.f32 %v1007, %v1278
      %v1327 = vadd.f32 %v1008, %v1283
      %v1328 = vadd.f32 %v1009, %v1286
      %v1329 = vadd.f32 %v1010, %v1291
      %v1330 = vadd.f32 %v1011, %v1294
      %v1331 = vadd.f32 %v1012, %v1299
      %v1332 = vadd.f32 %v1013, %v1302
      %s1333 = scalar_lea.vmem %s210, 8
      %v1334 = vld [vmem:[%s1333] sm:$0x3]
      %v1336 = vsel %vm365, %v1334, 0
      %1338 = vmatprep.subr.bf16.mxu0 0
      %1339 = vmatpush1.bf16.msra.mxu0 %v1336
      %1340 = vmatprep.subr.bf16.mxu0 0
      %1341 = vmatpush1.bf16.msra.mxu0 0
      %1342 = vmatprep.subr.bf16.mxu0 0
      %1343 = vmatpush1.bf16.msra.mxu0 0
      %1344 = vmatprep.subr.bf16.mxu0 0
      %1345 = vmatpush1.bf16.msra.mxu0 0
      %1346 = vmatprep.subr.bf16.mxu0 0
      %1347 = vmatpush1.bf16.msra.mxu0 0
      %1348 = vmatprep.subr.bf16.mxu0 0
      %1349 = vmatpush1.bf16.msra.mxu0 0
      %1350 = vmatprep.subr.bf16.mxu0 0
      %1351 = vmatpush1.bf16.msra.mxu0 0
      %1352 = vmatprep.subr.bf16.mxu0 0
      %1353 = vmatpush1.bf16.msra.mxu0 0
      %1354 = vmatprep.subr.bf16.mxu0 0
      %1355 = vmatpush1.bf16.msra.mxu0 0
      %1356 = vmatprep.subr.bf16.mxu0 0
      %1357 = vmatpush1.bf16.msra.mxu0 0
      %1358 = vmatprep.subr.bf16.mxu0 0
      %1359 = vmatpush1.bf16.msra.mxu0 0
      %1360 = vmatprep.subr.bf16.mxu0 0
      %1361 = vmatpush1.bf16.msra.mxu0 0
      %1362 = vmatprep.subr.bf16.mxu0 0
      %1363 = vmatpush1.bf16.msra.mxu0 0
      %1364 = vmatprep.subr.bf16.mxu0 0
      %1365 = vmatpush1.bf16.msra.mxu0 0
      %1366 = vmatprep.subr.bf16.mxu0 0
      %1367 = vmatpush1.bf16.msra.mxu0 0
      %1368 = vmatprep.subr.bf16.mxu0 0
      %1369 = vmatpush1.bf16.msra.mxu0 0
      %1370 = vmatprep.mubr.bf16.mxu0 0
      %1371 = vmatmul.mubr.bf16.gmra.mrb[0].mxu0 %v1116
      %v1372 = vpop.f32.mrb[0].mxu0
      %v1373 = vadd.f32 0.0, %v1372
      %v1374 = vpop.f32.mrb[0].mxu0
      %v1375 = vpop.f32.mrb[0].mxu0
      %v1376 = vadd.f32 0.0, %v1375
      %v1377 = vpop.f32.mrb[0].mxu0
      %1378 = vmatprep.mubr.bf16.mxu0 0
      %1379 = vmatmul.mubr.bf16.gmra.mrb[0].mxu0 %v1119
      %v1380 = vpop.f32.mrb[0].mxu0
      %v1381 = vadd.f32 0.0, %v1380
      %v1382 = vpop.f32.mrb[0].mxu0
      %v1383 = vpop.f32.mrb[0].mxu0
      %v1384 = vadd.f32 0.0, %v1383
      %v1385 = vpop.f32.mrb[0].mxu0
      %1386 = vmatprep.mubr.bf16.mxu0 0
      %1387 = vmatmul.mubr.bf16.gmra.mrb[0].mxu0 %v1122
      %v1388 = vpop.f32.mrb[0].mxu0
      %v1389 = vadd.f32 0.0, %v1388
      %v1390 = vpop.f32.mrb[0].mxu0
      %v1391 = vpop.f32.mrb[0].mxu0
      %v1392 = vadd.f32 0.0, %v1391
      %v1393 = vpop.f32.mrb[0].mxu0
      %1394 = vmatprep.mubr.bf16.mxu0 0
      %1395 = vmatmul.mubr.bf16.gmra.mrb[0].mxu0 %v1125
      %v1396 = vpop.f32.mrb[0].mxu0
      %v1397 = vadd.f32 0.0, %v1396
      %v1398 = vpop.f32.mrb[0].mxu0
      %v1399 = vpop.f32.mrb[0].mxu0
      %v1400 = vadd.f32 0.0, %v1399
      %v1401 = vpop.f32.mrb[0].mxu0
      %1402 = vmatprep.mubr.bf16.mxu0 0
      %1403 = vmatmul.mubr.bf16.gmra.mrb[0].mxu0 %v1128
      %v1404 = vpop.f32.mrb[0].mxu0
      %v1405 = vadd.f32 0.0, %v1404
      %v1406 = vpop.f32.mrb[0].mxu0
      %v1407 = vpop.f32.mrb[0].mxu0
      %v1408 = vadd.f32 0.0, %v1407
      %v1409 = vpop.f32.mrb[0].mxu0
      %1410 = vmatprep.mubr.bf16.mxu0 0
      %1411 = vmatmul.mubr.bf16.gmra.mrb[0].mxu0 %v1131
      %v1412 = vpop.f32.mrb[0].mxu0
      %v1413 = vadd.f32 0.0, %v1412
      %v1414 = vpop.f32.mrb[0].mxu0
      %v1415 = vpop.f32.mrb[0].mxu0
      %v1416 = vadd.f32 0.0, %v1415
      %v1417 = vpop.f32.mrb[0].mxu0
      %1418 = vmatprep.mubr.bf16.mxu0 0
      %1419 = vmatmul.mubr.bf16.gmra.mrb[0].mxu0 %v1134
      %v1420 = vpop.f32.mrb[0].mxu0
      %v1421 = vadd.f32 0.0, %v1420
      %v1422 = vpop.f32.mrb[0].mxu0
      %v1423 = vpop.f32.mrb[0].mxu0
      %v1424 = vadd.f32 0.0, %v1423
      %v1425 = vpop.f32.mrb[0].mxu0
      %1426 = vmatprep.mubr.bf16.mxu0 0
      %1427 = vmatmul.mubr.bf16.gmra.mrb[0].mxu0 %v1137
      %v1428 = vpop.f32.mrb[0].mxu0
      %v1429 = vadd.f32 0.0, %v1428
      %v1430 = vpop.f32.mrb[0].mxu0
      %v1431 = vpop.f32.mrb[0].mxu0
      %v1432 = vadd.f32 0.0, %v1431
      %v1433 = vpop.f32.mrb[0].mxu0
      %1434 = vmatprep.mubr.bf16.mxu0 0
      %1435 = vmatmul.mubr.bf16.gmra.mrb[0].mxu0 %v1140
      %v1436 = vpop.f32.mrb[0].mxu0
      %v1437 = vadd.f32 0.0, %v1436
      %v1438 = vpop.f32.mrb[0].mxu0
      %v1439 = vpop.f32.mrb[0].mxu0
      %v1440 = vadd.f32 0.0, %v1439
      %v1441 = vpop.f32.mrb[0].mxu0
      %1442 = vmatprep.mubr.bf16.mxu0 0
      %1443 = vmatmul.mubr.bf16.gmra.mrb[0].mxu0 %v1143
      %v1444 = vpop.f32.mrb[0].mxu0
      %v1445 = vadd.f32 0.0, %v1444
      %v1446 = vpop.f32.mrb[0].mxu0
      %v1447 = vpop.f32.mrb[0].mxu0
      %v1448 = vadd.f32 0.0, %v1447
      %v1449 = vpop.f32.mrb[0].mxu0
      %1450 = vmatprep.mubr.bf16.mxu0 0
      %1451 = vmatmul.mubr.bf16.gmra.mrb[0].mxu0 %v1146
      %v1452 = vpop.f32.mrb[0].mxu0
      %v1453 = vadd.f32 0.0, %v1452
      %v1454 = vpop.f32.mrb[0].mxu0
      %v1455 = vpop.f32.mrb[0].mxu0
      %v1456 = vadd.f32 0.0, %v1455
      %v1457 = vpop.f32.mrb[0].mxu0
      %1458 = vmatprep.mubr.bf16.mxu0 0
      %1459 = vmatmul.mubr.bf16.gmra.mrb[0].mxu0 %v1149
      %v1460 = vpop.f32.mrb[0].mxu0
      %v1461 = vadd.f32 0.0, %v1460
      %v1462 = vpop.f32.mrb[0].mxu0
      %v1463 = vpop.f32.mrb[0].mxu0
      %v1464 = vadd.f32 0.0, %v1463
      %v1465 = vpop.f32.mrb[0].mxu0
      %1466 = vmatprep.mubr.bf16.mxu0 0
      %1467 = vmatmul.mubr.bf16.gmra.mrb[0].mxu0 %v1152
      %v1468 = vpop.f32.mrb[0].mxu0
      %v1469 = vadd.f32 0.0, %v1468
      %v1470 = vpop.f32.mrb[0].mxu0
      %v1471 = vpop.f32.mrb[0].mxu0
      %v1472 = vadd.f32 0.0, %v1471
      %v1473 = vpop.f32.mrb[0].mxu0
      %1474 = vmatprep.mubr.bf16.mxu0 0
      %1475 = vmatmul.mubr.bf16.gmra.mrb[0].mxu0 %v1155
      %v1476 = vpop.f32.mrb[0].mxu0
      %v1477 = vadd.f32 0.0, %v1476
      %v1478 = vpop.f32.mrb[0].mxu0
      %v1479 = vpop.f32.mrb[0].mxu0
      %v1480 = vadd.f32 0.0, %v1479
      %v1481 = vpop.f32.mrb[0].mxu0
      %1482 = vdwg.mxu0
      %v1483 = vrot.slane %v1373, 1
      %v1484 = vrot.slane %v1381, 1
      %v1485 = vrot.slane %v1389, 1
      %v1486 = vrot.slane %v1397, 1
      %v1487 = vrot.slane %v1405, 1
      %v1488 = vrot.slane %v1413, 1
      %v1489 = vrot.slane %v1421, 1
      %v1490 = vrot.slane %v1429, 1
      %v1491 = vrot.slane %v1437, 1
      %v1492 = vrot.slane %v1445, 1
      %v1493 = vrot.slane %v1453, 1
      %v1494 = vrot.slane %v1461, 1
      %v1495 = vrot.slane %v1469, 1
      %v1496 = vrot.slane %v1477, 1
      %v1497 = vrot.slane %v1376, 1
      %v1498 = vrot.slane %v1384, 1
      %v1499 = vrot.slane %v1392, 1
      %v1500 = vrot.slane %v1400, 1
      %v1501 = vrot.slane %v1408, 1
      %v1502 = vrot.slane %v1416, 1
      %v1503 = vrot.slane %v1424, 1
      %v1504 = vrot.slane %v1432, 1
      %v1505 = vrot.slane %v1440, 1
      %v1506 = vrot.slane %v1448, 1
      %v1507 = vrot.slane %v1456, 1
      %v1508 = vrot.slane %v1464, 1
      %v1509 = vrot.slane %v1472, 1
      %v1510 = vrot.slane %v1480, 1
      %v1511 = vsel %vm722, %v1483, %v1497
      %v1512 = vsel %vm722, %v1484, %v1498
      %v1513 = vsel %vm722, %v1485, %v1499
      %v1514 = vsel %vm722, %v1486, %v1500
      %v1515 = vsel %vm722, %v1487, %v1501
      %v1516 = vsel %vm722, %v1488, %v1502
      %v1517 = vsel %vm722, %v1489, %v1503
      %v1518 = vsel %vm722, %v1490, %v1504
      %v1519 = vsel %vm722, %v1491, %v1505
      %v1520 = vsel %vm722, %v1492, %v1506
      %v1521 = vsel %vm722, %v1493, %v1507
      %v1522 = vsel %vm722, %v1494, %v1508
      %v1523 = vsel %vm722, %v1495, %v1509
      %v1524 = vsel %vm722, %v1496, %v1510
      %v1525 = vsel %vm722, %v1497, %v1483
      %v1526 = vsel %vm722, %v1498, %v1484
      %v1527 = vsel %vm722, %v1499, %v1485
      %v1528 = vsel %vm722, %v1500, %v1486
      %v1529 = vsel %vm722, %v1501, %v1487
      %v1530 = vsel %vm722, %v1502, %v1488
      %v1531 = vsel %vm722, %v1503, %v1489
      %v1532 = vsel %vm722, %v1504, %v1490
      %v1533 = vsel %vm722, %v1505, %v1491
      %v1534 = vsel %vm722, %v1506, %v1492
      %v1535 = vsel %vm722, %v1507, %v1493
      %v1536 = vsel %vm722, %v1508, %v1494
      %v1537 = vsel %vm722, %v1509, %v1495
      %v1538 = vsel %vm722, %v1510, %v1496
      %v1539 = vadd.f32 %v1305, %v1511
      %v1540 = vadd.f32 %v1306, %v1525
      %v1541 = vadd.f32 %v1307, %v1512
      %v1542 = vadd.f32 %v1308, %v1526
      %v1543 = vadd.f32 %v1309, %v1513
      %v1544 = vadd.f32 %v1310, %v1527
      %v1545 = vadd.f32 %v1311, %v1514
      %v1546 = vadd.f32 %v1312, %v1528
      %v1547 = vadd.f32 %v1313, %v1515
      %v1548 = vadd.f32 %v1314, %v1529
      %v1549 = vadd.f32 %v1315, %v1516
      %v1550 = vadd.f32 %v1316, %v1530
      %v1551 = vadd.f32 %v1317, %v1517
      %v1552 = vadd.f32 %v1318, %v1531
      %v1553 = vadd.f32 %v1319, %v1518
      %v1554 = vadd.f32 %v1320, %v1532
      %v1555 = vadd.f32 %v1321, %v1519
      %v1556 = vadd.f32 %v1322, %v1533
      %v1557 = vadd.f32 %v1323, %v1520
      %v1558 = vadd.f32 %v1324, %v1534
      %v1559 = vadd.f32 %v1325, %v1521
      %v1560 = vadd.f32 %v1326, %v1535
      %v1561 = vadd.f32 %v1327, %v1522
      %v1562 = vadd.f32 %v1328, %v1536
      %v1563 = vadd.f32 %v1329, %v1523
      %v1564 = vadd.f32 %v1330, %v1537
      %v1565 = vadd.f32 %v1331, %v1524
      %v1566 = vadd.f32 %v1332, %v1538
      %s1567 = scalar_lea.vmem %s210, 10
      %v1568 = vld [vmem:[%s1567] sm:$0x3]
      %v1570 = vsel %vm365, %v1568, 0
      %1572 = vmatprep.subr.bf16.mxu0 0
      %1573 = vmatpush1.bf16.msra.mxu0 %v1570
      %1574 = vmatprep.subr.bf16.mxu0 0
      %1575 = vmatpush1.bf16.msra.mxu0 0
      %1576 = vmatprep.subr.bf16.mxu0 0
      %1577 = vmatpush1.bf16.msra.mxu0 0
      %1578 = vmatprep.subr.bf16.mxu0 0
      %1579 = vmatpush1.bf16.msra.mxu0 0
      %1580 = vmatprep.subr.bf16.mxu0 0
      %1581 = vmatpush1.bf16.msra.mxu0 0
      %1582 = vmatprep.subr.bf16.mxu0 0
      %1583 = vmatpush1.bf16.msra.mxu0 0
      %1584 = vmatprep.subr.bf16.mxu0 0
      %1585 = vmatpush1.bf16.msra.mxu0 0
      %1586 = vmatprep.subr.bf16.mxu0 0
      %1587 = vmatpush1.bf16.msra.mxu0 0
      %1588 = vmatprep.subr.bf16.mxu0 0
      %1589 = vmatpush1.bf16.msra.mxu0 0
      %1590 = vmatprep.subr.bf16.mxu0 0
      %1591 = vmatpush1.bf16.msra.mxu0 0
      %1592 = vmatprep.subr.bf16.mxu0 0
      %1593 = vmatpush1.bf16.msra.mxu0 0
      %1594 = vmatprep.subr.bf16.mxu0 0
      %1595 = vmatpush1.bf16.msra.mxu0 0
      %1596 = vmatprep.subr.bf16.mxu0 0
      %1597 = vmatpush1.bf16.msra.mxu0 0
      %1598 = vmatprep.subr.bf16.mxu0 0
      %1599 = vmatpush1.bf16.msra.mxu0 0
      %1600 = vmatprep.subr.bf16.mxu0 0
      %1601 = vmatpush1.bf16.msra.mxu0 0
      %1602 = vmatprep.subr.bf16.mxu0 0
      %1603 = vmatpush1.bf16.msra.mxu0 0
      %1604 = vmatprep.mubr.bf16.mxu0 0
      %1605 = vmatmul.mubr.bf16.gmra.mrb[0].mxu0 %v1116
      %v1606 = vpop.f32.mrb[0].mxu0
      %v1607 = vadd.f32 0.0, %v1606
      %v1608 = vpop.f32.mrb[0].mxu0
      %v1609 = vpop.f32.mrb[0].mxu0
      %v1610 = vadd.f32 0.0, %v1609
      %v1611 = vpop.f32.mrb[0].mxu0
      %1612 = vmatprep.mubr.bf16.mxu0 0
      %1613 = vmatmul.mubr.bf16.gmra.mrb[0].mxu0 %v1119
      %v1614 = vpop.f32.mrb[0].mxu0
      %v1615 = vadd.f32 0.0, %v1614
      %v1616 = vpop.f32.mrb[0].mxu0
      %v1617 = vpop.f32.mrb[0].mxu0
      %v1618 = vadd.f32 0.0, %v1617
      %v1619 = vpop.f32.mrb[0].mxu0
      %1620 = vmatprep.mubr.bf16.mxu0 0
      %1621 = vmatmul.mubr.bf16.gmra.mrb[0].mxu0 %v1122
      %v1622 = vpop.f32.mrb[0].mxu0
      %v1623 = vadd.f32 0.0, %v1622
      %v1624 = vpop.f32.mrb[0].mxu0
      %v1625 = vpop.f32.mrb[0].mxu0
      %v1626 = vadd.f32 0.0, %v1625
      %v1627 = vpop.f32.mrb[0].mxu0
      %1628 = vmatprep.mubr.bf16.mxu0 0
      %1629 = vmatmul.mubr.bf16.gmra.mrb[0].mxu0 %v1125
      %v1630 = vpop.f32.mrb[0].mxu0
      %v1631 = vadd.f32 0.0, %v1630
      %v1632 = vpop.f32.mrb[0].mxu0
      %v1633 = vpop.f32.mrb[0].mxu0
      %v1634 = vadd.f32 0.0, %v1633
      %v1635 = vpop.f32.mrb[0].mxu0
      %1636 = vmatprep.mubr.bf16.mxu0 0
      %1637 = vmatmul.mubr.bf16.gmra.mrb[0].mxu0 %v1128
      %v1638 = vpop.f32.mrb[0].mxu0
      %v1639 = vadd.f32 0.0, %v1638
      %v1640 = vpop.f32.mrb[0].mxu0
      %v1641 = vpop.f32.mrb[0].mxu0
      %v1642 = vadd.f32 0.0, %v1641
      %v1643 = vpop.f32.mrb[0].mxu0
      %1644 = vmatprep.mubr.bf16.mxu0 0
      %1645 = vmatmul.mubr.bf16.gmra.mrb[0].mxu0 %v1131
      %v1646 = vpop.f32.mrb[0].mxu0
      %v1647 = vadd.f32 0.0, %v1646
      %v1648 = vpop.f32.mrb[0].mxu0
      %v1649 = vpop.f32.mrb[0].mxu0
      %v1650 = vadd.f32 0.0, %v1649
      %v1651 = vpop.f32.mrb[0].mxu0
      %1652 = vmatprep.mubr.bf16.mxu0 0
      %1653 = vmatmul.mubr.bf16.gmra.mrb[0].mxu0 %v1134
      %v1654 = vpop.f32.mrb[0].mxu0
      %v1655 = vadd.f32 0.0, %v1654
      %v1656 = vpop.f32.mrb[0].mxu0
      %v1657 = vpop.f32.mrb[0].mxu0
      %v1658 = vadd.f32 0.0, %v1657
      %v1659 = vpop.f32.mrb[0].mxu0
      %1660 = vmatprep.mubr.bf16.mxu0 0
      %1661 = vmatmul.mubr.bf16.gmra.mrb[0].mxu0 %v1137
      %v1662 = vpop.f32.mrb[0].mxu0
      %v1663 = vadd.f32 0.0, %v1662
      %v1664 = vpop.f32.mrb[0].mxu0
      %v1665 = vpop.f32.mrb[0].mxu0
      %v1666 = vadd.f32 0.0, %v1665
      %v1667 = vpop.f32.mrb[0].mxu0
      %1668 = vmatprep.mubr.bf16.mxu0 0
      %1669 = vmatmul.mubr.bf16.gmra.mrb[0].mxu0 %v1140
      %v1670 = vpop.f32.mrb[0].mxu0
      %v1671 = vadd.f32 0.0, %v1670
      %v1672 = vpop.f32.mrb[0].mxu0
      %v1673 = vpop.f32.mrb[0].mxu0
      %v1674 = vadd.f32 0.0, %v1673
      %v1675 = vpop.f32.mrb[0].mxu0
      %1676 = vmatprep.mubr.bf16.mxu0 0
      %1677 = vmatmul.mubr.bf16.gmra.mrb[0].mxu0 %v1143
      %v1678 = vpop.f32.mrb[0].mxu0
      %v1679 = vadd.f32 0.0, %v1678
      %v1680 = vpop.f32.mrb[0].mxu0
      %v1681 = vpop.f32.mrb[0].mxu0
      %v1682 = vadd.f32 0.0, %v1681
      %v1683 = vpop.f32.mrb[0].mxu0
      %1684 = vmatprep.mubr.bf16.mxu0 0
      %1685 = vmatmul.mubr.bf16.gmra.mrb[0].mxu0 %v1146
      %v1686 = vpop.f32.mrb[0].mxu0
      %v1687 = vadd.f32 0.0, %v1686
      %v1688 = vpop.f32.mrb[0].mxu0
      %v1689 = vpop.f32.mrb[0].mxu0
      %v1690 = vadd.f32 0.0, %v1689
      %v1691 = vpop.f32.mrb[0].mxu0
      %1692 = vmatprep.mubr.bf16.mxu0 0
      %1693 = vmatmul.mubr.bf16.gmra.mrb[0].mxu0 %v1149
      %v1694 = vpop.f32.mrb[0].mxu0
      %v1695 = vadd.f32 0.0, %v1694
      %v1696 = vpop.f32.mrb[0].mxu0
      %v1697 = vpop.f32.mrb[0].mxu0
      %v1698 = vadd.f32 0.0, %v1697
      %v1699 = vpop.f32.mrb[0].mxu0
      %1700 = vmatprep.mubr.bf16.mxu0 0
      %1701 = vmatmul.mubr.bf16.gmra.mrb[0].mxu0 %v1152
      %v1702 = vpop.f32.mrb[0].mxu0
      %v1703 = vadd.f32 0.0, %v1702
      %v1704 = vpop.f32.mrb[0].mxu0
      %v1705 = vpop.f32.mrb[0].mxu0
      %v1706 = vadd.f32 0.0, %v1705
      %v1707 = vpop.f32.mrb[0].mxu0
      %1708 = vmatprep.mubr.bf16.mxu0 0
      %1709 = vmatmul.mubr.bf16.gmra.mrb[0].mxu0 %v1155
      %v1710 = vpop.f32.mrb[0].mxu0
      %v1711 = vadd.f32 0.0, %v1710
      %v1712 = vpop.f32.mrb[0].mxu0
      %v1713 = vpop.f32.mrb[0].mxu0
      %v1714 = vadd.f32 0.0, %v1713
      %v1715 = vpop.f32.mrb[0].mxu0
      %1716 = vdwg.mxu0
      %v1717 = vrot.slane %v1607, 2
      %v1718 = vrot.slane %v1615, 2
      %v1719 = vrot.slane %v1623, 2
      %v1720 = vrot.slane %v1631, 2
      %v1721 = vrot.slane %v1639, 2
      %v1722 = vrot.slane %v1647, 2
      %v1723 = vrot.slane %v1655, 2
      %v1724 = vrot.slane %v1663, 2
      %v1725 = vrot.slane %v1671, 2
      %v1726 = vrot.slane %v1679, 2
      %v1727 = vrot.slane %v1687, 2
      %v1728 = vrot.slane %v1695, 2
      %v1729 = vrot.slane %v1703, 2
      %v1730 = vrot.slane %v1711, 2
      %v1731 = vrot.slane %v1610, 2
      %v1732 = vrot.slane %v1618, 2
      %v1733 = vrot.slane %v1626, 2
      %v1734 = vrot.slane %v1634, 2
      %v1735 = vrot.slane %v1642, 2
      %v1736 = vrot.slane %v1650, 2
      %v1737 = vrot.slane %v1658, 2
      %v1738 = vrot.slane %v1666, 2
      %v1739 = vrot.slane %v1674, 2
      %v1740 = vrot.slane %v1682, 2
      %v1741 = vrot.slane %v1690, 2
      %v1742 = vrot.slane %v1698, 2
      %v1743 = vrot.slane %v1706, 2
      %v1744 = vrot.slane %v1714, 2
      %v1745 = vsel %vm957, %v1717, %v1731
      %v1746 = vsel %vm957, %v1718, %v1732
      %v1747 = vsel %vm957, %v1719, %v1733
      %v1748 = vsel %vm957, %v1720, %v1734
      %v1749 = vsel %vm957, %v1721, %v1735
      %v1750 = vsel %vm957, %v1722, %v1736
      %v1751 = vsel %vm957, %v1723, %v1737
      %v1752 = vsel %vm957, %v1724, %v1738
      %v1753 = vsel %vm957, %v1725, %v1739
      %v1754 = vsel %vm957, %v1726, %v1740
      %v1755 = vsel %vm957, %v1727, %v1741
      %v1756 = vsel %vm957, %v1728, %v1742
      %v1757 = vsel %vm957, %v1729, %v1743
      %v1758 = vsel %vm957, %v1730, %v1744
      %v1759 = vsel %vm957, %v1731, %v1717
      %v1760 = vsel %vm957, %v1732, %v1718
      %v1761 = vsel %vm957, %v1733, %v1719
      %v1762 = vsel %vm957, %v1734, %v1720
      %v1763 = vsel %vm957, %v1735, %v1721
      %v1764 = vsel %vm957, %v1736, %v1722
      %v1765 = vsel %vm957, %v1737, %v1723
      %v1766 = vsel %vm957, %v1738, %v1724
      %v1767 = vsel %vm957, %v1739, %v1725
      %v1768 = vsel %vm957, %v1740, %v1726
      %v1769 = vsel %vm957, %v1741, %v1727
      %v1770 = vsel %vm957, %v1742, %v1728
      %v1771 = vsel %vm957, %v1743, %v1729
      %v1772 = vsel %vm957, %v1744, %v1730
      %v1773 = vadd.f32 %v1539, %v1745
      %v1774 = vadd.f32 %v1540, %v1759
      %v1775 = vadd.f32 %v1541, %v1746
      %v1776 = vadd.f32 %v1542, %v1760
      %v1777 = vadd.f32 %v1543, %v1747
      %v1778 = vadd.f32 %v1544, %v1761
      %v1779 = vadd.f32 %v1545, %v1748
      %v1780 = vadd.f32 %v1546, %v1762
      %v1781 = vadd.f32 %v1547, %v1749
      %v1782 = vadd.f32 %v1548, %v1763
      %v1783 = vadd.f32 %v1549, %v1750
      %v1784 = vadd.f32 %v1550, %v1764
      %v1785 = vadd.f32 %v1551, %v1751
      %v1786 = vadd.f32 %v1552, %v1765
      %v1787 = vadd.f32 %v1553, %v1752
      %v1788 = vadd.f32 %v1554, %v1766
      %v1789 = vadd.f32 %v1555, %v1753
      %v1790 = vadd.f32 %v1556, %v1767
      %v1791 = vadd.f32 %v1557, %v1754
      %v1792 = vadd.f32 %v1558, %v1768
      %v1793 = vadd.f32 %v1559, %v1755
      %v1794 = vadd.f32 %v1560, %v1769
      %v1795 = vadd.f32 %v1561, %v1756
      %v1796 = vadd.f32 %v1562, %v1770
      %v1797 = vadd.f32 %v1563, %v1757
      %v1798 = vadd.f32 %v1564, %v1771
      %v1799 = vadd.f32 %v1565, %v1758
      %v1800 = vadd.f32 %v1566, %v1772
      %s1801 = scalar_lea.vmem %s206, 16
      %v1802 = vld [vmem:[%s1801] sm:$0xf]
      %v1803 = vld [vmem:[%s1801 + $0x4] sm:$0xf]
      %v1804 = vld [vmem:[%s1801 + $0x8] sm:$0xf]
      %v1805 = vld [vmem:[%s1801 + $0xc] sm:$0xf]
      %v1806 = vld [vmem:[%s1801 + $0x10] sm:$0xf]
      %v1807 = vld [vmem:[%s1801 + $0x14] sm:$0xf]
      %v1808 = vld [vmem:[%s1801 + $0x18] sm:$0xf]
      %v1809 = vld [vmem:[%s1801 + $0x1c] sm:$0xf]
      %v1810 = vld [vmem:[%s1801 + $0x20] sm:$0xf]
      %v1811 = vld [vmem:[%s1801 + $0x24] sm:$0xf]
      %v1812 = vld [vmem:[%s1801 + $0x28] sm:$0xf]
      %v1813 = vld [vmem:[%s1801 + $0x2c] sm:$0xf]
      %v1814 = vld [vmem:[%s1801 + $0x30] sm:$0xf]
      %v1815 = vld [vmem:[%s1801 + $0x34] sm:$0xf]
      %v1816 = vld [vmem:[%s1801 + $0x38] sm:$0xf]
      %v1817 = vld [vmem:[%s1801 + $0x3c] sm:$0xf]
      %v1818 = vld [vmem:[%s1801 + $0x40] sm:$0xf]
      %v1819 = vld [vmem:[%s1801 + $0x44] sm:$0xf]
      %v1820 = vld [vmem:[%s1801 + $0x48] sm:$0xf]
      %v1821 = vld [vmem:[%s1801 + $0x4c] sm:$0xf]
      %v1822 = vld [vmem:[%s1801 + $0x50] sm:$0xf]
      %v1823 = vld [vmem:[%s1801 + $0x54] sm:$0xf]
      %v1824 = vld [vmem:[%s1801 + $0x58] sm:$0xf]
      %v1825 = vld [vmem:[%s1801 + $0x5c] sm:$0xf]
      %v1826 = vld [vmem:[%s1801 + $0x60] sm:$0xf]
      %v1827 = vld [vmem:[%s1801 + $0x64] sm:$0xf]
      %v1828 = vld [vmem:[%s1801 + $0x68] sm:$0xf]
      %v1829 = vld [vmem:[%s1801 + $0x6c] sm:$0xf]
      %s1830 = scalar_lea.vmem %s210, 12
      %v1831 = vld [vmem:[%s1830] sm:$0x3]
      %v1860 = vunpack.c.l.b16 %v1802
      %v1861 = vunpack.c.l.b16 %v1803
      %v1862 = vunpack.c.l.b16 %v1804
      %v1863 = vunpack.c.l.b16 %v1805
      %v1864 = vunpack.c.l.b16 %v1806
      %v1865 = vunpack.c.l.b16 %v1807
      %v1866 = vunpack.c.l.b16 %v1808
      %v1867 = vunpack.c.l.b16 %v1809
      %v1868 = vunpack.c.l.b16 %v1810
      %v1869 = vunpack.c.l.b16 %v1811
      %v1870 = vunpack.c.l.b16 %v1812
      %v1871 = vunpack.c.l.b16 %v1813
      %v1872 = vunpack.c.l.b16 %v1814
      %v1873 = vunpack.c.l.b16 %v1815
      %v1874 = vunpack.c.l.b16 %v1816
      %v1875 = vunpack.c.l.b16 %v1817
      %v1876 = vunpack.c.l.b16 %v1818
      %v1877 = vunpack.c.l.b16 %v1819
      %v1878 = vunpack.c.l.b16 %v1820
      %v1879 = vunpack.c.l.b16 %v1821
      %v1880 = vunpack.c.l.b16 %v1822
      %v1881 = vunpack.c.l.b16 %v1823
      %v1882 = vunpack.c.l.b16 %v1824
      %v1883 = vunpack.c.l.b16 %v1825
      %v1884 = vunpack.c.l.b16 %v1826
      %v1885 = vunpack.c.l.b16 %v1827
      %v1886 = vunpack.c.l.b16 %v1828
      %v1887 = vunpack.c.l.b16 %v1829
      %v1888 = vpack.c.b16 %v1861, %v1860
      %v1889 = vpack.c.b16 %v1863, %v1862
      %v1890 = vpack.c.b16 %v1865, %v1864
      %v1891 = vpack.c.b16 %v1867, %v1866
      %v1892 = vpack.c.b16 %v1869, %v1868
      %v1893 = vpack.c.b16 %v1871, %v1870
      %v1894 = vpack.c.b16 %v1873, %v1872
      %v1895 = vpack.c.b16 %v1875, %v1874
      %v1896 = vpack.c.b16 %v1877, %v1876
      %v1897 = vpack.c.b16 %v1879, %v1878
      %v1898 = vpack.c.b16 %v1881, %v1880
      %v1899 = vpack.c.b16 %v1883, %v1882
      %v1900 = vpack.c.b16 %v1885, %v1884
      %v1901 = vpack.c.b16 %v1887, %v1886
      %v1903 = vsel %vm322, %v1888, 0
      %v1906 = vsel %vm322, %v1889, 0
      %v1909 = vsel %vm322, %v1890, 0
      %v1912 = vsel %vm322, %v1891, 0
      %v1915 = vsel %vm322, %v1892, 0
      %v1918 = vsel %vm322, %v1893, 0
      %v1921 = vsel %vm322, %v1894, 0
      %v1924 = vsel %vm322, %v1895, 0
      %v1927 = vsel %vm322, %v1896, 0
      %v1930 = vsel %vm322, %v1897, 0
      %v1933 = vsel %vm322, %v1898, 0
      %v1936 = vsel %vm322, %v1899, 0
      %v1939 = vsel %vm322, %v1900, 0
      %v1942 = vsel %vm322, %v1901, 0
      %v1945 = vsel %vm365, %v1831, 0
      %1947 = vmatprep.subr.bf16.mxu0 0
      %1948 = vmatpush1.bf16.msra.mxu0 %v1945
      %1949 = vmatprep.subr.bf16.mxu0 0
      %1950 = vmatpush1.bf16.msra.mxu0 0
      %1951 = vmatprep.subr.bf16.mxu0 0
      %1952 = vmatpush1.bf16.msra.mxu0 0
      %1953 = vmatprep.subr.bf16.mxu0 0
      %1954 = vmatpush1.bf16.msra.mxu0 0
      %1955 = vmatprep.subr.bf16.mxu0 0
      %1956 = vmatpush1.bf16.msra.mxu0 0
      %1957 = vmatprep.subr.bf16.mxu0 0
      %1958 = vmatpush1.bf16.msra.mxu0 0
      %1959 = vmatprep.subr.bf16.mxu0 0
      %1960 = vmatpush1.bf16.msra.mxu0 0
      %1961 = vmatprep.subr.bf16.mxu0 0
      %1962 = vmatpush1.bf16.msra.mxu0 0
      %1963 = vmatprep.subr.bf16.mxu0 0
      %1964 = vmatpush1.bf16.msra.mxu0 0
      %1965 = vmatprep.subr.bf16.mxu0 0
      %1966 = vmatpush1.bf16.msra.mxu0 0
      %1967 = vmatprep.subr.bf16.mxu0 0
      %1968 = vmatpush1.bf16.msra.mxu0 0
      %1969 = vmatprep.subr.bf16.mxu0 0
      %1970 = vmatpush1.bf16.msra.mxu0 0
      %1971 = vmatprep.subr.bf16.mxu0 0
      %1972 = vmatpush1.bf16.msra.mxu0 0
      %1973 = vmatprep.subr.bf16.mxu0 0
      %1974 = vmatpush1.bf16.msra.mxu0 0
      %1975 = vmatprep.subr.bf16.mxu0 0
      %1976 = vmatpush1.bf16.msra.mxu0 0
      %1977 = vmatprep.subr.bf16.mxu0 0
      %1978 = vmatpush1.bf16.msra.mxu0 0
      %1979 = vmatprep.mubr.bf16.mxu0 0
      %1980 = vmatmul.mubr.bf16.gmra.mrb[0].mxu0 %v1903
      %v1981 = vpop.f32.mrb[0].mxu0
      %v1982 = vadd.f32 0.0, %v1981
      %v1983 = vpop.f32.mrb[0].mxu0
      %v1984 = vpop.f32.mrb[0].mxu0
      %v1985 = vadd.f32 0.0, %v1984
      %v1986 = vpop.f32.mrb[0].mxu0
      %1987 = vmatprep.mubr.bf16.mxu0 0
      %1988 = vmatmul.mubr.bf16.gmra.mrb[0].mxu0 %v1906
      %v1989 = vpop.f32.mrb[0].mxu0
      %v1990 = vadd.f32 0.0, %v1989
      %v1991 = vpop.f32.mrb[0].mxu0
      %v1992 = vpop.f32.mrb[0].mxu0
      %v1993 = vadd.f32 0.0, %v1992
      %v1994 = vpop.f32.mrb[0].mxu0
      %1995 = vmatprep.mubr.bf16.mxu0 0
      %1996 = vmatmul.mubr.bf16.gmra.mrb[0].mxu0 %v1909
      %v1997 = vpop.f32.mrb[0].mxu0
      %v1998 = vadd.f32 0.0, %v1997
      %v1999 = vpop.f32.mrb[0].mxu0
      %v2000 = vpop.f32.mrb[0].mxu0
      %v2001 = vadd.f32 0.0, %v2000
      %v2002 = vpop.f32.mrb[0].mxu0
      %2003 = vmatprep.mubr.bf16.mxu0 0
      %2004 = vmatmul.mubr.bf16.gmra.mrb[0].mxu0 %v1912
      %v2005 = vpop.f32.mrb[0].mxu0
      %v2006 = vadd.f32 0.0, %v2005
      %v2007 = vpop.f32.mrb[0].mxu0
      %v2008 = vpop.f32.mrb[0].mxu0
      %v2009 = vadd.f32 0.0, %v2008
      %v2010 = vpop.f32.mrb[0].mxu0
      %2011 = vmatprep.mubr.bf16.mxu0 0
      %2012 = vmatmul.mubr.bf16.gmra.mrb[0].mxu0 %v1915
      %v2013 = vpop.f32.mrb[0].mxu0
      %v2014 = vadd.f32 0.0, %v2013
      %v2015 = vpop.f32.mrb[0].mxu0
      %v2016 = vpop.f32.mrb[0].mxu0
      %v2017 = vadd.f32 0.0, %v2016
      %v2018 = vpop.f32.mrb[0].mxu0
      %2019 = vmatprep.mubr.bf16.mxu0 0
      %2020 = vmatmul.mubr.bf16.gmra.mrb[0].mxu0 %v1918
      %v2021 = vpop.f32.mrb[0].mxu0
      %v2022 = vadd.f32 0.0, %v2021
      %v2023 = vpop.f32.mrb[0].mxu0
      %v2024 = vpop.f32.mrb[0].mxu0
      %v2025 = vadd.f32 0.0, %v2024
      %v2026 = vpop.f32.mrb[0].mxu0
      %2027 = vmatprep.mubr.bf16.mxu0 0
      %2028 = vmatmul.mubr.bf16.gmra.mrb[0].mxu0 %v1921
      %v2029 = vpop.f32.mrb[0].mxu0
      %v2030 = vadd.f32 0.0, %v2029
      %v2031 = vpop.f32.mrb[0].mxu0
      %v2032 = vpop.f32.mrb[0].mxu0
      %v2033 = vadd.f32 0.0, %v2032
      %v2034 = vpop.f32.mrb[0].mxu0
      %2035 = vmatprep.mubr.bf16.mxu0 0
      %2036 = vmatmul.mubr.bf16.gmra.mrb[0].mxu0 %v1924
      %v2037 = vpop.f32.mrb[0].mxu0
      %v2038 = vadd.f32 0.0, %v2037
      %v2039 = vpop.f32.mrb[0].mxu0
      %v2040 = vpop.f32.mrb[0].mxu0
      %v2041 = vadd.f32 0.0, %v2040
      %v2042 = vpop.f32.mrb[0].mxu0
      %2043 = vmatprep.mubr.bf16.mxu0 0
      %2044 = vmatmul.mubr.bf16.gmra.mrb[0].mxu0 %v1927
      %v2045 = vpop.f32.mrb[0].mxu0
      %v2046 = vadd.f32 0.0, %v2045
      %v2047 = vpop.f32.mrb[0].mxu0
      %v2048 = vpop.f32.mrb[0].mxu0
      %v2049 = vadd.f32 0.0, %v2048
      %v2050 = vpop.f32.mrb[0].mxu0
      %2051 = vmatprep.mubr.bf16.mxu0 0
      %2052 = vmatmul.mubr.bf16.gmra.mrb[0].mxu0 %v1930
      %v2053 = vpop.f32.mrb[0].mxu0
      %v2054 = vadd.f32 0.0, %v2053
      %v2055 = vpop.f32.mrb[0].mxu0
      %v2056 = vpop.f32.mrb[0].mxu0
      %v2057 = vadd.f32 0.0, %v2056
      %v2058 = vpop.f32.mrb[0].mxu0
      %2059 = vmatprep.mubr.bf16.mxu0 0
      %2060 = vmatmul.mubr.bf16.gmra.mrb[0].mxu0 %v1933
      %v2061 = vpop.f32.mrb[0].mxu0
      %v2062 = vadd.f32 0.0, %v2061
      %v2063 = vpop.f32.mrb[0].mxu0
      %v2064 = vpop.f32.mrb[0].mxu0
      %v2065 = vadd.f32 0.0, %v2064
      %v2066 = vpop.f32.mrb[0].mxu0
      %2067 = vmatprep.mubr.bf16.mxu0 0
      %2068 = vmatmul.mubr.bf16.gmra.mrb[0].mxu0 %v1936
      %v2069 = vpop.f32.mrb[0].mxu0
      %v2070 = vadd.f32 0.0, %v2069
      %v2071 = vpop.f32.mrb[0].mxu0
      %v2072 = vpop.f32.mrb[0].mxu0
      %v2073 = vadd.f32 0.0, %v2072
      %v2074 = vpop.f32.mrb[0].mxu0
      %2075 = vmatprep.mubr.bf16.mxu0 0
      %2076 = vmatmul.mubr.bf16.gmra.mrb[0].mxu0 %v1939
      %v2077 = vpop.f32.mrb[0].mxu0
      %v2078 = vadd.f32 0.0, %v2077
      %v2079 = vpop.f32.mrb[0].mxu0
      %v2080 = vpop.f32.mrb[0].mxu0
      %v2081 = vadd.f32 0.0, %v2080
      %v2082 = vpop.f32.mrb[0].mxu0
      %2083 = vmatprep.mubr.bf16.mxu0 0
      %2084 = vmatmul.mubr.bf16.gmra.mrb[0].mxu0 %v1942
      %v2085 = vpop.f32.mrb[0].mxu0
      %v2086 = vadd.f32 0.0, %v2085
      %v2087 = vpop.f32.mrb[0].mxu0
      %v2088 = vpop.f32.mrb[0].mxu0
      %v2089 = vadd.f32 0.0, %v2088
      %v2090 = vpop.f32.mrb[0].mxu0
      %2091 = vdwg.mxu0
      %v2092 = vadd.f32 %v1773, %v1982
      %v2093 = vadd.f32 %v1774, %v1985
      %v2094 = vadd.f32 %v1775, %v1990
      %v2095 = vadd.f32 %v1776, %v1993
      %v2096 = vadd.f32 %v1777, %v1998
      %v2097 = vadd.f32 %v1778, %v2001
      %v2098 = vadd.f32 %v1779, %v2006
      %v2099 = vadd.f32 %v1780, %v2009
      %v2100 = vadd.f32 %v1781, %v2014
      %v2101 = vadd.f32 %v1782, %v2017
      %v2102 = vadd.f32 %v1783, %v2022
      %v2103 = vadd.f32 %v1784, %v2025
      %v2104 = vadd.f32 %v1785, %v2030
      %v2105 = vadd.f32 %v1786, %v2033
      %v2106 = vadd.f32 %v1787, %v2038
      %v2107 = vadd.f32 %v1788, %v2041
      %v2108 = vadd.f32 %v1789, %v2046
      %v2109 = vadd.f32 %v1790, %v2049
      %v2110 = vadd.f32 %v1791, %v2054
      %v2111 = vadd.f32 %v1792, %v2057
      %v2112 = vadd.f32 %v1793, %v2062
      %v2113 = vadd.f32 %v1794, %v2065
      %v2114 = vadd.f32 %v1795, %v2070
      %v2115 = vadd.f32 %v1796, %v2073
      %v2116 = vadd.f32 %v1797, %v2078
      %v2117 = vadd.f32 %v1798, %v2081
      %v2118 = vadd.f32 %v1799, %v2086
      %v2119 = vadd.f32 %v1800, %v2089
      %s2120 = scalar_lea.vmem %s210, 14
      %v2121 = vld [vmem:[%s2120] sm:$0x3]
      %v2123 = vsel %vm365, %v2121, 0
      %2125 = vmatprep.subr.bf16.mxu0 0
      %2126 = vmatpush1.bf16.msra.mxu0 %v2123
      %2127 = vmatprep.subr.bf16.mxu0 0
      %2128 = vmatpush1.bf16.msra.mxu0 0
      %2129 = vmatprep.subr.bf16.mxu0 0
      %2130 = vmatpush1.bf16.msra.mxu0 0
      %2131 = vmatprep.subr.bf16.mxu0 0
      %2132 = vmatpush1.bf16.msra.mxu0 0
      %2133 = vmatprep.subr.bf16.mxu0 0
      %2134 = vmatpush1.bf16.msra.mxu0 0
      %2135 = vmatprep.subr.bf16.mxu0 0
      %2136 = vmatpush1.bf16.msra.mxu0 0
      %2137 = vmatprep.subr.bf16.mxu0 0
      %2138 = vmatpush1.bf16.msra.mxu0 0
      %2139 = vmatprep.subr.bf16.mxu0 0
      %2140 = vmatpush1.bf16.msra.mxu0 0
      %2141 = vmatprep.subr.bf16.mxu0 0
      %2142 = vmatpush1.bf16.msra.mxu0 0
      %2143 = vmatprep.subr.bf16.mxu0 0
      %2144 = vmatpush1.bf16.msra.mxu0 0
      %2145 = vmatprep.subr.bf16.mxu0 0
      %2146 = vmatpush1.bf16.msra.mxu0 0
      %2147 = vmatprep.subr.bf16.mxu0 0
      %2148 = vmatpush1.bf16.msra.mxu0 0
      %2149 = vmatprep.subr.bf16.mxu0 0
      %2150 = vmatpush1.bf16.msra.mxu0 0
      %2151 = vmatprep.subr.bf16.mxu0 0
      %2152 = vmatpush1.bf16.msra.mxu0 0
      %2153 = vmatprep.subr.bf16.mxu0 0
      %2154 = vmatpush1.bf16.msra.mxu0 0
      %2155 = vmatprep.subr.bf16.mxu0 0
      %2156 = vmatpush1.bf16.msra.mxu0 0
      %2157 = vmatprep.mubr.bf16.mxu0 0
      %2158 = vmatmul.mubr.bf16.gmra.mrb[0].mxu0 %v1903
      %v2159 = vpop.f32.mrb[0].mxu0
      %v2160 = vadd.f32 0.0, %v2159
      %v2161 = vpop.f32.mrb[0].mxu0
      %v2162 = vpop.f32.mrb[0].mxu0
      %v2163 = vadd.f32 0.0, %v2162
      %v2164 = vpop.f32.mrb[0].mxu0
      %2165 = vmatprep.mubr.bf16.mxu0 0
      %2166 = vmatmul.mubr.bf16.gmra.mrb[0].mxu0 %v1906
      %v2167 = vpop.f32.mrb[0].mxu0
      %v2168 = vadd.f32 0.0, %v2167
      %v2169 = vpop.f32.mrb[0].mxu0
      %v2170 = vpop.f32.mrb[0].mxu0
      %v2171 = vadd.f32 0.0, %v2170
      %v2172 = vpop.f32.mrb[0].mxu0
      %2173 = vmatprep.mubr.bf16.mxu0 0
      %2174 = vmatmul.mubr.bf16.gmra.mrb[0].mxu0 %v1909
      %v2175 = vpop.f32.mrb[0].mxu0
      %v2176 = vadd.f32 0.0, %v2175
      %v2177 = vpop.f32.mrb[0].mxu0
      %v2178 = vpop.f32.mrb[0].mxu0
      %v2179 = vadd.f32 0.0, %v2178
      %v2180 = vpop.f32.mrb[0].mxu0
      %2181 = vmatprep.mubr.bf16.mxu0 0
      %2182 = vmatmul.mubr.bf16.gmra.mrb[0].mxu0 %v1912
      %v2183 = vpop.f32.mrb[0].mxu0
      %v2184 = vadd.f32 0.0, %v2183
      %v2185 = vpop.f32.mrb[0].mxu0
      %v2186 = vpop.f32.mrb[0].mxu0
      %v2187 = vadd.f32 0.0, %v2186
      %v2188 = vpop.f32.mrb[0].mxu0
      %2189 = vmatprep.mubr.bf16.mxu0 0
      %2190 = vmatmul.mubr.bf16.gmra.mrb[0].mxu0 %v1915
      %v2191 = vpop.f32.mrb[0].mxu0
      %v2192 = vadd.f32 0.0, %v2191
      %v2193 = vpop.f32.mrb[0].mxu0
      %v2194 = vpop.f32.mrb[0].mxu0
      %v2195 = vadd.f32 0.0, %v2194
      %v2196 = vpop.f32.mrb[0].mxu0
      %2197 = vmatprep.mubr.bf16.mxu0 0
      %2198 = vmatmul.mubr.bf16.gmra.mrb[0].mxu0 %v1918
      %v2199 = vpop.f32.mrb[0].mxu0
      %v2200 = vadd.f32 0.0, %v2199
      %v2201 = vpop.f32.mrb[0].mxu0
      %v2202 = vpop.f32.mrb[0].mxu0
      %v2203 = vadd.f32 0.0, %v2202
      %v2204 = vpop.f32.mrb[0].mxu0
      %2205 = vmatprep.mubr.bf16.mxu0 0
      %2206 = vmatmul.mubr.bf16.gmra.mrb[0].mxu0 %v1921
      %v2207 = vpop.f32.mrb[0].mxu0
      %v2208 = vadd.f32 0.0, %v2207
      %v2209 = vpop.f32.mrb[0].mxu0
      %v2210 = vpop.f32.mrb[0].mxu0
      %v2211 = vadd.f32 0.0, %v2210
      %v2212 = vpop.f32.mrb[0].mxu0
      %2213 = vmatprep.mubr.bf16.mxu0 0
      %2214 = vmatmul.mubr.bf16.gmra.mrb[0].mxu0 %v1924
      %v2215 = vpop.f32.mrb[0].mxu0
      %v2216 = vadd.f32 0.0, %v2215
      %v2217 = vpop.f32.mrb[0].mxu0
      %v2218 = vpop.f32.mrb[0].mxu0
      %v2219 = vadd.f32 0.0, %v2218
      %v2220 = vpop.f32.mrb[0].mxu0
      %2221 = vmatprep.mubr.bf16.mxu0 0
      %2222 = vmatmul.mubr.bf16.gmra.mrb[0].mxu0 %v1927
      %v2223 = vpop.f32.mrb[0].mxu0
      %v2224 = vadd.f32 0.0, %v2223
      %v2225 = vpop.f32.mrb[0].mxu0
      %v2226 = vpop.f32.mrb[0].mxu0
      %v2227 = vadd.f32 0.0, %v2226
      %v2228 = vpop.f32.mrb[0].mxu0
      %2229 = vmatprep.mubr.bf16.mxu0 0
      %2230 = vmatmul.mubr.bf16.gmra.mrb[0].mxu0 %v1930
      %v2231 = vpop.f32.mrb[0].mxu0
      %v2232 = vadd.f32 0.0, %v2231
      %v2233 = vpop.f32.mrb[0].mxu0
      %v2234 = vpop.f32.mrb[0].mxu0
      %v2235 = vadd.f32 0.0, %v2234
      %v2236 = vpop.f32.mrb[0].mxu0
      %2237 = vmatprep.mubr.bf16.mxu0 0
      %2238 = vmatmul.mubr.bf16.gmra.mrb[0].mxu0 %v1933
      %v2239 = vpop.f32.mrb[0].mxu0
      %v2240 = vadd.f32 0.0, %v2239
      %v2241 = vpop.f32.mrb[0].mxu0
      %v2242 = vpop.f32.mrb[0].mxu0
      %v2243 = vadd.f32 0.0, %v2242
      %v2244 = vpop.f32.mrb[0].mxu0
      %2245 = vmatprep.mubr.bf16.mxu0 0
      %2246 = vmatmul.mubr.bf16.gmra.mrb[0].mxu0 %v1936
      %v2247 = vpop.f32.mrb[0].mxu0
      %v2248 = vadd.f32 0.0, %v2247
      %v2249 = vpop.f32.mrb[0].mxu0
      %v2250 = vpop.f32.mrb[0].mxu0
      %v2251 = vadd.f32 0.0, %v2250
      %v2252 = vpop.f32.mrb[0].mxu0
      %2253 = vmatprep.mubr.bf16.mxu0 0
      %2254 = vmatmul.mubr.bf16.gmra.mrb[0].mxu0 %v1939
      %v2255 = vpop.f32.mrb[0].mxu0
      %v2256 = vadd.f32 0.0, %v2255
      %v2257 = vpop.f32.mrb[0].mxu0
      %v2258 = vpop.f32.mrb[0].mxu0
      %v2259 = vadd.f32 0.0, %v2258
      %v2260 = vpop.f32.mrb[0].mxu0
      %2261 = vmatprep.mubr.bf16.mxu0 0
      %2262 = vmatmul.mubr.bf16.gmra.mrb[0].mxu0 %v1942
      %v2263 = vpop.f32.mrb[0].mxu0
      %v2264 = vadd.f32 0.0, %v2263
      %v2265 = vpop.f32.mrb[0].mxu0
      %v2266 = vpop.f32.mrb[0].mxu0
      %v2267 = vadd.f32 0.0, %v2266
      %v2268 = vpop.f32.mrb[0].mxu0
      %2269 = vdwg.mxu0
      %v2270 = vrot.slane %v2160, 1
      %v2271 = vrot.slane %v2168, 1
      %v2272 = vrot.slane %v2176, 1
      %v2273 = vrot.slane %v2184, 1
      %v2274 = vrot.slane %v2192, 1
      %v2275 = vrot.slane %v2200, 1
      %v2276 = vrot.slane %v2208, 1
      %v2277 = vrot.slane %v2216, 1
      %v2278 = vrot.slane %v2224, 1
      %v2279 = vrot.slane %v2232, 1
      %v2280 = vrot.slane %v2240, 1
      %v2281 = vrot.slane %v2248, 1
      %v2282 = vrot.slane %v2256, 1
      %v2283 = vrot.slane %v2264, 1
      %v2284 = vrot.slane %v2163, 1
      %v2285 = vrot.slane %v2171, 1
      %v2286 = vrot.slane %v2179, 1
      %v2287 = vrot.slane %v2187, 1
      %v2288 = vrot.slane %v2195, 1
      %v2289 = vrot.slane %v2203, 1
      %v2290 = vrot.slane %v2211, 1
      %v2291 = vrot.slane %v2219, 1
      %v2292 = vrot.slane %v2227, 1
      %v2293 = vrot.slane %v2235, 1
      %v2294 = vrot.slane %v2243, 1
      %v2295 = vrot.slane %v2251, 1
      %v2296 = vrot.slane %v2259, 1
      %v2297 = vrot.slane %v2267, 1
      %v2298 = vsel %vm722, %v2270, %v2284
      %v2299 = vsel %vm722, %v2271, %v2285
      %v2300 = vsel %vm722, %v2272, %v2286
      %v2301 = vsel %vm722, %v2273, %v2287
      %v2302 = vsel %vm722, %v2274, %v2288
      %v2303 = vsel %vm722, %v2275, %v2289
      %v2304 = vsel %vm722, %v2276, %v2290
      %v2305 = vsel %vm722, %v2277, %v2291
      %v2306 = vsel %vm722, %v2278, %v2292
      %v2307 = vsel %vm722, %v2279, %v2293
      %v2308 = vsel %vm722, %v2280, %v2294
      %v2309 = vsel %vm722, %v2281, %v2295
      %v2310 = vsel %vm722, %v2282, %v2296
      %v2311 = vsel %vm722, %v2283, %v2297
      %v2312 = vsel %vm722, %v2284, %v2270
      %v2313 = vsel %vm722, %v2285, %v2271
      %v2314 = vsel %vm722, %v2286, %v2272
      %v2315 = vsel %vm722, %v2287, %v2273
      %v2316 = vsel %vm722, %v2288, %v2274
      %v2317 = vsel %vm722, %v2289, %v2275
      %v2318 = vsel %vm722, %v2290, %v2276
      %v2319 = vsel %vm722, %v2291, %v2277
      %v2320 = vsel %vm722, %v2292, %v2278
      %v2321 = vsel %vm722, %v2293, %v2279
      %v2322 = vsel %vm722, %v2294, %v2280
      %v2323 = vsel %vm722, %v2295, %v2281
      %v2324 = vsel %vm722, %v2296, %v2282
      %v2325 = vsel %vm722, %v2297, %v2283
      %v2326 = vadd.f32 %v2092, %v2298
      %v2327 = vadd.f32 %v2093, %v2312
      %v2328 = vadd.f32 %v2094, %v2299
      %v2329 = vadd.f32 %v2095, %v2313
      %v2330 = vadd.f32 %v2096, %v2300
      %v2331 = vadd.f32 %v2097, %v2314
      %v2332 = vadd.f32 %v2098, %v2301
      %v2333 = vadd.f32 %v2099, %v2315
      %v2334 = vadd.f32 %v2100, %v2302
      %v2335 = vadd.f32 %v2101, %v2316
      %v2336 = vadd.f32 %v2102, %v2303
      %v2337 = vadd.f32 %v2103, %v2317
      %v2338 = vadd.f32 %v2104, %v2304
      %v2339 = vadd.f32 %v2105, %v2318
      %v2340 = vadd.f32 %v2106, %v2305
      %v2341 = vadd.f32 %v2107, %v2319
      %v2342 = vadd.f32 %v2108, %v2306
      %v2343 = vadd.f32 %v2109, %v2320
      %v2344 = vadd.f32 %v2110, %v2307
      %v2345 = vadd.f32 %v2111, %v2321
      %v2346 = vadd.f32 %v2112, %v2308
      %v2347 = vadd.f32 %v2113, %v2322
      %v2348 = vadd.f32 %v2114, %v2309
      %v2349 = vadd.f32 %v2115, %v2323
      %v2350 = vadd.f32 %v2116, %v2310
      %v2351 = vadd.f32 %v2117, %v2324
      %v2352 = vadd.f32 %v2118, %v2311
      %v2353 = vadd.f32 %v2119, %v2325
      %s2354 = scalar_lea.vmem %s210, 16
      %v2355 = vld [vmem:[%s2354] sm:$0x3]
      %v2357 = vsel %vm365, %v2355, 0
      %2359 = vmatprep.subr.bf16.mxu0 0
      %2360 = vmatpush1.bf16.msra.mxu0 %v2357
      %2361 = vmatprep.subr.bf16.mxu0 0
      %2362 = vmatpush1.bf16.msra.mxu0 0
      %2363 = vmatprep.subr.bf16.mxu0 0
      %2364 = vmatpush1.bf16.msra.mxu0 0
      %2365 = vmatprep.subr.bf16.mxu0 0
      %2366 = vmatpush1.bf16.msra.mxu0 0
      %2367 = vmatprep.subr.bf16.mxu0 0
      %2368 = vmatpush1.bf16.msra.mxu0 0
      %2369 = vmatprep.subr.bf16.mxu0 0
      %2370 = vmatpush1.bf16.msra.mxu0 0
      %2371 = vmatprep.subr.bf16.mxu0 0
      %2372 = vmatpush1.bf16.msra.mxu0 0
      %2373 = vmatprep.subr.bf16.mxu0 0
      %2374 = vmatpush1.bf16.msra.mxu0 0
      %2375 = vmatprep.subr.bf16.mxu0 0
      %2376 = vmatpush1.bf16.msra.mxu0 0
      %2377 = vmatprep.subr.bf16.mxu0 0
      %2378 = vmatpush1.bf16.msra.mxu0 0
      %2379 = vmatprep.subr.bf16.mxu0 0
      %2380 = vmatpush1.bf16.msra.mxu0 0
      %2381 = vmatprep.subr.bf16.mxu0 0
      %2382 = vmatpush1.bf16.msra.mxu0 0
      %2383 = vmatprep.subr.bf16.mxu0 0
      %2384 = vmatpush1.bf16.msra.mxu0 0
      %2385 = vmatprep.subr.bf16.mxu0 0
      %2386 = vmatpush1.bf16.msra.mxu0 0
      %2387 = vmatprep.subr.bf16.mxu0 0
      %2388 = vmatpush1.bf16.msra.mxu0 0
      %2389 = vmatprep.subr.bf16.mxu0 0
      %2390 = vmatpush1.bf16.msra.mxu0 0
      %2391 = vmatprep.mubr.bf16.mxu0 0
      %2392 = vmatmul.mubr.bf16.gmra.mrb[0].mxu0 %v1903
      %v2393 = vpop.f32.mrb[0].mxu0
      %v2394 = vadd.f32 0.0, %v2393
      %v2395 = vpop.f32.mrb[0].mxu0
      %v2396 = vpop.f32.mrb[0].mxu0
      %v2397 = vadd.f32 0.0, %v2396
      %v2398 = vpop.f32.mrb[0].mxu0
      %2399 = vmatprep.mubr.bf16.mxu0 0
      %2400 = vmatmul.mubr.bf16.gmra.mrb[0].mxu0 %v1906
      %v2401 = vpop.f32.mrb[0].mxu0
      %v2402 = vadd.f32 0.0, %v2401
      %v2403 = vpop.f32.mrb[0].mxu0
      %v2404 = vpop.f32.mrb[0].mxu0
      %v2405 = vadd.f32 0.0, %v2404
      %v2406 = vpop.f32.mrb[0].mxu0
      %2407 = vmatprep.mubr.bf16.mxu0 0
      %2408 = vmatmul.mubr.bf16.gmra.mrb[0].mxu0 %v1909
      %v2409 = vpop.f32.mrb[0].mxu0
      %v2410 = vadd.f32 0.0, %v2409
      %v2411 = vpop.f32.mrb[0].mxu0
      %v2412 = vpop.f32.mrb[0].mxu0
      %v2413 = vadd.f32 0.0, %v2412
      %v2414 = vpop.f32.mrb[0].mxu0
      %2415 = vmatprep.mubr.bf16.mxu0 0
      %2416 = vmatmul.mubr.bf16.gmra.mrb[0].mxu0 %v1912
      %v2417 = vpop.f32.mrb[0].mxu0
      %v2418 = vadd.f32 0.0, %v2417
      %v2419 = vpop.f32.mrb[0].mxu0
      %v2420 = vpop.f32.mrb[0].mxu0
      %v2421 = vadd.f32 0.0, %v2420
      %v2422 = vpop.f32.mrb[0].mxu0
      %2423 = vmatprep.mubr.bf16.mxu0 0
      %2424 = vmatmul.mubr.bf16.gmra.mrb[0].mxu0 %v1915
      %v2425 = vpop.f32.mrb[0].mxu0
      %v2426 = vadd.f32 0.0, %v2425
      %v2427 = vpop.f32.mrb[0].mxu0
      %v2428 = vpop.f32.mrb[0].mxu0
      %v2429 = vadd.f32 0.0, %v2428
      %v2430 = vpop.f32.mrb[0].mxu0
      %2431 = vmatprep.mubr.bf16.mxu0 0
      %2432 = vmatmul.mubr.bf16.gmra.mrb[0].mxu0 %v1918
      %v2433 = vpop.f32.mrb[0].mxu0
      %v2434 = vadd.f32 0.0, %v2433
      %v2435 = vpop.f32.mrb[0].mxu0
      %v2436 = vpop.f32.mrb[0].mxu0
      %v2437 = vadd.f32 0.0, %v2436
      %v2438 = vpop.f32.mrb[0].mxu0
      %2439 = vmatprep.mubr.bf16.mxu0 0
      %2440 = vmatmul.mubr.bf16.gmra.mrb[0].mxu0 %v1921
      %v2441 = vpop.f32.mrb[0].mxu0
      %v2442 = vadd.f32 0.0, %v2441
      %v2443 = vpop.f32.mrb[0].mxu0
      %v2444 = vpop.f32.mrb[0].mxu0
      %v2445 = vadd.f32 0.0, %v2444
      %v2446 = vpop.f32.mrb[0].mxu0
      %2447 = vmatprep.mubr.bf16.mxu0 0
      %2448 = vmatmul.mubr.bf16.gmra.mrb[0].mxu0 %v1924
      %v2449 = vpop.f32.mrb[0].mxu0
      %v2450 = vadd.f32 0.0, %v2449
      %v2451 = vpop.f32.mrb[0].mxu0
      %v2452 = vpop.f32.mrb[0].mxu0
      %v2453 = vadd.f32 0.0, %v2452
      %v2454 = vpop.f32.mrb[0].mxu0
      %2455 = vmatprep.mubr.bf16.mxu0 0
      %2456 = vmatmul.mubr.bf16.gmra.mrb[0].mxu0 %v1927
      %v2457 = vpop.f32.mrb[0].mxu0
      %v2458 = vadd.f32 0.0, %v2457
      %v2459 = vpop.f32.mrb[0].mxu0
      %v2460 = vpop.f32.mrb[0].mxu0
      %v2461 = vadd.f32 0.0, %v2460
      %v2462 = vpop.f32.mrb[0].mxu0
      %2463 = vmatprep.mubr.bf16.mxu0 0
      %2464 = vmatmul.mubr.bf16.gmra.mrb[0].mxu0 %v1930
      %v2465 = vpop.f32.mrb[0].mxu0
      %v2466 = vadd.f32 0.0, %v2465
      %v2467 = vpop.f32.mrb[0].mxu0
      %v2468 = vpop.f32.mrb[0].mxu0
      %v2469 = vadd.f32 0.0, %v2468
      %v2470 = vpop.f32.mrb[0].mxu0
      %2471 = vmatprep.mubr.bf16.mxu0 0
      %2472 = vmatmul.mubr.bf16.gmra.mrb[0].mxu0 %v1933
      %v2473 = vpop.f32.mrb[0].mxu0
      %v2474 = vadd.f32 0.0, %v2473
      %v2475 = vpop.f32.mrb[0].mxu0
      %v2476 = vpop.f32.mrb[0].mxu0
      %v2477 = vadd.f32 0.0, %v2476
      %v2478 = vpop.f32.mrb[0].mxu0
      %2479 = vmatprep.mubr.bf16.mxu0 0
      %2480 = vmatmul.mubr.bf16.gmra.mrb[0].mxu0 %v1936
      %v2481 = vpop.f32.mrb[0].mxu0
      %v2482 = vadd.f32 0.0, %v2481
      %v2483 = vpop.f32.mrb[0].mxu0
      %v2484 = vpop.f32.mrb[0].mxu0
      %v2485 = vadd.f32 0.0, %v2484
      %v2486 = vpop.f32.mrb[0].mxu0
      %2487 = vmatprep.mubr.bf16.mxu0 0
      %2488 = vmatmul.mubr.bf16.gmra.mrb[0].mxu0 %v1939
      %v2489 = vpop.f32.mrb[0].mxu0
      %v2490 = vadd.f32 0.0, %v2489
      %v2491 = vpop.f32.mrb[0].mxu0
      %v2492 = vpop.f32.mrb[0].mxu0
      %v2493 = vadd.f32 0.0, %v2492
      %v2494 = vpop.f32.mrb[0].mxu0
      %2495 = vmatprep.mubr.bf16.mxu0 0
      %2496 = vmatmul.mubr.bf16.gmra.mrb[0].mxu0 %v1942
      %v2497 = vpop.f32.mrb[0].mxu0
      %v2498 = vadd.f32 0.0, %v2497
      %v2499 = vpop.f32.mrb[0].mxu0
      %v2500 = vpop.f32.mrb[0].mxu0
      %v2501 = vadd.f32 0.0, %v2500
      %v2502 = vpop.f32.mrb[0].mxu0
      %2503 = vdwg.mxu0
      %v2504 = vrot.slane %v2394, 2
      %v2505 = vrot.slane %v2402, 2
      %v2506 = vrot.slane %v2410, 2
      %v2507 = vrot.slane %v2418, 2
      %v2508 = vrot.slane %v2426, 2
      %v2509 = vrot.slane %v2434, 2
      %v2510 = vrot.slane %v2442, 2
      %v2511 = vrot.slane %v2450, 2
      %v2512 = vrot.slane %v2458, 2
      %v2513 = vrot.slane %v2466, 2
      %v2514 = vrot.slane %v2474, 2
      %v2515 = vrot.slane %v2482, 2
      %v2516 = vrot.slane %v2490, 2
      %v2517 = vrot.slane %v2498, 2
      %v2518 = vrot.slane %v2397, 2
      %v2519 = vrot.slane %v2405, 2
      %v2520 = vrot.slane %v2413, 2
      %v2521 = vrot.slane %v2421, 2
      %v2522 = vrot.slane %v2429, 2
      %v2523 = vrot.slane %v2437, 2
      %v2524 = vrot.slane %v2445, 2
      %v2525 = vrot.slane %v2453, 2
      %v2526 = vrot.slane %v2461, 2
      %v2527 = vrot.slane %v2469, 2
      %v2528 = vrot.slane %v2477, 2
      %v2529 = vrot.slane %v2485, 2
      %v2530 = vrot.slane %v2493, 2
      %v2531 = vrot.slane %v2501, 2
      %v2532 = vsel %vm957, %v2504, %v2518
      %v2533 = vsel %vm957, %v2505, %v2519
      %v2534 = vsel %vm957, %v2506, %v2520
      %v2535 = vsel %vm957, %v2507, %v2521
      %v2536 = vsel %vm957, %v2508, %v2522
      %v2537 = vsel %vm957, %v2509, %v2523
      %v2538 = vsel %vm957, %v2510, %v2524
      %v2539 = vsel %vm957, %v2511, %v2525
      %v2540 = vsel %vm957, %v2512, %v2526
      %v2541 = vsel %vm957, %v2513, %v2527
      %v2542 = vsel %vm957, %v2514, %v2528
      %v2543 = vsel %vm957, %v2515, %v2529
      %v2544 = vsel %vm957, %v2516, %v2530
      %v2545 = vsel %vm957, %v2517, %v2531
      %v2546 = vsel %vm957, %v2518, %v2504
      %v2547 = vsel %vm957, %v2519, %v2505
      %v2548 = vsel %vm957, %v2520, %v2506
      %v2549 = vsel %vm957, %v2521, %v2507
      %v2550 = vsel %vm957, %v2522, %v2508
      %v2551 = vsel %vm957, %v2523, %v2509
      %v2552 = vsel %vm957, %v2524, %v2510
      %v2553 = vsel %vm957, %v2525, %v2511
      %v2554 = vsel %vm957, %v2526, %v2512
      %v2555 = vsel %vm957, %v2527, %v2513
      %v2556 = vsel %vm957, %v2528, %v2514
      %v2557 = vsel %vm957, %v2529, %v2515
      %v2558 = vsel %vm957, %v2530, %v2516
      %v2559 = vsel %vm957, %v2531, %v2517
      %v2560 = vadd.f32 %v2326, %v2532
      %v2561 = vadd.f32 %v2327, %v2546
      %v2562 = vadd.f32 %v2328, %v2533
      %v2563 = vadd.f32 %v2329, %v2547
      %v2564 = vadd.f32 %v2330, %v2534
      %v2565 = vadd.f32 %v2331, %v2548
      %v2566 = vadd.f32 %v2332, %v2535
      %v2567 = vadd.f32 %v2333, %v2549
      %v2568 = vadd.f32 %v2334, %v2536
      %v2569 = vadd.f32 %v2335, %v2550
      %v2570 = vadd.f32 %v2336, %v2537
      %v2571 = vadd.f32 %v2337, %v2551
      %v2572 = vadd.f32 %v2338, %v2538
      %v2573 = vadd.f32 %v2339, %v2552
      %v2574 = vadd.f32 %v2340, %v2539
      %v2575 = vadd.f32 %v2341, %v2553
      %v2576 = vadd.f32 %v2342, %v2540
      %v2577 = vadd.f32 %v2343, %v2554
      %v2578 = vadd.f32 %v2344, %v2541
      %v2579 = vadd.f32 %v2345, %v2555
      %v2580 = vadd.f32 %v2346, %v2542
      %v2581 = vadd.f32 %v2347, %v2556
      %v2582 = vadd.f32 %v2348, %v2543
      %v2583 = vadd.f32 %v2349, %v2557
      %v2584 = vadd.f32 %v2350, %v2544
      %v2585 = vadd.f32 %v2351, %v2558
      %v2586 = vadd.f32 %v2352, %v2545
      %v2587 = vadd.f32 %v2353, %v2559
      %v2588 = vld [vmem:[%s213] sm:$0x1]
      %v2590 = vlaneseq
      %v2591 = vshrl.u32 %v2590, 7
      %v2592 = vsub.s32 0, %v2591
      %v2593 = vrot.slane %v2588, %v2592
      %v2595 = vadd.f32 %v2560, %v2593
      %v2596 = vadd.f32 %v2561, %v2593
      %v2597 = vadd.f32 %v2562, %v2593
      %v2598 = vadd.f32 %v2563, %v2593
      %v2599 = vadd.f32 %v2564, %v2593
      %v2600 = vadd.f32 %v2565, %v2593
      %v2601 = vadd.f32 %v2566, %v2593
      %v2602 = vadd.f32 %v2567, %v2593
      %v2603 = vadd.f32 %v2568, %v2593
      %v2604 = vadd.f32 %v2569, %v2593
      %v2605 = vadd.f32 %v2570, %v2593
      %v2606 = vadd.f32 %v2571, %v2593
      %v2607 = vadd.f32 %v2572, %v2593
      %v2608 = vadd.f32 %v2573, %v2593
      %v2609 = vadd.f32 %v2574, %v2593
      %v2610 = vadd.f32 %v2575, %v2593
      %v2611 = vadd.f32 %v2576, %v2593
      %v2612 = vadd.f32 %v2577, %v2593
      %v2613 = vadd.f32 %v2578, %v2593
      %v2614 = vadd.f32 %v2579, %v2593
      %v2615 = vadd.f32 %v2580, %v2593
      %v2616 = vadd.f32 %v2581, %v2593
      %v2617 = vadd.f32 %v2582, %v2593
      %v2618 = vadd.f32 %v2583, %v2593
      %v2619 = vadd.f32 %v2584, %v2593
      %v2620 = vadd.f32 %v2585, %v2593
      %v2621 = vadd.f32 %v2586, %v2593
      %v2622 = vadd.f32 %v2587, %v2593
      %v2623 = vmax.f32 %v2595, 0.0
      %v2624 = vmax.f32 %v2596, 0.0
      %v2625 = vmax.f32 %v2597, 0.0
      %v2626 = vmax.f32 %v2598, 0.0
      %v2627 = vmax.f32 %v2599, 0.0
      %v2628 = vmax.f32 %v2600, 0.0
      %v2629 = vmax.f32 %v2601, 0.0
      %v2630 = vmax.f32 %v2602, 0.0
      %v2631 = vmax.f32 %v2603, 0.0
      %v2632 = vmax.f32 %v2604, 0.0
      %v2633 = vmax.f32 %v2605, 0.0
      %v2634 = vmax.f32 %v2606, 0.0
      %v2635 = vmax.f32 %v2607, 0.0
      %v2636 = vmax.f32 %v2608, 0.0
      %v2637 = vmax.f32 %v2609, 0.0
      %v2638 = vmax.f32 %v2610, 0.0
      %v2639 = vmax.f32 %v2611, 0.0
      %v2640 = vmax.f32 %v2612, 0.0
      %v2641 = vmax.f32 %v2613, 0.0
      %v2642 = vmax.f32 %v2614, 0.0
      %v2643 = vmax.f32 %v2615, 0.0
      %v2644 = vmax.f32 %v2616, 0.0
      %v2645 = vmax.f32 %v2617, 0.0
      %v2646 = vmax.f32 %v2618, 0.0
      %v2647 = vmax.f32 %v2619, 0.0
      %v2648 = vmax.f32 %v2620, 0.0
      %v2649 = vmax.f32 %v2621, 0.0
      %v2650 = vmax.f32 %v2622, 0.0
      %v2651 = vpack.c.bf16 %v2624, %v2623
      %v2652 = vpack.c.bf16 %v2626, %v2625
      %v2653 = vpack.c.bf16 %v2628, %v2627
      %v2654 = vpack.c.bf16 %v2630, %v2629
      %v2655 = vpack.c.bf16 %v2632, %v2631
      %v2656 = vpack.c.bf16 %v2634, %v2633
      %v2657 = vpack.c.bf16 %v2636, %v2635
      %v2658 = vpack.c.bf16 %v2638, %v2637
      %v2659 = vpack.c.bf16 %v2640, %v2639
      %v2660 = vpack.c.bf16 %v2642, %v2641
      %v2661 = vpack.c.bf16 %v2644, %v2643
      %v2662 = vpack.c.bf16 %v2646, %v2645
      %v2663 = vpack.c.bf16 %v2648, %v2647
      %v2664 = vpack.c.bf16 %v2650, %v2649
      %v2679 = vunpack.c.l.b16 %v2651
      %v2680 = vunpack.c.h.b16 %v2651
      %v2681 = vunpack.c.l.b16 %v2652
      %v2682 = vunpack.c.h.b16 %v2652
      %v2683 = vunpack.c.l.b16 %v2653
      %v2684 = vunpack.c.h.b16 %v2653
      %v2685 = vunpack.c.l.b16 %v2654
      %v2686 = vunpack.c.h.b16 %v2654
      %v2687 = vunpack.c.l.b16 %v2655
      %v2688 = vunpack.c.h.b16 %v2655
      %v2689 = vunpack.c.l.b16 %v2656
      %v2690 = vunpack.c.h.b16 %v2656
      %v2691 = vunpack.c.l.b16 %v2657
      %v2692 = vunpack.c.h.b16 %v2657
      %v2693 = vunpack.c.l.b16 %v2658
      %v2694 = vunpack.c.h.b16 %v2658
      %v2695 = vunpack.c.l.b16 %v2659
      %v2696 = vunpack.c.h.b16 %v2659
      %v2697 = vunpack.c.l.b16 %v2660
      %v2698 = vunpack.c.h.b16 %v2660
      %v2699 = vunpack.c.l.b16 %v2661
      %v2700 = vunpack.c.h.b16 %v2661
      %v2701 = vunpack.c.l.b16 %v2662
      %v2702 = vunpack.c.h.b16 %v2662
      %v2703 = vunpack.c.l.b16 %v2663
      %v2704 = vunpack.c.h.b16 %v2663
      %v2705 = vunpack.c.l.b16 %v2664
      %v2706 = vunpack.c.h.b16 %v2664
      %v2707 = vpack.c.b16 %v2679, %v2679
      %v2708 = vpack.c.b16 %v2680, %v2680
      %v2709 = vpack.c.b16 %v2681, %v2681
      %v2710 = vpack.c.b16 %v2682, %v2682
      %v2711 = vpack.c.b16 %v2683, %v2683
      %v2712 = vpack.c.b16 %v2684, %v2684
      %v2713 = vpack.c.b16 %v2685, %v2685
      %v2714 = vpack.c.b16 %v2686, %v2686
      %v2715 = vpack.c.b16 %v2687, %v2687
      %v2716 = vpack.c.b16 %v2688, %v2688
      %v2717 = vpack.c.b16 %v2689, %v2689
      %v2718 = vpack.c.b16 %v2690, %v2690
      %v2719 = vpack.c.b16 %v2691, %v2691
      %v2720 = vpack.c.b16 %v2692, %v2692
      %v2721 = vpack.c.b16 %v2693, %v2693
      %v2722 = vpack.c.b16 %v2694, %v2694
      %v2723 = vpack.c.b16 %v2695, %v2695
      %v2724 = vpack.c.b16 %v2696, %v2696
      %v2725 = vpack.c.b16 %v2697, %v2697
      %v2726 = vpack.c.b16 %v2698, %v2698
      %v2727 = vpack.c.b16 %v2699, %v2699
      %v2728 = vpack.c.b16 %v2700, %v2700
      %v2729 = vpack.c.b16 %v2701, %v2701
      %v2730 = vpack.c.b16 %v2702, %v2702
      %v2731 = vpack.c.b16 %v2703, %v2703
      %v2732 = vpack.c.b16 %v2704, %v2704
      %v2733 = vpack.c.b16 %v2705, %v2705
      %v2734 = vpack.c.b16 %v2706, %v2706
      %2763 = vst [vmem:[%s221] sm:$0xf] %v2707
      %2764 = vst [vmem:[%s221 + $0x4] sm:$0xf] %v2708
      %2765 = vst [vmem:[%s221 + $0x8] sm:$0xf] %v2709
      %2766 = vst [vmem:[%s221 + $0xc] sm:$0xf] %v2710
      %2767 = vst [vmem:[%s221 + $0x10] sm:$0xf] %v2711
      %2768 = vst [vmem:[%s221 + $0x14] sm:$0xf] %v2712
      %2769 = vst [vmem:[%s221 + $0x18] sm:$0xf] %v2713
      %2770 = vst [vmem:[%s221 + $0x1c] sm:$0xf] %v2714
      %2771 = vst [vmem:[%s221 + $0x20] sm:$0xf] %v2715
      %2772 = vst [vmem:[%s221 + $0x24] sm:$0xf] %v2716
      %2773 = vst [vmem:[%s221 + $0x28] sm:$0xf] %v2717
      %2774 = vst [vmem:[%s221 + $0x2c] sm:$0xf] %v2718
      %2775 = vst [vmem:[%s221 + $0x30] sm:$0xf] %v2719
      %2776 = vst [vmem:[%s221 + $0x34] sm:$0xf] %v2720
      %2777 = vst [vmem:[%s221 + $0x38] sm:$0xf] %v2721
      %2778 = vst [vmem:[%s221 + $0x3c] sm:$0xf] %v2722
      %2779 = vst [vmem:[%s221 + $0x40] sm:$0xf] %v2723
      %2780 = vst [vmem:[%s221 + $0x44] sm:$0xf] %v2724
      %2781 = vst [vmem:[%s221 + $0x48] sm:$0xf] %v2725
      %2782 = vst [vmem:[%s221 + $0x4c] sm:$0xf] %v2726
      %2783 = vst [vmem:[%s221 + $0x50] sm:$0xf] %v2727
      %2784 = vst [vmem:[%s221 + $0x54] sm:$0xf] %v2728
      %2785 = vst [vmem:[%s221 + $0x58] sm:$0xf] %v2729
      %2786 = vst [vmem:[%s221 + $0x5c] sm:$0xf] %v2730
      %2787 = vst [vmem:[%s221 + $0x60] sm:$0xf] %v2731
      %2788 = vst [vmem:[%s221 + $0x64] sm:$0xf] %v2732
      %2789 = vst [vmem:[%s221 + $0x68] sm:$0xf] %v2733
      %2790 = vst [vmem:[%s221 + $0x6c] sm:$0xf] %v2734
      %p2791 = scmp.lt.s32.totalorder %s18, 1
      %s2792 = scalar_select %p2791, %s18, 1
      %p2793 = scmp.lt.s32.totalorder %s19, 0
      %s2794 = scalar_select %p2793, %s19, 0
      %s2795 = smul.addr %s2792, 28
      %s2796 = sadd.s32 %s2794, %s2795
      %s2797 = smul.addr %s2796, 4
      %s2798 = scalar_lea.vmem %s3, %s2797
      // Predicated region
      $region33: #{depthwise_xcorr_forward.5} parent=31 // pred_check
        %p2799 = pneg %p124
      $region34: #{depthwise_xcorr_forward.5} parent=31 // pred_check_branch
        %2801 = sbr.rel (%p2799) target = $region36
      $region35: #{depthwise_xcorr_forward.5} parent=31 // pred_region
        _
      $region36: #{depthwise_xcorr_forward.5} parent=31 // pred_fallthru
        _
    $region32: #{depthwise_xcorr_forward.5} parent=5 // pred_fallthru
      _
    %p2802 = scmp.le.s32.totalorder 2, %s9
    // Predicated region
    $region37: #{depthwise_xcorr_forward.5} parent=5 // pred_check
      %p2803 = pneg %p2802
    $region38: #{depthwise_xcorr_forward.5} parent=5 // pred_check_branch
      %2805 = sbr.rel (%p2803) target = $region40
    $region39: #{depthwise_xcorr_forward.5} parent=5 // pred_region
      %s2806 = ssub.s32 %s9, 2
      // Predicated region
      $region41: #{depthwise_xcorr_forward.5} parent=39 // pred_check
        %p2807 = pneg %p130
      $region42: #{depthwise_xcorr_forward.5} parent=39 // pred_check_branch
        %2809 = sbr.rel (%p2807) target = $region44
      $region43: #{depthwise_xcorr_forward.5} parent=39 // pred_region
        %p2810 = scmp.lt.s32.totalorder %s20, 1
        %s2811 = scalar_select %p2810, %s20, 1
        %p2812 = scmp.lt.s32.totalorder %s21, 0
        %s2813 = scalar_select %p2812, %s21, 0
        %s2814 = smul.addr %s2811, 28
        %s2815 = sadd.s32 %s2813, %s2814
        %s2816 = smul.addr %s2815, 4
        %s2817 = scalar_lea.vmem %s3, %s2816
      $region44: #{depthwise_xcorr_forward.5} parent=39 // pred_fallthru
        _
    $region40: #{depthwise_xcorr_forward.5} parent=5 // pred_fallthru
      _
  $region6: #{depthwise_xcorr_forward.5} parent=0 // loop_footer
    %s13 = sadd.s32 1, %s9
  $region7: #{depthwise_xcorr_forward.5} parent=0 // loop_footer_branch
    %8 = sbr.rel target = $region3
  $region8: #{depthwise_xcorr_forward.5} parent=0 // loop_exit
    _

</llo_original>
